<compile_context>
chip_gen: v7x
topology: tpu7x:2x2x1
jax: 0.10.0
libtpu: 0.0.40
codegen_flags: <defaults>
</compile_context>

<pallas_src>
import functools

import jax
import jax.numpy as jnp
from jax import lax
from jax.experimental import pallas as pl
from jax.experimental.pallas import tpu as pltpu


# ---------------------------------------------------------------------------
# Path 1: fully fused ResidualBlock kernel (small shapes, VMEM resident)
# ---------------------------------------------------------------------------
def _fused_block_kernel(wts_ref, chp_ref, x_ref, o_ref, pad_ref, *, C, H, W, eps):
    """Whole ResidualBlock for one image, fully VMEM-resident.

    wts_ref : SMEM (2, C*C*9)  flattened conv weights [w1, w2] (OIHW order)
    chp_ref : SMEM (7, C)      rows: b1, g1, be1, tau, b2, g2, be2
    x_ref   : VMEM (1, C, H, W) input block (also the residual)
    o_ref   : VMEM (1, C, H, W) output block
    pad_ref : VMEM scratch (C, H+2, W+2): reflection-padded activation
    """
    f32 = jnp.float32

    def reflect_pad(planes):
        # Build the 1-pixel reflection-padded planes directly in VMEM scratch.
        for c in range(C):
            p = planes[c]
            pad_ref[c, 1:H + 1, 1:W + 1] = p
            pad_ref[c, 0:1, 1:W + 1] = p[1:2, :]                   # top    <- row 1
            pad_ref[c, H + 1:H + 2, 1:W + 1] = p[H - 2:H - 1, :]   # bottom <- row H-2
        for c in range(C):
            pad_ref[c, :, 0:1] = pad_ref[c, :, 2:3]                # left   <- col 1
            pad_ref[c, :, W + 1:W + 2] = pad_ref[c, :, W - 1:W]    # right  <- col W-2

    def conv3x3(w_row, b_row):
        # out[co] = bias[co] + sum_{ci,kh,kw} w[co,ci,kh,kw] * pad[ci, kh:kh+H, kw:kw+W]
        acc = [jnp.zeros((H, W), f32) + chp_ref[b_row, co] for co in range(C)]
        for ci in range(C):
            for k9 in range(9):
                kh, kw = k9 // 3, k9 % 3
                shift = pad_ref[ci, kh:kh + H, kw:kw + W]          # (H, W)
                for co in range(C):
                    w = wts_ref[w_row, (co * C + ci) * 9 + k9]
                    acc[co] = acc[co] + w * shift
        return acc

    def frn(y, g_row, b_row, c):
        nu2 = jnp.mean(y * y, keepdims=True)                       # (1, 1)
        y = y * lax.rsqrt(nu2 + eps)
        return chp_ref[g_row, c] * y + chp_ref[b_row, c]

    # residual (kept live across the whole kernel)
    x_planes = [x_ref[0, c, :, :].astype(f32) for c in range(C)]

    # conv1 (+bias) -> FRN -> TLU
    reflect_pad(x_planes)
    a1 = conv3x3(0, 0)
    h1 = [jnp.maximum(frn(a1[c], 1, 2, c), chp_ref[3, c]) for c in range(C)]

    # conv2 (+bias) -> FRN -> + residual
    reflect_pad(h1)
    a2 = conv3x3(1, 4)
    for c in range(C):
        y = frn(a2[c], 5, 6, c) + x_planes[c]
        o_ref[0, c, :, :] = y.astype(o_ref.dtype)


def _residual_block_fused(x, p, eps):
    N, C, H, W = x.shape
    cc9 = C * C * 9
    wts = jnp.stack(
        [p["w1"].reshape(cc9), p["w2"].reshape(cc9)]).astype(jnp.float32)
    chp = jnp.stack(
        [p["b1"], p["g1"], p["be1"], p["tau"],
         p["b2"], p["g2"], p["be2"]]).astype(jnp.float32)

    kernel = functools.partial(
        _fused_block_kernel, C=C, H=H, W=W, eps=abs(float(eps)))
    smem = pl.BlockSpec(memory_space=pltpu.MemorySpace.SMEM)

    return pl.pallas_call(
        kernel,
        out_shape=jax.ShapeDtypeStruct((N, C, H, W), x.dtype),
        grid=(N,),
        in_specs=[smem, smem,
                  pl.BlockSpec((1, C, H, W), lambda n: (n, 0, 0, 0))],
        out_specs=pl.BlockSpec((1, C, H, W), lambda n: (n, 0, 0, 0)),
        scratch_shapes=[pltpu.VMEM((C, H + 2, W + 2), jnp.float32)],
        compiler_params=pltpu.CompilerParams(
            dimension_semantics=("parallel",)),   # images independent -> megacore
    )(wts, chp, x)


def _can_fuse_whole_block(N, C, H, W):
    # Fused path unrolls over C_in*C_out*9 scalar MACs and keeps per-channel
    # (H, W) planes live, so reserve it for small channel counts / images.
    return (C <= 8) and (2 <= H <= 64) and (2 <= W <= 64)


# ---------------------------------------------------------------------------
# Path 2: fused FRN kernels (conv-bias + FRN + TLU / + residual) on (NC, HW)
# ---------------------------------------------------------------------------
def _frn_tlu_kernel(x_ref, p_ref, o_ref, *, eps):
    # x_ref: (TM, HW) conv output (bias NOT yet added)
    # p_ref: (TM, 4) per-row [conv_bias, gamma, beta, tau]; math kept in f32.
    p = p_ref[...]
    x = x_ref[...].astype(jnp.float32) + p[:, 0:1]
    nu2 = jnp.mean(x * x, axis=-1, keepdims=True)       # mean over H*W per row
    y = p[:, 1:2] * (x * lax.rsqrt(nu2 + eps)) + p[:, 2:3]
    o_ref[...] = jnp.maximum(y, p[:, 3:4]).astype(o_ref.dtype)


def _frn_add_kernel(x_ref, p_ref, r_ref, o_ref, *, eps):
    # p_ref: (TM, 3) per-row [conv_bias, gamma, beta]
    p = p_ref[...]
    x = x_ref[...].astype(jnp.float32) + p[:, 0:1]
    nu2 = jnp.mean(x * x, axis=-1, keepdims=True)
    y = p[:, 1:2] * (x * lax.rsqrt(nu2 + eps)) + p[:, 2:3]
    o_ref[...] = (y + r_ref[...].astype(jnp.float32)).astype(o_ref.dtype)


def _choose_tm(nc, hw, itemsize, target_block_bytes=4 << 20):
    """Rows per grid step for the (NC, HW) FRN kernels (sublane-aligned)."""
    if nc <= 8:
        return nc                                   # full extent: always legal
    max_rows = max(8, target_block_bytes // max(1, hw * itemsize))
    tm = min(nc, max_rows)
    if tm >= nc and nc >= 16:
        tm = (nc + 1) // 2                          # >=2 steps: megacore + pipelining
    return max(8, (tm // 8) * 8)                    # grid uses cdiv + masked tail


def _frn_stage(x, bias, gamma, beta, eps, *, tau=None, residual=None):
    """FRN (with conv bias folded in) followed by TLU or by +residual."""
    N, C, H, W = x.shape
    NC, HW = N * C, H * W
    x2d = x.reshape(NC, HW)

    def per_row(cols):                              # list of (C,) -> (NC, k)
        m = jnp.stack(cols, axis=-1).astype(jnp.float32)
        return jnp.broadcast_to(m[None], (N, C, m.shape[-1])).reshape(NC, -1)

    tm = _choose_tm(NC, HW, x.dtype.itemsize)
    grid = (pl.cdiv(NC, tm),)
    row_spec = pl.BlockSpec((tm, HW), lambda i: (i, 0))

    if tau is not None:
        params = per_row([bias, gamma, beta, tau])  # (NC, 4)
        kernel = functools.partial(_frn_tlu_kernel, eps=abs(float(eps)))
        inputs = [x2d, params]
        in_specs = [row_spec, pl.BlockSpec((tm, 4), lambda i: (i, 0))]
    else:
        params = per_row([bias, gamma, beta])       # (NC, 3)
        kernel = functools.partial(_frn_add_kernel, eps=abs(float(eps)))
        inputs = [x2d, params, residual.reshape(NC, HW)]
        in_specs = [row_spec, pl.BlockSpec((tm, 3), lambda i: (i, 0)), row_spec]

    # Double-buffered x/params/(residual)/out blocks + headroom; stays well
    # under v7x's 64 MiB per-TensorCore VMEM.
    blk = tm * HW * max(4, x.dtype.itemsize)
    vmem_limit = int(min(48 << 20, max(16 << 20, 8 * blk)))

    out2d = pl.pallas_call(
        kernel,
        out_shape=jax.ShapeDtypeStruct((NC, HW), x.dtype),
        grid=grid,
        in_specs=in_specs,
        out_specs=row_spec,
        # x2d is a fresh conv-output intermediate -> safe to overwrite in place.
        input_output_aliases={0: 0},
        compiler_params=pltpu.CompilerParams(
            dimension_semantics=("parallel",),
            vmem_limit_bytes=vmem_limit,
        ),
    )(*inputs)
    return out2d.reshape(N, C, H, W)


def _conv3x3_reflect(x, w):
    # TODO(synk): XLA materializes the reflect-padded tensor in HBM here; a
    # Pallas conv with in-VMEM halo/padding (and bf16 NHWC im2col) is the
    # next step for the large-shape path.
    xp = jnp.pad(x, ((0, 0), (0, 0), (1, 1), (1, 1)), mode="reflect")
    return lax.conv_general_dilated(
        xp, w, window_strides=(1, 1), padding="VALID",
        dimension_numbers=("NCHW", "OIHW", "NCHW"),
        precision=lax.Precision.HIGHEST)


# ---------------------------------------------------------------------------
# ResidualBlock forward
# ---------------------------------------------------------------------------
def residual_block(x, p, eps=1e-6):
    N, C, H, W = x.shape
    if _can_fuse_whole_block(N, C, H, W):
        return _residual_block_fused(x, p, eps)
    residual = x
    out = _conv3x3_reflect(x, p["w1"])                              # no bias here
    out = _frn_stage(out, p["b1"], p["g1"], p["be1"], eps, tau=p["tau"])
    out = _conv3x3_reflect(out, p["w2"])
    out = _frn_stage(out, p["b2"], p["g2"], p["be2"], eps, residual=residual)
    return out


residual_block_jit = jax.jit(residual_block)


# ---------------------------------------------------------------------------
# Pure-JAX reference
# ---------------------------------------------------------------------------
def residual_block_ref(x, p, eps=1e-6):
    def frn(t, g, b):
        nu2 = jnp.mean(t * t, axis=(2, 3), keepdims=True)
        y = t * lax.rsqrt(nu2 + abs(eps))
        return g.reshape(1, -1, 1, 1) * y + b.reshape(1, -1, 1, 1)

    out = _conv3x3_reflect(x, p["w1"]) + p["b1"].reshape(1, -1, 1, 1)
    out = jnp.maximum(frn(out, p["g1"], p["be1"]), p["tau"].reshape(1, -1, 1, 1))
    out = _conv3x3_reflect(out, p["w2"]) + p["b2"].reshape(1, -1, 1, 1)
    return frn(out, p["g2"], p["be2"]) + x


if __name__ == "__main__":
    def make_params(key, C):
        ks = jax.random.split(key, 9)
        return {
            "w1": jax.random.normal(ks[0], (C, C, 3, 3), jnp.float32) * 0.1,
            "b1": jax.random.normal(ks[1], (C,), jnp.float32) * 0.1,
            "g1": 1.0 + 0.1 * jax.random.normal(ks[2], (C,), jnp.float32),
            "be1": 0.1 * jax.random.normal(ks[3], (C,), jnp.float32),
            "tau": 0.1 * jax.random.normal(ks[4], (C,), jnp.float32),
            "w2": jax.random.normal(ks[5], (C, C, 3, 3), jnp.float32) * 0.1,
            "b2": jax.random.normal(ks[6], (C,), jnp.float32) * 0.1,
            "g2": 1.0 + 0.1 * jax.random.normal(ks[7], (C,), jnp.float32),
            "be2": 0.1 * jax.random.normal(ks[8], (C,), jnp.float32),
        }

    key = jax.random.PRNGKey(0)
    k_a, k_b, k_pa, k_pb = jax.random.split(key, 4)

    # Case 1: small shape -> fully fused single-kernel (VMEM-resident) path.
    x1 = jax.random.normal(k_a, (2, 4, 16, 16), jnp.float32)
    p1 = make_params(k_pa, 4)
    out1 = jax.block_until_ready(residual_block_jit(x1, p1))
    ref1 = jax.block_until_ready(residual_block_ref(x1, p1))
    assert out1.shape == x1.shape
    assert jnp.allclose(out1, ref1, rtol=1e-4, atol=1e-4), "fused path mismatch"

    # Case 2: larger channel count -> XLA conv + fused FRN Pallas kernels.
    # Also exercises H*W not a multiple of 128 and a masked partial last block.
    x2 = jax.random.normal(k_b, (3, 12, 15, 15), jnp.float32)
    p2 = make_params(k_pb, 12)
    out2 = jax.block_until_ready(residual_block_jit(x2, p2))
    ref2 = jax.block_until_ready(residual_block_ref(x2, p2))
    assert out2.shape == x2.shape
    assert jnp.allclose(out2, ref2, rtol=1e-4, atol=1e-4), "fallback path mismatch"

    print("KERNEL_OK")
</pallas_src>

<mosaic_0001>
module attributes {stable_mosaic.version = 11 : i64} {
  func.func @_fused_block_kernel(%arg0: i32, %arg1: memref<2x144xf32, #tpu.memory_space<smem>>, %arg2: memref<7x4xf32, #tpu.memory_space<smem>>, %arg3: memref<1x4x16x16xf32, #tpu.memory_space<vmem>>, %arg4: memref<1x4x16x16xf32, #tpu.memory_space<vmem>>, %arg5: memref<4x18x18xf32, #tpu.memory_space<vmem>>) attributes {dimension_semantics = [#tpu.dimension_semantics<parallel>], iteration_bounds = array<i64: 2>, scalar_prefetch = 0 : i64, scratch_operands = 1 : i64, tpu.core_type = #tpu.core_type<tc>, window_params = [{transform_indices = @transform_0, window_bounds = array<i64: 2, 144>}, {transform_indices = @transform_1, window_bounds = array<i64: 7, 4>}, {transform_indices = @transform_2, window_bounds = array<i64: 1, 4, 16, 16>}, {transform_indices = @transform_3, window_bounds = array<i64: 1, 4, 16, 16>}]} {
    %c0 = arith.constant 0 : index
    %c0_0 = arith.constant 0 : index
    %c0_1 = arith.constant 0 : index
    %c0_2 = arith.constant 0 : index
    %0 = vector.load %arg3[%c0, %c0_0, %c0_1, %c0_2] : memref<1x4x16x16xf32, #tpu.memory_space<vmem>>, vector<1x1x16x16xf32>
    %1 = vector.shape_cast %0 : vector<1x1x16x16xf32> to vector<16x16xf32>
    %c0_3 = arith.constant 0 : index
    %c1 = arith.constant 1 : index
    %c0_4 = arith.constant 0 : index
    %c0_5 = arith.constant 0 : index
    %2 = vector.load %arg3[%c0_3, %c1, %c0_4, %c0_5] : memref<1x4x16x16xf32, #tpu.memory_space<vmem>>, vector<1x1x16x16xf32>
    %3 = vector.shape_cast %2 : vector<1x1x16x16xf32> to vector<16x16xf32>
    %c0_6 = arith.constant 0 : index
    %c2 = arith.constant 2 : index
    %c0_7 = arith.constant 0 : index
    %c0_8 = arith.constant 0 : index
    %4 = vector.load %arg3[%c0_6, %c2, %c0_7, %c0_8] : memref<1x4x16x16xf32, #tpu.memory_space<vmem>>, vector<1x1x16x16xf32>
    %5 = vector.shape_cast %4 : vector<1x1x16x16xf32> to vector<16x16xf32>
    %c0_9 = arith.constant 0 : index
    %c3 = arith.constant 3 : index
    %c0_10 = arith.constant 0 : index
    %c0_11 = arith.constant 0 : index
    %6 = vector.load %arg3[%c0_9, %c3, %c0_10, %c0_11] : memref<1x4x16x16xf32, #tpu.memory_space<vmem>>, vector<1x1x16x16xf32>
    %7 = vector.shape_cast %6 : vector<1x1x16x16xf32> to vector<16x16xf32>
    %c0_12 = arith.constant 0 : index
    %c1_13 = arith.constant 1 : index
    %c1_14 = arith.constant 1 : index
    %8 = vector.load %arg5[%c0_12, %c1_13, %c1_14] : memref<4x18x18xf32, #tpu.memory_space<vmem>>, vector<1x16x16xf32>
    %9 = vector.shape_cast %8 : vector<1x16x16xf32> to vector<16x16xf32>
    %10 = vector.shape_cast %1 : vector<16x16xf32> to vector<1x16x16xf32>
    tpu.vector_store %arg5[%c0_12, %c1_13, %c1_14], %10 {strides = array<i32>} : memref<4x18x18xf32, #tpu.memory_space<vmem>>, vector<1x16x16xf32>,
    %11 = vector.extract_strided_slice %1 {offsets = [1, 0], sizes = [1, 16], strides = [1, 1]} : vector<16x16xf32> to vector<1x16xf32>
    %c0_15 = arith.constant 0 : index
    %c0_16 = arith.constant 0 : index
    %c1_17 = arith.constant 1 : index
    %12 = vector.load %arg5[%c0_15, %c0_16, %c1_17] : memref<4x18x18xf32, #tpu.memory_space<vmem>>, vector<1x1x16xf32>
    %13 = vector.shape_cast %12 : vector<1x1x16xf32> to vector<1x16xf32>
    %14 = vector.shape_cast %11 : vector<1x16xf32> to vector<1x1x16xf32>
    tpu.vector_store %arg5[%c0_15, %c0_16, %c1_17], %14 {strides = array<i32>} : memref<4x18x18xf32, #tpu.memory_space<vmem>>, vector<1x1x16xf32>,
    %15 = vector.extract_strided_slice %1 {offsets = [14, 0], sizes = [1, 16], strides = [1, 1]} : vector<16x16xf32> to vector<1x16xf32>
    %c0_18 = arith.constant 0 : index
    %c17 = arith.constant 17 : index
    %c1_19 = arith.constant 1 : index
    %16 = vector.load %arg5[%c0_18, %c17, %c1_19] : memref<4x18x18xf32, #tpu.memory_space<vmem>>, vector<1x1x16xf32>
    %17 = vector.shape_cast %16 : vector<1x1x16xf32> to vector<1x16xf32>
    %18 = vector.shape_cast %15 : vector<1x16xf32> to vector<1x1x16xf32>
    tpu.vector_store %arg5[%c0_18, %c17, %c1_19], %18 {strides = array<i32>} : memref<4x18x18xf32, #tpu.memory_space<vmem>>, vector<1x1x16xf32>,
    %c1_20 = arith.constant 1 : index
    %c1_21 = arith.constant 1 : index
    %c1_22 = arith.constant 1 : index
    %19 = vector.load %arg5[%c1_20, %c1_21, %c1_22] : memref<4x18x18xf32, #tpu.memory_space<vmem>>, vector<1x16x16xf32>
    %20 = vector.shape_cast %19 : vector<1x16x16xf32> to vector<16x16xf32>
    %21 = vector.shape_cast %3 : vector<16x16xf32> to vector<1x16x16xf32>
    tpu.vector_store %arg5[%c1_20, %c1_21, %c1_22], %21 {strides = array<i32>} : memref<4x18x18xf32, #tpu.memory_space<vmem>>, vector<1x16x16xf32>,
    %22 = vector.extract_strided_slice %3 {offsets = [1, 0], sizes = [1, 16], strides = [1, 1]} : vector<16x16xf32> to vector<1x16xf32>
    %c1_23 = arith.constant 1 : index
    %c0_24 = arith.constant 0 : index
    %c1_25 = arith.constant 1 : index
    %23 = vector.load %arg5[%c1_23, %c0_24, %c1_25] : memref<4x18x18xf32, #tpu.memory_space<vmem>>, vector<1x1x16xf32>
    %24 = vector.shape_cast %23 : vector<1x1x16xf32> to vector<1x16xf32>
    %25 = vector.shape_cast %22 : vector<1x16xf32> to vector<1x1x16xf32>
    tpu.vector_store %arg5[%c1_23, %c0_24, %c1_25], %25 {strides = array<i32>} : memref<4x18x18xf32, #tpu.memory_space<vmem>>, vector<1x1x16xf32>,
    %26 = vector.extract_strided_slice %3 {offsets = [14, 0], sizes = [1, 16], strides = [1, 1]} : vector<16x16xf32> to vector<1x16xf32>
    %c1_26 = arith.constant 1 : index
    %c17_27 = arith.constant 17 : index
    %c1_28 = arith.constant 1 : index
    %27 = vector.load %arg5[%c1_26, %c17_27, %c1_28] : memref<4x18x18xf32, #tpu.memory_space<vmem>>, vector<1x1x16xf32>
    %28 = vector.shape_cast %27 : vector<1x1x16xf32> to vector<1x16xf32>
    %29 = vector.shape_cast %26 : vector<1x16xf32> to vector<1x1x16xf32>
    tpu.vector_store %arg5[%c1_26, %c17_27, %c1_28], %29 {strides = array<i32>} : memref<4x18x18xf32, #tpu.memory_space<vmem>>, vector<1x1x16xf32>,
    %c2_29 = arith.constant 2 : index
    %c1_30 = arith.constant 1 : index
    %c1_31 = arith.constant 1 : index
    %30 = vector.load %arg5[%c2_29, %c1_30, %c1_31] : memref<4x18x18xf32, #tpu.memory_space<vmem>>, vector<1x16x16xf32>
    %31 = vector.shape_cast %30 : vector<1x16x16xf32> to vector<16x16xf32>
    %32 = vector.shape_cast %5 : vector<16x16xf32> to vector<1x16x16xf32>
    tpu.vector_store %arg5[%c2_29, %c1_30, %c1_31], %32 {strides = array<i32>} : memref<4x18x18xf32, #tpu.memory_space<vmem>>, vector<1x16x16xf32>,
    %33 = vector.extract_strided_slice %5 {offsets = [1, 0], sizes = [1, 16], strides = [1, 1]} : vector<16x16xf32> to vector<1x16xf32>
    %c2_32 = arith.constant 2 : index
    %c0_33 = arith.constant 0 : index
    %c1_34 = arith.constant 1 : index
    %34 = vector.load %arg5[%c2_32, %c0_33, %c1_34] : memref<4x18x18xf32, #tpu.memory_space<vmem>>, vector<1x1x16xf32>
    %35 = vector.shape_cast %34 : vector<1x1x16xf32> to vector<1x16xf32>
    %36 = vector.shape_cast %33 : vector<1x16xf32> to vector<1x1x16xf32>
    tpu.vector_store %arg5[%c2_32, %c0_33, %c1_34], %36 {strides = array<i32>} : memref<4x18x18xf32, #tpu.memory_space<vmem>>, vector<1x1x16xf32>,
    %37 = vector.extract_strided_slice %5 {offsets = [14, 0], sizes = [1, 16], strides = [1, 1]} : vector<16x16xf32> to vector<1x16xf32>
    %c2_35 = arith.constant 2 : index
    %c17_36 = arith.constant 17 : index
    %c1_37 = arith.constant 1 : index
    %38 = vector.load %arg5[%c2_35, %c17_36, %c1_37] : memref<4x18x18xf32, #tpu.memory_space<vmem>>, vector<1x1x16xf32>
    %39 = vector.shape_cast %38 : vector<1x1x16xf32> to vector<1x16xf32>
    %40 = vector.shape_cast %37 : vector<1x16xf32> to vector<1x1x16xf32>
    tpu.vector_store %arg5[%c2_35, %c17_36, %c1_37], %40 {strides = array<i32>} : memref<4x18x18xf32, #tpu.memory_space<vmem>>, vector<1x1x16xf32>,
    %c3_38 = arith.constant 3 : index
    %c1_39 = arith.constant 1 : index
    %c1_40 = arith.constant 1 : index
    %41 = vector.load %arg5[%c3_38, %c1_39, %c1_40] : memref<4x18x18xf32, #tpu.memory_space<vmem>>, vector<1x16x16xf32>
    %42 = vector.shape_cast %41 : vector<1x16x16xf32> to vector<16x16xf32>
    %43 = vector.shape_cast %7 : vector<16x16xf32> to vector<1x16x16xf32>
    tpu.vector_store %arg5[%c3_38, %c1_39, %c1_40], %43 {strides = array<i32>} : memref<4x18x18xf32, #tpu.memory_space<vmem>>, vector<1x16x16xf32>,
    %44 = vector.extract_strided_slice %7 {offsets = [1, 0], sizes = [1, 16], strides = [1, 1]} : vector<16x16xf32> to vector<1x16xf32>
    %c3_41 = arith.constant 3 : index
    %c0_42 = arith.constant 0 : index
    %c1_43 = arith.constant 1 : index
    %45 = vector.load %arg5[%c3_41, %c0_42, %c1_43] : memref<4x18x18xf32, #tpu.memory_space<vmem>>, vector<1x1x16xf32>
    %46 = vector.shape_cast %45 : vector<1x1x16xf32> to vector<1x16xf32>
    %47 = vector.shape_cast %44 : vector<1x16xf32> to vector<1x1x16xf32>
    tpu.vector_store %arg5[%c3_41, %c0_42, %c1_43], %47 {strides = array<i32>} : memref<4x18x18xf32, #tpu.memory_space<vmem>>, vector<1x1x16xf32>,
    %48 = vector.extract_strided_slice %7 {offsets = [14, 0], sizes = [1, 16], strides = [1, 1]} : vector<16x16xf32> to vector<1x16xf32>
    %c3_44 = arith.constant 3 : index
    %c17_45 = arith.constant 17 : index
    %c1_46 = arith.constant 1 : index
    %49 = vector.load %arg5[%c3_44, %c17_45, %c1_46] : memref<4x18x18xf32, #tpu.memory_space<vmem>>, vector<1x1x16xf32>
    %50 = vector.shape_cast %49 : vector<1x1x16xf32> to vector<1x16xf32>
    %51 = vector.shape_cast %48 : vector<1x16xf32> to vector<1x1x16xf32>
    tpu.vector_store %arg5[%c3_44, %c17_45, %c1_46], %51 {strides = array<i32>} : memref<4x18x18xf32, #tpu.memory_space<vmem>>, vector<1x1x16xf32>,
    %c0_47 = arith.constant 0 : index
    %c0_48 = arith.constant 0 : index
    %c2_49 = arith.constant 2 : index
    %52 = vector.load %arg5[%c0_47, %c0_48, %c2_49] : memref<4x18x18xf32, #tpu.memory_space<vmem>>, vector<1x18x1xf32>
    %53 = vector.shape_cast %52 : vector<1x18x1xf32> to vector<18x1xf32>
    %c0_50 = arith.constant 0 : index
    %c0_51 = arith.constant 0 : index
    %c0_52 = arith.constant 0 : index
    %54 = vector.load %arg5[%c0_50, %c0_51, %c0_52] : memref<4x18x18xf32, #tpu.memory_space<vmem>>, vector<1x18x1xf32>
    %55 = vector.shape_cast %54 : vector<1x18x1xf32> to vector<18x1xf32>
    %56 = vector.shape_cast %53 : vector<18x1xf32> to vector<1x18x1xf32>
    tpu.vector_store %arg5[%c0_50, %c0_51, %c0_52], %56 {strides = array<i32>} : memref<4x18x18xf32, #tpu.memory_space<vmem>>, vector<1x18x1xf32>,
    %c0_53 = arith.constant 0 : index
    %c0_54 = arith.constant 0 : index
    %c15 = arith.constant 15 : index
    %57 = vector.load %arg5[%c0_53, %c0_54, %c15] : memref<4x18x18xf32, #tpu.memory_space<vmem>>, vector<1x18x1xf32>
    %58 = vector.shape_cast %57 : vector<1x18x1xf32> to vector<18x1xf32>
    %c0_55 = arith.constant 0 : index
    %c0_56 = arith.constant 0 : index
    %c17_57 = arith.constant 17 : index
    %59 = vector.load %arg5[%c0_55, %c0_56, %c17_57] : memref<4x18x18xf32, #tpu.memory_space<vmem>>, vector<1x18x1xf32>
    %60 = vector.shape_cast %59 : vector<1x18x1xf32> to vector<18x1xf32>
    %61 = vector.shape_cast %58 : vector<18x1xf32> to vector<1x18x1xf32>
    tpu.vector_store %arg5[%c0_55, %c0_56, %c17_57], %61 {strides = array<i32>} : memref<4x18x18xf32, #tpu.memory_space<vmem>>, vector<1x18x1xf32>,
    %c1_58 = arith.constant 1 : index
    %c0_59 = arith.constant 0 : index
    %c2_60 = arith.constant 2 : index
    %62 = vector.load %arg5[%c1_58, %c0_59, %c2_60] : memref<4x18x18xf32, #tpu.memory_space<vmem>>, vector<1x18x1xf32>
    %63 = vector.shape_cast %62 : vector<1x18x1xf32> to vector<18x1xf32>
    %c1_61 = arith.constant 1 : index
    %c0_62 = arith.constant 0 : index
    %c0_63 = arith.constant 0 : index
    %64 = vector.load %arg5[%c1_61, %c0_62, %c0_63] : memref<4x18x18xf32, #tpu.memory_space<vmem>>, vector<1x18x1xf32>
    %65 = vector.shape_cast %64 : vector<1x18x1xf32> to vector<18x1xf32>
    %66 = vector.shape_cast %63 : vector<18x1xf32> to vector<1x18x1xf32>
    tpu.vector_store %arg5[%c1_61, %c0_62, %c0_63], %66 {strides = array<i32>} : memref<4x18x18xf32, #tpu.memory_space<vmem>>, vector<1x18x1xf32>,
    %c1_64 = arith.constant 1 : index
    %c0_65 = arith.constant 0 : index
    %c15_66 = arith.constant 15 : index
    %67 = vector.load %arg5[%c1_64, %c0_65, %c15_66] : memref<4x18x18xf32, #tpu.memory_space<vmem>>, vector<1x18x1xf32>
    %68 = vector.shape_cast %67 : vector<1x18x1xf32> to vector<18x1xf32>
    %c1_67 = arith.constant 1 : index
    %c0_68 = arith.constant 0 : index
    %c17_69 = arith.constant 17 : index
    %69 = vector.load %arg5[%c1_67, %c0_68, %c17_69] : memref<4x18x18xf32, #tpu.memory_space<vmem>>, vector<1x18x1xf32>
    %70 = vector.shape_cast %69 : vector<1x18x1xf32> to vector<18x1xf32>
    %71 = vector.shape_cast %68 : vector<18x1xf32> to vector<1x18x1xf32>
    tpu.vector_store %arg5[%c1_67, %c0_68, %c17_69], %71 {strides = array<i32>} : memref<4x18x18xf32, #tpu.memory_space<vmem>>, vector<1x18x1xf32>,
    %c2_70 = arith.constant 2 : index
    %c0_71 = arith.constant 0 : index
    %c2_72 = arith.constant 2 : index
    %72 = vector.load %arg5[%c2_70, %c0_71, %c2_72] : memref<4x18x18xf32, #tpu.memory_space<vmem>>, vector<1x18x1xf32>
    %73 = vector.shape_cast %72 : vector<1x18x1xf32> to vector<18x1xf32>
    %c2_73 = arith.constant 2 : index
    %c0_74 = arith.constant 0 : index
    %c0_75 = arith.constant 0 : index
    %74 = vector.load %arg5[%c2_73, %c0_74, %c0_75] : memref<4x18x18xf32, #tpu.memory_space<vmem>>, vector<1x18x1xf32>
    %75 = vector.shape_cast %74 : vector<1x18x1xf32> to vector<18x1xf32>
    %76 = vector.shape_cast %73 : vector<18x1xf32> to vector<1x18x1xf32>
    tpu.vector_store %arg5[%c2_73, %c0_74, %c0_75], %76 {strides = array<i32>} : memref<4x18x18xf32, #tpu.memory_space<vmem>>, vector<1x18x1xf32>,
    %c2_76 = arith.constant 2 : index
    %c0_77 = arith.constant 0 : index
    %c15_78 = arith.constant 15 : index
    %77 = vector.load %arg5[%c2_76, %c0_77, %c15_78] : memref<4x18x18xf32, #tpu.memory_space<vmem>>, vector<1x18x1xf32>
    %78 = vector.shape_cast %77 : vector<1x18x1xf32> to vector<18x1xf32>
    %c2_79 = arith.constant 2 : index
    %c0_80 = arith.constant 0 : index
    %c17_81 = arith.constant 17 : index
    %79 = vector.load %arg5[%c2_79, %c0_80, %c17_81] : memref<4x18x18xf32, #tpu.memory_space<vmem>>, vector<1x18x1xf32>
    %80 = vector.shape_cast %79 : vector<1x18x1xf32> to vector<18x1xf32>
    %81 = vector.shape_cast %78 : vector<18x1xf32> to vector<1x18x1xf32>
    tpu.vector_store %arg5[%c2_79, %c0_80, %c17_81], %81 {strides = array<i32>} : memref<4x18x18xf32, #tpu.memory_space<vmem>>, vector<1x18x1xf32>,
    %c3_82 = arith.constant 3 : index
    %c0_83 = arith.constant 0 : index
    %c2_84 = arith.constant 2 : index
    %82 = vector.load %arg5[%c3_82, %c0_83, %c2_84] : memref<4x18x18xf32, #tpu.memory_space<vmem>>, vector<1x18x1xf32>
    %83 = vector.shape_cast %82 : vector<1x18x1xf32> to vector<18x1xf32>
    %c3_85 = arith.constant 3 : index
    %c0_86 = arith.constant 0 : index
    %c0_87 = arith.constant 0 : index
    %84 = vector.load %arg5[%c3_85, %c0_86, %c0_87] : memref<4x18x18xf32, #tpu.memory_space<vmem>>, vector<1x18x1xf32>
    %85 = vector.shape_cast %84 : vector<1x18x1xf32> to vector<18x1xf32>
    %86 = vector.shape_cast %83 : vector<18x1xf32> to vector<1x18x1xf32>
    tpu.vector_store %arg5[%c3_85, %c0_86, %c0_87], %86 {strides = array<i32>} : memref<4x18x18xf32, #tpu.memory_space<vmem>>, vector<1x18x1xf32>,
    %c3_88 = arith.constant 3 : index
    %c0_89 = arith.constant 0 : index
    %c15_90 = arith.constant 15 : index
    %87 = vector.load %arg5[%c3_88, %c0_89, %c15_90] : memref<4x18x18xf32, #tpu.memory_space<vmem>>, vector<1x18x1xf32>
    %88 = vector.shape_cast %87 : vector<1x18x1xf32> to vector<18x1xf32>
    %c3_91 = arith.constant 3 : index
    %c0_92 = arith.constant 0 : index
    %c17_93 = arith.constant 17 : index
    %89 = vector.load %arg5[%c3_91, %c0_92, %c17_93] : memref<4x18x18xf32, #tpu.memory_space<vmem>>, vector<1x18x1xf32>
    %90 = vector.shape_cast %89 : vector<1x18x1xf32> to vector<18x1xf32>
    %91 = vector.shape_cast %88 : vector<18x1xf32> to vector<1x18x1xf32>
    tpu.vector_store %arg5[%c3_91, %c0_92, %c17_93], %91 {strides = array<i32>} : memref<4x18x18xf32, #tpu.memory_space<vmem>>, vector<1x18x1xf32>,
    %cst = arith.constant 0.000000e+00 : f32
    %92 = vector.broadcast %cst : f32 to vector<16x16xf32>
    %c0_94 = arith.constant 0 : index
    %c0_95 = arith.constant 0 : index
    %93 = memref.load %arg2[%c0_94, %c0_95] : memref<7x4xf32, #tpu.memory_space<smem>>
    %94 = vector.broadcast %93 : f32 to vector<16x16xf32>
    %95 = arith.addf %92, %94 : vector<16x16xf32>
    %cst_96 = arith.constant 0.000000e+00 : f32
    %96 = vector.broadcast %cst_96 : f32 to vector<16x16xf32>
    %c0_97 = arith.constant 0 : index
    %c1_98 = arith.constant 1 : index
    %97 = memref.load %arg2[%c0_97, %c1_98] : memref<7x4xf32, #tpu.memory_space<smem>>
    %98 = vector.broadcast %97 : f32 to vector<16x16xf32>
    %99 = arith.addf %96, %98 : vector<16x16xf32>
    %cst_99 = arith.constant 0.000000e+00 : f32
    %100 = vector.broadcast %cst_99 : f32 to vector<16x16xf32>
    %c0_100 = arith.constant 0 : index
    %c2_101 = arith.constant 2 : index
    %101 = memref.load %arg2[%c0_100, %c2_101] : memref<7x4xf32, #tpu.memory_space<smem>>
    %102 = vector.broadcast %101 : f32 to vector<16x16xf32>
    %103 = arith.addf %100, %102 : vector<16x16xf32>
    %cst_102 = arith.constant 0.000000e+00 : f32
    %104 = vector.broadcast %cst_102 : f32 to vector<16x16xf32>
    %c0_103 = arith.constant 0 : index
    %c3_104 = arith.constant 3 : index
    %105 = memref.load %arg2[%c0_103, %c3_104] : memref<7x4xf32, #tpu.memory_space<smem>>
    %106 = vector.broadcast %105 : f32 to vector<16x16xf32>
    %107 = arith.addf %104, %106 : vector<16x16xf32>
    %c0_105 = arith.constant 0 : index
    %c0_106 = arith.constant 0 : index
    %c0_107 = arith.constant 0 : index
    %108 = vector.load %arg5[%c0_105, %c0_106, %c0_107] : memref<4x18x18xf32, #tpu.memory_space<vmem>>, vector<1x16x16xf32>
    %109 = vector.shape_cast %108 : vector<1x16x16xf32> to vector<16x16xf32>
    %c0_108 = arith.constant 0 : index
    %c0_109 = arith.constant 0 : index
    %110 = memref.load %arg1[%c0_108, %c0_109] : memref<2x144xf32, #tpu.memory_space<smem>>
    %111 = vector.broadcast %110 : f32 to vector<16x16xf32>
    %112 = arith.mulf %111, %109 : vector<16x16xf32>
    %113 = arith.addf %95, %112 : vector<16x16xf32>
    %c0_110 = arith.constant 0 : index
    %c36 = arith.constant 36 : index
    %114 = memref.load %arg1[%c0_110, %c36] : memref<2x144xf32, #tpu.memory_space<smem>>
    %115 = vector.broadcast %114 : f32 to vector<16x16xf32>
    %116 = arith.mulf %115, %109 : vector<16x16xf32>
    %117 = arith.addf %99, %116 : vector<16x16xf32>
    %c0_111 = arith.constant 0 : index
    %c72 = arith.constant 72 : index
    %118 = memref.load %arg1[%c0_111, %c72] : memref<2x144xf32, #tpu.memory_space<smem>>
    %119 = vector.broadcast %118 : f32 to vector<16x16xf32>
    %120 = arith.mulf %119, %109 : vector<16x16xf32>
    %121 = arith.addf %103, %120 : vector<16x16xf32>
    %c0_112 = arith.constant 0 : index
    %c108 = arith.constant 108 : index
    %122 = memref.load %arg1[%c0_112, %c108] : memref<2x144xf32, #tpu.memory_space<smem>>
    %123 = vector.broadcast %122 : f32 to vector<16x16xf32>
    %124 = arith.mulf %123, %109 : vector<16x16xf32>
    %125 = arith.addf %107, %124 : vector<16x16xf32>
    %c0_113 = arith.constant 0 : index
    %c0_114 = arith.constant 0 : index
    %c1_115 = arith.constant 1 : index
    %126 = vector.load %arg5[%c0_113, %c0_114, %c1_115] : memref<4x18x18xf32, #tpu.memory_space<vmem>>, vector<1x16x16xf32>
    %127 = vector.shape_cast %126 : vector<1x16x16xf32> to vector<16x16xf32>
    %c0_116 = arith.constant 0 : index
    %c1_117 = arith.constant 1 : index
    %128 = memref.load %arg1[%c0_116, %c1_117] : memref<2x144xf32, #tpu.memory_space<smem>>
    %129 = vector.broadcast %128 : f32 to vector<16x16xf32>
    %130 = arith.mulf %129, %127 : vector<16x16xf32>
    %131 = arith.addf %113, %130 : vector<16x16xf32>
    %c0_118 = arith.constant 0 : index
    %c37 = arith.constant 37 : index
    %132 = memref.load %arg1[%c0_118, %c37] : memref<2x144xf32, #tpu.memory_space<smem>>
    %133 = vector.broadcast %132 : f32 to vector<16x16xf32>
    %134 = arith.mulf %133, %127 : vector<16x16xf32>
    %135 = arith.addf %117, %134 : vector<16x16xf32>
    %c0_119 = arith.constant 0 : index
    %c73 = arith.constant 73 : index
    %136 = memref.load %arg1[%c0_119, %c73] : memref<2x144xf32, #tpu.memory_space<smem>>
    %137 = vector.broadcast %136 : f32 to vector<16x16xf32>
    %138 = arith.mulf %137, %127 : vector<16x16xf32>
    %139 = arith.addf %121, %138 : vector<16x16xf32>
    %c0_120 = arith.constant 0 : index
    %c109 = arith.constant 109 : index
    %140 = memref.load %arg1[%c0_120, %c109] : memref<2x144xf32, #tpu.memory_space<smem>>
    %141 = vector.broadcast %140 : f32 to vector<16x16xf32>
    %142 = arith.mulf %141, %127 : vector<16x16xf32>
    %143 = arith.addf %125, %142 : vector<16x16xf32>
    %c0_121 = arith.constant 0 : index
    %c0_122 = arith.constant 0 : index
    %c2_123 = arith.constant 2 : index
    %144 = vector.load %arg5[%c0_121, %c0_122, %c2_123] : memref<4x18x18xf32, #tpu.memory_space<vmem>>, vector<1x16x16xf32>
    %145 = vector.shape_cast %144 : vector<1x16x16xf32> to vector<16x16xf32>
    %c0_124 = arith.constant 0 : index
    %c2_125 = arith.constant 2 : index
    %146 = memref.load %arg1[%c0_124, %c2_125] : memref<2x144xf32, #tpu.memory_space<smem>>
    %147 = vector.broadcast %146 : f32 to vector<16x16xf32>
    %148 = arith.mulf %147, %145 : vector<16x16xf32>
    %149 = arith.addf %131, %148 : vector<16x16xf32>
    %c0_126 = arith.constant 0 : index
    %c38 = arith.constant 38 : index
    %150 = memref.load %arg1[%c0_126, %c38] : memref<2x144xf32, #tpu.memory_space<smem>>
    %151 = vector.broadcast %150 : f32 to vector<16x16xf32>
    %152 = arith.mulf %151, %145 : vector<16x16xf32>
    %153 = arith.addf %135, %152 : vector<16x16xf32>
    %c0_127 = arith.constant 0 : index
    %c74 = arith.constant 74 : index
    %154 = memref.load %arg1[%c0_127, %c74] : memref<2x144xf32, #tpu.memory_space<smem>>
    %155 = vector.broadcast %154 : f32 to vector<16x16xf32>
    %156 = arith.mulf %155, %145 : vector<16x16xf32>
    %157 = arith.addf %139, %156 : vector<16x16xf32>
    %c0_128 = arith.constant 0 : index
    %c110 = arith.constant 110 : index
    %158 = memref.load %arg1[%c0_128, %c110] : memref<2x144xf32, #tpu.memory_space<smem>>
    %159 = vector.broadcast %158 : f32 to vector<16x16xf32>
    %160 = arith.mulf %159, %145 : vector<16x16xf32>
    %161 = arith.addf %143, %160 : vector<16x16xf32>
    %c0_129 = arith.constant 0 : index
    %c1_130 = arith.constant 1 : index
    %c0_131 = arith.constant 0 : index
    %162 = vector.load %arg5[%c0_129, %c1_130, %c0_131] : memref<4x18x18xf32, #tpu.memory_space<vmem>>, vector<1x16x16xf32>
    %163 = vector.shape_cast %162 : vector<1x16x16xf32> to vector<16x16xf32>
    %c0_132 = arith.constant 0 : index
    %c3_133 = arith.constant 3 : index
    %164 = memref.load %arg1[%c0_132, %c3_133] : memref<2x144xf32, #tpu.memory_space<smem>>
    %165 = vector.broadcast %164 : f32 to vector<16x16xf32>
    %166 = arith.mulf %165, %163 : vector<16x16xf32>
    %167 = arith.addf %149, %166 : vector<16x16xf32>
    %c0_134 = arith.constant 0 : index
    %c39 = arith.constant 39 : index
    %168 = memref.load %arg1[%c0_134, %c39] : memref<2x144xf32, #tpu.memory_space<smem>>
    %169 = vector.broadcast %168 : f32 to vector<16x16xf32>
    %170 = arith.mulf %169, %163 : vector<16x16xf32>
    %171 = arith.addf %153, %170 : vector<16x16xf32>
    %c0_135 = arith.constant 0 : index
    %c75 = arith.constant 75 : index
    %172 = memref.load %arg1[%c0_135, %c75] : memref<2x144xf32, #tpu.memory_space<smem>>
    %173 = vector.broadcast %172 : f32 to vector<16x16xf32>
    %174 = arith.mulf %173, %163 : vector<16x16xf32>
    %175 = arith.addf %157, %174 : vector<16x16xf32>
    %c0_136 = arith.constant 0 : index
    %c111 = arith.constant 111 : index
    %176 = memref.load %arg1[%c0_136, %c111] : memref<2x144xf32, #tpu.memory_space<smem>>
    %177 = vector.broadcast %176 : f32 to vector<16x16xf32>
    %178 = arith.mulf %177, %163 : vector<16x16xf32>
    %179 = arith.addf %161, %178 : vector<16x16xf32>
    %c0_137 = arith.constant 0 : index
    %c1_138 = arith.constant 1 : index
    %c1_139 = arith.constant 1 : index
    %180 = vector.load %arg5[%c0_137, %c1_138, %c1_139] : memref<4x18x18xf32, #tpu.memory_space<vmem>>, vector<1x16x16xf32>
    %181 = vector.shape_cast %180 : vector<1x16x16xf32> to vector<16x16xf32>
    %c0_140 = arith.constant 0 : index
    %c4 = arith.constant 4 : index
    %182 = memref.load %arg1[%c0_140, %c4] : memref<2x144xf32, #tpu.memory_space<smem>>
    %183 = vector.broadcast %182 : f32 to vector<16x16xf32>
    %184 = arith.mulf %183, %181 : vector<16x16xf32>
    %185 = arith.addf %167, %184 : vector<16x16xf32>
    %c0_141 = arith.constant 0 : index
    %c40 = arith.constant 40 : index
    %186 = memref.load %arg1[%c0_141, %c40] : memref<2x144xf32, #tpu.memory_space<smem>>
    %187 = vector.broadcast %186 : f32 to vector<16x16xf32>
    %188 = arith.mulf %187, %181 : vector<16x16xf32>
    %189 = arith.addf %171, %188 : vector<16x16xf32>
    %c0_142 = arith.constant 0 : index
    %c76 = arith.constant 76 : index
    %190 = memref.load %arg1[%c0_142, %c76] : memref<2x144xf32, #tpu.memory_space<smem>>
    %191 = vector.broadcast %190 : f32 to vector<16x16xf32>
    %192 = arith.mulf %191, %181 : vector<16x16xf32>
    %193 = arith.addf %175, %192 : vector<16x16xf32>
    %c0_143 = arith.constant 0 : index
    %c112 = arith.constant 112 : index
    %194 = memref.load %arg1[%c0_143, %c112] : memref<2x144xf32, #tpu.memory_space<smem>>
    %195 = vector.broadcast %194 : f32 to vector<16x16xf32>
    %196 = arith.mulf %195, %181 : vector<16x16xf32>
    %197 = arith.addf %179, %196 : vector<16x16xf32>
    %c0_144 = arith.constant 0 : index
    %c1_145 = arith.constant 1 : index
    %c2_146 = arith.constant 2 : index
    %198 = vector.load %arg5[%c0_144, %c1_145, %c2_146] : memref<4x18x18xf32, #tpu.memory_space<vmem>>, vector<1x16x16xf32>
    %199 = vector.shape_cast %198 : vector<1x16x16xf32> to vector<16x16xf32>
    %c0_147 = arith.constant 0 : index
    %c5 = arith.constant 5 : index
    %200 = memref.load %arg1[%c0_147, %c5] : memref<2x144xf32, #tpu.memory_space<smem>>
    %201 = vector.broadcast %200 : f32 to vector<16x16xf32>
    %202 = arith.mulf %201, %199 : vector<16x16xf32>
    %203 = arith.addf %185, %202 : vector<16x16xf32>
    %c0_148 = arith.constant 0 : index
    %c41 = arith.constant 41 : index
    %204 = memref.load %arg1[%c0_148, %c41] : memref<2x144xf32, #tpu.memory_space<smem>>
    %205 = vector.broadcast %204 : f32 to vector<16x16xf32>
    %206 = arith.mulf %205, %199 : vector<16x16xf32>
    %207 = arith.addf %189, %206 : vector<16x16xf32>
    %c0_149 = arith.constant 0 : index
    %c77 = arith.constant 77 : index
    %208 = memref.load %arg1[%c0_149, %c77] : memref<2x144xf32, #tpu.memory_space<smem>>
    %209 = vector.broadcast %208 : f32 to vector<16x16xf32>
    %210 = arith.mulf %209, %199 : vector<16x16xf32>
    %211 = arith.addf %193, %210 : vector<16x16xf32>
    %c0_150 = arith.constant 0 : index
    %c113 = arith.constant 113 : index
    %212 = memref.load %arg1[%c0_150, %c113] : memref<2x144xf32, #tpu.memory_space<smem>>
    %213 = vector.broadcast %212 : f32 to vector<16x16xf32>
    %214 = arith.mulf %213, %199 : vector<16x16xf32>
    %215 = arith.addf %197, %214 : vector<16x16xf32>
    %c0_151 = arith.constant 0 : index
    %c2_152 = arith.constant 2 : index
    %c0_153 = arith.constant 0 : index
    %216 = vector.load %arg5[%c0_151, %c2_152, %c0_153] : memref<4x18x18xf32, #tpu.memory_space<vmem>>, vector<1x16x16xf32>
    %217 = vector.shape_cast %216 : vector<1x16x16xf32> to vector<16x16xf32>
    %c0_154 = arith.constant 0 : index
    %c6 = arith.constant 6 : index
    %218 = memref.load %arg1[%c0_154, %c6] : memref<2x144xf32, #tpu.memory_space<smem>>
    %219 = vector.broadcast %218 : f32 to vector<16x16xf32>
    %220 = arith.mulf %219, %217 : vector<16x16xf32>
    %221 = arith.addf %203, %220 : vector<16x16xf32>
    %c0_155 = arith.constant 0 : index
    %c42 = arith.constant 42 : index
    %222 = memref.load %arg1[%c0_155, %c42] : memref<2x144xf32, #tpu.memory_space<smem>>
    %223 = vector.broadcast %222 : f32 to vector<16x16xf32>
    %224 = arith.mulf %223, %217 : vector<16x16xf32>
    %225 = arith.addf %207, %224 : vector<16x16xf32>
    %c0_156 = arith.constant 0 : index
    %c78 = arith.constant 78 : index
    %226 = memref.load %arg1[%c0_156, %c78] : memref<2x144xf32, #tpu.memory_space<smem>>
    %227 = vector.broadcast %226 : f32 to vector<16x16xf32>
    %228 = arith.mulf %227, %217 : vector<16x16xf32>
    %229 = arith.addf %211, %228 : vector<16x16xf32>
    %c0_157 = arith.constant 0 : index
    %c114 = arith.constant 114 : index
    %230 = memref.load %arg1[%c0_157, %c114] : memref<2x144xf32, #tpu.memory_space<smem>>
    %231 = vector.broadcast %230 : f32 to vector<16x16xf32>
    %232 = arith.mulf %231, %217 : vector<16x16xf32>
    %233 = arith.addf %215, %232 : vector<16x16xf32>
    %c0_158 = arith.constant 0 : index
    %c2_159 = arith.constant 2 : index
    %c1_160 = arith.constant 1 : index
    %234 = vector.load %arg5[%c0_158, %c2_159, %c1_160] : memref<4x18x18xf32, #tpu.memory_space<vmem>>, vector<1x16x16xf32>
    %235 = vector.shape_cast %234 : vector<1x16x16xf32> to vector<16x16xf32>
    %c0_161 = arith.constant 0 : index
    %c7 = arith.constant 7 : index
    %236 = memref.load %arg1[%c0_161, %c7] : memref<2x144xf32, #tpu.memory_space<smem>>
    %237 = vector.broadcast %236 : f32 to vector<16x16xf32>
    %238 = arith.mulf %237, %235 : vector<16x16xf32>
    %239 = arith.addf %221, %238 : vector<16x16xf32>
    %c0_162 = arith.constant 0 : index
    %c43 = arith.constant 43 : index
    %240 = memref.load %arg1[%c0_162, %c43] : memref<2x144xf32, #tpu.memory_space<smem>>
    %241 = vector.broadcast %240 : f32 to vector<16x16xf32>
    %242 = arith.mulf %241, %235 : vector<16x16xf32>
    %243 = arith.addf %225, %242 : vector<16x16xf32>
    %c0_163 = arith.constant 0 : index
    %c79 = arith.constant 79 : index
    %244 = memref.load %arg1[%c0_163, %c79] : memref<2x144xf32, #tpu.memory_space<smem>>
    %245 = vector.broadcast %244 : f32 to vector<16x16xf32>
    %246 = arith.mulf %245, %235 : vector<16x16xf32>
    %247 = arith.addf %229, %246 : vector<16x16xf32>
    %c0_164 = arith.constant 0 : index
    %c115 = arith.constant 115 : index
    %248 = memref.load %arg1[%c0_164, %c115] : memref<2x144xf32, #tpu.memory_space<smem>>
    %249 = vector.broadcast %248 : f32 to vector<16x16xf32>
    %250 = arith.mulf %249, %235 : vector<16x16xf32>
    %251 = arith.addf %233, %250 : vector<16x16xf32>
    %c0_165 = arith.constant 0 : index
    %c2_166 = arith.constant 2 : index
    %c2_167 = arith.constant 2 : index
    %252 = vector.load %arg5[%c0_165, %c2_166, %c2_167] : memref<4x18x18xf32, #tpu.memory_space<vmem>>, vector<1x16x16xf32>
    %253 = vector.shape_cast %252 : vector<1x16x16xf32> to vector<16x16xf32>
    %c0_168 = arith.constant 0 : index
    %c8 = arith.constant 8 : index
    %254 = memref.load %arg1[%c0_168, %c8] : memref<2x144xf32, #tpu.memory_space<smem>>
    %255 = vector.broadcast %254 : f32 to vector<16x16xf32>
    %256 = arith.mulf %255, %253 : vector<16x16xf32>
    %257 = arith.addf %239, %256 : vector<16x16xf32>
    %c0_169 = arith.constant 0 : index
    %c44 = arith.constant 44 : index
    %258 = memref.load %arg1[%c0_169, %c44] : memref<2x144xf32, #tpu.memory_space<smem>>
    %259 = vector.broadcast %258 : f32 to vector<16x16xf32>
    %260 = arith.mulf %259, %253 : vector<16x16xf32>
    %261 = arith.addf %243, %260 : vector<16x16xf32>
    %c0_170 = arith.constant 0 : index
    %c80 = arith.constant 80 : index
    %262 = memref.load %arg1[%c0_170, %c80] : memref<2x144xf32, #tpu.memory_space<smem>>
    %263 = vector.broadcast %262 : f32 to vector<16x16xf32>
    %264 = arith.mulf %263, %253 : vector<16x16xf32>
    %265 = arith.addf %247, %264 : vector<16x16xf32>
    %c0_171 = arith.constant 0 : index
    %c116 = arith.constant 116 : index
    %266 = memref.load %arg1[%c0_171, %c116] : memref<2x144xf32, #tpu.memory_space<smem>>
    %267 = vector.broadcast %266 : f32 to vector<16x16xf32>
    %268 = arith.mulf %267, %253 : vector<16x16xf32>
    %269 = arith.addf %251, %268 : vector<16x16xf32>
    %c1_172 = arith.constant 1 : index
    %c0_173 = arith.constant 0 : index
    %c0_174 = arith.constant 0 : index
    %270 = vector.load %arg5[%c1_172, %c0_173, %c0_174] : memref<4x18x18xf32, #tpu.memory_space<vmem>>, vector<1x16x16xf32>
    %271 = vector.shape_cast %270 : vector<1x16x16xf32> to vector<16x16xf32>
    %c0_175 = arith.constant 0 : index
    %c9 = arith.constant 9 : index
    %272 = memref.load %arg1[%c0_175, %c9] : memref<2x144xf32, #tpu.memory_space<smem>>
    %273 = vector.broadcast %272 : f32 to vector<16x16xf32>
    %274 = arith.mulf %273, %271 : vector<16x16xf32>
    %275 = arith.addf %257, %274 : vector<16x16xf32>
    %c0_176 = arith.constant 0 : index
    %c45 = arith.constant 45 : index
    %276 = memref.load %arg1[%c0_176, %c45] : memref<2x144xf32, #tpu.memory_space<smem>>
    %277 = vector.broadcast %276 : f32 to vector<16x16xf32>
    %278 = arith.mulf %277, %271 : vector<16x16xf32>
    %279 = arith.addf %261, %278 : vector<16x16xf32>
    %c0_177 = arith.constant 0 : index
    %c81 = arith.constant 81 : index
    %280 = memref.load %arg1[%c0_177, %c81] : memref<2x144xf32, #tpu.memory_space<smem>>
    %281 = vector.broadcast %280 : f32 to vector<16x16xf32>
    %282 = arith.mulf %281, %271 : vector<16x16xf32>
    %283 = arith.addf %265, %282 : vector<16x16xf32>
    %c0_178 = arith.constant 0 : index
    %c117 = arith.constant 117 : index
    %284 = memref.load %arg1[%c0_178, %c117] : memref<2x144xf32, #tpu.memory_space<smem>>
    %285 = vector.broadcast %284 : f32 to vector<16x16xf32>
    %286 = arith.mulf %285, %271 : vector<16x16xf32>
    %287 = arith.addf %269, %286 : vector<16x16xf32>
    %c1_179 = arith.constant 1 : index
    %c0_180 = arith.constant 0 : index
    %c1_181 = arith.constant 1 : index
    %288 = vector.load %arg5[%c1_179, %c0_180, %c1_181] : memref<4x18x18xf32, #tpu.memory_space<vmem>>, vector<1x16x16xf32>
    %289 = vector.shape_cast %288 : vector<1x16x16xf32> to vector<16x16xf32>
    %c0_182 = arith.constant 0 : index
    %c10 = arith.constant 10 : index
    %290 = memref.load %arg1[%c0_182, %c10] : memref<2x144xf32, #tpu.memory_space<smem>>
    %291 = vector.broadcast %290 : f32 to vector<16x16xf32>
    %292 = arith.mulf %291, %289 : vector<16x16xf32>
    %293 = arith.addf %275, %292 : vector<16x16xf32>
    %c0_183 = arith.constant 0 : index
    %c46 = arith.constant 46 : index
    %294 = memref.load %arg1[%c0_183, %c46] : memref<2x144xf32, #tpu.memory_space<smem>>
    %295 = vector.broadcast %294 : f32 to vector<16x16xf32>
    %296 = arith.mulf %295, %289 : vector<16x16xf32>
    %297 = arith.addf %279, %296 : vector<16x16xf32>
    %c0_184 = arith.constant 0 : index
    %c82 = arith.constant 82 : index
    %298 = memref.load %arg1[%c0_184, %c82] : memref<2x144xf32, #tpu.memory_space<smem>>
    %299 = vector.broadcast %298 : f32 to vector<16x16xf32>
    %300 = arith.mulf %299, %289 : vector<16x16xf32>
    %301 = arith.addf %283, %300 : vector<16x16xf32>
    %c0_185 = arith.constant 0 : index
    %c118 = arith.constant 118 : index
    %302 = memref.load %arg1[%c0_185, %c118] : memref<2x144xf32, #tpu.memory_space<smem>>
    %303 = vector.broadcast %302 : f32 to vector<16x16xf32>
    %304 = arith.mulf %303, %289 : vector<16x16xf32>
    %305 = arith.addf %287, %304 : vector<16x16xf32>
    %c1_186 = arith.constant 1 : index
    %c0_187 = arith.constant 0 : index
    %c2_188 = arith.constant 2 : index
    %306 = vector.load %arg5[%c1_186, %c0_187, %c2_188] : memref<4x18x18xf32, #tpu.memory_space<vmem>>, vector<1x16x16xf32>
    %307 = vector.shape_cast %306 : vector<1x16x16xf32> to vector<16x16xf32>
    %c0_189 = arith.constant 0 : index
    %c11 = arith.constant 11 : index
    %308 = memref.load %arg1[%c0_189, %c11] : memref<2x144xf32, #tpu.memory_space<smem>>
    %309 = vector.broadcast %308 : f32 to vector<16x16xf32>
    %310 = arith.mulf %309, %307 : vector<16x16xf32>
    %311 = arith.addf %293, %310 : vector<16x16xf32>
    %c0_190 = arith.constant 0 : index
    %c47 = arith.constant 47 : index
    %312 = memref.load %arg1[%c0_190, %c47] : memref<2x144xf32, #tpu.memory_space<smem>>
    %313 = vector.broadcast %312 : f32 to vector<16x16xf32>
    %314 = arith.mulf %313, %307 : vector<16x16xf32>
    %315 = arith.addf %297, %314 : vector<16x16xf32>
    %c0_191 = arith.constant 0 : index
    %c83 = arith.constant 83 : index
    %316 = memref.load %arg1[%c0_191, %c83] : memref<2x144xf32, #tpu.memory_space<smem>>
    %317 = vector.broadcast %316 : f32 to vector<16x16xf32>
    %318 = arith.mulf %317, %307 : vector<16x16xf32>
    %319 = arith.addf %301, %318 : vector<16x16xf32>
    %c0_192 = arith.constant 0 : index
    %c119 = arith.constant 119 : index
    %320 = memref.load %arg1[%c0_192, %c119] : memref<2x144xf32, #tpu.memory_space<smem>>
    %321 = vector.broadcast %320 : f32 to vector<16x16xf32>
    %322 = arith.mulf %321, %307 : vector<16x16xf32>
    %323 = arith.addf %305, %322 : vector<16x16xf32>
    %c1_193 = arith.constant 1 : index
    %c1_194 = arith.constant 1 : index
    %c0_195 = arith.constant 0 : index
    %324 = vector.load %arg5[%c1_193, %c1_194, %c0_195] : memref<4x18x18xf32, #tpu.memory_space<vmem>>, vector<1x16x16xf32>
    %325 = vector.shape_cast %324 : vector<1x16x16xf32> to vector<16x16xf32>
    %c0_196 = arith.constant 0 : index
    %c12 = arith.constant 12 : index
    %326 = memref.load %arg1[%c0_196, %c12] : memref<2x144xf32, #tpu.memory_space<smem>>
    %327 = vector.broadcast %326 : f32 to vector<16x16xf32>
    %328 = arith.mulf %327, %325 : vector<16x16xf32>
    %329 = arith.addf %311, %328 : vector<16x16xf32>
    %c0_197 = arith.constant 0 : index
    %c48 = arith.constant 48 : index
    %330 = memref.load %arg1[%c0_197, %c48] : memref<2x144xf32, #tpu.memory_space<smem>>
    %331 = vector.broadcast %330 : f32 to vector<16x16xf32>
    %332 = arith.mulf %331, %325 : vector<16x16xf32>
    %333 = arith.addf %315, %332 : vector<16x16xf32>
    %c0_198 = arith.constant 0 : index
    %c84 = arith.constant 84 : index
    %334 = memref.load %arg1[%c0_198, %c84] : memref<2x144xf32, #tpu.memory_space<smem>>
    %335 = vector.broadcast %334 : f32 to vector<16x16xf32>
    %336 = arith.mulf %335, %325 : vector<16x16xf32>
    %337 = arith.addf %319, %336 : vector<16x16xf32>
    %c0_199 = arith.constant 0 : index
    %c120 = arith.constant 120 : index
    %338 = memref.load %arg1[%c0_199, %c120] : memref<2x144xf32, #tpu.memory_space<smem>>
    %339 = vector.broadcast %338 : f32 to vector<16x16xf32>
    %340 = arith.mulf %339, %325 : vector<16x16xf32>
    %341 = arith.addf %323, %340 : vector<16x16xf32>
    %c1_200 = arith.constant 1 : index
    %c1_201 = arith.constant 1 : index
    %c1_202 = arith.constant 1 : index
    %342 = vector.load %arg5[%c1_200, %c1_201, %c1_202] : memref<4x18x18xf32, #tpu.memory_space<vmem>>, vector<1x16x16xf32>
    %343 = vector.shape_cast %342 : vector<1x16x16xf32> to vector<16x16xf32>
    %c0_203 = arith.constant 0 : index
    %c13 = arith.constant 13 : index
    %344 = memref.load %arg1[%c0_203, %c13] : memref<2x144xf32, #tpu.memory_space<smem>>
    %345 = vector.broadcast %344 : f32 to vector<16x16xf32>
    %346 = arith.mulf %345, %343 : vector<16x16xf32>
    %347 = arith.addf %329, %346 : vector<16x16xf32>
    %c0_204 = arith.constant 0 : index
    %c49 = arith.constant 49 : index
    %348 = memref.load %arg1[%c0_204, %c49] : memref<2x144xf32, #tpu.memory_space<smem>>
    %349 = vector.broadcast %348 : f32 to vector<16x16xf32>
    %350 = arith.mulf %349, %343 : vector<16x16xf32>
    %351 = arith.addf %333, %350 : vector<16x16xf32>
    %c0_205 = arith.constant 0 : index
    %c85 = arith.constant 85 : index
    %352 = memref.load %arg1[%c0_205, %c85] : memref<2x144xf32, #tpu.memory_space<smem>>
    %353 = vector.broadcast %352 : f32 to vector<16x16xf32>
    %354 = arith.mulf %353, %343 : vector<16x16xf32>
    %355 = arith.addf %337, %354 : vector<16x16xf32>
    %c0_206 = arith.constant 0 : index
    %c121 = arith.constant 121 : index
    %356 = memref.load %arg1[%c0_206, %c121] : memref<2x144xf32, #tpu.memory_space<smem>>
    %357 = vector.broadcast %356 : f32 to vector<16x16xf32>
    %358 = arith.mulf %357, %343 : vector<16x16xf32>
    %359 = arith.addf %341, %358 : vector<16x16xf32>
    %c1_207 = arith.constant 1 : index
    %c1_208 = arith.constant 1 : index
    %c2_209 = arith.constant 2 : index
    %360 = vector.load %arg5[%c1_207, %c1_208, %c2_209] : memref<4x18x18xf32, #tpu.memory_space<vmem>>, vector<1x16x16xf32>
    %361 = vector.shape_cast %360 : vector<1x16x16xf32> to vector<16x16xf32>
    %c0_210 = arith.constant 0 : index
    %c14 = arith.constant 14 : index
    %362 = memref.load %arg1[%c0_210, %c14] : memref<2x144xf32, #tpu.memory_space<smem>>
    %363 = vector.broadcast %362 : f32 to vector<16x16xf32>
    %364 = arith.mulf %363, %361 : vector<16x16xf32>
    %365 = arith.addf %347, %364 : vector<16x16xf32>
    %c0_211 = arith.constant 0 : index
    %c50 = arith.constant 50 : index
    %366 = memref.load %arg1[%c0_211, %c50] : memref<2x144xf32, #tpu.memory_space<smem>>
    %367 = vector.broadcast %366 : f32 to vector<16x16xf32>
    %368 = arith.mulf %367, %361 : vector<16x16xf32>
    %369 = arith.addf %351, %368 : vector<16x16xf32>
    %c0_212 = arith.constant 0 : index
    %c86 = arith.constant 86 : index
    %370 = memref.load %arg1[%c0_212, %c86] : memref<2x144xf32, #tpu.memory_space<smem>>
    %371 = vector.broadcast %370 : f32 to vector<16x16xf32>
    %372 = arith.mulf %371, %361 : vector<16x16xf32>
    %373 = arith.addf %355, %372 : vector<16x16xf32>
    %c0_213 = arith.constant 0 : index
    %c122 = arith.constant 122 : index
    %374 = memref.load %arg1[%c0_213, %c122] : memref<2x144xf32, #tpu.memory_space<smem>>
    %375 = vector.broadcast %374 : f32 to vector<16x16xf32>
    %376 = arith.mulf %375, %361 : vector<16x16xf32>
    %377 = arith.addf %359, %376 : vector<16x16xf32>
    %c1_214 = arith.constant 1 : index
    %c2_215 = arith.constant 2 : index
    %c0_216 = arith.constant 0 : index
    %378 = vector.load %arg5[%c1_214, %c2_215, %c0_216] : memref<4x18x18xf32, #tpu.memory_space<vmem>>, vector<1x16x16xf32>
    %379 = vector.shape_cast %378 : vector<1x16x16xf32> to vector<16x16xf32>
    %c0_217 = arith.constant 0 : index
    %c15_218 = arith.constant 15 : index
    %380 = memref.load %arg1[%c0_217, %c15_218] : memref<2x144xf32, #tpu.memory_space<smem>>
    %381 = vector.broadcast %380 : f32 to vector<16x16xf32>
    %382 = arith.mulf %381, %379 : vector<16x16xf32>
    %383 = arith.addf %365, %382 : vector<16x16xf32>
    %c0_219 = arith.constant 0 : index
    %c51 = arith.constant 51 : index
    %384 = memref.load %arg1[%c0_219, %c51] : memref<2x144xf32, #tpu.memory_space<smem>>
    %385 = vector.broadcast %384 : f32 to vector<16x16xf32>
    %386 = arith.mulf %385, %379 : vector<16x16xf32>
    %387 = arith.addf %369, %386 : vector<16x16xf32>
    %c0_220 = arith.constant 0 : index
    %c87 = arith.constant 87 : index
    %388 = memref.load %arg1[%c0_220, %c87] : memref<2x144xf32, #tpu.memory_space<smem>>
    %389 = vector.broadcast %388 : f32 to vector<16x16xf32>
    %390 = arith.mulf %389, %379 : vector<16x16xf32>
    %391 = arith.addf %373, %390 : vector<16x16xf32>
    %c0_221 = arith.constant 0 : index
    %c123 = arith.constant 123 : index
    %392 = memref.load %arg1[%c0_221, %c123] : memref<2x144xf32, #tpu.memory_space<smem>>
    %393 = vector.broadcast %392 : f32 to vector<16x16xf32>
    %394 = arith.mulf %393, %379 : vector<16x16xf32>
    %395 = arith.addf %377, %394 : vector<16x16xf32>
    %c1_222 = arith.constant 1 : index
    %c2_223 = arith.constant 2 : index
    %c1_224 = arith.constant 1 : index
    %396 = vector.load %arg5[%c1_222, %c2_223, %c1_224] : memref<4x18x18xf32, #tpu.memory_space<vmem>>, vector<1x16x16xf32>
    %397 = vector.shape_cast %396 : vector<1x16x16xf32> to vector<16x16xf32>
    %c0_225 = arith.constant 0 : index
    %c16 = arith.constant 16 : index
    %398 = memref.load %arg1[%c0_225, %c16] : memref<2x144xf32, #tpu.memory_space<smem>>
    %399 = vector.broadcast %398 : f32 to vector<16x16xf32>
    %400 = arith.mulf %399, %397 : vector<16x16xf32>
    %401 = arith.addf %383, %400 : vector<16x16xf32>
    %c0_226 = arith.constant 0 : index
    %c52 = arith.constant 52 : index
    %402 = memref.load %arg1[%c0_226, %c52] : memref<2x144xf32, #tpu.memory_space<smem>>
    %403 = vector.broadcast %402 : f32 to vector<16x16xf32>
    %404 = arith.mulf %403, %397 : vector<16x16xf32>
    %405 = arith.addf %387, %404 : vector<16x16xf32>
    %c0_227 = arith.constant 0 : index
    %c88 = arith.constant 88 : index
    %406 = memref.load %arg1[%c0_227, %c88] : memref<2x144xf32, #tpu.memory_space<smem>>
    %407 = vector.broadcast %406 : f32 to vector<16x16xf32>
    %408 = arith.mulf %407, %397 : vector<16x16xf32>
    %409 = arith.addf %391, %408 : vector<16x16xf32>
    %c0_228 = arith.constant 0 : index
    %c124 = arith.constant 124 : index
    %410 = memref.load %arg1[%c0_228, %c124] : memref<2x144xf32, #tpu.memory_space<smem>>
    %411 = vector.broadcast %410 : f32 to vector<16x16xf32>
    %412 = arith.mulf %411, %397 : vector<16x16xf32>
    %413 = arith.addf %395, %412 : vector<16x16xf32>
    %c1_229 = arith.constant 1 : index
    %c2_230 = arith.constant 2 : index
    %c2_231 = arith.constant 2 : index
    %414 = vector.load %arg5[%c1_229, %c2_230, %c2_231] : memref<4x18x18xf32, #tpu.memory_space<vmem>>, vector<1x16x16xf32>
    %415 = vector.shape_cast %414 : vector<1x16x16xf32> to vector<16x16xf32>
    %c0_232 = arith.constant 0 : index
    %c17_233 = arith.constant 17 : index
    %416 = memref.load %arg1[%c0_232, %c17_233] : memref<2x144xf32, #tpu.memory_space<smem>>
    %417 = vector.broadcast %416 : f32 to vector<16x16xf32>
    %418 = arith.mulf %417, %415 : vector<16x16xf32>
    %419 = arith.addf %401, %418 : vector<16x16xf32>
    %c0_234 = arith.constant 0 : index
    %c53 = arith.constant 53 : index
    %420 = memref.load %arg1[%c0_234, %c53] : memref<2x144xf32, #tpu.memory_space<smem>>
    %421 = vector.broadcast %420 : f32 to vector<16x16xf32>
    %422 = arith.mulf %421, %415 : vector<16x16xf32>
    %423 = arith.addf %405, %422 : vector<16x16xf32>
    %c0_235 = arith.constant 0 : index
    %c89 = arith.constant 89 : index
    %424 = memref.load %arg1[%c0_235, %c89] : memref<2x144xf32, #tpu.memory_space<smem>>
    %425 = vector.broadcast %424 : f32 to vector<16x16xf32>
    %426 = arith.mulf %425, %415 : vector<16x16xf32>
    %427 = arith.addf %409, %426 : vector<16x16xf32>
    %c0_236 = arith.constant 0 : index
    %c125 = arith.constant 125 : index
    %428 = memref.load %arg1[%c0_236, %c125] : memref<2x144xf32, #tpu.memory_space<smem>>
    %429 = vector.broadcast %428 : f32 to vector<16x16xf32>
    %430 = arith.mulf %429, %415 : vector<16x16xf32>
    %431 = arith.addf %413, %430 : vector<16x16xf32>
    %c2_237 = arith.constant 2 : index
    %c0_238 = arith.constant 0 : index
    %c0_239 = arith.constant 0 : index
    %432 = vector.load %arg5[%c2_237, %c0_238, %c0_239] : memref<4x18x18xf32, #tpu.memory_space<vmem>>, vector<1x16x16xf32>
    %433 = vector.shape_cast %432 : vector<1x16x16xf32> to vector<16x16xf32>
    %c0_240 = arith.constant 0 : index
    %c18 = arith.constant 18 : index
    %434 = memref.load %arg1[%c0_240, %c18] : memref<2x144xf32, #tpu.memory_space<smem>>
    %435 = vector.broadcast %434 : f32 to vector<16x16xf32>
    %436 = arith.mulf %435, %433 : vector<16x16xf32>
    %437 = arith.addf %419, %436 : vector<16x16xf32>
    %c0_241 = arith.constant 0 : index
    %c54 = arith.constant 54 : index
    %438 = memref.load %arg1[%c0_241, %c54] : memref<2x144xf32, #tpu.memory_space<smem>>
    %439 = vector.broadcast %438 : f32 to vector<16x16xf32>
    %440 = arith.mulf %439, %433 : vector<16x16xf32>
    %441 = arith.addf %423, %440 : vector<16x16xf32>
    %c0_242 = arith.constant 0 : index
    %c90 = arith.constant 90 : index
    %442 = memref.load %arg1[%c0_242, %c90] : memref<2x144xf32, #tpu.memory_space<smem>>
    %443 = vector.broadcast %442 : f32 to vector<16x16xf32>
    %444 = arith.mulf %443, %433 : vector<16x16xf32>
    %445 = arith.addf %427, %444 : vector<16x16xf32>
    %c0_243 = arith.constant 0 : index
    %c126 = arith.constant 126 : index
    %446 = memref.load %arg1[%c0_243, %c126] : memref<2x144xf32, #tpu.memory_space<smem>>
    %447 = vector.broadcast %446 : f32 to vector<16x16xf32>
    %448 = arith.mulf %447, %433 : vector<16x16xf32>
    %449 = arith.addf %431, %448 : vector<16x16xf32>
    %c2_244 = arith.constant 2 : index
    %c0_245 = arith.constant 0 : index
    %c1_246 = arith.constant 1 : index
    %450 = vector.load %arg5[%c2_244, %c0_245, %c1_246] : memref<4x18x18xf32, #tpu.memory_space<vmem>>, vector<1x16x16xf32>
    %451 = vector.shape_cast %450 : vector<1x16x16xf32> to vector<16x16xf32>
    %c0_247 = arith.constant 0 : index
    %c19 = arith.constant 19 : index
    %452 = memref.load %arg1[%c0_247, %c19] : memref<2x144xf32, #tpu.memory_space<smem>>
    %453 = vector.broadcast %452 : f32 to vector<16x16xf32>
    %454 = arith.mulf %453, %451 : vector<16x16xf32>
    %455 = arith.addf %437, %454 : vector<16x16xf32>
    %c0_248 = arith.constant 0 : index
    %c55 = arith.constant 55 : index
    %456 = memref.load %arg1[%c0_248, %c55] : memref<2x144xf32, #tpu.memory_space<smem>>
    %457 = vector.broadcast %456 : f32 to vector<16x16xf32>
    %458 = arith.mulf %457, %451 : vector<16x16xf32>
    %459 = arith.addf %441, %458 : vector<16x16xf32>
    %c0_249 = arith.constant 0 : index
    %c91 = arith.constant 91 : index
    %460 = memref.load %arg1[%c0_249, %c91] : memref<2x144xf32, #tpu.memory_space<smem>>
    %461 = vector.broadcast %460 : f32 to vector<16x16xf32>
    %462 = arith.mulf %461, %451 : vector<16x16xf32>
    %463 = arith.addf %445, %462 : vector<16x16xf32>
    %c0_250 = arith.constant 0 : index
    %c127 = arith.constant 127 : index
    %464 = memref.load %arg1[%c0_250, %c127] : memref<2x144xf32, #tpu.memory_space<smem>>
    %465 = vector.broadcast %464 : f32 to vector<16x16xf32>
    %466 = arith.mulf %465, %451 : vector<16x16xf32>
    %467 = arith.addf %449, %466 : vector<16x16xf32>
    %c2_251 = arith.constant 2 : index
    %c0_252 = arith.constant 0 : index
    %c2_253 = arith.constant 2 : index
    %468 = vector.load %arg5[%c2_251, %c0_252, %c2_253] : memref<4x18x18xf32, #tpu.memory_space<vmem>>, vector<1x16x16xf32>
    %469 = vector.shape_cast %468 : vector<1x16x16xf32> to vector<16x16xf32>
    %c0_254 = arith.constant 0 : index
    %c20 = arith.constant 20 : index
    %470 = memref.load %arg1[%c0_254, %c20] : memref<2x144xf32, #tpu.memory_space<smem>>
    %471 = vector.broadcast %470 : f32 to vector<16x16xf32>
    %472 = arith.mulf %471, %469 : vector<16x16xf32>
    %473 = arith.addf %455, %472 : vector<16x16xf32>
    %c0_255 = arith.constant 0 : index
    %c56 = arith.constant 56 : index
    %474 = memref.load %arg1[%c0_255, %c56] : memref<2x144xf32, #tpu.memory_space<smem>>
    %475 = vector.broadcast %474 : f32 to vector<16x16xf32>
    %476 = arith.mulf %475, %469 : vector<16x16xf32>
    %477 = arith.addf %459, %476 : vector<16x16xf32>
    %c0_256 = arith.constant 0 : index
    %c92 = arith.constant 92 : index
    %478 = memref.load %arg1[%c0_256, %c92] : memref<2x144xf32, #tpu.memory_space<smem>>
    %479 = vector.broadcast %478 : f32 to vector<16x16xf32>
    %480 = arith.mulf %479, %469 : vector<16x16xf32>
    %481 = arith.addf %463, %480 : vector<16x16xf32>
    %c0_257 = arith.constant 0 : index
    %c128 = arith.constant 128 : index
    %482 = memref.load %arg1[%c0_257, %c128] : memref<2x144xf32, #tpu.memory_space<smem>>
    %483 = vector.broadcast %482 : f32 to vector<16x16xf32>
    %484 = arith.mulf %483, %469 : vector<16x16xf32>
    %485 = arith.addf %467, %484 : vector<16x16xf32>
    %c2_258 = arith.constant 2 : index
    %c1_259 = arith.constant 1 : index
    %c0_260 = arith.constant 0 : index
    %486 = vector.load %arg5[%c2_258, %c1_259, %c0_260] : memref<4x18x18xf32, #tpu.memory_space<vmem>>, vector<1x16x16xf32>
    %487 = vector.shape_cast %486 : vector<1x16x16xf32> to vector<16x16xf32>
    %c0_261 = arith.constant 0 : index
    %c21 = arith.constant 21 : index
    %488 = memref.load %arg1[%c0_261, %c21] : memref<2x144xf32, #tpu.memory_space<smem>>
    %489 = vector.broadcast %488 : f32 to vector<16x16xf32>
    %490 = arith.mulf %489, %487 : vector<16x16xf32>
    %491 = arith.addf %473, %490 : vector<16x16xf32>
    %c0_262 = arith.constant 0 : index
    %c57 = arith.constant 57 : index
    %492 = memref.load %arg1[%c0_262, %c57] : memref<2x144xf32, #tpu.memory_space<smem>>
    %493 = vector.broadcast %492 : f32 to vector<16x16xf32>
    %494 = arith.mulf %493, %487 : vector<16x16xf32>
    %495 = arith.addf %477, %494 : vector<16x16xf32>
    %c0_263 = arith.constant 0 : index
    %c93 = arith.constant 93 : index
    %496 = memref.load %arg1[%c0_263, %c93] : memref<2x144xf32, #tpu.memory_space<smem>>
    %497 = vector.broadcast %496 : f32 to vector<16x16xf32>
    %498 = arith.mulf %497, %487 : vector<16x16xf32>
    %499 = arith.addf %481, %498 : vector<16x16xf32>
    %c0_264 = arith.constant 0 : index
    %c129 = arith.constant 129 : index
    %500 = memref.load %arg1[%c0_264, %c129] : memref<2x144xf32, #tpu.memory_space<smem>>
    %501 = vector.broadcast %500 : f32 to vector<16x16xf32>
    %502 = arith.mulf %501, %487 : vector<16x16xf32>
    %503 = arith.addf %485, %502 : vector<16x16xf32>
    %c2_265 = arith.constant 2 : index
    %c1_266 = arith.constant 1 : index
    %c1_267 = arith.constant 1 : index
    %504 = vector.load %arg5[%c2_265, %c1_266, %c1_267] : memref<4x18x18xf32, #tpu.memory_space<vmem>>, vector<1x16x16xf32>
    %505 = vector.shape_cast %504 : vector<1x16x16xf32> to vector<16x16xf32>
    %c0_268 = arith.constant 0 : index
    %c22 = arith.constant 22 : index
    %506 = memref.load %arg1[%c0_268, %c22] : memref<2x144xf32, #tpu.memory_space<smem>>
    %507 = vector.broadcast %506 : f32 to vector<16x16xf32>
    %508 = arith.mulf %507, %505 : vector<16x16xf32>
    %509 = arith.addf %491, %508 : vector<16x16xf32>
    %c0_269 = arith.constant 0 : index
    %c58 = arith.constant 58 : index
    %510 = memref.load %arg1[%c0_269, %c58] : memref<2x144xf32, #tpu.memory_space<smem>>
    %511 = vector.broadcast %510 : f32 to vector<16x16xf32>
    %512 = arith.mulf %511, %505 : vector<16x16xf32>
    %513 = arith.addf %495, %512 : vector<16x16xf32>
    %c0_270 = arith.constant 0 : index
    %c94 = arith.constant 94 : index
    %514 = memref.load %arg1[%c0_270, %c94] : memref<2x144xf32, #tpu.memory_space<smem>>
    %515 = vector.broadcast %514 : f32 to vector<16x16xf32>
    %516 = arith.mulf %515, %505 : vector<16x16xf32>
    %517 = arith.addf %499, %516 : vector<16x16xf32>
    %c0_271 = arith.constant 0 : index
    %c130 = arith.constant 130 : index
    %518 = memref.load %arg1[%c0_271, %c130] : memref<2x144xf32, #tpu.memory_space<smem>>
    %519 = vector.broadcast %518 : f32 to vector<16x16xf32>
    %520 = arith.mulf %519, %505 : vector<16x16xf32>
    %521 = arith.addf %503, %520 : vector<16x16xf32>
    %c2_272 = arith.constant 2 : index
    %c1_273 = arith.constant 1 : index
    %c2_274 = arith.constant 2 : index
    %522 = vector.load %arg5[%c2_272, %c1_273, %c2_274] : memref<4x18x18xf32, #tpu.memory_space<vmem>>, vector<1x16x16xf32>
    %523 = vector.shape_cast %522 : vector<1x16x16xf32> to vector<16x16xf32>
    %c0_275 = arith.constant 0 : index
    %c23 = arith.constant 23 : index
    %524 = memref.load %arg1[%c0_275, %c23] : memref<2x144xf32, #tpu.memory_space<smem>>
    %525 = vector.broadcast %524 : f32 to vector<16x16xf32>
    %526 = arith.mulf %525, %523 : vector<16x16xf32>
    %527 = arith.addf %509, %526 : vector<16x16xf32>
    %c0_276 = arith.constant 0 : index
    %c59 = arith.constant 59 : index
    %528 = memref.load %arg1[%c0_276, %c59] : memref<2x144xf32, #tpu.memory_space<smem>>
    %529 = vector.broadcast %528 : f32 to vector<16x16xf32>
    %530 = arith.mulf %529, %523 : vector<16x16xf32>
    %531 = arith.addf %513, %530 : vector<16x16xf32>
    %c0_277 = arith.constant 0 : index
    %c95 = arith.constant 95 : index
    %532 = memref.load %arg1[%c0_277, %c95] : memref<2x144xf32, #tpu.memory_space<smem>>
    %533 = vector.broadcast %532 : f32 to vector<16x16xf32>
    %534 = arith.mulf %533, %523 : vector<16x16xf32>
    %535 = arith.addf %517, %534 : vector<16x16xf32>
    %c0_278 = arith.constant 0 : index
    %c131 = arith.constant 131 : index
    %536 = memref.load %arg1[%c0_278, %c131] : memref<2x144xf32, #tpu.memory_space<smem>>
    %537 = vector.broadcast %536 : f32 to vector<16x16xf32>
    %538 = arith.mulf %537, %523 : vector<16x16xf32>
    %539 = arith.addf %521, %538 : vector<16x16xf32>
    %c2_279 = arith.constant 2 : index
    %c2_280 = arith.constant 2 : index
    %c0_281 = arith.constant 0 : index
    %540 = vector.load %arg5[%c2_279, %c2_280, %c0_281] : memref<4x18x18xf32, #tpu.memory_space<vmem>>, vector<1x16x16xf32>
    %541 = vector.shape_cast %540 : vector<1x16x16xf32> to vector<16x16xf32>
    %c0_282 = arith.constant 0 : index
    %c24 = arith.constant 24 : index
    %542 = memref.load %arg1[%c0_282, %c24] : memref<2x144xf32, #tpu.memory_space<smem>>
    %543 = vector.broadcast %542 : f32 to vector<16x16xf32>
    %544 = arith.mulf %543, %541 : vector<16x16xf32>
    %545 = arith.addf %527, %544 : vector<16x16xf32>
    %c0_283 = arith.constant 0 : index
    %c60 = arith.constant 60 : index
    %546 = memref.load %arg1[%c0_283, %c60] : memref<2x144xf32, #tpu.memory_space<smem>>
    %547 = vector.broadcast %546 : f32 to vector<16x16xf32>
    %548 = arith.mulf %547, %541 : vector<16x16xf32>
    %549 = arith.addf %531, %548 : vector<16x16xf32>
    %c0_284 = arith.constant 0 : index
    %c96 = arith.constant 96 : index
    %550 = memref.load %arg1[%c0_284, %c96] : memref<2x144xf32, #tpu.memory_space<smem>>
    %551 = vector.broadcast %550 : f32 to vector<16x16xf32>
    %552 = arith.mulf %551, %541 : vector<16x16xf32>
    %553 = arith.addf %535, %552 : vector<16x16xf32>
    %c0_285 = arith.constant 0 : index
    %c132 = arith.constant 132 : index
    %554 = memref.load %arg1[%c0_285, %c132] : memref<2x144xf32, #tpu.memory_space<smem>>
    %555 = vector.broadcast %554 : f32 to vector<16x16xf32>
    %556 = arith.mulf %555, %541 : vector<16x16xf32>
    %557 = arith.addf %539, %556 : vector<16x16xf32>
    %c2_286 = arith.constant 2 : index
    %c2_287 = arith.constant 2 : index
    %c1_288 = arith.constant 1 : index
    %558 = vector.load %arg5[%c2_286, %c2_287, %c1_288] : memref<4x18x18xf32, #tpu.memory_space<vmem>>, vector<1x16x16xf32>
    %559 = vector.shape_cast %558 : vector<1x16x16xf32> to vector<16x16xf32>
    %c0_289 = arith.constant 0 : index
    %c25 = arith.constant 25 : index
    %560 = memref.load %arg1[%c0_289, %c25] : memref<2x144xf32, #tpu.memory_space<smem>>
    %561 = vector.broadcast %560 : f32 to vector<16x16xf32>
    %562 = arith.mulf %561, %559 : vector<16x16xf32>
    %563 = arith.addf %545, %562 : vector<16x16xf32>
    %c0_290 = arith.constant 0 : index
    %c61 = arith.constant 61 : index
    %564 = memref.load %arg1[%c0_290, %c61] : memref<2x144xf32, #tpu.memory_space<smem>>
    %565 = vector.broadcast %564 : f32 to vector<16x16xf32>
    %566 = arith.mulf %565, %559 : vector<16x16xf32>
    %567 = arith.addf %549, %566 : vector<16x16xf32>
    %c0_291 = arith.constant 0 : index
    %c97 = arith.constant 97 : index
    %568 = memref.load %arg1[%c0_291, %c97] : memref<2x144xf32, #tpu.memory_space<smem>>
    %569 = vector.broadcast %568 : f32 to vector<16x16xf32>
    %570 = arith.mulf %569, %559 : vector<16x16xf32>
    %571 = arith.addf %553, %570 : vector<16x16xf32>
    %c0_292 = arith.constant 0 : index
    %c133 = arith.constant 133 : index
    %572 = memref.load %arg1[%c0_292, %c133] : memref<2x144xf32, #tpu.memory_space<smem>>
    %573 = vector.broadcast %572 : f32 to vector<16x16xf32>
    %574 = arith.mulf %573, %559 : vector<16x16xf32>
    %575 = arith.addf %557, %574 : vector<16x16xf32>
    %c2_293 = arith.constant 2 : index
    %c2_294 = arith.constant 2 : index
    %c2_295 = arith.constant 2 : index
    %576 = vector.load %arg5[%c2_293, %c2_294, %c2_295] : memref<4x18x18xf32, #tpu.memory_space<vmem>>, vector<1x16x16xf32>
    %577 = vector.shape_cast %576 : vector<1x16x16xf32> to vector<16x16xf32>
    %c0_296 = arith.constant 0 : index
    %c26 = arith.constant 26 : index
    %578 = memref.load %arg1[%c0_296, %c26] : memref<2x144xf32, #tpu.memory_space<smem>>
    %579 = vector.broadcast %578 : f32 to vector<16x16xf32>
    %580 = arith.mulf %579, %577 : vector<16x16xf32>
    %581 = arith.addf %563, %580 : vector<16x16xf32>
    %c0_297 = arith.constant 0 : index
    %c62 = arith.constant 62 : index
    %582 = memref.load %arg1[%c0_297, %c62] : memref<2x144xf32, #tpu.memory_space<smem>>
    %583 = vector.broadcast %582 : f32 to vector<16x16xf32>
    %584 = arith.mulf %583, %577 : vector<16x16xf32>
    %585 = arith.addf %567, %584 : vector<16x16xf32>
    %c0_298 = arith.constant 0 : index
    %c98 = arith.constant 98 : index
    %586 = memref.load %arg1[%c0_298, %c98] : memref<2x144xf32, #tpu.memory_space<smem>>
    %587 = vector.broadcast %586 : f32 to vector<16x16xf32>
    %588 = arith.mulf %587, %577 : vector<16x16xf32>
    %589 = arith.addf %571, %588 : vector<16x16xf32>
    %c0_299 = arith.constant 0 : index
    %c134 = arith.constant 134 : index
    %590 = memref.load %arg1[%c0_299, %c134] : memref<2x144xf32, #tpu.memory_space<smem>>
    %591 = vector.broadcast %590 : f32 to vector<16x16xf32>
    %592 = arith.mulf %591, %577 : vector<16x16xf32>
    %593 = arith.addf %575, %592 : vector<16x16xf32>
    %c3_300 = arith.constant 3 : index
    %c0_301 = arith.constant 0 : index
    %c0_302 = arith.constant 0 : index
    %594 = vector.load %arg5[%c3_300, %c0_301, %c0_302] : memref<4x18x18xf32, #tpu.memory_space<vmem>>, vector<1x16x16xf32>
    %595 = vector.shape_cast %594 : vector<1x16x16xf32> to vector<16x16xf32>
    %c0_303 = arith.constant 0 : index
    %c27 = arith.constant 27 : index
    %596 = memref.load %arg1[%c0_303, %c27] : memref<2x144xf32, #tpu.memory_space<smem>>
    %597 = vector.broadcast %596 : f32 to vector<16x16xf32>
    %598 = arith.mulf %597, %595 : vector<16x16xf32>
    %599 = arith.addf %581, %598 : vector<16x16xf32>
    %c0_304 = arith.constant 0 : index
    %c63 = arith.constant 63 : index
    %600 = memref.load %arg1[%c0_304, %c63] : memref<2x144xf32, #tpu.memory_space<smem>>
    %601 = vector.broadcast %600 : f32 to vector<16x16xf32>
    %602 = arith.mulf %601, %595 : vector<16x16xf32>
    %603 = arith.addf %585, %602 : vector<16x16xf32>
    %c0_305 = arith.constant 0 : index
    %c99 = arith.constant 99 : index
    %604 = memref.load %arg1[%c0_305, %c99] : memref<2x144xf32, #tpu.memory_space<smem>>
    %605 = vector.broadcast %604 : f32 to vector<16x16xf32>
    %606 = arith.mulf %605, %595 : vector<16x16xf32>
    %607 = arith.addf %589, %606 : vector<16x16xf32>
    %c0_306 = arith.constant 0 : index
    %c135 = arith.constant 135 : index
    %608 = memref.load %arg1[%c0_306, %c135] : memref<2x144xf32, #tpu.memory_space<smem>>
    %609 = vector.broadcast %608 : f32 to vector<16x16xf32>
    %610 = arith.mulf %609, %595 : vector<16x16xf32>
    %611 = arith.addf %593, %610 : vector<16x16xf32>
    %c3_307 = arith.constant 3 : index
    %c0_308 = arith.constant 0 : index
    %c1_309 = arith.constant 1 : index
    %612 = vector.load %arg5[%c3_307, %c0_308, %c1_309] : memref<4x18x18xf32, #tpu.memory_space<vmem>>, vector<1x16x16xf32>
    %613 = vector.shape_cast %612 : vector<1x16x16xf32> to vector<16x16xf32>
    %c0_310 = arith.constant 0 : index
    %c28 = arith.constant 28 : index
    %614 = memref.load %arg1[%c0_310, %c28] : memref<2x144xf32, #tpu.memory_space<smem>>
    %615 = vector.broadcast %614 : f32 to vector<16x16xf32>
    %616 = arith.mulf %615, %613 : vector<16x16xf32>
    %617 = arith.addf %599, %616 : vector<16x16xf32>
    %c0_311 = arith.constant 0 : index
    %c64 = arith.constant 64 : index
    %618 = memref.load %arg1[%c0_311, %c64] : memref<2x144xf32, #tpu.memory_space<smem>>
    %619 = vector.broadcast %618 : f32 to vector<16x16xf32>
    %620 = arith.mulf %619, %613 : vector<16x16xf32>
    %621 = arith.addf %603, %620 : vector<16x16xf32>
    %c0_312 = arith.constant 0 : index
    %c100 = arith.constant 100 : index
    %622 = memref.load %arg1[%c0_312, %c100] : memref<2x144xf32, #tpu.memory_space<smem>>
    %623 = vector.broadcast %622 : f32 to vector<16x16xf32>
    %624 = arith.mulf %623, %613 : vector<16x16xf32>
    %625 = arith.addf %607, %624 : vector<16x16xf32>
    %c0_313 = arith.constant 0 : index
    %c136 = arith.constant 136 : index
    %626 = memref.load %arg1[%c0_313, %c136] : memref<2x144xf32, #tpu.memory_space<smem>>
    %627 = vector.broadcast %626 : f32 to vector<16x16xf32>
    %628 = arith.mulf %627, %613 : vector<16x16xf32>
    %629 = arith.addf %611, %628 : vector<16x16xf32>
    %c3_314 = arith.constant 3 : index
    %c0_315 = arith.constant 0 : index
    %c2_316 = arith.constant 2 : index
    %630 = vector.load %arg5[%c3_314, %c0_315, %c2_316] : memref<4x18x18xf32, #tpu.memory_space<vmem>>, vector<1x16x16xf32>
    %631 = vector.shape_cast %630 : vector<1x16x16xf32> to vector<16x16xf32>
    %c0_317 = arith.constant 0 : index
    %c29 = arith.constant 29 : index
    %632 = memref.load %arg1[%c0_317, %c29] : memref<2x144xf32, #tpu.memory_space<smem>>
    %633 = vector.broadcast %632 : f32 to vector<16x16xf32>
    %634 = arith.mulf %633, %631 : vector<16x16xf32>
    %635 = arith.addf %617, %634 : vector<16x16xf32>
    %c0_318 = arith.constant 0 : index
    %c65 = arith.constant 65 : index
    %636 = memref.load %arg1[%c0_318, %c65] : memref<2x144xf32, #tpu.memory_space<smem>>
    %637 = vector.broadcast %636 : f32 to vector<16x16xf32>
    %638 = arith.mulf %637, %631 : vector<16x16xf32>
    %639 = arith.addf %621, %638 : vector<16x16xf32>
    %c0_319 = arith.constant 0 : index
    %c101 = arith.constant 101 : index
    %640 = memref.load %arg1[%c0_319, %c101] : memref<2x144xf32, #tpu.memory_space<smem>>
    %641 = vector.broadcast %640 : f32 to vector<16x16xf32>
    %642 = arith.mulf %641, %631 : vector<16x16xf32>
    %643 = arith.addf %625, %642 : vector<16x16xf32>
    %c0_320 = arith.constant 0 : index
    %c137 = arith.constant 137 : index
    %644 = memref.load %arg1[%c0_320, %c137] : memref<2x144xf32, #tpu.memory_space<smem>>
    %645 = vector.broadcast %644 : f32 to vector<16x16xf32>
    %646 = arith.mulf %645, %631 : vector<16x16xf32>
    %647 = arith.addf %629, %646 : vector<16x16xf32>
    %c3_321 = arith.constant 3 : index
    %c1_322 = arith.constant 1 : index
    %c0_323 = arith.constant 0 : index
    %648 = vector.load %arg5[%c3_321, %c1_322, %c0_323] : memref<4x18x18xf32, #tpu.memory_space<vmem>>, vector<1x16x16xf32>
    %649 = vector.shape_cast %648 : vector<1x16x16xf32> to vector<16x16xf32>
    %c0_324 = arith.constant 0 : index
    %c30 = arith.constant 30 : index
    %650 = memref.load %arg1[%c0_324, %c30] : memref<2x144xf32, #tpu.memory_space<smem>>
    %651 = vector.broadcast %650 : f32 to vector<16x16xf32>
    %652 = arith.mulf %651, %649 : vector<16x16xf32>
    %653 = arith.addf %635, %652 : vector<16x16xf32>
    %c0_325 = arith.constant 0 : index
    %c66 = arith.constant 66 : index
    %654 = memref.load %arg1[%c0_325, %c66] : memref<2x144xf32, #tpu.memory_space<smem>>
    %655 = vector.broadcast %654 : f32 to vector<16x16xf32>
    %656 = arith.mulf %655, %649 : vector<16x16xf32>
    %657 = arith.addf %639, %656 : vector<16x16xf32>
    %c0_326 = arith.constant 0 : index
    %c102 = arith.constant 102 : index
    %658 = memref.load %arg1[%c0_326, %c102] : memref<2x144xf32, #tpu.memory_space<smem>>
    %659 = vector.broadcast %658 : f32 to vector<16x16xf32>
    %660 = arith.mulf %659, %649 : vector<16x16xf32>
    %661 = arith.addf %643, %660 : vector<16x16xf32>
    %c0_327 = arith.constant 0 : index
    %c138 = arith.constant 138 : index
    %662 = memref.load %arg1[%c0_327, %c138] : memref<2x144xf32, #tpu.memory_space<smem>>
    %663 = vector.broadcast %662 : f32 to vector<16x16xf32>
    %664 = arith.mulf %663, %649 : vector<16x16xf32>
    %665 = arith.addf %647, %664 : vector<16x16xf32>
    %c3_328 = arith.constant 3 : index
    %c1_329 = arith.constant 1 : index
    %c1_330 = arith.constant 1 : index
    %666 = vector.load %arg5[%c3_328, %c1_329, %c1_330] : memref<4x18x18xf32, #tpu.memory_space<vmem>>, vector<1x16x16xf32>
    %667 = vector.shape_cast %666 : vector<1x16x16xf32> to vector<16x16xf32>
    %c0_331 = arith.constant 0 : index
    %c31 = arith.constant 31 : index
    %668 = memref.load %arg1[%c0_331, %c31] : memref<2x144xf32, #tpu.memory_space<smem>>
    %669 = vector.broadcast %668 : f32 to vector<16x16xf32>
    %670 = arith.mulf %669, %667 : vector<16x16xf32>
    %671 = arith.addf %653, %670 : vector<16x16xf32>
    %c0_332 = arith.constant 0 : index
    %c67 = arith.constant 67 : index
    %672 = memref.load %arg1[%c0_332, %c67] : memref<2x144xf32, #tpu.memory_space<smem>>
    %673 = vector.broadcast %672 : f32 to vector<16x16xf32>
    %674 = arith.mulf %673, %667 : vector<16x16xf32>
    %675 = arith.addf %657, %674 : vector<16x16xf32>
    %c0_333 = arith.constant 0 : index
    %c103 = arith.constant 103 : index
    %676 = memref.load %arg1[%c0_333, %c103] : memref<2x144xf32, #tpu.memory_space<smem>>
    %677 = vector.broadcast %676 : f32 to vector<16x16xf32>
    %678 = arith.mulf %677, %667 : vector<16x16xf32>
    %679 = arith.addf %661, %678 : vector<16x16xf32>
    %c0_334 = arith.constant 0 : index
    %c139 = arith.constant 139 : index
    %680 = memref.load %arg1[%c0_334, %c139] : memref<2x144xf32, #tpu.memory_space<smem>>
    %681 = vector.broadcast %680 : f32 to vector<16x16xf32>
    %682 = arith.mulf %681, %667 : vector<16x16xf32>
    %683 = arith.addf %665, %682 : vector<16x16xf32>
    %c3_335 = arith.constant 3 : index
    %c1_336 = arith.constant 1 : index
    %c2_337 = arith.constant 2 : index
    %684 = vector.load %arg5[%c3_335, %c1_336, %c2_337] : memref<4x18x18xf32, #tpu.memory_space<vmem>>, vector<1x16x16xf32>
    %685 = vector.shape_cast %684 : vector<1x16x16xf32> to vector<16x16xf32>
    %c0_338 = arith.constant 0 : index
    %c32 = arith.constant 32 : index
    %686 = memref.load %arg1[%c0_338, %c32] : memref<2x144xf32, #tpu.memory_space<smem>>
    %687 = vector.broadcast %686 : f32 to vector<16x16xf32>
    %688 = arith.mulf %687, %685 : vector<16x16xf32>
    %689 = arith.addf %671, %688 : vector<16x16xf32>
    %c0_339 = arith.constant 0 : index
    %c68 = arith.constant 68 : index
    %690 = memref.load %arg1[%c0_339, %c68] : memref<2x144xf32, #tpu.memory_space<smem>>
    %691 = vector.broadcast %690 : f32 to vector<16x16xf32>
    %692 = arith.mulf %691, %685 : vector<16x16xf32>
    %693 = arith.addf %675, %692 : vector<16x16xf32>
    %c0_340 = arith.constant 0 : index
    %c104 = arith.constant 104 : index
    %694 = memref.load %arg1[%c0_340, %c104] : memref<2x144xf32, #tpu.memory_space<smem>>
    %695 = vector.broadcast %694 : f32 to vector<16x16xf32>
    %696 = arith.mulf %695, %685 : vector<16x16xf32>
    %697 = arith.addf %679, %696 : vector<16x16xf32>
    %c0_341 = arith.constant 0 : index
    %c140 = arith.constant 140 : index
    %698 = memref.load %arg1[%c0_341, %c140] : memref<2x144xf32, #tpu.memory_space<smem>>
    %699 = vector.broadcast %698 : f32 to vector<16x16xf32>
    %700 = arith.mulf %699, %685 : vector<16x16xf32>
    %701 = arith.addf %683, %700 : vector<16x16xf32>
    %c3_342 = arith.constant 3 : index
    %c2_343 = arith.constant 2 : index
    %c0_344 = arith.constant 0 : index
    %702 = vector.load %arg5[%c3_342, %c2_343, %c0_344] : memref<4x18x18xf32, #tpu.memory_space<vmem>>, vector<1x16x16xf32>
    %703 = vector.shape_cast %702 : vector<1x16x16xf32> to vector<16x16xf32>
    %c0_345 = arith.constant 0 : index
    %c33 = arith.constant 33 : index
    %704 = memref.load %arg1[%c0_345, %c33] : memref<2x144xf32, #tpu.memory_space<smem>>
    %705 = vector.broadcast %704 : f32 to vector<16x16xf32>
    %706 = arith.mulf %705, %703 : vector<16x16xf32>
    %707 = arith.addf %689, %706 : vector<16x16xf32>
    %c0_346 = arith.constant 0 : index
    %c69 = arith.constant 69 : index
    %708 = memref.load %arg1[%c0_346, %c69] : memref<2x144xf32, #tpu.memory_space<smem>>
    %709 = vector.broadcast %708 : f32 to vector<16x16xf32>
    %710 = arith.mulf %709, %703 : vector<16x16xf32>
    %711 = arith.addf %693, %710 : vector<16x16xf32>
    %c0_347 = arith.constant 0 : index
    %c105 = arith.constant 105 : index
    %712 = memref.load %arg1[%c0_347, %c105] : memref<2x144xf32, #tpu.memory_space<smem>>
    %713 = vector.broadcast %712 : f32 to vector<16x16xf32>
    %714 = arith.mulf %713, %703 : vector<16x16xf32>
    %715 = arith.addf %697, %714 : vector<16x16xf32>
    %c0_348 = arith.constant 0 : index
    %c141 = arith.constant 141 : index
    %716 = memref.load %arg1[%c0_348, %c141] : memref<2x144xf32, #tpu.memory_space<smem>>
    %717 = vector.broadcast %716 : f32 to vector<16x16xf32>
    %718 = arith.mulf %717, %703 : vector<16x16xf32>
    %719 = arith.addf %701, %718 : vector<16x16xf32>
    %c3_349 = arith.constant 3 : index
    %c2_350 = arith.constant 2 : index
    %c1_351 = arith.constant 1 : index
    %720 = vector.load %arg5[%c3_349, %c2_350, %c1_351] : memref<4x18x18xf32, #tpu.memory_space<vmem>>, vector<1x16x16xf32>
    %721 = vector.shape_cast %720 : vector<1x16x16xf32> to vector<16x16xf32>
    %c0_352 = arith.constant 0 : index
    %c34 = arith.constant 34 : index
    %722 = memref.load %arg1[%c0_352, %c34] : memref<2x144xf32, #tpu.memory_space<smem>>
    %723 = vector.broadcast %722 : f32 to vector<16x16xf32>
    %724 = arith.mulf %723, %721 : vector<16x16xf32>
    %725 = arith.addf %707, %724 : vector<16x16xf32>
    %c0_353 = arith.constant 0 : index
    %c70 = arith.constant 70 : index
    %726 = memref.load %arg1[%c0_353, %c70] : memref<2x144xf32, #tpu.memory_space<smem>>
    %727 = vector.broadcast %726 : f32 to vector<16x16xf32>
    %728 = arith.mulf %727, %721 : vector<16x16xf32>
    %729 = arith.addf %711, %728 : vector<16x16xf32>
    %c0_354 = arith.constant 0 : index
    %c106 = arith.constant 106 : index
    %730 = memref.load %arg1[%c0_354, %c106] : memref<2x144xf32, #tpu.memory_space<smem>>
    %731 = vector.broadcast %730 : f32 to vector<16x16xf32>
    %732 = arith.mulf %731, %721 : vector<16x16xf32>
    %733 = arith.addf %715, %732 : vector<16x16xf32>
    %c0_355 = arith.constant 0 : index
    %c142 = arith.constant 142 : index
    %734 = memref.load %arg1[%c0_355, %c142] : memref<2x144xf32, #tpu.memory_space<smem>>
    %735 = vector.broadcast %734 : f32 to vector<16x16xf32>
    %736 = arith.mulf %735, %721 : vector<16x16xf32>
    %737 = arith.addf %719, %736 : vector<16x16xf32>
    %c3_356 = arith.constant 3 : index
    %c2_357 = arith.constant 2 : index
    %c2_358 = arith.constant 2 : index
    %738 = vector.load %arg5[%c3_356, %c2_357, %c2_358] : memref<4x18x18xf32, #tpu.memory_space<vmem>>, vector<1x16x16xf32>
    %739 = vector.shape_cast %738 : vector<1x16x16xf32> to vector<16x16xf32>
    %c0_359 = arith.constant 0 : index
    %c35 = arith.constant 35 : index
    %740 = memref.load %arg1[%c0_359, %c35] : memref<2x144xf32, #tpu.memory_space<smem>>
    %741 = vector.broadcast %740 : f32 to vector<16x16xf32>
    %742 = arith.mulf %741, %739 : vector<16x16xf32>
    %743 = arith.addf %725, %742 : vector<16x16xf32>
    %c0_360 = arith.constant 0 : index
    %c71 = arith.constant 71 : index
    %744 = memref.load %arg1[%c0_360, %c71] : memref<2x144xf32, #tpu.memory_space<smem>>
    %745 = vector.broadcast %744 : f32 to vector<16x16xf32>
    %746 = arith.mulf %745, %739 : vector<16x16xf32>
    %747 = arith.addf %729, %746 : vector<16x16xf32>
    %c0_361 = arith.constant 0 : index
    %c107 = arith.constant 107 : index
    %748 = memref.load %arg1[%c0_361, %c107] : memref<2x144xf32, #tpu.memory_space<smem>>
    %749 = vector.broadcast %748 : f32 to vector<16x16xf32>
    %750 = arith.mulf %749, %739 : vector<16x16xf32>
    %751 = arith.addf %733, %750 : vector<16x16xf32>
    %c0_362 = arith.constant 0 : index
    %c143 = arith.constant 143 : index
    %752 = memref.load %arg1[%c0_362, %c143] : memref<2x144xf32, #tpu.memory_space<smem>>
    %753 = vector.broadcast %752 : f32 to vector<16x16xf32>
    %754 = arith.mulf %753, %739 : vector<16x16xf32>
    %755 = arith.addf %737, %754 : vector<16x16xf32>
    %756 = arith.mulf %743, %743 : vector<16x16xf32>
    %757 = vector.shape_cast %756 : vector<16x16xf32> to vector<1x16x16xf32>
    %cst_363 = arith.constant dense<0.000000e+00> : vector<1xf32>
    %758 = vector.multi_reduction <add>, %757, %cst_363 [1, 2] : vector<1x16x16xf32> to vector<1xf32>
    %759 = vector.shape_cast %758 : vector<1xf32> to vector<1x1x1xf32>
    %760 = vector.extract %759[0, 0, 0] : f32 from vector<1x1x1xf32>
    %761 = vector.broadcast %760 : f32 to vector<1x1xf32>
    %cst_364 = arith.constant 2.560000e+02 : f32
    %762 = vector.broadcast %cst_364 : f32 to vector<1x1xf32>
    %763 = arith.divf %761, %762 : vector<1x1xf32>
    %cst_365 = arith.constant 9.99999997E-7 : f32
    %764 = vector.broadcast %cst_365 : f32 to vector<1x1xf32>
    %765 = arith.addf %763, %764 : vector<1x1xf32>
    %766 = math.rsqrt %765 : vector<1x1xf32>
    %767 = vector.broadcast %766 : vector<1x1xf32> to vector<16x16xf32>
    %768 = arith.mulf %743, %767 : vector<16x16xf32>
    %c1_366 = arith.constant 1 : index
    %c0_367 = arith.constant 0 : index
    %769 = memref.load %arg2[%c1_366, %c0_367] : memref<7x4xf32, #tpu.memory_space<smem>>
    %770 = vector.broadcast %769 : f32 to vector<16x16xf32>
    %771 = arith.mulf %770, %768 : vector<16x16xf32>
    %c2_368 = arith.constant 2 : index
    %c0_369 = arith.constant 0 : index
    %772 = memref.load %arg2[%c2_368, %c0_369] : memref<7x4xf32, #tpu.memory_space<smem>>
    %773 = vector.broadcast %772 : f32 to vector<16x16xf32>
    %774 = arith.addf %771, %773 : vector<16x16xf32>
    %c3_370 = arith.constant 3 : index
    %c0_371 = arith.constant 0 : index
    %775 = memref.load %arg2[%c3_370, %c0_371] : memref<7x4xf32, #tpu.memory_space<smem>>
    %776 = vector.broadcast %775 : f32 to vector<16x16xf32>
    %777 = arith.maximumf %774, %776 : vector<16x16xf32>
    %778 = arith.mulf %747, %747 : vector<16x16xf32>
    %779 = vector.shape_cast %778 : vector<16x16xf32> to vector<1x16x16xf32>
    %cst_372 = arith.constant dense<0.000000e+00> : vector<1xf32>
    %780 = vector.multi_reduction <add>, %779, %cst_372 [1, 2] : vector<1x16x16xf32> to vector<1xf32>
    %781 = vector.shape_cast %780 : vector<1xf32> to vector<1x1x1xf32>
    %782 = vector.extract %781[0, 0, 0] : f32 from vector<1x1x1xf32>
    %783 = vector.broadcast %782 : f32 to vector<1x1xf32>
    %cst_373 = arith.constant 2.560000e+02 : f32
    %784 = vector.broadcast %cst_373 : f32 to vector<1x1xf32>
    %785 = arith.divf %783, %784 : vector<1x1xf32>
    %cst_374 = arith.constant 9.99999997E-7 : f32
    %786 = vector.broadcast %cst_374 : f32 to vector<1x1xf32>
    %787 = arith.addf %785, %786 : vector<1x1xf32>
    %788 = math.rsqrt %787 : vector<1x1xf32>
    %789 = vector.broadcast %788 : vector<1x1xf32> to vector<16x16xf32>
    %790 = arith.mulf %747, %789 : vector<16x16xf32>
    %c1_375 = arith.constant 1 : index
    %c1_376 = arith.constant 1 : index
    %791 = memref.load %arg2[%c1_375, %c1_376] : memref<7x4xf32, #tpu.memory_space<smem>>
    %792 = vector.broadcast %791 : f32 to vector<16x16xf32>
    %793 = arith.mulf %792, %790 : vector<16x16xf32>
    %c2_377 = arith.constant 2 : index
    %c1_378 = arith.constant 1 : index
    %794 = memref.load %arg2[%c2_377, %c1_378] : memref<7x4xf32, #tpu.memory_space<smem>>
    %795 = vector.broadcast %794 : f32 to vector<16x16xf32>
    %796 = arith.addf %793, %795 : vector<16x16xf32>
    %c3_379 = arith.constant 3 : index
    %c1_380 = arith.constant 1 : index
    %797 = memref.load %arg2[%c3_379, %c1_380] : memref<7x4xf32, #tpu.memory_space<smem>>
    %798 = vector.broadcast %797 : f32 to vector<16x16xf32>
    %799 = arith.maximumf %796, %798 : vector<16x16xf32>
    %800 = arith.mulf %751, %751 : vector<16x16xf32>
    %801 = vector.shape_cast %800 : vector<16x16xf32> to vector<1x16x16xf32>
    %cst_381 = arith.constant dense<0.000000e+00> : vector<1xf32>
    %802 = vector.multi_reduction <add>, %801, %cst_381 [1, 2] : vector<1x16x16xf32> to vector<1xf32>
    %803 = vector.shape_cast %802 : vector<1xf32> to vector<1x1x1xf32>
    %804 = vector.extract %803[0, 0, 0] : f32 from vector<1x1x1xf32>
    %805 = vector.broadcast %804 : f32 to vector<1x1xf32>
    %cst_382 = arith.constant 2.560000e+02 : f32
    %806 = vector.broadcast %cst_382 : f32 to vector<1x1xf32>
    %807 = arith.divf %805, %806 : vector<1x1xf32>
    %cst_383 = arith.constant 9.99999997E-7 : f32
    %808 = vector.broadcast %cst_383 : f32 to vector<1x1xf32>
    %809 = arith.addf %807, %808 : vector<1x1xf32>
    %810 = math.rsqrt %809 : vector<1x1xf32>
    %811 = vector.broadcast %810 : vector<1x1xf32> to vector<16x16xf32>
    %812 = arith.mulf %751, %811 : vector<16x16xf32>
    %c1_384 = arith.constant 1 : index
    %c2_385 = arith.constant 2 : index
    %813 = memref.load %arg2[%c1_384, %c2_385] : memref<7x4xf32, #tpu.memory_space<smem>>
    %814 = vector.broadcast %813 : f32 to vector<16x16xf32>
    %815 = arith.mulf %814, %812 : vector<16x16xf32>
    %c2_386 = arith.constant 2 : index
    %c2_387 = arith.constant 2 : index
    %816 = memref.load %arg2[%c2_386, %c2_387] : memref<7x4xf32, #tpu.memory_space<smem>>
    %817 = vector.broadcast %816 : f32 to vector<16x16xf32>
    %818 = arith.addf %815, %817 : vector<16x16xf32>
    %c3_388 = arith.constant 3 : index
    %c2_389 = arith.constant 2 : index
    %819 = memref.load %arg2[%c3_388, %c2_389] : memref<7x4xf32, #tpu.memory_space<smem>>
    %820 = vector.broadcast %819 : f32 to vector<16x16xf32>
    %821 = arith.maximumf %818, %820 : vector<16x16xf32>
    %822 = arith.mulf %755, %755 : vector<16x16xf32>
    %823 = vector.shape_cast %822 : vector<16x16xf32> to vector<1x16x16xf32>
    %cst_390 = arith.constant dense<0.000000e+00> : vector<1xf32>
    %824 = vector.multi_reduction <add>, %823, %cst_390 [1, 2] : vector<1x16x16xf32> to vector<1xf32>
    %825 = vector.shape_cast %824 : vector<1xf32> to vector<1x1x1xf32>
    %826 = vector.extract %825[0, 0, 0] : f32 from vector<1x1x1xf32>
    %827 = vector.broadcast %826 : f32 to vector<1x1xf32>
    %cst_391 = arith.constant 2.560000e+02 : f32
    %828 = vector.broadcast %cst_391 : f32 to vector<1x1xf32>
    %829 = arith.divf %827, %828 : vector<1x1xf32>
    %cst_392 = arith.constant 9.99999997E-7 : f32
    %830 = vector.broadcast %cst_392 : f32 to vector<1x1xf32>
    %831 = arith.addf %829, %830 : vector<1x1xf32>
    %832 = math.rsqrt %831 : vector<1x1xf32>
    %833 = vector.broadcast %832 : vector<1x1xf32> to vector<16x16xf32>
    %834 = arith.mulf %755, %833 : vector<16x16xf32>
    %c1_393 = arith.constant 1 : index
    %c3_394 = arith.constant 3 : index
    %835 = memref.load %arg2[%c1_393, %c3_394] : memref<7x4xf32, #tpu.memory_space<smem>>
    %836 = vector.broadcast %835 : f32 to vector<16x16xf32>
    %837 = arith.mulf %836, %834 : vector<16x16xf32>
    %c2_395 = arith.constant 2 : index
    %c3_396 = arith.constant 3 : index
    %838 = memref.load %arg2[%c2_395, %c3_396] : memref<7x4xf32, #tpu.memory_space<smem>>
    %839 = vector.broadcast %838 : f32 to vector<16x16xf32>
    %840 = arith.addf %837, %839 : vector<16x16xf32>
    %c3_397 = arith.constant 3 : index
    %c3_398 = arith.constant 3 : index
    %841 = memref.load %arg2[%c3_397, %c3_398] : memref<7x4xf32, #tpu.memory_space<smem>>
    %842 = vector.broadcast %841 : f32 to vector<16x16xf32>
    %843 = arith.maximumf %840, %842 : vector<16x16xf32>
    %c0_399 = arith.constant 0 : index
    %c1_400 = arith.constant 1 : index
    %c1_401 = arith.constant 1 : index
    %844 = vector.load %arg5[%c0_399, %c1_400, %c1_401] : memref<4x18x18xf32, #tpu.memory_space<vmem>>, vector<1x16x16xf32>
    %845 = vector.shape_cast %844 : vector<1x16x16xf32> to vector<16x16xf32>
    %846 = vector.shape_cast %777 : vector<16x16xf32> to vector<1x16x16xf32>
    tpu.vector_store %arg5[%c0_399, %c1_400, %c1_401], %846 {strides = array<i32>} : memref<4x18x18xf32, #tpu.memory_space<vmem>>, vector<1x16x16xf32>,
    %847 = vector.extract_strided_slice %777 {offsets = [1, 0], sizes = [1, 16], strides = [1, 1]} : vector<16x16xf32> to vector<1x16xf32>
    %c0_402 = arith.constant 0 : index
    %c0_403 = arith.constant 0 : index
    %c1_404 = arith.constant 1 : index
    %848 = vector.load %arg5[%c0_402, %c0_403, %c1_404] : memref<4x18x18xf32, #tpu.memory_space<vmem>>, vector<1x1x16xf32>
    %849 = vector.shape_cast %848 : vector<1x1x16xf32> to vector<1x16xf32>
    %850 = vector.shape_cast %847 : vector<1x16xf32> to vector<1x1x16xf32>
    tpu.vector_store %arg5[%c0_402, %c0_403, %c1_404], %850 {strides = array<i32>} : memref<4x18x18xf32, #tpu.memory_space<vmem>>, vector<1x1x16xf32>,
    %851 = vector.extract_strided_slice %777 {offsets = [14, 0], sizes = [1, 16], strides = [1, 1]} : vector<16x16xf32> to vector<1x16xf32>
    %c0_405 = arith.constant 0 : index
    %c17_406 = arith.constant 17 : index
    %c1_407 = arith.constant 1 : index
    %852 = vector.load %arg5[%c0_405, %c17_406, %c1_407] : memref<4x18x18xf32, #tpu.memory_space<vmem>>, vector<1x1x16xf32>
    %853 = vector.shape_cast %852 : vector<1x1x16xf32> to vector<1x16xf32>
    %854 = vector.shape_cast %851 : vector<1x16xf32> to vector<1x1x16xf32>
    tpu.vector_store %arg5[%c0_405, %c17_406, %c1_407], %854 {strides = array<i32>} : memref<4x18x18xf32, #tpu.memory_space<vmem>>, vector<1x1x16xf32>,
    %c1_408 = arith.constant 1 : index
    %c1_409 = arith.constant 1 : index
    %c1_410 = arith.constant 1 : index
    %855 = vector.load %arg5[%c1_408, %c1_409, %c1_410] : memref<4x18x18xf32, #tpu.memory_space<vmem>>, vector<1x16x16xf32>
    %856 = vector.shape_cast %855 : vector<1x16x16xf32> to vector<16x16xf32>
    %857 = vector.shape_cast %799 : vector<16x16xf32> to vector<1x16x16xf32>
    tpu.vector_store %arg5[%c1_408, %c1_409, %c1_410], %857 {strides = array<i32>} : memref<4x18x18xf32, #tpu.memory_space<vmem>>, vector<1x16x16xf32>,
    %858 = vector.extract_strided_slice %799 {offsets = [1, 0], sizes = [1, 16], strides = [1, 1]} : vector<16x16xf32> to vector<1x16xf32>
    %c1_411 = arith.constant 1 : index
    %c0_412 = arith.constant 0 : index
    %c1_413 = arith.constant 1 : index
    %859 = vector.load %arg5[%c1_411, %c0_412, %c1_413] : memref<4x18x18xf32, #tpu.memory_space<vmem>>, vector<1x1x16xf32>
    %860 = vector.shape_cast %859 : vector<1x1x16xf32> to vector<1x16xf32>
    %861 = vector.shape_cast %858 : vector<1x16xf32> to vector<1x1x16xf32>
    tpu.vector_store %arg5[%c1_411, %c0_412, %c1_413], %861 {strides = array<i32>} : memref<4x18x18xf32, #tpu.memory_space<vmem>>, vector<1x1x16xf32>,
    %862 = vector.extract_strided_slice %799 {offsets = [14, 0], sizes = [1, 16], strides = [1, 1]} : vector<16x16xf32> to vector<1x16xf32>
    %c1_414 = arith.constant 1 : index
    %c17_415 = arith.constant 17 : index
    %c1_416 = arith.constant 1 : index
    %863 = vector.load %arg5[%c1_414, %c17_415, %c1_416] : memref<4x18x18xf32, #tpu.memory_space<vmem>>, vector<1x1x16xf32>
    %864 = vector.shape_cast %863 : vector<1x1x16xf32> to vector<1x16xf32>
    %865 = vector.shape_cast %862 : vector<1x16xf32> to vector<1x1x16xf32>
    tpu.vector_store %arg5[%c1_414, %c17_415, %c1_416], %865 {strides = array<i32>} : memref<4x18x18xf32, #tpu.memory_space<vmem>>, vector<1x1x16xf32>,
    %c2_417 = arith.constant 2 : index
    %c1_418 = arith.constant 1 : index
    %c1_419 = arith.constant 1 : index
    %866 = vector.load %arg5[%c2_417, %c1_418, %c1_419] : memref<4x18x18xf32, #tpu.memory_space<vmem>>, vector<1x16x16xf32>
    %867 = vector.shape_cast %866 : vector<1x16x16xf32> to vector<16x16xf32>
    %868 = vector.shape_cast %821 : vector<16x16xf32> to vector<1x16x16xf32>
    tpu.vector_store %arg5[%c2_417, %c1_418, %c1_419], %868 {strides = array<i32>} : memref<4x18x18xf32, #tpu.memory_space<vmem>>, vector<1x16x16xf32>,
    %869 = vector.extract_strided_slice %821 {offsets = [1, 0], sizes = [1, 16], strides = [1, 1]} : vector<16x16xf32> to vector<1x16xf32>
    %c2_420 = arith.constant 2 : index
    %c0_421 = arith.constant 0 : index
    %c1_422 = arith.constant 1 : index
    %870 = vector.load %arg5[%c2_420, %c0_421, %c1_422] : memref<4x18x18xf32, #tpu.memory_space<vmem>>, vector<1x1x16xf32>
    %871 = vector.shape_cast %870 : vector<1x1x16xf32> to vector<1x16xf32>
    %872 = vector.shape_cast %869 : vector<1x16xf32> to vector<1x1x16xf32>
    tpu.vector_store %arg5[%c2_420, %c0_421, %c1_422], %872 {strides = array<i32>} : memref<4x18x18xf32, #tpu.memory_space<vmem>>, vector<1x1x16xf32>,
    %873 = vector.extract_strided_slice %821 {offsets = [14, 0], sizes = [1, 16], strides = [1, 1]} : vector<16x16xf32> to vector<1x16xf32>
    %c2_423 = arith.constant 2 : index
    %c17_424 = arith.constant 17 : index
    %c1_425 = arith.constant 1 : index
    %874 = vector.load %arg5[%c2_423, %c17_424, %c1_425] : memref<4x18x18xf32, #tpu.memory_space<vmem>>, vector<1x1x16xf32>
    %875 = vector.shape_cast %874 : vector<1x1x16xf32> to vector<1x16xf32>
    %876 = vector.shape_cast %873 : vector<1x16xf32> to vector<1x1x16xf32>
    tpu.vector_store %arg5[%c2_423, %c17_424, %c1_425], %876 {strides = array<i32>} : memref<4x18x18xf32, #tpu.memory_space<vmem>>, vector<1x1x16xf32>,
    %c3_426 = arith.constant 3 : index
    %c1_427 = arith.constant 1 : index
    %c1_428 = arith.constant 1 : index
    %877 = vector.load %arg5[%c3_426, %c1_427, %c1_428] : memref<4x18x18xf32, #tpu.memory_space<vmem>>, vector<1x16x16xf32>
    %878 = vector.shape_cast %877 : vector<1x16x16xf32> to vector<16x16xf32>
    %879 = vector.shape_cast %843 : vector<16x16xf32> to vector<1x16x16xf32>
    tpu.vector_store %arg5[%c3_426, %c1_427, %c1_428], %879 {strides = array<i32>} : memref<4x18x18xf32, #tpu.memory_space<vmem>>, vector<1x16x16xf32>,
    %880 = vector.extract_strided_slice %843 {offsets = [1, 0], sizes = [1, 16], strides = [1, 1]} : vector<16x16xf32> to vector<1x16xf32>
    %c3_429 = arith.constant 3 : index
    %c0_430 = arith.constant 0 : index
    %c1_431 = arith.constant 1 : index
    %881 = vector.load %arg5[%c3_429, %c0_430, %c1_431] : memref<4x18x18xf32, #tpu.memory_space<vmem>>, vector<1x1x16xf32>
    %882 = vector.shape_cast %881 : vector<1x1x16xf32> to vector<1x16xf32>
    %883 = vector.shape_cast %880 : vector<1x16xf32> to vector<1x1x16xf32>
    tpu.vector_store %arg5[%c3_429, %c0_430, %c1_431], %883 {strides = array<i32>} : memref<4x18x18xf32, #tpu.memory_space<vmem>>, vector<1x1x16xf32>,
    %884 = vector.extract_strided_slice %843 {offsets = [14, 0], sizes = [1, 16], strides = [1, 1]} : vector<16x16xf32> to vector<1x16xf32>
    %c3_432 = arith.constant 3 : index
    %c17_433 = arith.constant 17 : index
    %c1_434 = arith.constant 1 : index
    %885 = vector.load %arg5[%c3_432, %c17_433, %c1_434] : memref<4x18x18xf32, #tpu.memory_space<vmem>>, vector<1x1x16xf32>
    %886 = vector.shape_cast %885 : vector<1x1x16xf32> to vector<1x16xf32>
    %887 = vector.shape_cast %884 : vector<1x16xf32> to vector<1x1x16xf32>
    tpu.vector_store %arg5[%c3_432, %c17_433, %c1_434], %887 {strides = array<i32>} : memref<4x18x18xf32, #tpu.memory_space<vmem>>, vector<1x1x16xf32>,
    %c0_435 = arith.constant 0 : index
    %c0_436 = arith.constant 0 : index
    %c2_437 = arith.constant 2 : index
    %888 = vector.load %arg5[%c0_435, %c0_436, %c2_437] : memref<4x18x18xf32, #tpu.memory_space<vmem>>, vector<1x18x1xf32>
    %889 = vector.shape_cast %888 : vector<1x18x1xf32> to vector<18x1xf32>
    %c0_438 = arith.constant 0 : index
    %c0_439 = arith.constant 0 : index
    %c0_440 = arith.constant 0 : index
    %890 = vector.load %arg5[%c0_438, %c0_439, %c0_440] : memref<4x18x18xf32, #tpu.memory_space<vmem>>, vector<1x18x1xf32>
    %891 = vector.shape_cast %890 : vector<1x18x1xf32> to vector<18x1xf32>
    %892 = vector.shape_cast %889 : vector<18x1xf32> to vector<1x18x1xf32>
    tpu.vector_store %arg5[%c0_438, %c0_439, %c0_440], %892 {strides = array<i32>} : memref<4x18x18xf32, #tpu.memory_space<vmem>>, vector<1x18x1xf32>,
    %c0_441 = arith.constant 0 : index
    %c0_442 = arith.constant 0 : index
    %c15_443 = arith.constant 15 : index
    %893 = vector.load %arg5[%c0_441, %c0_442, %c15_443] : memref<4x18x18xf32, #tpu.memory_space<vmem>>, vector<1x18x1xf32>
    %894 = vector.shape_cast %893 : vector<1x18x1xf32> to vector<18x1xf32>
    %c0_444 = arith.constant 0 : index
    %c0_445 = arith.constant 0 : index
    %c17_446 = arith.constant 17 : index
    %895 = vector.load %arg5[%c0_444, %c0_445, %c17_446] : memref<4x18x18xf32, #tpu.memory_space<vmem>>, vector<1x18x1xf32>
    %896 = vector.shape_cast %895 : vector<1x18x1xf32> to vector<18x1xf32>
    %897 = vector.shape_cast %894 : vector<18x1xf32> to vector<1x18x1xf32>
    tpu.vector_store %arg5[%c0_444, %c0_445, %c17_446], %897 {strides = array<i32>} : memref<4x18x18xf32, #tpu.memory_space<vmem>>, vector<1x18x1xf32>,
    %c1_447 = arith.constant 1 : index
    %c0_448 = arith.constant 0 : index
    %c2_449 = arith.constant 2 : index
    %898 = vector.load %arg5[%c1_447, %c0_448, %c2_449] : memref<4x18x18xf32, #tpu.memory_space<vmem>>, vector<1x18x1xf32>
    %899 = vector.shape_cast %898 : vector<1x18x1xf32> to vector<18x1xf32>
    %c1_450 = arith.constant 1 : index
    %c0_451 = arith.constant 0 : index
    %c0_452 = arith.constant 0 : index
    %900 = vector.load %arg5[%c1_450, %c0_451, %c0_452] : memref<4x18x18xf32, #tpu.memory_space<vmem>>, vector<1x18x1xf32>
    %901 = vector.shape_cast %900 : vector<1x18x1xf32> to vector<18x1xf32>
    %902 = vector.shape_cast %899 : vector<18x1xf32> to vector<1x18x1xf32>
    tpu.vector_store %arg5[%c1_450, %c0_451, %c0_452], %902 {strides = array<i32>} : memref<4x18x18xf32, #tpu.memory_space<vmem>>, vector<1x18x1xf32>,
    %c1_453 = arith.constant 1 : index
    %c0_454 = arith.constant 0 : index
    %c15_455 = arith.constant 15 : index
    %903 = vector.load %arg5[%c1_453, %c0_454, %c15_455] : memref<4x18x18xf32, #tpu.memory_space<vmem>>, vector<1x18x1xf32>
    %904 = vector.shape_cast %903 : vector<1x18x1xf32> to vector<18x1xf32>
    %c1_456 = arith.constant 1 : index
    %c0_457 = arith.constant 0 : index
    %c17_458 = arith.constant 17 : index
    %905 = vector.load %arg5[%c1_456, %c0_457, %c17_458] : memref<4x18x18xf32, #tpu.memory_space<vmem>>, vector<1x18x1xf32>
    %906 = vector.shape_cast %905 : vector<1x18x1xf32> to vector<18x1xf32>
    %907 = vector.shape_cast %904 : vector<18x1xf32> to vector<1x18x1xf32>
    tpu.vector_store %arg5[%c1_456, %c0_457, %c17_458], %907 {strides = array<i32>} : memref<4x18x18xf32, #tpu.memory_space<vmem>>, vector<1x18x1xf32>,
    %c2_459 = arith.constant 2 : index
    %c0_460 = arith.constant 0 : index
    %c2_461 = arith.constant 2 : index
    %908 = vector.load %arg5[%c2_459, %c0_460, %c2_461] : memref<4x18x18xf32, #tpu.memory_space<vmem>>, vector<1x18x1xf32>
    %909 = vector.shape_cast %908 : vector<1x18x1xf32> to vector<18x1xf32>
    %c2_462 = arith.constant 2 : index
    %c0_463 = arith.constant 0 : index
    %c0_464 = arith.constant 0 : index
    %910 = vector.load %arg5[%c2_462, %c0_463, %c0_464] : memref<4x18x18xf32, #tpu.memory_space<vmem>>, vector<1x18x1xf32>
    %911 = vector.shape_cast %910 : vector<1x18x1xf32> to vector<18x1xf32>
    %912 = vector.shape_cast %909 : vector<18x1xf32> to vector<1x18x1xf32>
    tpu.vector_store %arg5[%c2_462, %c0_463, %c0_464], %912 {strides = array<i32>} : memref<4x18x18xf32, #tpu.memory_space<vmem>>, vector<1x18x1xf32>,
    %c2_465 = arith.constant 2 : index
    %c0_466 = arith.constant 0 : index
    %c15_467 = arith.constant 15 : index
    %913 = vector.load %arg5[%c2_465, %c0_466, %c15_467] : memref<4x18x18xf32, #tpu.memory_space<vmem>>, vector<1x18x1xf32>
    %914 = vector.shape_cast %913 : vector<1x18x1xf32> to vector<18x1xf32>
    %c2_468 = arith.constant 2 : index
    %c0_469 = arith.constant 0 : index
    %c17_470 = arith.constant 17 : index
    %915 = vector.load %arg5[%c2_468, %c0_469, %c17_470] : memref<4x18x18xf32, #tpu.memory_space<vmem>>, vector<1x18x1xf32>
    %916 = vector.shape_cast %915 : vector<1x18x1xf32> to vector<18x1xf32>
    %917 = vector.shape_cast %914 : vector<18x1xf32> to vector<1x18x1xf32>
    tpu.vector_store %arg5[%c2_468, %c0_469, %c17_470], %917 {strides = array<i32>} : memref<4x18x18xf32, #tpu.memory_space<vmem>>, vector<1x18x1xf32>,
    %c3_471 = arith.constant 3 : index
    %c0_472 = arith.constant 0 : index
    %c2_473 = arith.constant 2 : index
    %918 = vector.load %arg5[%c3_471, %c0_472, %c2_473] : memref<4x18x18xf32, #tpu.memory_space<vmem>>, vector<1x18x1xf32>
    %919 = vector.shape_cast %918 : vector<1x18x1xf32> to vector<18x1xf32>
    %c3_474 = arith.constant 3 : index
    %c0_475 = arith.constant 0 : index
    %c0_476 = arith.constant 0 : index
    %920 = vector.load %arg5[%c3_474, %c0_475, %c0_476] : memref<4x18x18xf32, #tpu.memory_space<vmem>>, vector<1x18x1xf32>
    %921 = vector.shape_cast %920 : vector<1x18x1xf32> to vector<18x1xf32>
    %922 = vector.shape_cast %919 : vector<18x1xf32> to vector<1x18x1xf32>
    tpu.vector_store %arg5[%c3_474, %c0_475, %c0_476], %922 {strides = array<i32>} : memref<4x18x18xf32, #tpu.memory_space<vmem>>, vector<1x18x1xf32>,
    %c3_477 = arith.constant 3 : index
    %c0_478 = arith.constant 0 : index
    %c15_479 = arith.constant 15 : index
    %923 = vector.load %arg5[%c3_477, %c0_478, %c15_479] : memref<4x18x18xf32, #tpu.memory_space<vmem>>, vector<1x18x1xf32>
    %924 = vector.shape_cast %923 : vector<1x18x1xf32> to vector<18x1xf32>
    %c3_480 = arith.constant 3 : index
    %c0_481 = arith.constant 0 : index
    %c17_482 = arith.constant 17 : index
    %925 = vector.load %arg5[%c3_480, %c0_481, %c17_482] : memref<4x18x18xf32, #tpu.memory_space<vmem>>, vector<1x18x1xf32>
    %926 = vector.shape_cast %925 : vector<1x18x1xf32> to vector<18x1xf32>
    %927 = vector.shape_cast %924 : vector<18x1xf32> to vector<1x18x1xf32>
    tpu.vector_store %arg5[%c3_480, %c0_481, %c17_482], %927 {strides = array<i32>} : memref<4x18x18xf32, #tpu.memory_space<vmem>>, vector<1x18x1xf32>,
    %cst_483 = arith.constant 0.000000e+00 : f32
    %928 = vector.broadcast %cst_483 : f32 to vector<16x16xf32>
    %c4_484 = arith.constant 4 : index
    %c0_485 = arith.constant 0 : index
    %929 = memref.load %arg2[%c4_484, %c0_485] : memref<7x4xf32, #tpu.memory_space<smem>>
    %930 = vector.broadcast %929 : f32 to vector<16x16xf32>
    %931 = arith.addf %928, %930 : vector<16x16xf32>
    %cst_486 = arith.constant 0.000000e+00 : f32
    %932 = vector.broadcast %cst_486 : f32 to vector<16x16xf32>
    %c4_487 = arith.constant 4 : index
    %c1_488 = arith.constant 1 : index
    %933 = memref.load %arg2[%c4_487, %c1_488] : memref<7x4xf32, #tpu.memory_space<smem>>
    %934 = vector.broadcast %933 : f32 to vector<16x16xf32>
    %935 = arith.addf %932, %934 : vector<16x16xf32>
    %cst_489 = arith.constant 0.000000e+00 : f32
    %936 = vector.broadcast %cst_489 : f32 to vector<16x16xf32>
    %c4_490 = arith.constant 4 : index
    %c2_491 = arith.constant 2 : index
    %937 = memref.load %arg2[%c4_490, %c2_491] : memref<7x4xf32, #tpu.memory_space<smem>>
    %938 = vector.broadcast %937 : f32 to vector<16x16xf32>
    %939 = arith.addf %936, %938 : vector<16x16xf32>
    %cst_492 = arith.constant 0.000000e+00 : f32
    %940 = vector.broadcast %cst_492 : f32 to vector<16x16xf32>
    %c4_493 = arith.constant 4 : index
    %c3_494 = arith.constant 3 : index
    %941 = memref.load %arg2[%c4_493, %c3_494] : memref<7x4xf32, #tpu.memory_space<smem>>
    %942 = vector.broadcast %941 : f32 to vector<16x16xf32>
    %943 = arith.addf %940, %942 : vector<16x16xf32>
    %c0_495 = arith.constant 0 : index
    %c0_496 = arith.constant 0 : index
    %c0_497 = arith.constant 0 : index
    %944 = vector.load %arg5[%c0_495, %c0_496, %c0_497] : memref<4x18x18xf32, #tpu.memory_space<vmem>>, vector<1x16x16xf32>
    %945 = vector.shape_cast %944 : vector<1x16x16xf32> to vector<16x16xf32>
    %c1_498 = arith.constant 1 : index
    %c0_499 = arith.constant 0 : index
    %946 = memref.load %arg1[%c1_498, %c0_499] : memref<2x144xf32, #tpu.memory_space<smem>>
    %947 = vector.broadcast %946 : f32 to vector<16x16xf32>
    %948 = arith.mulf %947, %945 : vector<16x16xf32>
    %949 = arith.addf %931, %948 : vector<16x16xf32>
    %c1_500 = arith.constant 1 : index
    %c36_501 = arith.constant 36 : index
    %950 = memref.load %arg1[%c1_500, %c36_501] : memref<2x144xf32, #tpu.memory_space<smem>>
    %951 = vector.broadcast %950 : f32 to vector<16x16xf32>
    %952 = arith.mulf %951, %945 : vector<16x16xf32>
    %953 = arith.addf %935, %952 : vector<16x16xf32>
    %c1_502 = arith.constant 1 : index
    %c72_503 = arith.constant 72 : index
    %954 = memref.load %arg1[%c1_502, %c72_503] : memref<2x144xf32, #tpu.memory_space<smem>>
    %955 = vector.broadcast %954 : f32 to vector<16x16xf32>
    %956 = arith.mulf %955, %945 : vector<16x16xf32>
    %957 = arith.addf %939, %956 : vector<16x16xf32>
    %c1_504 = arith.constant 1 : index
    %c108_505 = arith.constant 108 : index
    %958 = memref.load %arg1[%c1_504, %c108_505] : memref<2x144xf32, #tpu.memory_space<smem>>
    %959 = vector.broadcast %958 : f32 to vector<16x16xf32>
    %960 = arith.mulf %959, %945 : vector<16x16xf32>
    %961 = arith.addf %943, %960 : vector<16x16xf32>
    %c0_506 = arith.constant 0 : index
    %c0_507 = arith.constant 0 : index
    %c1_508 = arith.constant 1 : index
    %962 = vector.load %arg5[%c0_506, %c0_507, %c1_508] : memref<4x18x18xf32, #tpu.memory_space<vmem>>, vector<1x16x16xf32>
    %963 = vector.shape_cast %962 : vector<1x16x16xf32> to vector<16x16xf32>
    %c1_509 = arith.constant 1 : index
    %c1_510 = arith.constant 1 : index
    %964 = memref.load %arg1[%c1_509, %c1_510] : memref<2x144xf32, #tpu.memory_space<smem>>
    %965 = vector.broadcast %964 : f32 to vector<16x16xf32>
    %966 = arith.mulf %965, %963 : vector<16x16xf32>
    %967 = arith.addf %949, %966 : vector<16x16xf32>
    %c1_511 = arith.constant 1 : index
    %c37_512 = arith.constant 37 : index
    %968 = memref.load %arg1[%c1_511, %c37_512] : memref<2x144xf32, #tpu.memory_space<smem>>
    %969 = vector.broadcast %968 : f32 to vector<16x16xf32>
    %970 = arith.mulf %969, %963 : vector<16x16xf32>
    %971 = arith.addf %953, %970 : vector<16x16xf32>
    %c1_513 = arith.constant 1 : index
    %c73_514 = arith.constant 73 : index
    %972 = memref.load %arg1[%c1_513, %c73_514] : memref<2x144xf32, #tpu.memory_space<smem>>
    %973 = vector.broadcast %972 : f32 to vector<16x16xf32>
    %974 = arith.mulf %973, %963 : vector<16x16xf32>
    %975 = arith.addf %957, %974 : vector<16x16xf32>
    %c1_515 = arith.constant 1 : index
    %c109_516 = arith.constant 109 : index
    %976 = memref.load %arg1[%c1_515, %c109_516] : memref<2x144xf32, #tpu.memory_space<smem>>
    %977 = vector.broadcast %976 : f32 to vector<16x16xf32>
    %978 = arith.mulf %977, %963 : vector<16x16xf32>
    %979 = arith.addf %961, %978 : vector<16x16xf32>
    %c0_517 = arith.constant 0 : index
    %c0_518 = arith.constant 0 : index
    %c2_519 = arith.constant 2 : index
    %980 = vector.load %arg5[%c0_517, %c0_518, %c2_519] : memref<4x18x18xf32, #tpu.memory_space<vmem>>, vector<1x16x16xf32>
    %981 = vector.shape_cast %980 : vector<1x16x16xf32> to vector<16x16xf32>
    %c1_520 = arith.constant 1 : index
    %c2_521 = arith.constant 2 : index
    %982 = memref.load %arg1[%c1_520, %c2_521] : memref<2x144xf32, #tpu.memory_space<smem>>
    %983 = vector.broadcast %982 : f32 to vector<16x16xf32>
    %984 = arith.mulf %983, %981 : vector<16x16xf32>
    %985 = arith.addf %967, %984 : vector<16x16xf32>
    %c1_522 = arith.constant 1 : index
    %c38_523 = arith.constant 38 : index
    %986 = memref.load %arg1[%c1_522, %c38_523] : memref<2x144xf32, #tpu.memory_space<smem>>
    %987 = vector.broadcast %986 : f32 to vector<16x16xf32>
    %988 = arith.mulf %987, %981 : vector<16x16xf32>
    %989 = arith.addf %971, %988 : vector<16x16xf32>
    %c1_524 = arith.constant 1 : index
    %c74_525 = arith.constant 74 : index
    %990 = memref.load %arg1[%c1_524, %c74_525] : memref<2x144xf32, #tpu.memory_space<smem>>
    %991 = vector.broadcast %990 : f32 to vector<16x16xf32>
    %992 = arith.mulf %991, %981 : vector<16x16xf32>
    %993 = arith.addf %975, %992 : vector<16x16xf32>
    %c1_526 = arith.constant 1 : index
    %c110_527 = arith.constant 110 : index
    %994 = memref.load %arg1[%c1_526, %c110_527] : memref<2x144xf32, #tpu.memory_space<smem>>
    %995 = vector.broadcast %994 : f32 to vector<16x16xf32>
    %996 = arith.mulf %995, %981 : vector<16x16xf32>
    %997 = arith.addf %979, %996 : vector<16x16xf32>
    %c0_528 = arith.constant 0 : index
    %c1_529 = arith.constant 1 : index
    %c0_530 = arith.constant 0 : index
    %998 = vector.load %arg5[%c0_528, %c1_529, %c0_530] : memref<4x18x18xf32, #tpu.memory_space<vmem>>, vector<1x16x16xf32>
    %999 = vector.shape_cast %998 : vector<1x16x16xf32> to vector<16x16xf32>
    %c1_531 = arith.constant 1 : index
    %c3_532 = arith.constant 3 : index
    %1000 = memref.load %arg1[%c1_531, %c3_532] : memref<2x144xf32, #tpu.memory_space<smem>>
    %1001 = vector.broadcast %1000 : f32 to vector<16x16xf32>
    %1002 = arith.mulf %1001, %999 : vector<16x16xf32>
    %1003 = arith.addf %985, %1002 : vector<16x16xf32>
    %c1_533 = arith.constant 1 : index
    %c39_534 = arith.constant 39 : index
    %1004 = memref.load %arg1[%c1_533, %c39_534] : memref<2x144xf32, #tpu.memory_space<smem>>
    %1005 = vector.broadcast %1004 : f32 to vector<16x16xf32>
    %1006 = arith.mulf %1005, %999 : vector<16x16xf32>
    %1007 = arith.addf %989, %1006 : vector<16x16xf32>
    %c1_535 = arith.constant 1 : index
    %c75_536 = arith.constant 75 : index
    %1008 = memref.load %arg1[%c1_535, %c75_536] : memref<2x144xf32, #tpu.memory_space<smem>>
    %1009 = vector.broadcast %1008 : f32 to vector<16x16xf32>
    %1010 = arith.mulf %1009, %999 : vector<16x16xf32>
    %1011 = arith.addf %993, %1010 : vector<16x16xf32>
    %c1_537 = arith.constant 1 : index
    %c111_538 = arith.constant 111 : index
    %1012 = memref.load %arg1[%c1_537, %c111_538] : memref<2x144xf32, #tpu.memory_space<smem>>
    %1013 = vector.broadcast %1012 : f32 to vector<16x16xf32>
    %1014 = arith.mulf %1013, %999 : vector<16x16xf32>
    %1015 = arith.addf %997, %1014 : vector<16x16xf32>
    %c0_539 = arith.constant 0 : index
    %c1_540 = arith.constant 1 : index
    %c1_541 = arith.constant 1 : index
    %1016 = vector.load %arg5[%c0_539, %c1_540, %c1_541] : memref<4x18x18xf32, #tpu.memory_space<vmem>>, vector<1x16x16xf32>
    %1017 = vector.shape_cast %1016 : vector<1x16x16xf32> to vector<16x16xf32>
    %c1_542 = arith.constant 1 : index
    %c4_543 = arith.constant 4 : index
    %1018 = memref.load %arg1[%c1_542, %c4_543] : memref<2x144xf32, #tpu.memory_space<smem>>
    %1019 = vector.broadcast %1018 : f32 to vector<16x16xf32>
    %1020 = arith.mulf %1019, %1017 : vector<16x16xf32>
    %1021 = arith.addf %1003, %1020 : vector<16x16xf32>
    %c1_544 = arith.constant 1 : index
    %c40_545 = arith.constant 40 : index
    %1022 = memref.load %arg1[%c1_544, %c40_545] : memref<2x144xf32, #tpu.memory_space<smem>>
    %1023 = vector.broadcast %1022 : f32 to vector<16x16xf32>
    %1024 = arith.mulf %1023, %1017 : vector<16x16xf32>
    %1025 = arith.addf %1007, %1024 : vector<16x16xf32>
    %c1_546 = arith.constant 1 : index
    %c76_547 = arith.constant 76 : index
    %1026 = memref.load %arg1[%c1_546, %c76_547] : memref<2x144xf32, #tpu.memory_space<smem>>
    %1027 = vector.broadcast %1026 : f32 to vector<16x16xf32>
    %1028 = arith.mulf %1027, %1017 : vector<16x16xf32>
    %1029 = arith.addf %1011, %1028 : vector<16x16xf32>
    %c1_548 = arith.constant 1 : index
    %c112_549 = arith.constant 112 : index
    %1030 = memref.load %arg1[%c1_548, %c112_549] : memref<2x144xf32, #tpu.memory_space<smem>>
    %1031 = vector.broadcast %1030 : f32 to vector<16x16xf32>
    %1032 = arith.mulf %1031, %1017 : vector<16x16xf32>
    %1033 = arith.addf %1015, %1032 : vector<16x16xf32>
    %c0_550 = arith.constant 0 : index
    %c1_551 = arith.constant 1 : index
    %c2_552 = arith.constant 2 : index
    %1034 = vector.load %arg5[%c0_550, %c1_551, %c2_552] : memref<4x18x18xf32, #tpu.memory_space<vmem>>, vector<1x16x16xf32>
    %1035 = vector.shape_cast %1034 : vector<1x16x16xf32> to vector<16x16xf32>
    %c1_553 = arith.constant 1 : index
    %c5_554 = arith.constant 5 : index
    %1036 = memref.load %arg1[%c1_553, %c5_554] : memref<2x144xf32, #tpu.memory_space<smem>>
    %1037 = vector.broadcast %1036 : f32 to vector<16x16xf32>
    %1038 = arith.mulf %1037, %1035 : vector<16x16xf32>
    %1039 = arith.addf %1021, %1038 : vector<16x16xf32>
    %c1_555 = arith.constant 1 : index
    %c41_556 = arith.constant 41 : index
    %1040 = memref.load %arg1[%c1_555, %c41_556] : memref<2x144xf32, #tpu.memory_space<smem>>
    %1041 = vector.broadcast %1040 : f32 to vector<16x16xf32>
    %1042 = arith.mulf %1041, %1035 : vector<16x16xf32>
    %1043 = arith.addf %1025, %1042 : vector<16x16xf32>
    %c1_557 = arith.constant 1 : index
    %c77_558 = arith.constant 77 : index
    %1044 = memref.load %arg1[%c1_557, %c77_558] : memref<2x144xf32, #tpu.memory_space<smem>>
    %1045 = vector.broadcast %1044 : f32 to vector<16x16xf32>
    %1046 = arith.mulf %1045, %1035 : vector<16x16xf32>
    %1047 = arith.addf %1029, %1046 : vector<16x16xf32>
    %c1_559 = arith.constant 1 : index
    %c113_560 = arith.constant 113 : index
    %1048 = memref.load %arg1[%c1_559, %c113_560] : memref<2x144xf32, #tpu.memory_space<smem>>
    %1049 = vector.broadcast %1048 : f32 to vector<16x16xf32>
    %1050 = arith.mulf %1049, %1035 : vector<16x16xf32>
    %1051 = arith.addf %1033, %1050 : vector<16x16xf32>
    %c0_561 = arith.constant 0 : index
    %c2_562 = arith.constant 2 : index
    %c0_563 = arith.constant 0 : index
    %1052 = vector.load %arg5[%c0_561, %c2_562, %c0_563] : memref<4x18x18xf32, #tpu.memory_space<vmem>>, vector<1x16x16xf32>
    %1053 = vector.shape_cast %1052 : vector<1x16x16xf32> to vector<16x16xf32>
    %c1_564 = arith.constant 1 : index
    %c6_565 = arith.constant 6 : index
    %1054 = memref.load %arg1[%c1_564, %c6_565] : memref<2x144xf32, #tpu.memory_space<smem>>
    %1055 = vector.broadcast %1054 : f32 to vector<16x16xf32>
    %1056 = arith.mulf %1055, %1053 : vector<16x16xf32>
    %1057 = arith.addf %1039, %1056 : vector<16x16xf32>
    %c1_566 = arith.constant 1 : index
    %c42_567 = arith.constant 42 : index
    %1058 = memref.load %arg1[%c1_566, %c42_567] : memref<2x144xf32, #tpu.memory_space<smem>>
    %1059 = vector.broadcast %1058 : f32 to vector<16x16xf32>
    %1060 = arith.mulf %1059, %1053 : vector<16x16xf32>
    %1061 = arith.addf %1043, %1060 : vector<16x16xf32>
    %c1_568 = arith.constant 1 : index
    %c78_569 = arith.constant 78 : index
    %1062 = memref.load %arg1[%c1_568, %c78_569] : memref<2x144xf32, #tpu.memory_space<smem>>
    %1063 = vector.broadcast %1062 : f32 to vector<16x16xf32>
    %1064 = arith.mulf %1063, %1053 : vector<16x16xf32>
    %1065 = arith.addf %1047, %1064 : vector<16x16xf32>
    %c1_570 = arith.constant 1 : index
    %c114_571 = arith.constant 114 : index
    %1066 = memref.load %arg1[%c1_570, %c114_571] : memref<2x144xf32, #tpu.memory_space<smem>>
    %1067 = vector.broadcast %1066 : f32 to vector<16x16xf32>
    %1068 = arith.mulf %1067, %1053 : vector<16x16xf32>
    %1069 = arith.addf %1051, %1068 : vector<16x16xf32>
    %c0_572 = arith.constant 0 : index
    %c2_573 = arith.constant 2 : index
    %c1_574 = arith.constant 1 : index
    %1070 = vector.load %arg5[%c0_572, %c2_573, %c1_574] : memref<4x18x18xf32, #tpu.memory_space<vmem>>, vector<1x16x16xf32>
    %1071 = vector.shape_cast %1070 : vector<1x16x16xf32> to vector<16x16xf32>
    %c1_575 = arith.constant 1 : index
    %c7_576 = arith.constant 7 : index
    %1072 = memref.load %arg1[%c1_575, %c7_576] : memref<2x144xf32, #tpu.memory_space<smem>>
    %1073 = vector.broadcast %1072 : f32 to vector<16x16xf32>
    %1074 = arith.mulf %1073, %1071 : vector<16x16xf32>
    %1075 = arith.addf %1057, %1074 : vector<16x16xf32>
    %c1_577 = arith.constant 1 : index
    %c43_578 = arith.constant 43 : index
    %1076 = memref.load %arg1[%c1_577, %c43_578] : memref<2x144xf32, #tpu.memory_space<smem>>
    %1077 = vector.broadcast %1076 : f32 to vector<16x16xf32>
    %1078 = arith.mulf %1077, %1071 : vector<16x16xf32>
    %1079 = arith.addf %1061, %1078 : vector<16x16xf32>
    %c1_579 = arith.constant 1 : index
    %c79_580 = arith.constant 79 : index
    %1080 = memref.load %arg1[%c1_579, %c79_580] : memref<2x144xf32, #tpu.memory_space<smem>>
    %1081 = vector.broadcast %1080 : f32 to vector<16x16xf32>
    %1082 = arith.mulf %1081, %1071 : vector<16x16xf32>
    %1083 = arith.addf %1065, %1082 : vector<16x16xf32>
    %c1_581 = arith.constant 1 : index
    %c115_582 = arith.constant 115 : index
    %1084 = memref.load %arg1[%c1_581, %c115_582] : memref<2x144xf32, #tpu.memory_space<smem>>
    %1085 = vector.broadcast %1084 : f32 to vector<16x16xf32>
    %1086 = arith.mulf %1085, %1071 : vector<16x16xf32>
    %1087 = arith.addf %1069, %1086 : vector<16x16xf32>
    %c0_583 = arith.constant 0 : index
    %c2_584 = arith.constant 2 : index
    %c2_585 = arith.constant 2 : index
    %1088 = vector.load %arg5[%c0_583, %c2_584, %c2_585] : memref<4x18x18xf32, #tpu.memory_space<vmem>>, vector<1x16x16xf32>
    %1089 = vector.shape_cast %1088 : vector<1x16x16xf32> to vector<16x16xf32>
    %c1_586 = arith.constant 1 : index
    %c8_587 = arith.constant 8 : index
    %1090 = memref.load %arg1[%c1_586, %c8_587] : memref<2x144xf32, #tpu.memory_space<smem>>
    %1091 = vector.broadcast %1090 : f32 to vector<16x16xf32>
    %1092 = arith.mulf %1091, %1089 : vector<16x16xf32>
    %1093 = arith.addf %1075, %1092 : vector<16x16xf32>
    %c1_588 = arith.constant 1 : index
    %c44_589 = arith.constant 44 : index
    %1094 = memref.load %arg1[%c1_588, %c44_589] : memref<2x144xf32, #tpu.memory_space<smem>>
    %1095 = vector.broadcast %1094 : f32 to vector<16x16xf32>
    %1096 = arith.mulf %1095, %1089 : vector<16x16xf32>
    %1097 = arith.addf %1079, %1096 : vector<16x16xf32>
    %c1_590 = arith.constant 1 : index
    %c80_591 = arith.constant 80 : index
    %1098 = memref.load %arg1[%c1_590, %c80_591] : memref<2x144xf32, #tpu.memory_space<smem>>
    %1099 = vector.broadcast %1098 : f32 to vector<16x16xf32>
    %1100 = arith.mulf %1099, %1089 : vector<16x16xf32>
    %1101 = arith.addf %1083, %1100 : vector<16x16xf32>
    %c1_592 = arith.constant 1 : index
    %c116_593 = arith.constant 116 : index
    %1102 = memref.load %arg1[%c1_592, %c116_593] : memref<2x144xf32, #tpu.memory_space<smem>>
    %1103 = vector.broadcast %1102 : f32 to vector<16x16xf32>
    %1104 = arith.mulf %1103, %1089 : vector<16x16xf32>
    %1105 = arith.addf %1087, %1104 : vector<16x16xf32>
    %c1_594 = arith.constant 1 : index
    %c0_595 = arith.constant 0 : index
    %c0_596 = arith.constant 0 : index
    %1106 = vector.load %arg5[%c1_594, %c0_595, %c0_596] : memref<4x18x18xf32, #tpu.memory_space<vmem>>, vector<1x16x16xf32>
    %1107 = vector.shape_cast %1106 : vector<1x16x16xf32> to vector<16x16xf32>
    %c1_597 = arith.constant 1 : index
    %c9_598 = arith.constant 9 : index
    %1108 = memref.load %arg1[%c1_597, %c9_598] : memref<2x144xf32, #tpu.memory_space<smem>>
    %1109 = vector.broadcast %1108 : f32 to vector<16x16xf32>
    %1110 = arith.mulf %1109, %1107 : vector<16x16xf32>
    %1111 = arith.addf %1093, %1110 : vector<16x16xf32>
    %c1_599 = arith.constant 1 : index
    %c45_600 = arith.constant 45 : index
    %1112 = memref.load %arg1[%c1_599, %c45_600] : memref<2x144xf32, #tpu.memory_space<smem>>
    %1113 = vector.broadcast %1112 : f32 to vector<16x16xf32>
    %1114 = arith.mulf %1113, %1107 : vector<16x16xf32>
    %1115 = arith.addf %1097, %1114 : vector<16x16xf32>
    %c1_601 = arith.constant 1 : index
    %c81_602 = arith.constant 81 : index
    %1116 = memref.load %arg1[%c1_601, %c81_602] : memref<2x144xf32, #tpu.memory_space<smem>>
    %1117 = vector.broadcast %1116 : f32 to vector<16x16xf32>
    %1118 = arith.mulf %1117, %1107 : vector<16x16xf32>
    %1119 = arith.addf %1101, %1118 : vector<16x16xf32>
    %c1_603 = arith.constant 1 : index
    %c117_604 = arith.constant 117 : index
    %1120 = memref.load %arg1[%c1_603, %c117_604] : memref<2x144xf32, #tpu.memory_space<smem>>
    %1121 = vector.broadcast %1120 : f32 to vector<16x16xf32>
    %1122 = arith.mulf %1121, %1107 : vector<16x16xf32>
    %1123 = arith.addf %1105, %1122 : vector<16x16xf32>
    %c1_605 = arith.constant 1 : index
    %c0_606 = arith.constant 0 : index
    %c1_607 = arith.constant 1 : index
    %1124 = vector.load %arg5[%c1_605, %c0_606, %c1_607] : memref<4x18x18xf32, #tpu.memory_space<vmem>>, vector<1x16x16xf32>
    %1125 = vector.shape_cast %1124 : vector<1x16x16xf32> to vector<16x16xf32>
    %c1_608 = arith.constant 1 : index
    %c10_609 = arith.constant 10 : index
    %1126 = memref.load %arg1[%c1_608, %c10_609] : memref<2x144xf32, #tpu.memory_space<smem>>
    %1127 = vector.broadcast %1126 : f32 to vector<16x16xf32>
    %1128 = arith.mulf %1127, %1125 : vector<16x16xf32>
    %1129 = arith.addf %1111, %1128 : vector<16x16xf32>
    %c1_610 = arith.constant 1 : index
    %c46_611 = arith.constant 46 : index
    %1130 = memref.load %arg1[%c1_610, %c46_611] : memref<2x144xf32, #tpu.memory_space<smem>>
    %1131 = vector.broadcast %1130 : f32 to vector<16x16xf32>
    %1132 = arith.mulf %1131, %1125 : vector<16x16xf32>
    %1133 = arith.addf %1115, %1132 : vector<16x16xf32>
    %c1_612 = arith.constant 1 : index
    %c82_613 = arith.constant 82 : index
    %1134 = memref.load %arg1[%c1_612, %c82_613] : memref<2x144xf32, #tpu.memory_space<smem>>
    %1135 = vector.broadcast %1134 : f32 to vector<16x16xf32>
    %1136 = arith.mulf %1135, %1125 : vector<16x16xf32>
    %1137 = arith.addf %1119, %1136 : vector<16x16xf32>
    %c1_614 = arith.constant 1 : index
    %c118_615 = arith.constant 118 : index
    %1138 = memref.load %arg1[%c1_614, %c118_615] : memref<2x144xf32, #tpu.memory_space<smem>>
    %1139 = vector.broadcast %1138 : f32 to vector<16x16xf32>
    %1140 = arith.mulf %1139, %1125 : vector<16x16xf32>
    %1141 = arith.addf %1123, %1140 : vector<16x16xf32>
    %c1_616 = arith.constant 1 : index
    %c0_617 = arith.constant 0 : index
    %c2_618 = arith.constant 2 : index
    %1142 = vector.load %arg5[%c1_616, %c0_617, %c2_618] : memref<4x18x18xf32, #tpu.memory_space<vmem>>, vector<1x16x16xf32>
    %1143 = vector.shape_cast %1142 : vector<1x16x16xf32> to vector<16x16xf32>
    %c1_619 = arith.constant 1 : index
    %c11_620 = arith.constant 11 : index
    %1144 = memref.load %arg1[%c1_619, %c11_620] : memref<2x144xf32, #tpu.memory_space<smem>>
    %1145 = vector.broadcast %1144 : f32 to vector<16x16xf32>
    %1146 = arith.mulf %1145, %1143 : vector<16x16xf32>
    %1147 = arith.addf %1129, %1146 : vector<16x16xf32>
    %c1_621 = arith.constant 1 : index
    %c47_622 = arith.constant 47 : index
    %1148 = memref.load %arg1[%c1_621, %c47_622] : memref<2x144xf32, #tpu.memory_space<smem>>
    %1149 = vector.broadcast %1148 : f32 to vector<16x16xf32>
    %1150 = arith.mulf %1149, %1143 : vector<16x16xf32>
    %1151 = arith.addf %1133, %1150 : vector<16x16xf32>
    %c1_623 = arith.constant 1 : index
    %c83_624 = arith.constant 83 : index
    %1152 = memref.load %arg1[%c1_623, %c83_624] : memref<2x144xf32, #tpu.memory_space<smem>>
    %1153 = vector.broadcast %1152 : f32 to vector<16x16xf32>
    %1154 = arith.mulf %1153, %1143 : vector<16x16xf32>
    %1155 = arith.addf %1137, %1154 : vector<16x16xf32>
    %c1_625 = arith.constant 1 : index
    %c119_626 = arith.constant 119 : index
    %1156 = memref.load %arg1[%c1_625, %c119_626] : memref<2x144xf32, #tpu.memory_space<smem>>
    %1157 = vector.broadcast %1156 : f32 to vector<16x16xf32>
    %1158 = arith.mulf %1157, %1143 : vector<16x16xf32>
    %1159 = arith.addf %1141, %1158 : vector<16x16xf32>
    %c1_627 = arith.constant 1 : index
    %c1_628 = arith.constant 1 : index
    %c0_629 = arith.constant 0 : index
    %1160 = vector.load %arg5[%c1_627, %c1_628, %c0_629] : memref<4x18x18xf32, #tpu.memory_space<vmem>>, vector<1x16x16xf32>
    %1161 = vector.shape_cast %1160 : vector<1x16x16xf32> to vector<16x16xf32>
    %c1_630 = arith.constant 1 : index
    %c12_631 = arith.constant 12 : index
    %1162 = memref.load %arg1[%c1_630, %c12_631] : memref<2x144xf32, #tpu.memory_space<smem>>
    %1163 = vector.broadcast %1162 : f32 to vector<16x16xf32>
    %1164 = arith.mulf %1163, %1161 : vector<16x16xf32>
    %1165 = arith.addf %1147, %1164 : vector<16x16xf32>
    %c1_632 = arith.constant 1 : index
    %c48_633 = arith.constant 48 : index
    %1166 = memref.load %arg1[%c1_632, %c48_633] : memref<2x144xf32, #tpu.memory_space<smem>>
    %1167 = vector.broadcast %1166 : f32 to vector<16x16xf32>
    %1168 = arith.mulf %1167, %1161 : vector<16x16xf32>
    %1169 = arith.addf %1151, %1168 : vector<16x16xf32>
    %c1_634 = arith.constant 1 : index
    %c84_635 = arith.constant 84 : index
    %1170 = memref.load %arg1[%c1_634, %c84_635] : memref<2x144xf32, #tpu.memory_space<smem>>
    %1171 = vector.broadcast %1170 : f32 to vector<16x16xf32>
    %1172 = arith.mulf %1171, %1161 : vector<16x16xf32>
    %1173 = arith.addf %1155, %1172 : vector<16x16xf32>
    %c1_636 = arith.constant 1 : index
    %c120_637 = arith.constant 120 : index
    %1174 = memref.load %arg1[%c1_636, %c120_637] : memref<2x144xf32, #tpu.memory_space<smem>>
    %1175 = vector.broadcast %1174 : f32 to vector<16x16xf32>
    %1176 = arith.mulf %1175, %1161 : vector<16x16xf32>
    %1177 = arith.addf %1159, %1176 : vector<16x16xf32>
    %c1_638 = arith.constant 1 : index
    %c1_639 = arith.constant 1 : index
    %c1_640 = arith.constant 1 : index
    %1178 = vector.load %arg5[%c1_638, %c1_639, %c1_640] : memref<4x18x18xf32, #tpu.memory_space<vmem>>, vector<1x16x16xf32>
    %1179 = vector.shape_cast %1178 : vector<1x16x16xf32> to vector<16x16xf32>
    %c1_641 = arith.constant 1 : index
    %c13_642 = arith.constant 13 : index
    %1180 = memref.load %arg1[%c1_641, %c13_642] : memref<2x144xf32, #tpu.memory_space<smem>>
    %1181 = vector.broadcast %1180 : f32 to vector<16x16xf32>
    %1182 = arith.mulf %1181, %1179 : vector<16x16xf32>
    %1183 = arith.addf %1165, %1182 : vector<16x16xf32>
    %c1_643 = arith.constant 1 : index
    %c49_644 = arith.constant 49 : index
    %1184 = memref.load %arg1[%c1_643, %c49_644] : memref<2x144xf32, #tpu.memory_space<smem>>
    %1185 = vector.broadcast %1184 : f32 to vector<16x16xf32>
    %1186 = arith.mulf %1185, %1179 : vector<16x16xf32>
    %1187 = arith.addf %1169, %1186 : vector<16x16xf32>
    %c1_645 = arith.constant 1 : index
    %c85_646 = arith.constant 85 : index
    %1188 = memref.load %arg1[%c1_645, %c85_646] : memref<2x144xf32, #tpu.memory_space<smem>>
    %1189 = vector.broadcast %1188 : f32 to vector<16x16xf32>
    %1190 = arith.mulf %1189, %1179 : vector<16x16xf32>
    %1191 = arith.addf %1173, %1190 : vector<16x16xf32>
    %c1_647 = arith.constant 1 : index
    %c121_648 = arith.constant 121 : index
    %1192 = memref.load %arg1[%c1_647, %c121_648] : memref<2x144xf32, #tpu.memory_space<smem>>
    %1193 = vector.broadcast %1192 : f32 to vector<16x16xf32>
    %1194 = arith.mulf %1193, %1179 : vector<16x16xf32>
    %1195 = arith.addf %1177, %1194 : vector<16x16xf32>
    %c1_649 = arith.constant 1 : index
    %c1_650 = arith.constant 1 : index
    %c2_651 = arith.constant 2 : index
    %1196 = vector.load %arg5[%c1_649, %c1_650, %c2_651] : memref<4x18x18xf32, #tpu.memory_space<vmem>>, vector<1x16x16xf32>
    %1197 = vector.shape_cast %1196 : vector<1x16x16xf32> to vector<16x16xf32>
    %c1_652 = arith.constant 1 : index
    %c14_653 = arith.constant 14 : index
    %1198 = memref.load %arg1[%c1_652, %c14_653] : memref<2x144xf32, #tpu.memory_space<smem>>
    %1199 = vector.broadcast %1198 : f32 to vector<16x16xf32>
    %1200 = arith.mulf %1199, %1197 : vector<16x16xf32>
    %1201 = arith.addf %1183, %1200 : vector<16x16xf32>
    %c1_654 = arith.constant 1 : index
    %c50_655 = arith.constant 50 : index
    %1202 = memref.load %arg1[%c1_654, %c50_655] : memref<2x144xf32, #tpu.memory_space<smem>>
    %1203 = vector.broadcast %1202 : f32 to vector<16x16xf32>
    %1204 = arith.mulf %1203, %1197 : vector<16x16xf32>
    %1205 = arith.addf %1187, %1204 : vector<16x16xf32>
    %c1_656 = arith.constant 1 : index
    %c86_657 = arith.constant 86 : index
    %1206 = memref.load %arg1[%c1_656, %c86_657] : memref<2x144xf32, #tpu.memory_space<smem>>
    %1207 = vector.broadcast %1206 : f32 to vector<16x16xf32>
    %1208 = arith.mulf %1207, %1197 : vector<16x16xf32>
    %1209 = arith.addf %1191, %1208 : vector<16x16xf32>
    %c1_658 = arith.constant 1 : index
    %c122_659 = arith.constant 122 : index
    %1210 = memref.load %arg1[%c1_658, %c122_659] : memref<2x144xf32, #tpu.memory_space<smem>>
    %1211 = vector.broadcast %1210 : f32 to vector<16x16xf32>
    %1212 = arith.mulf %1211, %1197 : vector<16x16xf32>
    %1213 = arith.addf %1195, %1212 : vector<16x16xf32>
    %c1_660 = arith.constant 1 : index
    %c2_661 = arith.constant 2 : index
    %c0_662 = arith.constant 0 : index
    %1214 = vector.load %arg5[%c1_660, %c2_661, %c0_662] : memref<4x18x18xf32, #tpu.memory_space<vmem>>, vector<1x16x16xf32>
    %1215 = vector.shape_cast %1214 : vector<1x16x16xf32> to vector<16x16xf32>
    %c1_663 = arith.constant 1 : index
    %c15_664 = arith.constant 15 : index
    %1216 = memref.load %arg1[%c1_663, %c15_664] : memref<2x144xf32, #tpu.memory_space<smem>>
    %1217 = vector.broadcast %1216 : f32 to vector<16x16xf32>
    %1218 = arith.mulf %1217, %1215 : vector<16x16xf32>
    %1219 = arith.addf %1201, %1218 : vector<16x16xf32>
    %c1_665 = arith.constant 1 : index
    %c51_666 = arith.constant 51 : index
    %1220 = memref.load %arg1[%c1_665, %c51_666] : memref<2x144xf32, #tpu.memory_space<smem>>
    %1221 = vector.broadcast %1220 : f32 to vector<16x16xf32>
    %1222 = arith.mulf %1221, %1215 : vector<16x16xf32>
    %1223 = arith.addf %1205, %1222 : vector<16x16xf32>
    %c1_667 = arith.constant 1 : index
    %c87_668 = arith.constant 87 : index
    %1224 = memref.load %arg1[%c1_667, %c87_668] : memref<2x144xf32, #tpu.memory_space<smem>>
    %1225 = vector.broadcast %1224 : f32 to vector<16x16xf32>
    %1226 = arith.mulf %1225, %1215 : vector<16x16xf32>
    %1227 = arith.addf %1209, %1226 : vector<16x16xf32>
    %c1_669 = arith.constant 1 : index
    %c123_670 = arith.constant 123 : index
    %1228 = memref.load %arg1[%c1_669, %c123_670] : memref<2x144xf32, #tpu.memory_space<smem>>
    %1229 = vector.broadcast %1228 : f32 to vector<16x16xf32>
    %1230 = arith.mulf %1229, %1215 : vector<16x16xf32>
    %1231 = arith.addf %1213, %1230 : vector<16x16xf32>
    %c1_671 = arith.constant 1 : index
    %c2_672 = arith.constant 2 : index
    %c1_673 = arith.constant 1 : index
    %1232 = vector.load %arg5[%c1_671, %c2_672, %c1_673] : memref<4x18x18xf32, #tpu.memory_space<vmem>>, vector<1x16x16xf32>
    %1233 = vector.shape_cast %1232 : vector<1x16x16xf32> to vector<16x16xf32>
    %c1_674 = arith.constant 1 : index
    %c16_675 = arith.constant 16 : index
    %1234 = memref.load %arg1[%c1_674, %c16_675] : memref<2x144xf32, #tpu.memory_space<smem>>
    %1235 = vector.broadcast %1234 : f32 to vector<16x16xf32>
    %1236 = arith.mulf %1235, %1233 : vector<16x16xf32>
    %1237 = arith.addf %1219, %1236 : vector<16x16xf32>
    %c1_676 = arith.constant 1 : index
    %c52_677 = arith.constant 52 : index
    %1238 = memref.load %arg1[%c1_676, %c52_677] : memref<2x144xf32, #tpu.memory_space<smem>>
    %1239 = vector.broadcast %1238 : f32 to vector<16x16xf32>
    %1240 = arith.mulf %1239, %1233 : vector<16x16xf32>
    %1241 = arith.addf %1223, %1240 : vector<16x16xf32>
    %c1_678 = arith.constant 1 : index
    %c88_679 = arith.constant 88 : index
    %1242 = memref.load %arg1[%c1_678, %c88_679] : memref<2x144xf32, #tpu.memory_space<smem>>
    %1243 = vector.broadcast %1242 : f32 to vector<16x16xf32>
    %1244 = arith.mulf %1243, %1233 : vector<16x16xf32>
    %1245 = arith.addf %1227, %1244 : vector<16x16xf32>
    %c1_680 = arith.constant 1 : index
    %c124_681 = arith.constant 124 : index
    %1246 = memref.load %arg1[%c1_680, %c124_681] : memref<2x144xf32, #tpu.memory_space<smem>>
    %1247 = vector.broadcast %1246 : f32 to vector<16x16xf32>
    %1248 = arith.mulf %1247, %1233 : vector<16x16xf32>
    %1249 = arith.addf %1231, %1248 : vector<16x16xf32>
    %c1_682 = arith.constant 1 : index
    %c2_683 = arith.constant 2 : index
    %c2_684 = arith.constant 2 : index
    %1250 = vector.load %arg5[%c1_682, %c2_683, %c2_684] : memref<4x18x18xf32, #tpu.memory_space<vmem>>, vector<1x16x16xf32>
    %1251 = vector.shape_cast %1250 : vector<1x16x16xf32> to vector<16x16xf32>
    %c1_685 = arith.constant 1 : index
    %c17_686 = arith.constant 17 : index
    %1252 = memref.load %arg1[%c1_685, %c17_686] : memref<2x144xf32, #tpu.memory_space<smem>>
    %1253 = vector.broadcast %1252 : f32 to vector<16x16xf32>
    %1254 = arith.mulf %1253, %1251 : vector<16x16xf32>
    %1255 = arith.addf %1237, %1254 : vector<16x16xf32>
    %c1_687 = arith.constant 1 : index
    %c53_688 = arith.constant 53 : index
    %1256 = memref.load %arg1[%c1_687, %c53_688] : memref<2x144xf32, #tpu.memory_space<smem>>
    %1257 = vector.broadcast %1256 : f32 to vector<16x16xf32>
    %1258 = arith.mulf %1257, %1251 : vector<16x16xf32>
    %1259 = arith.addf %1241, %1258 : vector<16x16xf32>
    %c1_689 = arith.constant 1 : index
    %c89_690 = arith.constant 89 : index
    %1260 = memref.load %arg1[%c1_689, %c89_690] : memref<2x144xf32, #tpu.memory_space<smem>>
    %1261 = vector.broadcast %1260 : f32 to vector<16x16xf32>
    %1262 = arith.mulf %1261, %1251 : vector<16x16xf32>
    %1263 = arith.addf %1245, %1262 : vector<16x16xf32>
    %c1_691 = arith.constant 1 : index
    %c125_692 = arith.constant 125 : index
    %1264 = memref.load %arg1[%c1_691, %c125_692] : memref<2x144xf32, #tpu.memory_space<smem>>
    %1265 = vector.broadcast %1264 : f32 to vector<16x16xf32>
    %1266 = arith.mulf %1265, %1251 : vector<16x16xf32>
    %1267 = arith.addf %1249, %1266 : vector<16x16xf32>
    %c2_693 = arith.constant 2 : index
    %c0_694 = arith.constant 0 : index
    %c0_695 = arith.constant 0 : index
    %1268 = vector.load %arg5[%c2_693, %c0_694, %c0_695] : memref<4x18x18xf32, #tpu.memory_space<vmem>>, vector<1x16x16xf32>
    %1269 = vector.shape_cast %1268 : vector<1x16x16xf32> to vector<16x16xf32>
    %c1_696 = arith.constant 1 : index
    %c18_697 = arith.constant 18 : index
    %1270 = memref.load %arg1[%c1_696, %c18_697] : memref<2x144xf32, #tpu.memory_space<smem>>
    %1271 = vector.broadcast %1270 : f32 to vector<16x16xf32>
    %1272 = arith.mulf %1271, %1269 : vector<16x16xf32>
    %1273 = arith.addf %1255, %1272 : vector<16x16xf32>
    %c1_698 = arith.constant 1 : index
    %c54_699 = arith.constant 54 : index
    %1274 = memref.load %arg1[%c1_698, %c54_699] : memref<2x144xf32, #tpu.memory_space<smem>>
    %1275 = vector.broadcast %1274 : f32 to vector<16x16xf32>
    %1276 = arith.mulf %1275, %1269 : vector<16x16xf32>
    %1277 = arith.addf %1259, %1276 : vector<16x16xf32>
    %c1_700 = arith.constant 1 : index
    %c90_701 = arith.constant 90 : index
    %1278 = memref.load %arg1[%c1_700, %c90_701] : memref<2x144xf32, #tpu.memory_space<smem>>
    %1279 = vector.broadcast %1278 : f32 to vector<16x16xf32>
    %1280 = arith.mulf %1279, %1269 : vector<16x16xf32>
    %1281 = arith.addf %1263, %1280 : vector<16x16xf32>
    %c1_702 = arith.constant 1 : index
    %c126_703 = arith.constant 126 : index
    %1282 = memref.load %arg1[%c1_702, %c126_703] : memref<2x144xf32, #tpu.memory_space<smem>>
    %1283 = vector.broadcast %1282 : f32 to vector<16x16xf32>
    %1284 = arith.mulf %1283, %1269 : vector<16x16xf32>
    %1285 = arith.addf %1267, %1284 : vector<16x16xf32>
    %c2_704 = arith.constant 2 : index
    %c0_705 = arith.constant 0 : index
    %c1_706 = arith.constant 1 : index
    %1286 = vector.load %arg5[%c2_704, %c0_705, %c1_706] : memref<4x18x18xf32, #tpu.memory_space<vmem>>, vector<1x16x16xf32>
    %1287 = vector.shape_cast %1286 : vector<1x16x16xf32> to vector<16x16xf32>
    %c1_707 = arith.constant 1 : index
    %c19_708 = arith.constant 19 : index
    %1288 = memref.load %arg1[%c1_707, %c19_708] : memref<2x144xf32, #tpu.memory_space<smem>>
    %1289 = vector.broadcast %1288 : f32 to vector<16x16xf32>
    %1290 = arith.mulf %1289, %1287 : vector<16x16xf32>
    %1291 = arith.addf %1273, %1290 : vector<16x16xf32>
    %c1_709 = arith.constant 1 : index
    %c55_710 = arith.constant 55 : index
    %1292 = memref.load %arg1[%c1_709, %c55_710] : memref<2x144xf32, #tpu.memory_space<smem>>
    %1293 = vector.broadcast %1292 : f32 to vector<16x16xf32>
    %1294 = arith.mulf %1293, %1287 : vector<16x16xf32>
    %1295 = arith.addf %1277, %1294 : vector<16x16xf32>
    %c1_711 = arith.constant 1 : index
    %c91_712 = arith.constant 91 : index
    %1296 = memref.load %arg1[%c1_711, %c91_712] : memref<2x144xf32, #tpu.memory_space<smem>>
    %1297 = vector.broadcast %1296 : f32 to vector<16x16xf32>
    %1298 = arith.mulf %1297, %1287 : vector<16x16xf32>
    %1299 = arith.addf %1281, %1298 : vector<16x16xf32>
    %c1_713 = arith.constant 1 : index
    %c127_714 = arith.constant 127 : index
    %1300 = memref.load %arg1[%c1_713, %c127_714] : memref<2x144xf32, #tpu.memory_space<smem>>
    %1301 = vector.broadcast %1300 : f32 to vector<16x16xf32>
    %1302 = arith.mulf %1301, %1287 : vector<16x16xf32>
    %1303 = arith.addf %1285, %1302 : vector<16x16xf32>
    %c2_715 = arith.constant 2 : index
    %c0_716 = arith.constant 0 : index
    %c2_717 = arith.constant 2 : index
    %1304 = vector.load %arg5[%c2_715, %c0_716, %c2_717] : memref<4x18x18xf32, #tpu.memory_space<vmem>>, vector<1x16x16xf32>
    %1305 = vector.shape_cast %1304 : vector<1x16x16xf32> to vector<16x16xf32>
    %c1_718 = arith.constant 1 : index
    %c20_719 = arith.constant 20 : index
    %1306 = memref.load %arg1[%c1_718, %c20_719] : memref<2x144xf32, #tpu.memory_space<smem>>
    %1307 = vector.broadcast %1306 : f32 to vector<16x16xf32>
    %1308 = arith.mulf %1307, %1305 : vector<16x16xf32>
    %1309 = arith.addf %1291, %1308 : vector<16x16xf32>
    %c1_720 = arith.constant 1 : index
    %c56_721 = arith.constant 56 : index
    %1310 = memref.load %arg1[%c1_720, %c56_721] : memref<2x144xf32, #tpu.memory_space<smem>>
    %1311 = vector.broadcast %1310 : f32 to vector<16x16xf32>
    %1312 = arith.mulf %1311, %1305 : vector<16x16xf32>
    %1313 = arith.addf %1295, %1312 : vector<16x16xf32>
    %c1_722 = arith.constant 1 : index
    %c92_723 = arith.constant 92 : index
    %1314 = memref.load %arg1[%c1_722, %c92_723] : memref<2x144xf32, #tpu.memory_space<smem>>
    %1315 = vector.broadcast %1314 : f32 to vector<16x16xf32>
    %1316 = arith.mulf %1315, %1305 : vector<16x16xf32>
    %1317 = arith.addf %1299, %1316 : vector<16x16xf32>
    %c1_724 = arith.constant 1 : index
    %c128_725 = arith.constant 128 : index
    %1318 = memref.load %arg1[%c1_724, %c128_725] : memref<2x144xf32, #tpu.memory_space<smem>>
    %1319 = vector.broadcast %1318 : f32 to vector<16x16xf32>
    %1320 = arith.mulf %1319, %1305 : vector<16x16xf32>
    %1321 = arith.addf %1303, %1320 : vector<16x16xf32>
    %c2_726 = arith.constant 2 : index
    %c1_727 = arith.constant 1 : index
    %c0_728 = arith.constant 0 : index
    %1322 = vector.load %arg5[%c2_726, %c1_727, %c0_728] : memref<4x18x18xf32, #tpu.memory_space<vmem>>, vector<1x16x16xf32>
    %1323 = vector.shape_cast %1322 : vector<1x16x16xf32> to vector<16x16xf32>
    %c1_729 = arith.constant 1 : index
    %c21_730 = arith.constant 21 : index
    %1324 = memref.load %arg1[%c1_729, %c21_730] : memref<2x144xf32, #tpu.memory_space<smem>>
    %1325 = vector.broadcast %1324 : f32 to vector<16x16xf32>
    %1326 = arith.mulf %1325, %1323 : vector<16x16xf32>
    %1327 = arith.addf %1309, %1326 : vector<16x16xf32>
    %c1_731 = arith.constant 1 : index
    %c57_732 = arith.constant 57 : index
    %1328 = memref.load %arg1[%c1_731, %c57_732] : memref<2x144xf32, #tpu.memory_space<smem>>
    %1329 = vector.broadcast %1328 : f32 to vector<16x16xf32>
    %1330 = arith.mulf %1329, %1323 : vector<16x16xf32>
    %1331 = arith.addf %1313, %1330 : vector<16x16xf32>
    %c1_733 = arith.constant 1 : index
    %c93_734 = arith.constant 93 : index
    %1332 = memref.load %arg1[%c1_733, %c93_734] : memref<2x144xf32, #tpu.memory_space<smem>>
    %1333 = vector.broadcast %1332 : f32 to vector<16x16xf32>
    %1334 = arith.mulf %1333, %1323 : vector<16x16xf32>
    %1335 = arith.addf %1317, %1334 : vector<16x16xf32>
    %c1_735 = arith.constant 1 : index
    %c129_736 = arith.constant 129 : index
    %1336 = memref.load %arg1[%c1_735, %c129_736] : memref<2x144xf32, #tpu.memory_space<smem>>
    %1337 = vector.broadcast %1336 : f32 to vector<16x16xf32>
    %1338 = arith.mulf %1337, %1323 : vector<16x16xf32>
    %1339 = arith.addf %1321, %1338 : vector<16x16xf32>
    %c2_737 = arith.constant 2 : index
    %c1_738 = arith.constant 1 : index
    %c1_739 = arith.constant 1 : index
    %1340 = vector.load %arg5[%c2_737, %c1_738, %c1_739] : memref<4x18x18xf32, #tpu.memory_space<vmem>>, vector<1x16x16xf32>
    %1341 = vector.shape_cast %1340 : vector<1x16x16xf32> to vector<16x16xf32>
    %c1_740 = arith.constant 1 : index
    %c22_741 = arith.constant 22 : index
    %1342 = memref.load %arg1[%c1_740, %c22_741] : memref<2x144xf32, #tpu.memory_space<smem>>
    %1343 = vector.broadcast %1342 : f32 to vector<16x16xf32>
    %1344 = arith.mulf %1343, %1341 : vector<16x16xf32>
    %1345 = arith.addf %1327, %1344 : vector<16x16xf32>
    %c1_742 = arith.constant 1 : index
    %c58_743 = arith.constant 58 : index
    %1346 = memref.load %arg1[%c1_742, %c58_743] : memref<2x144xf32, #tpu.memory_space<smem>>
    %1347 = vector.broadcast %1346 : f32 to vector<16x16xf32>
    %1348 = arith.mulf %1347, %1341 : vector<16x16xf32>
    %1349 = arith.addf %1331, %1348 : vector<16x16xf32>
    %c1_744 = arith.constant 1 : index
    %c94_745 = arith.constant 94 : index
    %1350 = memref.load %arg1[%c1_744, %c94_745] : memref<2x144xf32, #tpu.memory_space<smem>>
    %1351 = vector.broadcast %1350 : f32 to vector<16x16xf32>
    %1352 = arith.mulf %1351, %1341 : vector<16x16xf32>
    %1353 = arith.addf %1335, %1352 : vector<16x16xf32>
    %c1_746 = arith.constant 1 : index
    %c130_747 = arith.constant 130 : index
    %1354 = memref.load %arg1[%c1_746, %c130_747] : memref<2x144xf32, #tpu.memory_space<smem>>
    %1355 = vector.broadcast %1354 : f32 to vector<16x16xf32>
    %1356 = arith.mulf %1355, %1341 : vector<16x16xf32>
    %1357 = arith.addf %1339, %1356 : vector<16x16xf32>
    %c2_748 = arith.constant 2 : index
    %c1_749 = arith.constant 1 : index
    %c2_750 = arith.constant 2 : index
    %1358 = vector.load %arg5[%c2_748, %c1_749, %c2_750] : memref<4x18x18xf32, #tpu.memory_space<vmem>>, vector<1x16x16xf32>
    %1359 = vector.shape_cast %1358 : vector<1x16x16xf32> to vector<16x16xf32>
    %c1_751 = arith.constant 1 : index
    %c23_752 = arith.constant 23 : index
    %1360 = memref.load %arg1[%c1_751, %c23_752] : memref<2x144xf32, #tpu.memory_space<smem>>
    %1361 = vector.broadcast %1360 : f32 to vector<16x16xf32>
    %1362 = arith.mulf %1361, %1359 : vector<16x16xf32>
    %1363 = arith.addf %1345, %1362 : vector<16x16xf32>
    %c1_753 = arith.constant 1 : index
    %c59_754 = arith.constant 59 : index
    %1364 = memref.load %arg1[%c1_753, %c59_754] : memref<2x144xf32, #tpu.memory_space<smem>>
    %1365 = vector.broadcast %1364 : f32 to vector<16x16xf32>
    %1366 = arith.mulf %1365, %1359 : vector<16x16xf32>
    %1367 = arith.addf %1349, %1366 : vector<16x16xf32>
    %c1_755 = arith.constant 1 : index
    %c95_756 = arith.constant 95 : index
    %1368 = memref.load %arg1[%c1_755, %c95_756] : memref<2x144xf32, #tpu.memory_space<smem>>
    %1369 = vector.broadcast %1368 : f32 to vector<16x16xf32>
    %1370 = arith.mulf %1369, %1359 : vector<16x16xf32>
    %1371 = arith.addf %1353, %1370 : vector<16x16xf32>
    %c1_757 = arith.constant 1 : index
    %c131_758 = arith.constant 131 : index
    %1372 = memref.load %arg1[%c1_757, %c131_758] : memref<2x144xf32, #tpu.memory_space<smem>>
    %1373 = vector.broadcast %1372 : f32 to vector<16x16xf32>
    %1374 = arith.mulf %1373, %1359 : vector<16x16xf32>
    %1375 = arith.addf %1357, %1374 : vector<16x16xf32>
    %c2_759 = arith.constant 2 : index
    %c2_760 = arith.constant 2 : index
    %c0_761 = arith.constant 0 : index
    %1376 = vector.load %arg5[%c2_759, %c2_760, %c0_761] : memref<4x18x18xf32, #tpu.memory_space<vmem>>, vector<1x16x16xf32>
    %1377 = vector.shape_cast %1376 : vector<1x16x16xf32> to vector<16x16xf32>
    %c1_762 = arith.constant 1 : index
    %c24_763 = arith.constant 24 : index
    %1378 = memref.load %arg1[%c1_762, %c24_763] : memref<2x144xf32, #tpu.memory_space<smem>>
    %1379 = vector.broadcast %1378 : f32 to vector<16x16xf32>
    %1380 = arith.mulf %1379, %1377 : vector<16x16xf32>
    %1381 = arith.addf %1363, %1380 : vector<16x16xf32>
    %c1_764 = arith.constant 1 : index
    %c60_765 = arith.constant 60 : index
    %1382 = memref.load %arg1[%c1_764, %c60_765] : memref<2x144xf32, #tpu.memory_space<smem>>
    %1383 = vector.broadcast %1382 : f32 to vector<16x16xf32>
    %1384 = arith.mulf %1383, %1377 : vector<16x16xf32>
    %1385 = arith.addf %1367, %1384 : vector<16x16xf32>
    %c1_766 = arith.constant 1 : index
    %c96_767 = arith.constant 96 : index
    %1386 = memref.load %arg1[%c1_766, %c96_767] : memref<2x144xf32, #tpu.memory_space<smem>>
    %1387 = vector.broadcast %1386 : f32 to vector<16x16xf32>
    %1388 = arith.mulf %1387, %1377 : vector<16x16xf32>
    %1389 = arith.addf %1371, %1388 : vector<16x16xf32>
    %c1_768 = arith.constant 1 : index
    %c132_769 = arith.constant 132 : index
    %1390 = memref.load %arg1[%c1_768, %c132_769] : memref<2x144xf32, #tpu.memory_space<smem>>
    %1391 = vector.broadcast %1390 : f32 to vector<16x16xf32>
    %1392 = arith.mulf %1391, %1377 : vector<16x16xf32>
    %1393 = arith.addf %1375, %1392 : vector<16x16xf32>
    %c2_770 = arith.constant 2 : index
    %c2_771 = arith.constant 2 : index
    %c1_772 = arith.constant 1 : index
    %1394 = vector.load %arg5[%c2_770, %c2_771, %c1_772] : memref<4x18x18xf32, #tpu.memory_space<vmem>>, vector<1x16x16xf32>
    %1395 = vector.shape_cast %1394 : vector<1x16x16xf32> to vector<16x16xf32>
    %c1_773 = arith.constant 1 : index
    %c25_774 = arith.constant 25 : index
    %1396 = memref.load %arg1[%c1_773, %c25_774] : memref<2x144xf32, #tpu.memory_space<smem>>
    %1397 = vector.broadcast %1396 : f32 to vector<16x16xf32>
    %1398 = arith.mulf %1397, %1395 : vector<16x16xf32>
    %1399 = arith.addf %1381, %1398 : vector<16x16xf32>
    %c1_775 = arith.constant 1 : index
    %c61_776 = arith.constant 61 : index
    %1400 = memref.load %arg1[%c1_775, %c61_776] : memref<2x144xf32, #tpu.memory_space<smem>>
    %1401 = vector.broadcast %1400 : f32 to vector<16x16xf32>
    %1402 = arith.mulf %1401, %1395 : vector<16x16xf32>
    %1403 = arith.addf %1385, %1402 : vector<16x16xf32>
    %c1_777 = arith.constant 1 : index
    %c97_778 = arith.constant 97 : index
    %1404 = memref.load %arg1[%c1_777, %c97_778] : memref<2x144xf32, #tpu.memory_space<smem>>
    %1405 = vector.broadcast %1404 : f32 to vector<16x16xf32>
    %1406 = arith.mulf %1405, %1395 : vector<16x16xf32>
    %1407 = arith.addf %1389, %1406 : vector<16x16xf32>
    %c1_779 = arith.constant 1 : index
    %c133_780 = arith.constant 133 : index
    %1408 = memref.load %arg1[%c1_779, %c133_780] : memref<2x144xf32, #tpu.memory_space<smem>>
    %1409 = vector.broadcast %1408 : f32 to vector<16x16xf32>
    %1410 = arith.mulf %1409, %1395 : vector<16x16xf32>
    %1411 = arith.addf %1393, %1410 : vector<16x16xf32>
    %c2_781 = arith.constant 2 : index
    %c2_782 = arith.constant 2 : index
    %c2_783 = arith.constant 2 : index
    %1412 = vector.load %arg5[%c2_781, %c2_782, %c2_783] : memref<4x18x18xf32, #tpu.memory_space<vmem>>, vector<1x16x16xf32>
    %1413 = vector.shape_cast %1412 : vector<1x16x16xf32> to vector<16x16xf32>
    %c1_784 = arith.constant 1 : index
    %c26_785 = arith.constant 26 : index
    %1414 = memref.load %arg1[%c1_784, %c26_785] : memref<2x144xf32, #tpu.memory_space<smem>>
    %1415 = vector.broadcast %1414 : f32 to vector<16x16xf32>
    %1416 = arith.mulf %1415, %1413 : vector<16x16xf32>
    %1417 = arith.addf %1399, %1416 : vector<16x16xf32>
    %c1_786 = arith.constant 1 : index
    %c62_787 = arith.constant 62 : index
    %1418 = memref.load %arg1[%c1_786, %c62_787] : memref<2x144xf32, #tpu.memory_space<smem>>
    %1419 = vector.broadcast %1418 : f32 to vector<16x16xf32>
    %1420 = arith.mulf %1419, %1413 : vector<16x16xf32>
    %1421 = arith.addf %1403, %1420 : vector<16x16xf32>
    %c1_788 = arith.constant 1 : index
    %c98_789 = arith.constant 98 : index
    %1422 = memref.load %arg1[%c1_788, %c98_789] : memref<2x144xf32, #tpu.memory_space<smem>>
    %1423 = vector.broadcast %1422 : f32 to vector<16x16xf32>
    %1424 = arith.mulf %1423, %1413 : vector<16x16xf32>
    %1425 = arith.addf %1407, %1424 : vector<16x16xf32>
    %c1_790 = arith.constant 1 : index
    %c134_791 = arith.constant 134 : index
    %1426 = memref.load %arg1[%c1_790, %c134_791] : memref<2x144xf32, #tpu.memory_space<smem>>
    %1427 = vector.broadcast %1426 : f32 to vector<16x16xf32>
    %1428 = arith.mulf %1427, %1413 : vector<16x16xf32>
    %1429 = arith.addf %1411, %1428 : vector<16x16xf32>
    %c3_792 = arith.constant 3 : index
    %c0_793 = arith.constant 0 : index
    %c0_794 = arith.constant 0 : index
    %1430 = vector.load %arg5[%c3_792, %c0_793, %c0_794] : memref<4x18x18xf32, #tpu.memory_space<vmem>>, vector<1x16x16xf32>
    %1431 = vector.shape_cast %1430 : vector<1x16x16xf32> to vector<16x16xf32>
    %c1_795 = arith.constant 1 : index
    %c27_796 = arith.constant 27 : index
    %1432 = memref.load %arg1[%c1_795, %c27_796] : memref<2x144xf32, #tpu.memory_space<smem>>
    %1433 = vector.broadcast %1432 : f32 to vector<16x16xf32>
    %1434 = arith.mulf %1433, %1431 : vector<16x16xf32>
    %1435 = arith.addf %1417, %1434 : vector<16x16xf32>
    %c1_797 = arith.constant 1 : index
    %c63_798 = arith.constant 63 : index
    %1436 = memref.load %arg1[%c1_797, %c63_798] : memref<2x144xf32, #tpu.memory_space<smem>>
    %1437 = vector.broadcast %1436 : f32 to vector<16x16xf32>
    %1438 = arith.mulf %1437, %1431 : vector<16x16xf32>
    %1439 = arith.addf %1421, %1438 : vector<16x16xf32>
    %c1_799 = arith.constant 1 : index
    %c99_800 = arith.constant 99 : index
    %1440 = memref.load %arg1[%c1_799, %c99_800] : memref<2x144xf32, #tpu.memory_space<smem>>
    %1441 = vector.broadcast %1440 : f32 to vector<16x16xf32>
    %1442 = arith.mulf %1441, %1431 : vector<16x16xf32>
    %1443 = arith.addf %1425, %1442 : vector<16x16xf32>
    %c1_801 = arith.constant 1 : index
    %c135_802 = arith.constant 135 : index
    %1444 = memref.load %arg1[%c1_801, %c135_802] : memref<2x144xf32, #tpu.memory_space<smem>>
    %1445 = vector.broadcast %1444 : f32 to vector<16x16xf32>
    %1446 = arith.mulf %1445, %1431 : vector<16x16xf32>
    %1447 = arith.addf %1429, %1446 : vector<16x16xf32>
    %c3_803 = arith.constant 3 : index
    %c0_804 = arith.constant 0 : index
    %c1_805 = arith.constant 1 : index
    %1448 = vector.load %arg5[%c3_803, %c0_804, %c1_805] : memref<4x18x18xf32, #tpu.memory_space<vmem>>, vector<1x16x16xf32>
    %1449 = vector.shape_cast %1448 : vector<1x16x16xf32> to vector<16x16xf32>
    %c1_806 = arith.constant 1 : index
    %c28_807 = arith.constant 28 : index
    %1450 = memref.load %arg1[%c1_806, %c28_807] : memref<2x144xf32, #tpu.memory_space<smem>>
    %1451 = vector.broadcast %1450 : f32 to vector<16x16xf32>
    %1452 = arith.mulf %1451, %1449 : vector<16x16xf32>
    %1453 = arith.addf %1435, %1452 : vector<16x16xf32>
    %c1_808 = arith.constant 1 : index
    %c64_809 = arith.constant 64 : index
    %1454 = memref.load %arg1[%c1_808, %c64_809] : memref<2x144xf32, #tpu.memory_space<smem>>
    %1455 = vector.broadcast %1454 : f32 to vector<16x16xf32>
    %1456 = arith.mulf %1455, %1449 : vector<16x16xf32>
    %1457 = arith.addf %1439, %1456 : vector<16x16xf32>
    %c1_810 = arith.constant 1 : index
    %c100_811 = arith.constant 100 : index
    %1458 = memref.load %arg1[%c1_810, %c100_811] : memref<2x144xf32, #tpu.memory_space<smem>>
    %1459 = vector.broadcast %1458 : f32 to vector<16x16xf32>
    %1460 = arith.mulf %1459, %1449 : vector<16x16xf32>
    %1461 = arith.addf %1443, %1460 : vector<16x16xf32>
    %c1_812 = arith.constant 1 : index
    %c136_813 = arith.constant 136 : index
    %1462 = memref.load %arg1[%c1_812, %c136_813] : memref<2x144xf32, #tpu.memory_space<smem>>
    %1463 = vector.broadcast %1462 : f32 to vector<16x16xf32>
    %1464 = arith.mulf %1463, %1449 : vector<16x16xf32>
    %1465 = arith.addf %1447, %1464 : vector<16x16xf32>
    %c3_814 = arith.constant 3 : index
    %c0_815 = arith.constant 0 : index
    %c2_816 = arith.constant 2 : index
    %1466 = vector.load %arg5[%c3_814, %c0_815, %c2_816] : memref<4x18x18xf32, #tpu.memory_space<vmem>>, vector<1x16x16xf32>
    %1467 = vector.shape_cast %1466 : vector<1x16x16xf32> to vector<16x16xf32>
    %c1_817 = arith.constant 1 : index
    %c29_818 = arith.constant 29 : index
    %1468 = memref.load %arg1[%c1_817, %c29_818] : memref<2x144xf32, #tpu.memory_space<smem>>
    %1469 = vector.broadcast %1468 : f32 to vector<16x16xf32>
    %1470 = arith.mulf %1469, %1467 : vector<16x16xf32>
    %1471 = arith.addf %1453, %1470 : vector<16x16xf32>
    %c1_819 = arith.constant 1 : index
    %c65_820 = arith.constant 65 : index
    %1472 = memref.load %arg1[%c1_819, %c65_820] : memref<2x144xf32, #tpu.memory_space<smem>>
    %1473 = vector.broadcast %1472 : f32 to vector<16x16xf32>
    %1474 = arith.mulf %1473, %1467 : vector<16x16xf32>
    %1475 = arith.addf %1457, %1474 : vector<16x16xf32>
    %c1_821 = arith.constant 1 : index
    %c101_822 = arith.constant 101 : index
    %1476 = memref.load %arg1[%c1_821, %c101_822] : memref<2x144xf32, #tpu.memory_space<smem>>
    %1477 = vector.broadcast %1476 : f32 to vector<16x16xf32>
    %1478 = arith.mulf %1477, %1467 : vector<16x16xf32>
    %1479 = arith.addf %1461, %1478 : vector<16x16xf32>
    %c1_823 = arith.constant 1 : index
    %c137_824 = arith.constant 137 : index
    %1480 = memref.load %arg1[%c1_823, %c137_824] : memref<2x144xf32, #tpu.memory_space<smem>>
    %1481 = vector.broadcast %1480 : f32 to vector<16x16xf32>
    %1482 = arith.mulf %1481, %1467 : vector<16x16xf32>
    %1483 = arith.addf %1465, %1482 : vector<16x16xf32>
    %c3_825 = arith.constant 3 : index
    %c1_826 = arith.constant 1 : index
    %c0_827 = arith.constant 0 : index
    %1484 = vector.load %arg5[%c3_825, %c1_826, %c0_827] : memref<4x18x18xf32, #tpu.memory_space<vmem>>, vector<1x16x16xf32>
    %1485 = vector.shape_cast %1484 : vector<1x16x16xf32> to vector<16x16xf32>
    %c1_828 = arith.constant 1 : index
    %c30_829 = arith.constant 30 : index
    %1486 = memref.load %arg1[%c1_828, %c30_829] : memref<2x144xf32, #tpu.memory_space<smem>>
    %1487 = vector.broadcast %1486 : f32 to vector<16x16xf32>
    %1488 = arith.mulf %1487, %1485 : vector<16x16xf32>
    %1489 = arith.addf %1471, %1488 : vector<16x16xf32>
    %c1_830 = arith.constant 1 : index
    %c66_831 = arith.constant 66 : index
    %1490 = memref.load %arg1[%c1_830, %c66_831] : memref<2x144xf32, #tpu.memory_space<smem>>
    %1491 = vector.broadcast %1490 : f32 to vector<16x16xf32>
    %1492 = arith.mulf %1491, %1485 : vector<16x16xf32>
    %1493 = arith.addf %1475, %1492 : vector<16x16xf32>
    %c1_832 = arith.constant 1 : index
    %c102_833 = arith.constant 102 : index
    %1494 = memref.load %arg1[%c1_832, %c102_833] : memref<2x144xf32, #tpu.memory_space<smem>>
    %1495 = vector.broadcast %1494 : f32 to vector<16x16xf32>
    %1496 = arith.mulf %1495, %1485 : vector<16x16xf32>
    %1497 = arith.addf %1479, %1496 : vector<16x16xf32>
    %c1_834 = arith.constant 1 : index
    %c138_835 = arith.constant 138 : index
    %1498 = memref.load %arg1[%c1_834, %c138_835] : memref<2x144xf32, #tpu.memory_space<smem>>
    %1499 = vector.broadcast %1498 : f32 to vector<16x16xf32>
    %1500 = arith.mulf %1499, %1485 : vector<16x16xf32>
    %1501 = arith.addf %1483, %1500 : vector<16x16xf32>
    %c3_836 = arith.constant 3 : index
    %c1_837 = arith.constant 1 : index
    %c1_838 = arith.constant 1 : index
    %1502 = vector.load %arg5[%c3_836, %c1_837, %c1_838] : memref<4x18x18xf32, #tpu.memory_space<vmem>>, vector<1x16x16xf32>
    %1503 = vector.shape_cast %1502 : vector<1x16x16xf32> to vector<16x16xf32>
    %c1_839 = arith.constant 1 : index
    %c31_840 = arith.constant 31 : index
    %1504 = memref.load %arg1[%c1_839, %c31_840] : memref<2x144xf32, #tpu.memory_space<smem>>
    %1505 = vector.broadcast %1504 : f32 to vector<16x16xf32>
    %1506 = arith.mulf %1505, %1503 : vector<16x16xf32>
    %1507 = arith.addf %1489, %1506 : vector<16x16xf32>
    %c1_841 = arith.constant 1 : index
    %c67_842 = arith.constant 67 : index
    %1508 = memref.load %arg1[%c1_841, %c67_842] : memref<2x144xf32, #tpu.memory_space<smem>>
    %1509 = vector.broadcast %1508 : f32 to vector<16x16xf32>
    %1510 = arith.mulf %1509, %1503 : vector<16x16xf32>
    %1511 = arith.addf %1493, %1510 : vector<16x16xf32>
    %c1_843 = arith.constant 1 : index
    %c103_844 = arith.constant 103 : index
    %1512 = memref.load %arg1[%c1_843, %c103_844] : memref<2x144xf32, #tpu.memory_space<smem>>
    %1513 = vector.broadcast %1512 : f32 to vector<16x16xf32>
    %1514 = arith.mulf %1513, %1503 : vector<16x16xf32>
    %1515 = arith.addf %1497, %1514 : vector<16x16xf32>
    %c1_845 = arith.constant 1 : index
    %c139_846 = arith.constant 139 : index
    %1516 = memref.load %arg1[%c1_845, %c139_846] : memref<2x144xf32, #tpu.memory_space<smem>>
    %1517 = vector.broadcast %1516 : f32 to vector<16x16xf32>
    %1518 = arith.mulf %1517, %1503 : vector<16x16xf32>
    %1519 = arith.addf %1501, %1518 : vector<16x16xf32>
    %c3_847 = arith.constant 3 : index
    %c1_848 = arith.constant 1 : index
    %c2_849 = arith.constant 2 : index
    %1520 = vector.load %arg5[%c3_847, %c1_848, %c2_849] : memref<4x18x18xf32, #tpu.memory_space<vmem>>, vector<1x16x16xf32>
    %1521 = vector.shape_cast %1520 : vector<1x16x16xf32> to vector<16x16xf32>
    %c1_850 = arith.constant 1 : index
    %c32_851 = arith.constant 32 : index
    %1522 = memref.load %arg1[%c1_850, %c32_851] : memref<2x144xf32, #tpu.memory_space<smem>>
    %1523 = vector.broadcast %1522 : f32 to vector<16x16xf32>
    %1524 = arith.mulf %1523, %1521 : vector<16x16xf32>
    %1525 = arith.addf %1507, %1524 : vector<16x16xf32>
    %c1_852 = arith.constant 1 : index
    %c68_853 = arith.constant 68 : index
    %1526 = memref.load %arg1[%c1_852, %c68_853] : memref<2x144xf32, #tpu.memory_space<smem>>
    %1527 = vector.broadcast %1526 : f32 to vector<16x16xf32>
    %1528 = arith.mulf %1527, %1521 : vector<16x16xf32>
    %1529 = arith.addf %1511, %1528 : vector<16x16xf32>
    %c1_854 = arith.constant 1 : index
    %c104_855 = arith.constant 104 : index
    %1530 = memref.load %arg1[%c1_854, %c104_855] : memref<2x144xf32, #tpu.memory_space<smem>>
    %1531 = vector.broadcast %1530 : f32 to vector<16x16xf32>
    %1532 = arith.mulf %1531, %1521 : vector<16x16xf32>
    %1533 = arith.addf %1515, %1532 : vector<16x16xf32>
    %c1_856 = arith.constant 1 : index
    %c140_857 = arith.constant 140 : index
    %1534 = memref.load %arg1[%c1_856, %c140_857] : memref<2x144xf32, #tpu.memory_space<smem>>
    %1535 = vector.broadcast %1534 : f32 to vector<16x16xf32>
    %1536 = arith.mulf %1535, %1521 : vector<16x16xf32>
    %1537 = arith.addf %1519, %1536 : vector<16x16xf32>
    %c3_858 = arith.constant 3 : index
    %c2_859 = arith.constant 2 : index
    %c0_860 = arith.constant 0 : index
    %1538 = vector.load %arg5[%c3_858, %c2_859, %c0_860] : memref<4x18x18xf32, #tpu.memory_space<vmem>>, vector<1x16x16xf32>
    %1539 = vector.shape_cast %1538 : vector<1x16x16xf32> to vector<16x16xf32>
    %c1_861 = arith.constant 1 : index
    %c33_862 = arith.constant 33 : index
    %1540 = memref.load %arg1[%c1_861, %c33_862] : memref<2x144xf32, #tpu.memory_space<smem>>
    %1541 = vector.broadcast %1540 : f32 to vector<16x16xf32>
    %1542 = arith.mulf %1541, %1539 : vector<16x16xf32>
    %1543 = arith.addf %1525, %1542 : vector<16x16xf32>
    %c1_863 = arith.constant 1 : index
    %c69_864 = arith.constant 69 : index
    %1544 = memref.load %arg1[%c1_863, %c69_864] : memref<2x144xf32, #tpu.memory_space<smem>>
    %1545 = vector.broadcast %1544 : f32 to vector<16x16xf32>
    %1546 = arith.mulf %1545, %1539 : vector<16x16xf32>
    %1547 = arith.addf %1529, %1546 : vector<16x16xf32>
    %c1_865 = arith.constant 1 : index
    %c105_866 = arith.constant 105 : index
    %1548 = memref.load %arg1[%c1_865, %c105_866] : memref<2x144xf32, #tpu.memory_space<smem>>
    %1549 = vector.broadcast %1548 : f32 to vector<16x16xf32>
    %1550 = arith.mulf %1549, %1539 : vector<16x16xf32>
    %1551 = arith.addf %1533, %1550 : vector<16x16xf32>
    %c1_867 = arith.constant 1 : index
    %c141_868 = arith.constant 141 : index
    %1552 = memref.load %arg1[%c1_867, %c141_868] : memref<2x144xf32, #tpu.memory_space<smem>>
    %1553 = vector.broadcast %1552 : f32 to vector<16x16xf32>
    %1554 = arith.mulf %1553, %1539 : vector<16x16xf32>
    %1555 = arith.addf %1537, %1554 : vector<16x16xf32>
    %c3_869 = arith.constant 3 : index
    %c2_870 = arith.constant 2 : index
    %c1_871 = arith.constant 1 : index
    %1556 = vector.load %arg5[%c3_869, %c2_870, %c1_871] : memref<4x18x18xf32, #tpu.memory_space<vmem>>, vector<1x16x16xf32>
    %1557 = vector.shape_cast %1556 : vector<1x16x16xf32> to vector<16x16xf32>
    %c1_872 = arith.constant 1 : index
    %c34_873 = arith.constant 34 : index
    %1558 = memref.load %arg1[%c1_872, %c34_873] : memref<2x144xf32, #tpu.memory_space<smem>>
    %1559 = vector.broadcast %1558 : f32 to vector<16x16xf32>
    %1560 = arith.mulf %1559, %1557 : vector<16x16xf32>
    %1561 = arith.addf %1543, %1560 : vector<16x16xf32>
    %c1_874 = arith.constant 1 : index
    %c70_875 = arith.constant 70 : index
    %1562 = memref.load %arg1[%c1_874, %c70_875] : memref<2x144xf32, #tpu.memory_space<smem>>
    %1563 = vector.broadcast %1562 : f32 to vector<16x16xf32>
    %1564 = arith.mulf %1563, %1557 : vector<16x16xf32>
    %1565 = arith.addf %1547, %1564 : vector<16x16xf32>
    %c1_876 = arith.constant 1 : index
    %c106_877 = arith.constant 106 : index
    %1566 = memref.load %arg1[%c1_876, %c106_877] : memref<2x144xf32, #tpu.memory_space<smem>>
    %1567 = vector.broadcast %1566 : f32 to vector<16x16xf32>
    %1568 = arith.mulf %1567, %1557 : vector<16x16xf32>
    %1569 = arith.addf %1551, %1568 : vector<16x16xf32>
    %c1_878 = arith.constant 1 : index
    %c142_879 = arith.constant 142 : index
    %1570 = memref.load %arg1[%c1_878, %c142_879] : memref<2x144xf32, #tpu.memory_space<smem>>
    %1571 = vector.broadcast %1570 : f32 to vector<16x16xf32>
    %1572 = arith.mulf %1571, %1557 : vector<16x16xf32>
    %1573 = arith.addf %1555, %1572 : vector<16x16xf32>
    %c3_880 = arith.constant 3 : index
    %c2_881 = arith.constant 2 : index
    %c2_882 = arith.constant 2 : index
    %1574 = vector.load %arg5[%c3_880, %c2_881, %c2_882] : memref<4x18x18xf32, #tpu.memory_space<vmem>>, vector<1x16x16xf32>
    %1575 = vector.shape_cast %1574 : vector<1x16x16xf32> to vector<16x16xf32>
    %c1_883 = arith.constant 1 : index
    %c35_884 = arith.constant 35 : index
    %1576 = memref.load %arg1[%c1_883, %c35_884] : memref<2x144xf32, #tpu.memory_space<smem>>
    %1577 = vector.broadcast %1576 : f32 to vector<16x16xf32>
    %1578 = arith.mulf %1577, %1575 : vector<16x16xf32>
    %1579 = arith.addf %1561, %1578 : vector<16x16xf32>
    %c1_885 = arith.constant 1 : index
    %c71_886 = arith.constant 71 : index
    %1580 = memref.load %arg1[%c1_885, %c71_886] : memref<2x144xf32, #tpu.memory_space<smem>>
    %1581 = vector.broadcast %1580 : f32 to vector<16x16xf32>
    %1582 = arith.mulf %1581, %1575 : vector<16x16xf32>
    %1583 = arith.addf %1565, %1582 : vector<16x16xf32>
    %c1_887 = arith.constant 1 : index
    %c107_888 = arith.constant 107 : index
    %1584 = memref.load %arg1[%c1_887, %c107_888] : memref<2x144xf32, #tpu.memory_space<smem>>
    %1585 = vector.broadcast %1584 : f32 to vector<16x16xf32>
    %1586 = arith.mulf %1585, %1575 : vector<16x16xf32>
    %1587 = arith.addf %1569, %1586 : vector<16x16xf32>
    %c1_889 = arith.constant 1 : index
    %c143_890 = arith.constant 143 : index
    %1588 = memref.load %arg1[%c1_889, %c143_890] : memref<2x144xf32, #tpu.memory_space<smem>>
    %1589 = vector.broadcast %1588 : f32 to vector<16x16xf32>
    %1590 = arith.mulf %1589, %1575 : vector<16x16xf32>
    %1591 = arith.addf %1573, %1590 : vector<16x16xf32>
    %1592 = arith.mulf %1579, %1579 : vector<16x16xf32>
    %1593 = vector.shape_cast %1592 : vector<16x16xf32> to vector<1x16x16xf32>
    %cst_891 = arith.constant dense<0.000000e+00> : vector<1xf32>
    %1594 = vector.multi_reduction <add>, %1593, %cst_891 [1, 2] : vector<1x16x16xf32> to vector<1xf32>
    %1595 = vector.shape_cast %1594 : vector<1xf32> to vector<1x1x1xf32>
    %1596 = vector.extract %1595[0, 0, 0] : f32 from vector<1x1x1xf32>
    %1597 = vector.broadcast %1596 : f32 to vector<1x1xf32>
    %cst_892 = arith.constant 2.560000e+02 : f32
    %1598 = vector.broadcast %cst_892 : f32 to vector<1x1xf32>
    %1599 = arith.divf %1597, %1598 : vector<1x1xf32>
    %cst_893 = arith.constant 9.99999997E-7 : f32
    %1600 = vector.broadcast %cst_893 : f32 to vector<1x1xf32>
    %1601 = arith.addf %1599, %1600 : vector<1x1xf32>
    %1602 = math.rsqrt %1601 : vector<1x1xf32>
    %1603 = vector.broadcast %1602 : vector<1x1xf32> to vector<16x16xf32>
    %1604 = arith.mulf %1579, %1603 : vector<16x16xf32>
    %c5_894 = arith.constant 5 : index
    %c0_895 = arith.constant 0 : index
    %1605 = memref.load %arg2[%c5_894, %c0_895] : memref<7x4xf32, #tpu.memory_space<smem>>
    %1606 = vector.broadcast %1605 : f32 to vector<16x16xf32>
    %1607 = arith.mulf %1606, %1604 : vector<16x16xf32>
    %c6_896 = arith.constant 6 : index
    %c0_897 = arith.constant 0 : index
    %1608 = memref.load %arg2[%c6_896, %c0_897] : memref<7x4xf32, #tpu.memory_space<smem>>
    %1609 = vector.broadcast %1608 : f32 to vector<16x16xf32>
    %1610 = arith.addf %1607, %1609 : vector<16x16xf32>
    %1611 = arith.addf %1610, %1 : vector<16x16xf32>
    %c0_898 = arith.constant 0 : index
    %c0_899 = arith.constant 0 : index
    %c0_900 = arith.constant 0 : index
    %c0_901 = arith.constant 0 : index
    %1612 = vector.load %arg4[%c0_898, %c0_899, %c0_900, %c0_901] : memref<1x4x16x16xf32, #tpu.memory_space<vmem>>, vector<1x1x16x16xf32>
    %1613 = vector.shape_cast %1612 : vector<1x1x16x16xf32> to vector<16x16xf32>
    %1614 = vector.shape_cast %1611 : vector<16x16xf32> to vector<1x1x16x16xf32>
    tpu.vector_store %arg4[%c0_898, %c0_899, %c0_900, %c0_901], %1614 {strides = array<i32>} : memref<1x4x16x16xf32, #tpu.memory_space<vmem>>, vector<1x1x16x16xf32>,
    %1615 = arith.mulf %1583, %1583 : vector<16x16xf32>
    %1616 = vector.shape_cast %1615 : vector<16x16xf32> to vector<1x16x16xf32>
    %cst_902 = arith.constant dense<0.000000e+00> : vector<1xf32>
    %1617 = vector.multi_reduction <add>, %1616, %cst_902 [1, 2] : vector<1x16x16xf32> to vector<1xf32>
    %1618 = vector.shape_cast %1617 : vector<1xf32> to vector<1x1x1xf32>
    %1619 = vector.extract %1618[0, 0, 0] : f32 from vector<1x1x1xf32>
    %1620 = vector.broadcast %1619 : f32 to vector<1x1xf32>
    %cst_903 = arith.constant 2.560000e+02 : f32
    %1621 = vector.broadcast %cst_903 : f32 to vector<1x1xf32>
    %1622 = arith.divf %1620, %1621 : vector<1x1xf32>
    %cst_904 = arith.constant 9.99999997E-7 : f32
    %1623 = vector.broadcast %cst_904 : f32 to vector<1x1xf32>
    %1624 = arith.addf %1622, %1623 : vector<1x1xf32>
    %1625 = math.rsqrt %1624 : vector<1x1xf32>
    %1626 = vector.broadcast %1625 : vector<1x1xf32> to vector<16x16xf32>
    %1627 = arith.mulf %1583, %1626 : vector<16x16xf32>
    %c5_905 = arith.constant 5 : index
    %c1_906 = arith.constant 1 : index
    %1628 = memref.load %arg2[%c5_905, %c1_906] : memref<7x4xf32, #tpu.memory_space<smem>>
    %1629 = vector.broadcast %1628 : f32 to vector<16x16xf32>
    %1630 = arith.mulf %1629, %1627 : vector<16x16xf32>
    %c6_907 = arith.constant 6 : index
    %c1_908 = arith.constant 1 : index
    %1631 = memref.load %arg2[%c6_907, %c1_908] : memref<7x4xf32, #tpu.memory_space<smem>>
    %1632 = vector.broadcast %1631 : f32 to vector<16x16xf32>
    %1633 = arith.addf %1630, %1632 : vector<16x16xf32>
    %1634 = arith.addf %1633, %3 : vector<16x16xf32>
    %c0_909 = arith.constant 0 : index
    %c1_910 = arith.constant 1 : index
    %c0_911 = arith.constant 0 : index
    %c0_912 = arith.constant 0 : index
    %1635 = vector.load %arg4[%c0_909, %c1_910, %c0_911, %c0_912] : memref<1x4x16x16xf32, #tpu.memory_space<vmem>>, vector<1x1x16x16xf32>
    %1636 = vector.shape_cast %1635 : vector<1x1x16x16xf32> to vector<16x16xf32>
    %1637 = vector.shape_cast %1634 : vector<16x16xf32> to vector<1x1x16x16xf32>
    tpu.vector_store %arg4[%c0_909, %c1_910, %c0_911, %c0_912], %1637 {strides = array<i32>} : memref<1x4x16x16xf32, #tpu.memory_space<vmem>>, vector<1x1x16x16xf32>,
    %1638 = arith.mulf %1587, %1587 : vector<16x16xf32>
    %1639 = vector.shape_cast %1638 : vector<16x16xf32> to vector<1x16x16xf32>
    %cst_913 = arith.constant dense<0.000000e+00> : vector<1xf32>
    %1640 = vector.multi_reduction <add>, %1639, %cst_913 [1, 2] : vector<1x16x16xf32> to vector<1xf32>
    %1641 = vector.shape_cast %1640 : vector<1xf32> to vector<1x1x1xf32>
    %1642 = vector.extract %1641[0, 0, 0] : f32 from vector<1x1x1xf32>
    %1643 = vector.broadcast %1642 : f32 to vector<1x1xf32>
    %cst_914 = arith.constant 2.560000e+02 : f32
    %1644 = vector.broadcast %cst_914 : f32 to vector<1x1xf32>
    %1645 = arith.divf %1643, %1644 : vector<1x1xf32>
    %cst_915 = arith.constant 9.99999997E-7 : f32
    %1646 = vector.broadcast %cst_915 : f32 to vector<1x1xf32>
    %1647 = arith.addf %1645, %1646 : vector<1x1xf32>
    %1648 = math.rsqrt %1647 : vector<1x1xf32>
    %1649 = vector.broadcast %1648 : vector<1x1xf32> to vector<16x16xf32>
    %1650 = arith.mulf %1587, %1649 : vector<16x16xf32>
    %c5_916 = arith.constant 5 : index
    %c2_917 = arith.constant 2 : index
    %1651 = memref.load %arg2[%c5_916, %c2_917] : memref<7x4xf32, #tpu.memory_space<smem>>
    %1652 = vector.broadcast %1651 : f32 to vector<16x16xf32>
    %1653 = arith.mulf %1652, %1650 : vector<16x16xf32>
    %c6_918 = arith.constant 6 : index
    %c2_919 = arith.constant 2 : index
    %1654 = memref.load %arg2[%c6_918, %c2_919] : memref<7x4xf32, #tpu.memory_space<smem>>
    %1655 = vector.broadcast %1654 : f32 to vector<16x16xf32>
    %1656 = arith.addf %1653, %1655 : vector<16x16xf32>
    %1657 = arith.addf %1656, %5 : vector<16x16xf32>
    %c0_920 = arith.constant 0 : index
    %c2_921 = arith.constant 2 : index
    %c0_922 = arith.constant 0 : index
    %c0_923 = arith.constant 0 : index
    %1658 = vector.load %arg4[%c0_920, %c2_921, %c0_922, %c0_923] : memref<1x4x16x16xf32, #tpu.memory_space<vmem>>, vector<1x1x16x16xf32>
    %1659 = vector.shape_cast %1658 : vector<1x1x16x16xf32> to vector<16x16xf32>
    %1660 = vector.shape_cast %1657 : vector<16x16xf32> to vector<1x1x16x16xf32>
    tpu.vector_store %arg4[%c0_920, %c2_921, %c0_922, %c0_923], %1660 {strides = array<i32>} : memref<1x4x16x16xf32, #tpu.memory_space<vmem>>, vector<1x1x16x16xf32>,
    %1661 = arith.mulf %1591, %1591 : vector<16x16xf32>
    %1662 = vector.shape_cast %1661 : vector<16x16xf32> to vector<1x16x16xf32>
    %cst_924 = arith.constant dense<0.000000e+00> : vector<1xf32>
    %1663 = vector.multi_reduction <add>, %1662, %cst_924 [1, 2] : vector<1x16x16xf32> to vector<1xf32>
    %1664 = vector.shape_cast %1663 : vector<1xf32> to vector<1x1x1xf32>
    %1665 = vector.extract %1664[0, 0, 0] : f32 from vector<1x1x1xf32>
    %1666 = vector.broadcast %1665 : f32 to vector<1x1xf32>
    %cst_925 = arith.constant 2.560000e+02 : f32
    %1667 = vector.broadcast %cst_925 : f32 to vector<1x1xf32>
    %1668 = arith.divf %1666, %1667 : vector<1x1xf32>
    %cst_926 = arith.constant 9.99999997E-7 : f32
    %1669 = vector.broadcast %cst_926 : f32 to vector<1x1xf32>
    %1670 = arith.addf %1668, %1669 : vector<1x1xf32>
    %1671 = math.rsqrt %1670 : vector<1x1xf32>
    %1672 = vector.broadcast %1671 : vector<1x1xf32> to vector<16x16xf32>
    %1673 = arith.mulf %1591, %1672 : vector<16x16xf32>
    %c5_927 = arith.constant 5 : index
    %c3_928 = arith.constant 3 : index
    %1674 = memref.load %arg2[%c5_927, %c3_928] : memref<7x4xf32, #tpu.memory_space<smem>>
    %1675 = vector.broadcast %1674 : f32 to vector<16x16xf32>
    %1676 = arith.mulf %1675, %1673 : vector<16x16xf32>
    %c6_929 = arith.constant 6 : index
    %c3_930 = arith.constant 3 : index
    %1677 = memref.load %arg2[%c6_929, %c3_930] : memref<7x4xf32, #tpu.memory_space<smem>>
    %1678 = vector.broadcast %1677 : f32 to vector<16x16xf32>
    %1679 = arith.addf %1676, %1678 : vector<16x16xf32>
    %1680 = arith.addf %1679, %7 : vector<16x16xf32>
    %c0_931 = arith.constant 0 : index
    %c3_932 = arith.constant 3 : index
    %c0_933 = arith.constant 0 : index
    %c0_934 = arith.constant 0 : index
    %1681 = vector.load %arg4[%c0_931, %c3_932, %c0_933, %c0_934] : memref<1x4x16x16xf32, #tpu.memory_space<vmem>>, vector<1x1x16x16xf32>
    %1682 = vector.shape_cast %1681 : vector<1x1x16x16xf32> to vector<16x16xf32>
    %1683 = vector.shape_cast %1680 : vector<16x16xf32> to vector<1x1x16x16xf32>
    tpu.vector_store %arg4[%c0_931, %c3_932, %c0_933, %c0_934], %1683 {strides = array<i32>} : memref<1x4x16x16xf32, #tpu.memory_space<vmem>>, vector<1x1x16x16xf32>,
    return
  }
  func.func @transform_0(%arg0: i32) -> (i32, i32) {
    %c0_i32 = arith.constant 0 : i32
    %c0_i32_0 = arith.constant 0 : i32
    %c0_i32_1 = arith.constant 0 : i32
    return %c0_i32, %c0_i32_0 : i32, i32
  }
  func.func @transform_1(%arg0: i32) -> (i32, i32) {
    %c0_i32 = arith.constant 0 : i32
    %c0_i32_0 = arith.constant 0 : i32
    %c0_i32_1 = arith.constant 0 : i32
    return %c0_i32, %c0_i32_0 : i32, i32
  }
  func.func @transform_2(%arg0: i32) -> (i32, i32, i32, i32) {
    %c0_i32 = arith.constant 0 : i32
    %c0_i32_0 = arith.constant 0 : i32
    %c0_i32_1 = arith.constant 0 : i32
    %c0_i32_2 = arith.constant 0 : i32
    return %arg0, %c0_i32, %c0_i32_0, %c0_i32_1 : i32, i32, i32, i32
  }
  func.func @transform_3(%arg0: i32) -> (i32, i32, i32, i32) {
    %c0_i32 = arith.constant 0 : i32
    %c0_i32_0 = arith.constant 0 : i32
    %c0_i32_1 = arith.constant 0 : i32
    %c0_i32_2 = arith.constant 0 : i32
    return %arg0, %c0_i32, %c0_i32_0, %c0_i32_1 : i32, i32, i32, i32
  }
}

</mosaic_0001>

<llo_original>
// kernel: residual_block.1
$region0: #{residual_block.1}
  #allocation0 [shape = 'u32[]', space=smem, size = 0x4, offset = 0x4, fixed_abs, tag = 'smem constant byte address 0x4 - core index']
  #allocation1 [shape = 'u32[144,128]{1,0:T(1,128)}', space=vmem, size = 0x12000, scoped, tag = 'internal scratch']
  #allocation2 [shape = 'f32[4,18,18]{2,1,0:T(8,128)}', space=vmem, size = 0xc000, scoped, tag = 'scratch operand']
  %s0 = inlined_call_operand.vmem [shape: f32[2,144], index: 0, kind: input, shape index: {}]
  %s1 = inlined_call_operand.vmem [shape: f32[7,4], index: 1, kind: input, shape index: {}]
  %s2 = inlined_call_operand.vmem [shape: f32[2,4,16,16], index: 2, kind: input, shape index: {}]
  %s3 = inlined_call_operand.hbm [shape: f32[2,4,16,16], index: 3, kind: output, shape index: {}]
  %s4 = sld [smem:[#allocation0]]
  $region53: #{residual_block.1} parent=0
    _
  %s6 = ssub.s32 1, %s4
  %s7 = scalar_select 0, %s6, %s4
  $region1: #{residual_block.1} parent=0
    #allocation3 [shape = 'u8[2048]{0}', space=smem, size = 0x800, scoped, tag = 'input window, operand 0, single buffered']
    #allocation4 [shape = 's32[2]{0}', space=sflag, size = 0x8, scoped, tag = 'scoped memory for residual_block.1']
    #allocation5 [shape = 's32[2]{0}', space=sflag, size = 0x8, scoped, tag = 'scoped memory for residual_block.1']
    #allocation6 [shape = 'u8[4096]{0}', space=smem, size = 0x1000, scoped, tag = 'input window, operand 1, single buffered']
    #allocation7 [shape = 's32[1]{0}', space=sflag, size = 0x4, scoped, tag = 'scoped memory for residual_block.1']
    #allocation8 [shape = 'u8[65536]{0}', space=vmem, size = 0x10000, scoped, tag = 'output window, operand 0']
    %8 = vsyncpa [#allocation5], 0
    %9 = vsyncpa [#allocation7], 0
    %10 = vsyncpa [#allocation4], 0
    %s11 = scalar_lea.sflag [#allocation4], 1
    %12 = vsyncpa %s11, 0
    loop: start=0, step=1, limit=4
    $region2: #{residual_block.1} parent=1 // loop_pre_header
      _
    $region3: #{residual_block.1} parent=1 // loop_header
      %s14 = sphi 0, %s18
      %p15 = scmp.ge.s32.totalorder %s14, 4
      %s22 = sphi 0, %s22
      %s24 = sphi 0, %s22
      %s25 = sphi 0, %s24
      %s39 = sphi 0, %s25
      %s43 = sphi 0, %s43
      %s45 = sphi 0, %s43
      %s46 = sphi 0, %s45
      %s60 = sphi 0, %s46
      %s66 = sphi 0, %s68
      %s69 = sphi 0, %s66
      %s70 = sphi 0, %s69
      %s86 = sphi 0, %s70
      %s92 = sphi 0, %s94
      %s95 = sphi 0, %s92
      %s96 = sphi 0, %s95
      %s112 = sphi 0, %s96
    $region4: #{residual_block.1} parent=1 // loop_header_branch
      %17 = sbr.rel (%p15) target = $region8
    $region5: #{residual_block.1} parent=1 // loop_body
      %s19 = ssub.s32 %s14, 1
      %s20 = ssub.s32 %s14, 2
      %s21 = sadd.s32 %s14, 1
      %s23 = sadd.s32 %s22, 1
      %p26 = scmp.eq.s32.totalorder %s14, 1
      %p27 = scmp.ne.s32.totalorder %s22, %s24
      %p28 = scmp.eq.s32.totalorder %s14, 0
      %p29 = por %p27, %p28
      %p30 = scmp.ne.s32.totalorder %s22, %s24
      %p31 = scmp.eq.s32.totalorder %s19, 1
      %p32 = por %p30, %p31
      %p33 = scmp.ne.s32.totalorder %s24, %s25
      %p34 = scmp.eq.s32.totalorder %s19, 0
      %p35 = por %p33, %p34
      %p36 = scmp.ne.s32.totalorder %s24, %s25
      %p37 = scmp.eq.s32.totalorder %s20, 1
      %p38 = por %p36, %p37
      %p40 = scmp.ne.s32.totalorder %s25, %s39
      %p41 = scmp.eq.s32.totalorder %s20, 0
      %p42 = por %p40, %p41
      %s44 = sadd.s32 %s43, 1
      %p47 = scmp.eq.s32.totalorder %s14, 1
      %p48 = scmp.ne.s32.totalorder %s43, %s45
      %p49 = scmp.eq.s32.totalorder %s14, 0
      %p50 = por %p48, %p49
      %p51 = scmp.ne.s32.totalorder %s43, %s45
      %p52 = scmp.eq.s32.totalorder %s19, 1
      %p53 = por %p51, %p52
      %p54 = scmp.ne.s32.totalorder %s45, %s46
      %p55 = scmp.eq.s32.totalorder %s19, 0
      %p56 = por %p54, %p55
      %p57 = scmp.ne.s32.totalorder %s45, %s46
      %p58 = scmp.eq.s32.totalorder %s20, 1
      %p59 = por %p57, %p58
      %p61 = scmp.ne.s32.totalorder %s46, %s60
      %p62 = scmp.eq.s32.totalorder %s20, 0
      %p63 = por %p61, %p62
      %s64 = ssub.s32 %s14, %s21
      %p65 = scmp.eq.s32.totalorder %s64, 0
      %s67 = sadd.s32 %s66, 1
      %s68 = scalar_select %p65, %s66, %s67
      %p71 = pneg %p65
      %p72 = scmp.eq.s32.totalorder %s14, 1
      %p73 = por %p71, %p72
      %p74 = scmp.ne.s32.totalorder %s66, %s69
      %p75 = scmp.eq.s32.totalorder %s14, 0
      %p76 = por %p74, %p75
      %p77 = scmp.ne.s32.totalorder %s66, %s69
      %p78 = scmp.eq.s32.totalorder %s19, 1
      %p79 = por %p77, %p78
      %p80 = scmp.ne.s32.totalorder %s69, %s70
      %p81 = scmp.eq.s32.totalorder %s19, 0
      %p82 = por %p80, %p81
      %p83 = scmp.ne.s32.totalorder %s69, %s70
      %p84 = scmp.eq.s32.totalorder %s20, 1
      %p85 = por %p83, %p84
      %p87 = scmp.ne.s32.totalorder %s70, %s86
      %p88 = scmp.eq.s32.totalorder %s20, 0
      %p89 = por %p87, %p88
      %s90 = ssub.s32 %s14, %s21
      %p91 = scmp.eq.s32.totalorder %s90, 0
      %s93 = sadd.s32 %s92, 1
      %s94 = scalar_select %p91, %s92, %s93
      %p97 = pneg %p91
      %p98 = scmp.eq.s32.totalorder %s14, 1
      %p99 = por %p97, %p98
      %p100 = scmp.ne.s32.totalorder %s92, %s95
      %p101 = scmp.eq.s32.totalorder %s14, 0
      %p102 = por %p100, %p101
      %p103 = scmp.ne.s32.totalorder %s92, %s95
      %p104 = scmp.eq.s32.totalorder %s19, 1
      %p105 = por %p103, %p104
      %p106 = scmp.ne.s32.totalorder %s95, %s96
      %p107 = scmp.eq.s32.totalorder %s19, 0
      %p108 = por %p106, %p107
      %p109 = scmp.ne.s32.totalorder %s95, %s96
      %p110 = scmp.eq.s32.totalorder %s20, 1
      %p111 = por %p109, %p110
      %p113 = scmp.ne.s32.totalorder %s96, %s112
      %p114 = scmp.eq.s32.totalorder %s20, 0
      %p115 = por %p113, %p114
      %p116 = scmp.le.s32.totalorder 1, %s14
      %p117 = scmp.lt.s32.totalorder %s14, 3
      %p118 = pnand %p116, %p117
      %p119 = pneg %p118
      // Predicated region
      $region9: #{residual_block.1} parent=5 // pred_check
        _
      $region10: #{residual_block.1} parent=5 // pred_check_branch
        %121 = sbr.rel (%p118) target = $region12
      $region11: #{residual_block.1} parent=5 // pred_region
        %s122 = ssub.s32 %s14, 1
        // Predicated region
        $region13: #{residual_block.1} parent=11 // pred_check
          %p123 = pneg %p35
        $region14: #{residual_block.1} parent=11 // pred_check_branch
          %125 = sbr.rel (%p123) target = $region16
        $region15: #{residual_block.1} parent=11 // pred_region
          %s127 = ssub.s32 64, 64
          %128 = vsyncadd [#allocation5], %s127
          %s130 = sshll.u32 %s0, 4
          %s131 = int_to_ptr.vmem [resolvable:$true] %s130
          %133 = dma.vmem_to_smem %s131, 64, [#allocation3], [#allocation5]
        $region16: #{residual_block.1} parent=11 // pred_fallthru
          _
        // Predicated region
        $region17: #{residual_block.1} parent=11 // pred_check
          %p134 = pneg %p56
        $region18: #{residual_block.1} parent=11 // pred_check_branch
          %136 = sbr.rel (%p134) target = $region20
        $region19: #{residual_block.1} parent=11 // pred_region
          %s138 = ssub.s32 128, 128
          %139 = vsyncadd [#allocation7], %s138
          %s141 = sshll.u32 %s1, 4
          %s142 = int_to_ptr.vmem [resolvable:$true] %s141
          %144 = dma.vmem_to_smem %s142, 128, [#allocation6], [#allocation7]
        $region20: #{residual_block.1} parent=11 // pred_fallthru
          _
      $region12: #{residual_block.1} parent=5 // pred_fallthru
        _
      %p145 = scmp.lt.s32.totalorder %s14, 2
      // Predicated region
      $region21: #{residual_block.1} parent=5 // pred_check
        %p146 = pneg %p145
      $region22: #{residual_block.1} parent=5 // pred_check_branch
        %148 = sbr.rel (%p146) target = $region24
      $region23: #{residual_block.1} parent=5 // pred_region
        // Predicated region
        $region25: #{residual_block.1} parent=23 // pred_check
          %p149 = pneg %p76
        $region26: #{residual_block.1} parent=23 // pred_check_branch
          %151 = sbr.rel (%p149) target = $region28
        $region27: #{residual_block.1} parent=23 // pred_region
          %p152 = scmp.lt.s32.totalorder %s14, 1
          %s153 = scalar_select %p152, %s14, 1
          %s154 = smul.addr %s153, 8
          %s155 = smul.addr %s154, 8
          %s156 = scalar_lea.vmem %s2, %s155
        $region28: #{residual_block.1} parent=23 // pred_fallthru
          _
      $region24: #{residual_block.1} parent=5 // pred_fallthru
        _
      %p157 = scmp.le.s32.totalorder 1, %s14
      %p158 = scmp.lt.s32.totalorder %s14, 3
      %p159 = pnand %p157, %p158
      %p160 = pneg %p159
      // Predicated region
      $region29: #{residual_block.1} parent=5 // pred_check
        _
      $region30: #{residual_block.1} parent=5 // pred_check_branch
        %162 = sbr.rel (%p159) target = $region32
      $region31: #{residual_block.1} parent=5 // pred_region
        %s163 = ssub.s32 %s14, 1
        // Predicated region
        $region33: #{residual_block.1} parent=31 // pred_check
          %p164 = pneg %p35
        $region34: #{residual_block.1} parent=31 // pred_check_branch
          %166 = sbr.rel (%p164) target = $region36
        $region35: #{residual_block.1} parent=31 // pred_region
          %167 = dma.done [#allocation5], 64
        $region36: #{residual_block.1} parent=31 // pred_fallthru
          _
        // Predicated region
        $region37: #{residual_block.1} parent=31 // pred_check
          %p168 = pneg %p56
        $region38: #{residual_block.1} parent=31 // pred_check_branch
          %170 = sbr.rel (%p168) target = $region40
        $region39: #{residual_block.1} parent=31 // pred_region
          %171 = dma.done [#allocation7], 128
        $region40: #{residual_block.1} parent=31 // pred_fallthru
          _
        %172 = sfence
        %p173 = pneg %p35
        %p174 = pneg %p32
        %p175 = pneg %p56
        %p176 = pneg %p53
        %p177 = scmp.lt.s32.totalorder %s19, 1
        %s178 = scalar_select %p177, %s19, 1
        %s179 = smul.addr %s178, 8
        %s180 = smul.addr %s179, 8
        %s181 = scalar_lea.vmem %s2, %s180
        %p182 = pneg %p82
        %p183 = pneg %p79
        %p184 = pneg %p108
        %p185 = pneg %p105
        %s186 = sand.u32 %s95, 1
        %s187 = scalar_lea.sflag [#allocation4], %s186
        %s188 = sand.u32 %s95, 1
        %s189 = smul.addr %s188, 64
        %s190 = scalar_lea.vmem [#allocation8], %s189
        %p191 = scmp.lt.s32.totalorder %s19, 1
        %s192 = scalar_select %p191, %s19, 1
        %s193 = smul.addr %s192, 8
        %s194 = smul.addr %s193, 8
        %s195 = scalar_lea.vmem %s2, %s194
        %v196 = vld [vmem:[%s195] sm:$0xff]
        %v197 = vld [vmem:[%s195 + $0x8] sm:$0xff]
        %s198 = scalar_lea.vmem %s195, 16
        %v199 = vld [vmem:[%s198] sm:$0xff]
        %v200 = vld [vmem:[%s198 + $0x8] sm:$0xff]
        %s201 = scalar_lea.vmem %s195, 32
        %v202 = vld [vmem:[%s201] sm:$0xff]
        %v203 = vld [vmem:[%s201 + $0x8] sm:$0xff]
        %s204 = scalar_lea.vmem %s195, 48
        %v205 = vld [vmem:[%s204] sm:$0xff]
        %v206 = vld [vmem:[%s204 + $0x8] sm:$0xff]
        %209 = vrot.lane.b32.xlu0 %v196, 1
        %v210 = vpop.permute.xlu0 %209
        %211 = vrot.lane.b32.xlu0 %v197, 1
        %v212 = vpop.permute.xlu0 %211
        %vm215 = vcmask 138248
        %216 = vst.msk [vmem:[#allocation2 + $0x1] sm:$0xff] %vm215, %v210
        %217 = vst.msk [vmem:[#allocation2 + $0x9] sm:$0xff] %vm215, %v212
        %vm218 = vcmask 132105
        %219 = vst.msk [vmem:[#allocation2 - $0x1] sm:$0x2] %vm218, %v210
        %vm220 = vcmask 137230
        %221 = vst.msk [vmem:[#allocation2 + $0xb] sm:$0x40] %vm220, %v212
        %224 = vrot.lane.b32.xlu0 %v199, 1
        %v225 = vpop.permute.xlu0 %224
        %226 = vrot.lane.b32.xlu0 %v200, 1
        %v227 = vpop.permute.xlu0 %226
        %s230 = scalar_lea.vmem [#allocation2], 24
        %231 = vst.msk [vmem:[%s230 + $0x1] sm:$0xff] %vm215, %v225
        %232 = vst.msk [vmem:[%s230 + $0x9] sm:$0xff] %vm215, %v227
        %233 = vst.msk [vmem:[%s230 - $0x1] sm:$0x2] %vm218, %v225
        %234 = vst.msk [vmem:[%s230 + $0xb] sm:$0x40] %vm220, %v227
        %237 = vrot.lane.b32.xlu0 %v202, 1
        %v238 = vpop.permute.xlu0 %237
        %239 = vrot.lane.b32.xlu0 %v203, 1
        %v240 = vpop.permute.xlu0 %239
        %s243 = scalar_lea.vmem [#allocation2], 48
        %244 = vst.msk [vmem:[%s243 + $0x1] sm:$0xff] %vm215, %v238
        %245 = vst.msk [vmem:[%s243 + $0x9] sm:$0xff] %vm215, %v240
        %246 = vst.msk [vmem:[%s243 - $0x1] sm:$0x2] %vm218, %v238
        %247 = vst.msk [vmem:[%s243 + $0xb] sm:$0x40] %vm220, %v240
        %250 = vrot.lane.b32.xlu0 %v205, 1
        %v251 = vpop.permute.xlu0 %250
        %252 = vrot.lane.b32.xlu0 %v206, 1
        %v253 = vpop.permute.xlu0 %252
        %s256 = scalar_lea.vmem [#allocation2], 72
        %257 = vst.msk [vmem:[%s256 + $0x1] sm:$0xff] %vm215, %v251
        %258 = vst.msk [vmem:[%s256 + $0x9] sm:$0xff] %vm215, %v253
        %259 = vst.msk [vmem:[%s256 - $0x1] sm:$0x2] %vm218, %v251
        %260 = vst.msk [vmem:[%s256 + $0xb] sm:$0x40] %vm220, %v253
        %v261 = vld [vmem:[#allocation2] sm:$0xff]
        %v262 = vld [vmem:[#allocation2 + $0x8] sm:$0xff]
        %v263 = vld [vmem:[#allocation2 + $0x10] sm:$0x3]
        %267 = vrot.lane.b32.xlu0 %v261, 126
        %v268 = vpop.permute.xlu0 %267
        %269 = vrot.lane.b32.xlu0 %v262, 126
        %v270 = vpop.permute.xlu0 %269
        %271 = vrot.lane.b32.xlu0 %v263, 126
        %v272 = vpop.permute.xlu0 %271
        %vm276 = vcmask 7168
        %277 = vst.msk [vmem:[#allocation2] sm:$0xff] %vm276, %v268
        %278 = vst.msk [vmem:[#allocation2 + $0x8] sm:$0xff] %vm276, %v270
        %vm279 = vcmask 1024
        %280 = vst.msk [vmem:[#allocation2 + $0x10] sm:$0x3] %vm279, %v272
        %v281 = vld [vmem:[#allocation2] sm:$0xff]
        %v282 = vld [vmem:[#allocation2 + $0x8] sm:$0xff]
        %v283 = vld [vmem:[#allocation2 + $0x10] sm:$0x3]
        %287 = vrot.lane.b32.xlu0 %v281, 2
        %v288 = vpop.permute.xlu0 %287
        %289 = vrot.lane.b32.xlu0 %v282, 2
        %v290 = vpop.permute.xlu0 %289
        %291 = vrot.lane.b32.xlu0 %v283, 2
        %v292 = vpop.permute.xlu0 %291
        %vm296 = vcmask 146568
        %297 = vst.msk [vmem:[#allocation2] sm:$0xff] %vm296, %v288
        %298 = vst.msk [vmem:[#allocation2 + $0x8] sm:$0xff] %vm296, %v290
        %vm299 = vcmask 140424
        %300 = vst.msk [vmem:[#allocation2 + $0x10] sm:$0x3] %vm299, %v292
        %v301 = vld [vmem:[%s230] sm:$0xff]
        %v302 = vld [vmem:[%s230 + $0x8] sm:$0xff]
        %v303 = vld [vmem:[%s230 + $0x10] sm:$0x3]
        %307 = vrot.lane.b32.xlu0 %v301, 126
        %v308 = vpop.permute.xlu0 %307
        %309 = vrot.lane.b32.xlu0 %v302, 126
        %v310 = vpop.permute.xlu0 %309
        %311 = vrot.lane.b32.xlu0 %v303, 126
        %v312 = vpop.permute.xlu0 %311
        %316 = vst.msk [vmem:[%s230] sm:$0xff] %vm276, %v308
        %317 = vst.msk [vmem:[%s230 + $0x8] sm:$0xff] %vm276, %v310
        %318 = vst.msk [vmem:[%s230 + $0x10] sm:$0x3] %vm279, %v312
        %v319 = vld [vmem:[%s230] sm:$0xff]
        %v320 = vld [vmem:[%s230 + $0x8] sm:$0xff]
        %v321 = vld [vmem:[%s230 + $0x10] sm:$0x3]
        %325 = vrot.lane.b32.xlu0 %v319, 2
        %v326 = vpop.permute.xlu0 %325
        %327 = vrot.lane.b32.xlu0 %v320, 2
        %v328 = vpop.permute.xlu0 %327
        %329 = vrot.lane.b32.xlu0 %v321, 2
        %v330 = vpop.permute.xlu0 %329
        %334 = vst.msk [vmem:[%s230] sm:$0xff] %vm296, %v326
        %335 = vst.msk [vmem:[%s230 + $0x8] sm:$0xff] %vm296, %v328
        %336 = vst.msk [vmem:[%s230 + $0x10] sm:$0x3] %vm299, %v330
        %v337 = vld [vmem:[%s243] sm:$0xff]
        %v338 = vld [vmem:[%s243 + $0x8] sm:$0xff]
        %v339 = vld [vmem:[%s243 + $0x10] sm:$0x3]
        %343 = vrot.lane.b32.xlu0 %v337, 126
        %v344 = vpop.permute.xlu0 %343
        %345 = vrot.lane.b32.xlu0 %v338, 126
        %v346 = vpop.permute.xlu0 %345
        %347 = vrot.lane.b32.xlu0 %v339, 126
        %v348 = vpop.permute.xlu0 %347
        %352 = vst.msk [vmem:[%s243] sm:$0xff] %vm276, %v344
        %353 = vst.msk [vmem:[%s243 + $0x8] sm:$0xff] %vm276, %v346
        %354 = vst.msk [vmem:[%s243 + $0x10] sm:$0x3] %vm279, %v348
        %v355 = vld [vmem:[%s243] sm:$0xff]
        %v356 = vld [vmem:[%s243 + $0x8] sm:$0xff]
        %v357 = vld [vmem:[%s243 + $0x10] sm:$0x3]
        %361 = vrot.lane.b32.xlu0 %v355, 2
        %v362 = vpop.permute.xlu0 %361
        %363 = vrot.lane.b32.xlu0 %v356, 2
        %v364 = vpop.permute.xlu0 %363
        %365 = vrot.lane.b32.xlu0 %v357, 2
        %v366 = vpop.permute.xlu0 %365
        %370 = vst.msk [vmem:[%s243] sm:$0xff] %vm296, %v362
        %371 = vst.msk [vmem:[%s243 + $0x8] sm:$0xff] %vm296, %v364
        %372 = vst.msk [vmem:[%s243 + $0x10] sm:$0x3] %vm299, %v366
        %v373 = vld [vmem:[%s256] sm:$0xff]
        %v374 = vld [vmem:[%s256 + $0x8] sm:$0xff]
        %v375 = vld [vmem:[%s256 + $0x10] sm:$0x3]
        %379 = vrot.lane.b32.xlu0 %v373, 126
        %v380 = vpop.permute.xlu0 %379
        %381 = vrot.lane.b32.xlu0 %v374, 126
        %v382 = vpop.permute.xlu0 %381
        %383 = vrot.lane.b32.xlu0 %v375, 126
        %v384 = vpop.permute.xlu0 %383
        %388 = vst.msk [vmem:[%s256] sm:$0xff] %vm276, %v380
        %389 = vst.msk [vmem:[%s256 + $0x8] sm:$0xff] %vm276, %v382
        %390 = vst.msk [vmem:[%s256 + $0x10] sm:$0x3] %vm279, %v384
        %v391 = vld [vmem:[%s256] sm:$0xff]
        %v392 = vld [vmem:[%s256 + $0x8] sm:$0xff]
        %v393 = vld [vmem:[%s256 + $0x10] sm:$0x3]
        %397 = vrot.lane.b32.xlu0 %v391, 2
        %v398 = vpop.permute.xlu0 %397
        %399 = vrot.lane.b32.xlu0 %v392, 2
        %v400 = vpop.permute.xlu0 %399
        %401 = vrot.lane.b32.xlu0 %v393, 2
        %v402 = vpop.permute.xlu0 %401
        %406 = vst.msk [vmem:[%s256] sm:$0xff] %vm296, %v398
        %407 = vst.msk [vmem:[%s256 + $0x8] sm:$0xff] %vm296, %v400
        %408 = vst.msk [vmem:[%s256 + $0x10] sm:$0x3] %vm299, %v402
        %s409 = sld [smem:[#allocation6]]
        %v410 = vstv %s409
        %v411 = vadd.f32 %v410, 0.0
        %s412 = sld [smem:[#allocation6 + $0x1]]
        %v413 = vstv %s412
        %v414 = vadd.f32 %v413, 0.0
        %s415 = sld [smem:[#allocation6 + $0x2]]
        %v416 = vstv %s415
        %v417 = vadd.f32 %v416, 0.0
        %s418 = sld [smem:[#allocation6 + $0x3]]
        %v419 = vstv %s418
        %v420 = vadd.f32 %v419, 0.0
        %v421 = vld [vmem:[#allocation2] sm:$0xff]
        %v422 = vld [vmem:[#allocation2 + $0x8] sm:$0xff]
        %s423 = sld [smem:[#allocation3]]
        %v424 = vstv %s423
        %v425 = vmul.f32 %v424, %v421
        %v426 = vmul.f32 %v424, %v422
        %v427 = vadd.f32 %v411, %v425
        %v428 = vadd.f32 %v411, %v426
        %s429 = sld [smem:[#allocation3 + $0x24]]
        %v430 = vstv %s429
        %v431 = vmul.f32 %v430, %v421
        %v432 = vmul.f32 %v430, %v422
        %v433 = vadd.f32 %v414, %v431
        %v434 = vadd.f32 %v414, %v432
        %s435 = sld [smem:[#allocation3 + $0x48]]
        %v436 = vstv %s435
        %v437 = vmul.f32 %v436, %v421
        %v438 = vmul.f32 %v436, %v422
        %v439 = vadd.f32 %v417, %v437
        %v440 = vadd.f32 %v417, %v438
        %s441 = sld [smem:[#allocation3 + $0x6c]]
        %v442 = vstv %s441
        %v443 = vmul.f32 %v442, %v421
        %v444 = vmul.f32 %v442, %v422
        %v445 = vadd.f32 %v420, %v443
        %v446 = vadd.f32 %v420, %v444
        %s447 = sld [smem:[#allocation3 + $0x1]]
        %v448 = vstv %s447
        %v449 = vmul.f32 %v448, %v421
        %v450 = vmul.f32 %v448, %v422
        %453 = vrot.lane.b32.xlu0 %v449, 127
        %v454 = vpop.permute.xlu0 %453
        %455 = vrot.lane.b32.xlu0 %v450, 127
        %v456 = vpop.permute.xlu0 %455
        %v459 = vadd.f32 %v427, %v454
        %v460 = vadd.f32 %v428, %v456
        %s461 = sld [smem:[#allocation3 + $0x25]]
        %v462 = vstv %s461
        %v463 = vmul.f32 %v462, %v421
        %v464 = vmul.f32 %v462, %v422
        %467 = vrot.lane.b32.xlu0 %v463, 127
        %v468 = vpop.permute.xlu0 %467
        %469 = vrot.lane.b32.xlu0 %v464, 127
        %v470 = vpop.permute.xlu0 %469
        %v473 = vadd.f32 %v433, %v468
        %v474 = vadd.f32 %v434, %v470
        %s475 = sld [smem:[#allocation3 + $0x49]]
        %v476 = vstv %s475
        %v477 = vmul.f32 %v476, %v421
        %v478 = vmul.f32 %v476, %v422
        %481 = vrot.lane.b32.xlu0 %v477, 127
        %v482 = vpop.permute.xlu0 %481
        %483 = vrot.lane.b32.xlu0 %v478, 127
        %v484 = vpop.permute.xlu0 %483
        %v487 = vadd.f32 %v439, %v482
        %v488 = vadd.f32 %v440, %v484
        %s489 = sld [smem:[#allocation3 + $0x6d]]
        %v490 = vstv %s489
        %v491 = vmul.f32 %v490, %v421
        %v492 = vmul.f32 %v490, %v422
        %495 = vrot.lane.b32.xlu0 %v491, 127
        %v496 = vpop.permute.xlu0 %495
        %497 = vrot.lane.b32.xlu0 %v492, 127
        %v498 = vpop.permute.xlu0 %497
        %v501 = vadd.f32 %v445, %v496
        %v502 = vadd.f32 %v446, %v498
        %s503 = sld [smem:[#allocation3 + $0x2]]
        %v504 = vstv %s503
        %v505 = vmul.f32 %v504, %v421
        %v506 = vmul.f32 %v504, %v422
        %509 = vrot.lane.b32.xlu0 %v505, 126
        %v510 = vpop.permute.xlu0 %509
        %511 = vrot.lane.b32.xlu0 %v506, 126
        %v512 = vpop.permute.xlu0 %511
        %v515 = vadd.f32 %v459, %v510
        %v516 = vadd.f32 %v460, %v512
        %s517 = sld [smem:[#allocation3 + $0x26]]
        %v518 = vstv %s517
        %v519 = vmul.f32 %v518, %v421
        %v520 = vmul.f32 %v518, %v422
        %523 = vrot.lane.b32.xlu0 %v519, 126
        %v524 = vpop.permute.xlu0 %523
        %525 = vrot.lane.b32.xlu0 %v520, 126
        %v526 = vpop.permute.xlu0 %525
        %v529 = vadd.f32 %v473, %v524
        %v530 = vadd.f32 %v474, %v526
        %s531 = sld [smem:[#allocation3 + $0x4a]]
        %v532 = vstv %s531
        %v533 = vmul.f32 %v532, %v421
        %v534 = vmul.f32 %v532, %v422
        %537 = vrot.lane.b32.xlu0 %v533, 126
        %v538 = vpop.permute.xlu0 %537
        %539 = vrot.lane.b32.xlu0 %v534, 126
        %v540 = vpop.permute.xlu0 %539
        %v543 = vadd.f32 %v487, %v538
        %v544 = vadd.f32 %v488, %v540
        %s545 = sld [smem:[#allocation3 + $0x6e]]
        %v546 = vstv %s545
        %v547 = vmul.f32 %v546, %v421
        %v548 = vmul.f32 %v546, %v422
        %551 = vrot.lane.b32.xlu0 %v547, 126
        %v552 = vpop.permute.xlu0 %551
        %553 = vrot.lane.b32.xlu0 %v548, 126
        %v554 = vpop.permute.xlu0 %553
        %v557 = vadd.f32 %v501, %v552
        %v558 = vadd.f32 %v502, %v554
        %v559 = vld [vmem:[#allocation2 + $0x1] sm:$0xff]
        %v560 = vld [vmem:[#allocation2 + $0x9] sm:$0xff]
        %s561 = sld [smem:[#allocation3 + $0x3]]
        %v562 = vstv %s561
        %v563 = vmul.f32 %v562, %v559
        %v564 = vmul.f32 %v562, %v560
        %v565 = vadd.f32 %v515, %v563
        %v566 = vadd.f32 %v516, %v564
        %s567 = sld [smem:[#allocation3 + $0x27]]
        %v568 = vstv %s567
        %v569 = vmul.f32 %v568, %v559
        %v570 = vmul.f32 %v568, %v560
        %v571 = vadd.f32 %v529, %v569
        %v572 = vadd.f32 %v530, %v570
        %s573 = sld [smem:[#allocation3 + $0x4b]]
        %v574 = vstv %s573
        %v575 = vmul.f32 %v574, %v559
        %v576 = vmul.f32 %v574, %v560
        %v577 = vadd.f32 %v543, %v575
        %v578 = vadd.f32 %v544, %v576
        %s579 = sld [smem:[#allocation3 + $0x6f]]
        %v580 = vstv %s579
        %v581 = vmul.f32 %v580, %v559
        %v582 = vmul.f32 %v580, %v560
        %v583 = vadd.f32 %v557, %v581
        %v584 = vadd.f32 %v558, %v582
        %s585 = sld [smem:[#allocation3 + $0x4]]
        %v586 = vstv %s585
        %v587 = vmul.f32 %v586, %v559
        %v588 = vmul.f32 %v586, %v560
        %591 = vrot.lane.b32.xlu0 %v587, 127
        %v592 = vpop.permute.xlu0 %591
        %593 = vrot.lane.b32.xlu0 %v588, 127
        %v594 = vpop.permute.xlu0 %593
        %v597 = vadd.f32 %v565, %v592
        %v598 = vadd.f32 %v566, %v594
        %s599 = sld [smem:[#allocation3 + $0x28]]
        %v600 = vstv %s599
        %v601 = vmul.f32 %v600, %v559
        %v602 = vmul.f32 %v600, %v560
        %605 = vrot.lane.b32.xlu0 %v601, 127
        %v606 = vpop.permute.xlu0 %605
        %607 = vrot.lane.b32.xlu0 %v602, 127
        %v608 = vpop.permute.xlu0 %607
        %v611 = vadd.f32 %v571, %v606
        %v612 = vadd.f32 %v572, %v608
        %s613 = sld [smem:[#allocation3 + $0x4c]]
        %v614 = vstv %s613
        %v615 = vmul.f32 %v614, %v559
        %v616 = vmul.f32 %v614, %v560
        %619 = vrot.lane.b32.xlu0 %v615, 127
        %v620 = vpop.permute.xlu0 %619
        %621 = vrot.lane.b32.xlu0 %v616, 127
        %v622 = vpop.permute.xlu0 %621
        %v625 = vadd.f32 %v577, %v620
        %v626 = vadd.f32 %v578, %v622
        %s627 = sld [smem:[#allocation3 + $0x70]]
        %v628 = vstv %s627
        %v629 = vmul.f32 %v628, %v559
        %v630 = vmul.f32 %v628, %v560
        %633 = vrot.lane.b32.xlu0 %v629, 127
        %v634 = vpop.permute.xlu0 %633
        %635 = vrot.lane.b32.xlu0 %v630, 127
        %v636 = vpop.permute.xlu0 %635
        %v639 = vadd.f32 %v583, %v634
        %v640 = vadd.f32 %v584, %v636
        %s641 = sld [smem:[#allocation3 + $0x5]]
        %v642 = vstv %s641
        %v643 = vmul.f32 %v642, %v559
        %v644 = vmul.f32 %v642, %v560
        %647 = vrot.lane.b32.xlu0 %v643, 126
        %v648 = vpop.permute.xlu0 %647
        %649 = vrot.lane.b32.xlu0 %v644, 126
        %v650 = vpop.permute.xlu0 %649
        %v653 = vadd.f32 %v597, %v648
        %v654 = vadd.f32 %v598, %v650
        %s655 = sld [smem:[#allocation3 + $0x29]]
        %v656 = vstv %s655
        %v657 = vmul.f32 %v656, %v559
        %v658 = vmul.f32 %v656, %v560
        %661 = vrot.lane.b32.xlu0 %v657, 126
        %v662 = vpop.permute.xlu0 %661
        %663 = vrot.lane.b32.xlu0 %v658, 126
        %v664 = vpop.permute.xlu0 %663
        %v667 = vadd.f32 %v611, %v662
        %v668 = vadd.f32 %v612, %v664
        %s669 = sld [smem:[#allocation3 + $0x4d]]
        %v670 = vstv %s669
        %v671 = vmul.f32 %v670, %v559
        %v672 = vmul.f32 %v670, %v560
        %675 = vrot.lane.b32.xlu0 %v671, 126
        %v676 = vpop.permute.xlu0 %675
        %677 = vrot.lane.b32.xlu0 %v672, 126
        %v678 = vpop.permute.xlu0 %677
        %v681 = vadd.f32 %v625, %v676
        %v682 = vadd.f32 %v626, %v678
        %s683 = sld [smem:[#allocation3 + $0x71]]
        %v684 = vstv %s683
        %v685 = vmul.f32 %v684, %v559
        %v686 = vmul.f32 %v684, %v560
        %689 = vrot.lane.b32.xlu0 %v685, 126
        %v690 = vpop.permute.xlu0 %689
        %691 = vrot.lane.b32.xlu0 %v686, 126
        %v692 = vpop.permute.xlu0 %691
        %v695 = vadd.f32 %v639, %v690
        %v696 = vadd.f32 %v640, %v692
        %v697 = vld [vmem:[#allocation2 + $0x2] sm:$0xff]
        %v698 = vld [vmem:[#allocation2 + $0xa] sm:$0xff]
        %s699 = sld [smem:[#allocation3 + $0x6]]
        %v700 = vstv %s699
        %v701 = vmul.f32 %v700, %v697
        %v702 = vmul.f32 %v700, %v698
        %v703 = vadd.f32 %v653, %v701
        %v704 = vadd.f32 %v654, %v702
        %s705 = sld [smem:[#allocation3 + $0x2a]]
        %v706 = vstv %s705
        %v707 = vmul.f32 %v706, %v697
        %v708 = vmul.f32 %v706, %v698
        %v709 = vadd.f32 %v667, %v707
        %v710 = vadd.f32 %v668, %v708
        %s711 = sld [smem:[#allocation3 + $0x4e]]
        %v712 = vstv %s711
        %v713 = vmul.f32 %v712, %v697
        %v714 = vmul.f32 %v712, %v698
        %v715 = vadd.f32 %v681, %v713
        %v716 = vadd.f32 %v682, %v714
        %s717 = sld [smem:[#allocation3 + $0x72]]
        %v718 = vstv %s717
        %v719 = vmul.f32 %v718, %v697
        %v720 = vmul.f32 %v718, %v698
        %v721 = vadd.f32 %v695, %v719
        %v722 = vadd.f32 %v696, %v720
        %s723 = sld [smem:[#allocation3 + $0x7]]
        %v724 = vstv %s723
        %v725 = vmul.f32 %v724, %v697
        %v726 = vmul.f32 %v724, %v698
        %729 = vrot.lane.b32.xlu0 %v725, 127
        %v730 = vpop.permute.xlu0 %729
        %731 = vrot.lane.b32.xlu0 %v726, 127
        %v732 = vpop.permute.xlu0 %731
        %v735 = vadd.f32 %v703, %v730
        %v736 = vadd.f32 %v704, %v732
        %s737 = sld [smem:[#allocation3 + $0x2b]]
        %v738 = vstv %s737
        %v739 = vmul.f32 %v738, %v697
        %v740 = vmul.f32 %v738, %v698
        %743 = vrot.lane.b32.xlu0 %v739, 127
        %v744 = vpop.permute.xlu0 %743
        %745 = vrot.lane.b32.xlu0 %v740, 127
        %v746 = vpop.permute.xlu0 %745
        %v749 = vadd.f32 %v709, %v744
        %v750 = vadd.f32 %v710, %v746
        %s751 = sld [smem:[#allocation3 + $0x4f]]
        %v752 = vstv %s751
        %v753 = vmul.f32 %v752, %v697
        %v754 = vmul.f32 %v752, %v698
        %757 = vrot.lane.b32.xlu0 %v753, 127
        %v758 = vpop.permute.xlu0 %757
        %759 = vrot.lane.b32.xlu0 %v754, 127
        %v760 = vpop.permute.xlu0 %759
        %v763 = vadd.f32 %v715, %v758
        %v764 = vadd.f32 %v716, %v760
        %s765 = sld [smem:[#allocation3 + $0x73]]
        %v766 = vstv %s765
        %v767 = vmul.f32 %v766, %v697
        %v768 = vmul.f32 %v766, %v698
        %771 = vrot.lane.b32.xlu0 %v767, 127
        %v772 = vpop.permute.xlu0 %771
        %773 = vrot.lane.b32.xlu0 %v768, 127
        %v774 = vpop.permute.xlu0 %773
        %v777 = vadd.f32 %v721, %v772
        %v778 = vadd.f32 %v722, %v774
        %s779 = sld [smem:[#allocation3 + $0x8]]
        %v780 = vstv %s779
        %v781 = vmul.f32 %v780, %v697
        %v782 = vmul.f32 %v780, %v698
        %785 = vrot.lane.b32.xlu0 %v781, 126
        %v786 = vpop.permute.xlu0 %785
        %787 = vrot.lane.b32.xlu0 %v782, 126
        %v788 = vpop.permute.xlu0 %787
        %v791 = vadd.f32 %v735, %v786
        %v792 = vadd.f32 %v736, %v788
        %s793 = sld [smem:[#allocation3 + $0x2c]]
        %v794 = vstv %s793
        %v795 = vmul.f32 %v794, %v697
        %v796 = vmul.f32 %v794, %v698
        %799 = vrot.lane.b32.xlu0 %v795, 126
        %v800 = vpop.permute.xlu0 %799
        %801 = vrot.lane.b32.xlu0 %v796, 126
        %v802 = vpop.permute.xlu0 %801
        %v805 = vadd.f32 %v749, %v800
        %v806 = vadd.f32 %v750, %v802
        %s807 = sld [smem:[#allocation3 + $0x50]]
        %v808 = vstv %s807
        %v809 = vmul.f32 %v808, %v697
        %v810 = vmul.f32 %v808, %v698
        %813 = vrot.lane.b32.xlu0 %v809, 126
        %v814 = vpop.permute.xlu0 %813
        %815 = vrot.lane.b32.xlu0 %v810, 126
        %v816 = vpop.permute.xlu0 %815
        %v819 = vadd.f32 %v763, %v814
        %v820 = vadd.f32 %v764, %v816
        %s821 = sld [smem:[#allocation3 + $0x74]]
        %v822 = vstv %s821
        %v823 = vmul.f32 %v822, %v697
        %v824 = vmul.f32 %v822, %v698
        %827 = vrot.lane.b32.xlu0 %v823, 126
        %v828 = vpop.permute.xlu0 %827
        %829 = vrot.lane.b32.xlu0 %v824, 126
        %v830 = vpop.permute.xlu0 %829
        %v833 = vadd.f32 %v777, %v828
        %v834 = vadd.f32 %v778, %v830
        %v835 = vld [vmem:[%s230] sm:$0xff]
        %v836 = vld [vmem:[%s230 + $0x8] sm:$0xff]
        %s837 = sld [smem:[#allocation3 + $0x9]]
        %v838 = vstv %s837
        %v839 = vmul.f32 %v838, %v835
        %v840 = vmul.f32 %v838, %v836
        %v841 = vadd.f32 %v791, %v839
        %v842 = vadd.f32 %v792, %v840
        %s843 = sld [smem:[#allocation3 + $0x2d]]
        %v844 = vstv %s843
        %v845 = vmul.f32 %v844, %v835
        %v846 = vmul.f32 %v844, %v836
        %v847 = vadd.f32 %v805, %v845
        %v848 = vadd.f32 %v806, %v846
        %s849 = sld [smem:[#allocation3 + $0x51]]
        %v850 = vstv %s849
        %v851 = vmul.f32 %v850, %v835
        %v852 = vmul.f32 %v850, %v836
        %v853 = vadd.f32 %v819, %v851
        %v854 = vadd.f32 %v820, %v852
        %s855 = sld [smem:[#allocation3 + $0x75]]
        %v856 = vstv %s855
        %v857 = vmul.f32 %v856, %v835
        %v858 = vmul.f32 %v856, %v836
        %v859 = vadd.f32 %v833, %v857
        %v860 = vadd.f32 %v834, %v858
        %s861 = sld [smem:[#allocation3 + $0xa]]
        %v862 = vstv %s861
        %v863 = vmul.f32 %v862, %v835
        %v864 = vmul.f32 %v862, %v836
        %867 = vrot.lane.b32.xlu0 %v863, 127
        %v868 = vpop.permute.xlu0 %867
        %869 = vrot.lane.b32.xlu0 %v864, 127
        %v870 = vpop.permute.xlu0 %869
        %v873 = vadd.f32 %v841, %v868
        %v874 = vadd.f32 %v842, %v870
        %s875 = sld [smem:[#allocation3 + $0x2e]]
        %v876 = vstv %s875
        %v877 = vmul.f32 %v876, %v835
        %v878 = vmul.f32 %v876, %v836
        %881 = vrot.lane.b32.xlu0 %v877, 127
        %v882 = vpop.permute.xlu0 %881
        %883 = vrot.lane.b32.xlu0 %v878, 127
        %v884 = vpop.permute.xlu0 %883
        %v887 = vadd.f32 %v847, %v882
        %v888 = vadd.f32 %v848, %v884
        %s889 = sld [smem:[#allocation3 + $0x52]]
        %v890 = vstv %s889
        %v891 = vmul.f32 %v890, %v835
        %v892 = vmul.f32 %v890, %v836
        %895 = vrot.lane.b32.xlu0 %v891, 127
        %v896 = vpop.permute.xlu0 %895
        %897 = vrot.lane.b32.xlu0 %v892, 127
        %v898 = vpop.permute.xlu0 %897
        %v901 = vadd.f32 %v853, %v896
        %v902 = vadd.f32 %v854, %v898
        %s903 = sld [smem:[#allocation3 + $0x76]]
        %v904 = vstv %s903
        %v905 = vmul.f32 %v904, %v835
        %v906 = vmul.f32 %v904, %v836
        %909 = vrot.lane.b32.xlu0 %v905, 127
        %v910 = vpop.permute.xlu0 %909
        %911 = vrot.lane.b32.xlu0 %v906, 127
        %v912 = vpop.permute.xlu0 %911
        %v915 = vadd.f32 %v859, %v910
        %v916 = vadd.f32 %v860, %v912
        %s917 = sld [smem:[#allocation3 + $0xb]]
        %v918 = vstv %s917
        %v919 = vmul.f32 %v918, %v835
        %v920 = vmul.f32 %v918, %v836
        %923 = vrot.lane.b32.xlu0 %v919, 126
        %v924 = vpop.permute.xlu0 %923
        %925 = vrot.lane.b32.xlu0 %v920, 126
        %v926 = vpop.permute.xlu0 %925
        %v929 = vadd.f32 %v873, %v924
        %v930 = vadd.f32 %v874, %v926
        %s931 = sld [smem:[#allocation3 + $0x2f]]
        %v932 = vstv %s931
        %v933 = vmul.f32 %v932, %v835
        %v934 = vmul.f32 %v932, %v836
        %937 = vrot.lane.b32.xlu0 %v933, 126
        %v938 = vpop.permute.xlu0 %937
        %939 = vrot.lane.b32.xlu0 %v934, 126
        %v940 = vpop.permute.xlu0 %939
        %v943 = vadd.f32 %v887, %v938
        %v944 = vadd.f32 %v888, %v940
        %s945 = sld [smem:[#allocation3 + $0x53]]
        %v946 = vstv %s945
        %v947 = vmul.f32 %v946, %v835
        %v948 = vmul.f32 %v946, %v836
        %951 = vrot.lane.b32.xlu0 %v947, 126
        %v952 = vpop.permute.xlu0 %951
        %953 = vrot.lane.b32.xlu0 %v948, 126
        %v954 = vpop.permute.xlu0 %953
        %v957 = vadd.f32 %v901, %v952
        %v958 = vadd.f32 %v902, %v954
        %s959 = sld [smem:[#allocation3 + $0x77]]
        %v960 = vstv %s959
        %v961 = vmul.f32 %v960, %v835
        %v962 = vmul.f32 %v960, %v836
        %965 = vrot.lane.b32.xlu0 %v961, 126
        %v966 = vpop.permute.xlu0 %965
        %967 = vrot.lane.b32.xlu0 %v962, 126
        %v968 = vpop.permute.xlu0 %967
        %v971 = vadd.f32 %v915, %v966
        %v972 = vadd.f32 %v916, %v968
        %v973 = vld [vmem:[%s230 + $0x1] sm:$0xff]
        %v974 = vld [vmem:[%s230 + $0x9] sm:$0xff]
        %s975 = sld [smem:[#allocation3 + $0xc]]
        %v976 = vstv %s975
        %v977 = vmul.f32 %v976, %v973
        %v978 = vmul.f32 %v976, %v974
        %v979 = vadd.f32 %v929, %v977
        %v980 = vadd.f32 %v930, %v978
        %s981 = sld [smem:[#allocation3 + $0x30]]
        %v982 = vstv %s981
        %v983 = vmul.f32 %v982, %v973
        %v984 = vmul.f32 %v982, %v974
        %v985 = vadd.f32 %v943, %v983
        %v986 = vadd.f32 %v944, %v984
        %s987 = sld [smem:[#allocation3 + $0x54]]
        %v988 = vstv %s987
        %v989 = vmul.f32 %v988, %v973
        %v990 = vmul.f32 %v988, %v974
        %v991 = vadd.f32 %v957, %v989
        %v992 = vadd.f32 %v958, %v990
        %s993 = sld [smem:[#allocation3 + $0x78]]
        %v994 = vstv %s993
        %v995 = vmul.f32 %v994, %v973
        %v996 = vmul.f32 %v994, %v974
        %v997 = vadd.f32 %v971, %v995
        %v998 = vadd.f32 %v972, %v996
        %s999 = sld [smem:[#allocation3 + $0xd]]
        %v1000 = vstv %s999
        %v1001 = vmul.f32 %v1000, %v973
        %v1002 = vmul.f32 %v1000, %v974
        %1005 = vrot.lane.b32.xlu0 %v1001, 127
        %v1006 = vpop.permute.xlu0 %1005
        %1007 = vrot.lane.b32.xlu0 %v1002, 127
        %v1008 = vpop.permute.xlu0 %1007
        %v1011 = vadd.f32 %v979, %v1006
        %v1012 = vadd.f32 %v980, %v1008
        %s1013 = sld [smem:[#allocation3 + $0x31]]
        %v1014 = vstv %s1013
        %v1015 = vmul.f32 %v1014, %v973
        %v1016 = vmul.f32 %v1014, %v974
        %1019 = vrot.lane.b32.xlu0 %v1015, 127
        %v1020 = vpop.permute.xlu0 %1019
        %1021 = vrot.lane.b32.xlu0 %v1016, 127
        %v1022 = vpop.permute.xlu0 %1021
        %v1025 = vadd.f32 %v985, %v1020
        %v1026 = vadd.f32 %v986, %v1022
        %s1027 = sld [smem:[#allocation3 + $0x55]]
        %v1028 = vstv %s1027
        %v1029 = vmul.f32 %v1028, %v973
        %v1030 = vmul.f32 %v1028, %v974
        %1033 = vrot.lane.b32.xlu0 %v1029, 127
        %v1034 = vpop.permute.xlu0 %1033
        %1035 = vrot.lane.b32.xlu0 %v1030, 127
        %v1036 = vpop.permute.xlu0 %1035
        %v1039 = vadd.f32 %v991, %v1034
        %v1040 = vadd.f32 %v992, %v1036
        %s1041 = sld [smem:[#allocation3 + $0x79]]
        %v1042 = vstv %s1041
        %v1043 = vmul.f32 %v1042, %v973
        %v1044 = vmul.f32 %v1042, %v974
        %1047 = vrot.lane.b32.xlu0 %v1043, 127
        %v1048 = vpop.permute.xlu0 %1047
        %1049 = vrot.lane.b32.xlu0 %v1044, 127
        %v1050 = vpop.permute.xlu0 %1049
        %v1053 = vadd.f32 %v997, %v1048
        %v1054 = vadd.f32 %v998, %v1050
        %s1055 = sld [smem:[#allocation3 + $0xe]]
        %v1056 = vstv %s1055
        %v1057 = vmul.f32 %v1056, %v973
        %v1058 = vmul.f32 %v1056, %v974
        %1061 = vrot.lane.b32.xlu0 %v1057, 126
        %v1062 = vpop.permute.xlu0 %1061
        %1063 = vrot.lane.b32.xlu0 %v1058, 126
        %v1064 = vpop.permute.xlu0 %1063
        %v1067 = vadd.f32 %v1011, %v1062
        %v1068 = vadd.f32 %v1012, %v1064
        %s1069 = sld [smem:[#allocation3 + $0x32]]
        %v1070 = vstv %s1069
        %v1071 = vmul.f32 %v1070, %v973
        %v1072 = vmul.f32 %v1070, %v974
        %1075 = vrot.lane.b32.xlu0 %v1071, 126
        %v1076 = vpop.permute.xlu0 %1075
        %1077 = vrot.lane.b32.xlu0 %v1072, 126
        %v1078 = vpop.permute.xlu0 %1077
        %v1081 = vadd.f32 %v1025, %v1076
        %v1082 = vadd.f32 %v1026, %v1078
        %s1083 = sld [smem:[#allocation3 + $0x56]]
        %v1084 = vstv %s1083
        %v1085 = vmul.f32 %v1084, %v973
        %v1086 = vmul.f32 %v1084, %v974
        %1089 = vrot.lane.b32.xlu0 %v1085, 126
        %v1090 = vpop.permute.xlu0 %1089
        %1091 = vrot.lane.b32.xlu0 %v1086, 126
        %v1092 = vpop.permute.xlu0 %1091
        %v1095 = vadd.f32 %v1039, %v1090
        %v1096 = vadd.f32 %v1040, %v1092
        %s1097 = sld [smem:[#allocation3 + $0x7a]]
        %v1098 = vstv %s1097
        %v1099 = vmul.f32 %v1098, %v973
        %v1100 = vmul.f32 %v1098, %v974
        %1103 = vrot.lane.b32.xlu0 %v1099, 126
        %v1104 = vpop.permute.xlu0 %1103
        %1105 = vrot.lane.b32.xlu0 %v1100, 126
        %v1106 = vpop.permute.xlu0 %1105
        %v1109 = vadd.f32 %v1053, %v1104
        %v1110 = vadd.f32 %v1054, %v1106
        %v1111 = vld [vmem:[%s230 + $0x2] sm:$0xff]
        %v1112 = vld [vmem:[%s230 + $0xa] sm:$0xff]
        %s1113 = sld [smem:[#allocation3 + $0xf]]
        %v1114 = vstv %s1113
        %v1115 = vmul.f32 %v1114, %v1111
        %v1116 = vmul.f32 %v1114, %v1112
        %v1117 = vadd.f32 %v1067, %v1115
        %v1118 = vadd.f32 %v1068, %v1116
        %s1119 = sld [smem:[#allocation3 + $0x33]]
        %v1120 = vstv %s1119
        %v1121 = vmul.f32 %v1120, %v1111
        %v1122 = vmul.f32 %v1120, %v1112
        %v1123 = vadd.f32 %v1081, %v1121
        %v1124 = vadd.f32 %v1082, %v1122
        %s1125 = sld [smem:[#allocation3 + $0x57]]
        %v1126 = vstv %s1125
        %v1127 = vmul.f32 %v1126, %v1111
        %v1128 = vmul.f32 %v1126, %v1112
        %v1129 = vadd.f32 %v1095, %v1127
        %v1130 = vadd.f32 %v1096, %v1128
        %s1131 = sld [smem:[#allocation3 + $0x7b]]
        %v1132 = vstv %s1131
        %v1133 = vmul.f32 %v1132, %v1111
        %v1134 = vmul.f32 %v1132, %v1112
        %v1135 = vadd.f32 %v1109, %v1133
        %v1136 = vadd.f32 %v1110, %v1134
        %s1137 = sld [smem:[#allocation3 + $0x10]]
        %v1138 = vstv %s1137
        %v1139 = vmul.f32 %v1138, %v1111
        %v1140 = vmul.f32 %v1138, %v1112
        %1143 = vrot.lane.b32.xlu0 %v1139, 127
        %v1144 = vpop.permute.xlu0 %1143
        %1145 = vrot.lane.b32.xlu0 %v1140, 127
        %v1146 = vpop.permute.xlu0 %1145
        %v1149 = vadd.f32 %v1117, %v1144
        %v1150 = vadd.f32 %v1118, %v1146
        %s1151 = sld [smem:[#allocation3 + $0x34]]
        %v1152 = vstv %s1151
        %v1153 = vmul.f32 %v1152, %v1111
        %v1154 = vmul.f32 %v1152, %v1112
        %1157 = vrot.lane.b32.xlu0 %v1153, 127
        %v1158 = vpop.permute.xlu0 %1157
        %1159 = vrot.lane.b32.xlu0 %v1154, 127
        %v1160 = vpop.permute.xlu0 %1159
        %v1163 = vadd.f32 %v1123, %v1158
        %v1164 = vadd.f32 %v1124, %v1160
        %s1165 = sld [smem:[#allocation3 + $0x58]]
        %v1166 = vstv %s1165
        %v1167 = vmul.f32 %v1166, %v1111
        %v1168 = vmul.f32 %v1166, %v1112
        %1171 = vrot.lane.b32.xlu0 %v1167, 127
        %v1172 = vpop.permute.xlu0 %1171
        %1173 = vrot.lane.b32.xlu0 %v1168, 127
        %v1174 = vpop.permute.xlu0 %1173
        %v1177 = vadd.f32 %v1129, %v1172
        %v1178 = vadd.f32 %v1130, %v1174
        %s1179 = sld [smem:[#allocation3 + $0x7c]]
        %v1180 = vstv %s1179
        %v1181 = vmul.f32 %v1180, %v1111
        %v1182 = vmul.f32 %v1180, %v1112
        %1185 = vrot.lane.b32.xlu0 %v1181, 127
        %v1186 = vpop.permute.xlu0 %1185
        %1187 = vrot.lane.b32.xlu0 %v1182, 127
        %v1188 = vpop.permute.xlu0 %1187
        %v1191 = vadd.f32 %v1135, %v1186
        %v1192 = vadd.f32 %v1136, %v1188
        %s1193 = sld [smem:[#allocation3 + $0x11]]
        %v1194 = vstv %s1193
        %v1195 = vmul.f32 %v1194, %v1111
        %v1196 = vmul.f32 %v1194, %v1112
        %1199 = vrot.lane.b32.xlu0 %v1195, 126
        %v1200 = vpop.permute.xlu0 %1199
        %1201 = vrot.lane.b32.xlu0 %v1196, 126
        %v1202 = vpop.permute.xlu0 %1201
        %v1205 = vadd.f32 %v1149, %v1200
        %v1206 = vadd.f32 %v1150, %v1202
        %s1207 = sld [smem:[#allocation3 + $0x35]]
        %v1208 = vstv %s1207
        %v1209 = vmul.f32 %v1208, %v1111
        %v1210 = vmul.f32 %v1208, %v1112
        %1213 = vrot.lane.b32.xlu0 %v1209, 126
        %v1214 = vpop.permute.xlu0 %1213
        %1215 = vrot.lane.b32.xlu0 %v1210, 126
        %v1216 = vpop.permute.xlu0 %1215
        %v1219 = vadd.f32 %v1163, %v1214
        %v1220 = vadd.f32 %v1164, %v1216
        %s1221 = sld [smem:[#allocation3 + $0x59]]
        %v1222 = vstv %s1221
        %v1223 = vmul.f32 %v1222, %v1111
        %v1224 = vmul.f32 %v1222, %v1112
        %1227 = vrot.lane.b32.xlu0 %v1223, 126
        %v1228 = vpop.permute.xlu0 %1227
        %1229 = vrot.lane.b32.xlu0 %v1224, 126
        %v1230 = vpop.permute.xlu0 %1229
        %v1233 = vadd.f32 %v1177, %v1228
        %v1234 = vadd.f32 %v1178, %v1230
        %s1235 = sld [smem:[#allocation3 + $0x7d]]
        %v1236 = vstv %s1235
        %v1237 = vmul.f32 %v1236, %v1111
        %v1238 = vmul.f32 %v1236, %v1112
        %1241 = vrot.lane.b32.xlu0 %v1237, 126
        %v1242 = vpop.permute.xlu0 %1241
        %1243 = vrot.lane.b32.xlu0 %v1238, 126
        %v1244 = vpop.permute.xlu0 %1243
        %v1247 = vadd.f32 %v1191, %v1242
        %v1248 = vadd.f32 %v1192, %v1244
        %v1249 = vld [vmem:[%s243] sm:$0xff]
        %v1250 = vld [vmem:[%s243 + $0x8] sm:$0xff]
        %s1251 = sld [smem:[#allocation3 + $0x12]]
        %v1252 = vstv %s1251
        %v1253 = vmul.f32 %v1252, %v1249
        %v1254 = vmul.f32 %v1252, %v1250
        %v1255 = vadd.f32 %v1205, %v1253
        %v1256 = vadd.f32 %v1206, %v1254
        %s1257 = sld [smem:[#allocation3 + $0x36]]
        %v1258 = vstv %s1257
        %v1259 = vmul.f32 %v1258, %v1249
        %v1260 = vmul.f32 %v1258, %v1250
        %v1261 = vadd.f32 %v1219, %v1259
        %v1262 = vadd.f32 %v1220, %v1260
        %s1263 = sld [smem:[#allocation3 + $0x5a]]
        %v1264 = vstv %s1263
        %v1265 = vmul.f32 %v1264, %v1249
        %v1266 = vmul.f32 %v1264, %v1250
        %v1267 = vadd.f32 %v1233, %v1265
        %v1268 = vadd.f32 %v1234, %v1266
        %s1269 = sld [smem:[#allocation3 + $0x7e]]
        %v1270 = vstv %s1269
        %v1271 = vmul.f32 %v1270, %v1249
        %v1272 = vmul.f32 %v1270, %v1250
        %v1273 = vadd.f32 %v1247, %v1271
        %v1274 = vadd.f32 %v1248, %v1272
        %s1275 = sld [smem:[#allocation3 + $0x13]]
        %v1276 = vstv %s1275
        %v1277 = vmul.f32 %v1276, %v1249
        %v1278 = vmul.f32 %v1276, %v1250
        %1281 = vrot.lane.b32.xlu0 %v1277, 127
        %v1282 = vpop.permute.xlu0 %1281
        %1283 = vrot.lane.b32.xlu0 %v1278, 127
        %v1284 = vpop.permute.xlu0 %1283
        %v1287 = vadd.f32 %v1255, %v1282
        %v1288 = vadd.f32 %v1256, %v1284
        %s1289 = sld [smem:[#allocation3 + $0x37]]
        %v1290 = vstv %s1289
        %v1291 = vmul.f32 %v1290, %v1249
        %v1292 = vmul.f32 %v1290, %v1250
        %1295 = vrot.lane.b32.xlu0 %v1291, 127
        %v1296 = vpop.permute.xlu0 %1295
        %1297 = vrot.lane.b32.xlu0 %v1292, 127
        %v1298 = vpop.permute.xlu0 %1297
        %v1301 = vadd.f32 %v1261, %v1296
        %v1302 = vadd.f32 %v1262, %v1298
        %s1303 = sld [smem:[#allocation3 + $0x5b]]
        %v1304 = vstv %s1303
        %v1305 = vmul.f32 %v1304, %v1249
        %v1306 = vmul.f32 %v1304, %v1250
        %1309 = vrot.lane.b32.xlu0 %v1305, 127
        %v1310 = vpop.permute.xlu0 %1309
        %1311 = vrot.lane.b32.xlu0 %v1306, 127
        %v1312 = vpop.permute.xlu0 %1311
        %v1315 = vadd.f32 %v1267, %v1310
        %v1316 = vadd.f32 %v1268, %v1312
        %s1317 = sld [smem:[#allocation3 + $0x7f]]
        %v1318 = vstv %s1317
        %v1319 = vmul.f32 %v1318, %v1249
        %v1320 = vmul.f32 %v1318, %v1250
        %1323 = vrot.lane.b32.xlu0 %v1319, 127
        %v1324 = vpop.permute.xlu0 %1323
        %1325 = vrot.lane.b32.xlu0 %v1320, 127
        %v1326 = vpop.permute.xlu0 %1325
        %v1329 = vadd.f32 %v1273, %v1324
        %v1330 = vadd.f32 %v1274, %v1326
        %s1331 = sld [smem:[#allocation3 + $0x14]]
        %v1332 = vstv %s1331
        %v1333 = vmul.f32 %v1332, %v1249
        %v1334 = vmul.f32 %v1332, %v1250
        %1337 = vrot.lane.b32.xlu0 %v1333, 126
        %v1338 = vpop.permute.xlu0 %1337
        %1339 = vrot.lane.b32.xlu0 %v1334, 126
        %v1340 = vpop.permute.xlu0 %1339
        %v1343 = vadd.f32 %v1287, %v1338
        %v1344 = vadd.f32 %v1288, %v1340
        %s1345 = sld [smem:[#allocation3 + $0x38]]
        %v1346 = vstv %s1345
        %v1347 = vmul.f32 %v1346, %v1249
        %v1348 = vmul.f32 %v1346, %v1250
        %1351 = vrot.lane.b32.xlu0 %v1347, 126
        %v1352 = vpop.permute.xlu0 %1351
        %1353 = vrot.lane.b32.xlu0 %v1348, 126
        %v1354 = vpop.permute.xlu0 %1353
        %v1357 = vadd.f32 %v1301, %v1352
        %v1358 = vadd.f32 %v1302, %v1354
        %s1359 = sld [smem:[#allocation3 + $0x5c]]
        %v1360 = vstv %s1359
        %v1361 = vmul.f32 %v1360, %v1249
        %v1362 = vmul.f32 %v1360, %v1250
        %1365 = vrot.lane.b32.xlu0 %v1361, 126
        %v1366 = vpop.permute.xlu0 %1365
        %1367 = vrot.lane.b32.xlu0 %v1362, 126
        %v1368 = vpop.permute.xlu0 %1367
        %v1371 = vadd.f32 %v1315, %v1366
        %v1372 = vadd.f32 %v1316, %v1368
        %s1373 = sld [smem:[#allocation3 + $0x100]]
        %v1374 = vstv %s1373
        %v1375 = vmul.f32 %v1374, %v1249
        %v1376 = vmul.f32 %v1374, %v1250
        %1379 = vrot.lane.b32.xlu0 %v1375, 126
        %v1380 = vpop.permute.xlu0 %1379
        %1381 = vrot.lane.b32.xlu0 %v1376, 126
        %v1382 = vpop.permute.xlu0 %1381
        %v1385 = vadd.f32 %v1329, %v1380
        %v1386 = vadd.f32 %v1330, %v1382
        %v1387 = vld [vmem:[%s243 + $0x1] sm:$0xff]
        %v1388 = vld [vmem:[%s243 + $0x9] sm:$0xff]
        %s1389 = sld [smem:[#allocation3 + $0x15]]
        %v1390 = vstv %s1389
        %v1391 = vmul.f32 %v1390, %v1387
        %v1392 = vmul.f32 %v1390, %v1388
        %v1393 = vadd.f32 %v1343, %v1391
        %v1394 = vadd.f32 %v1344, %v1392
        %s1395 = sld [smem:[#allocation3 + $0x39]]
        %v1396 = vstv %s1395
        %v1397 = vmul.f32 %v1396, %v1387
        %v1398 = vmul.f32 %v1396, %v1388
        %v1399 = vadd.f32 %v1357, %v1397
        %v1400 = vadd.f32 %v1358, %v1398
        %s1401 = sld [smem:[#allocation3 + $0x5d]]
        %v1402 = vstv %s1401
        %v1403 = vmul.f32 %v1402, %v1387
        %v1404 = vmul.f32 %v1402, %v1388
        %v1405 = vadd.f32 %v1371, %v1403
        %v1406 = vadd.f32 %v1372, %v1404
        %s1407 = sld [smem:[#allocation3 + $0x101]]
        %v1408 = vstv %s1407
        %v1409 = vmul.f32 %v1408, %v1387
        %v1410 = vmul.f32 %v1408, %v1388
        %v1411 = vadd.f32 %v1385, %v1409
        %v1412 = vadd.f32 %v1386, %v1410
        %s1413 = sld [smem:[#allocation3 + $0x16]]
        %v1414 = vstv %s1413
        %v1415 = vmul.f32 %v1414, %v1387
        %v1416 = vmul.f32 %v1414, %v1388
        %1419 = vrot.lane.b32.xlu0 %v1415, 127
        %v1420 = vpop.permute.xlu0 %1419
        %1421 = vrot.lane.b32.xlu0 %v1416, 127
        %v1422 = vpop.permute.xlu0 %1421
        %v1425 = vadd.f32 %v1393, %v1420
        %v1426 = vadd.f32 %v1394, %v1422
        %s1427 = sld [smem:[#allocation3 + $0x3a]]
        %v1428 = vstv %s1427
        %v1429 = vmul.f32 %v1428, %v1387
        %v1430 = vmul.f32 %v1428, %v1388
        %1433 = vrot.lane.b32.xlu0 %v1429, 127
        %v1434 = vpop.permute.xlu0 %1433
        %1435 = vrot.lane.b32.xlu0 %v1430, 127
        %v1436 = vpop.permute.xlu0 %1435
        %v1439 = vadd.f32 %v1399, %v1434
        %v1440 = vadd.f32 %v1400, %v1436
        %s1441 = sld [smem:[#allocation3 + $0x5e]]
        %v1442 = vstv %s1441
        %v1443 = vmul.f32 %v1442, %v1387
        %v1444 = vmul.f32 %v1442, %v1388
        %1447 = vrot.lane.b32.xlu0 %v1443, 127
        %v1448 = vpop.permute.xlu0 %1447
        %1449 = vrot.lane.b32.xlu0 %v1444, 127
        %v1450 = vpop.permute.xlu0 %1449
        %v1453 = vadd.f32 %v1405, %v1448
        %v1454 = vadd.f32 %v1406, %v1450
        %s1455 = sld [smem:[#allocation3 + $0x102]]
        %v1456 = vstv %s1455
        %v1457 = vmul.f32 %v1456, %v1387
        %v1458 = vmul.f32 %v1456, %v1388
        %1461 = vrot.lane.b32.xlu0 %v1457, 127
        %v1462 = vpop.permute.xlu0 %1461
        %1463 = vrot.lane.b32.xlu0 %v1458, 127
        %v1464 = vpop.permute.xlu0 %1463
        %v1467 = vadd.f32 %v1411, %v1462
        %v1468 = vadd.f32 %v1412, %v1464
        %s1469 = sld [smem:[#allocation3 + $0x17]]
        %v1470 = vstv %s1469
        %v1471 = vmul.f32 %v1470, %v1387
        %v1472 = vmul.f32 %v1470, %v1388
        %1475 = vrot.lane.b32.xlu0 %v1471, 126
        %v1476 = vpop.permute.xlu0 %1475
        %1477 = vrot.lane.b32.xlu0 %v1472, 126
        %v1478 = vpop.permute.xlu0 %1477
        %v1481 = vadd.f32 %v1425, %v1476
        %v1482 = vadd.f32 %v1426, %v1478
        %s1483 = sld [smem:[#allocation3 + $0x3b]]
        %v1484 = vstv %s1483
        %v1485 = vmul.f32 %v1484, %v1387
        %v1486 = vmul.f32 %v1484, %v1388
        %1489 = vrot.lane.b32.xlu0 %v1485, 126
        %v1490 = vpop.permute.xlu0 %1489
        %1491 = vrot.lane.b32.xlu0 %v1486, 126
        %v1492 = vpop.permute.xlu0 %1491
        %v1495 = vadd.f32 %v1439, %v1490
        %v1496 = vadd.f32 %v1440, %v1492
        %s1497 = sld [smem:[#allocation3 + $0x5f]]
        %v1498 = vstv %s1497
        %v1499 = vmul.f32 %v1498, %v1387
        %v1500 = vmul.f32 %v1498, %v1388
        %1503 = vrot.lane.b32.xlu0 %v1499, 126
        %v1504 = vpop.permute.xlu0 %1503
        %1505 = vrot.lane.b32.xlu0 %v1500, 126
        %v1506 = vpop.permute.xlu0 %1505
        %v1509 = vadd.f32 %v1453, %v1504
        %v1510 = vadd.f32 %v1454, %v1506
        %s1511 = sld [smem:[#allocation3 + $0x103]]
        %v1512 = vstv %s1511
        %v1513 = vmul.f32 %v1512, %v1387
        %v1514 = vmul.f32 %v1512, %v1388
        %1517 = vrot.lane.b32.xlu0 %v1513, 126
        %v1518 = vpop.permute.xlu0 %1517
        %1519 = vrot.lane.b32.xlu0 %v1514, 126
        %v1520 = vpop.permute.xlu0 %1519
        %v1523 = vadd.f32 %v1467, %v1518
        %v1524 = vadd.f32 %v1468, %v1520
        %v1525 = vld [vmem:[%s243 + $0x2] sm:$0xff]
        %v1526 = vld [vmem:[%s243 + $0xa] sm:$0xff]
        %s1527 = sld [smem:[#allocation3 + $0x18]]
        %v1528 = vstv %s1527
        %v1529 = vmul.f32 %v1528, %v1525
        %v1530 = vmul.f32 %v1528, %v1526
        %v1531 = vadd.f32 %v1481, %v1529
        %v1532 = vadd.f32 %v1482, %v1530
        %s1533 = sld [smem:[#allocation3 + $0x3c]]
        %v1534 = vstv %s1533
        %v1535 = vmul.f32 %v1534, %v1525
        %v1536 = vmul.f32 %v1534, %v1526
        %v1537 = vadd.f32 %v1495, %v1535
        %v1538 = vadd.f32 %v1496, %v1536
        %s1539 = sld [smem:[#allocation3 + $0x60]]
        %v1540 = vstv %s1539
        %v1541 = vmul.f32 %v1540, %v1525
        %v1542 = vmul.f32 %v1540, %v1526
        %v1543 = vadd.f32 %v1509, %v1541
        %v1544 = vadd.f32 %v1510, %v1542
        %s1545 = sld [smem:[#allocation3 + $0x104]]
        %v1546 = vstv %s1545
        %v1547 = vmul.f32 %v1546, %v1525
        %v1548 = vmul.f32 %v1546, %v1526
        %v1549 = vadd.f32 %v1523, %v1547
        %v1550 = vadd.f32 %v1524, %v1548
        %s1551 = sld [smem:[#allocation3 + $0x19]]
        %v1552 = vstv %s1551
        %v1553 = vmul.f32 %v1552, %v1525
        %v1554 = vmul.f32 %v1552, %v1526
        %1557 = vrot.lane.b32.xlu0 %v1553, 127
        %v1558 = vpop.permute.xlu0 %1557
        %1559 = vrot.lane.b32.xlu0 %v1554, 127
        %v1560 = vpop.permute.xlu0 %1559
        %v1563 = vadd.f32 %v1531, %v1558
        %v1564 = vadd.f32 %v1532, %v1560
        %s1565 = sld [smem:[#allocation3 + $0x3d]]
        %v1566 = vstv %s1565
        %v1567 = vmul.f32 %v1566, %v1525
        %v1568 = vmul.f32 %v1566, %v1526
        %1571 = vrot.lane.b32.xlu0 %v1567, 127
        %v1572 = vpop.permute.xlu0 %1571
        %1573 = vrot.lane.b32.xlu0 %v1568, 127
        %v1574 = vpop.permute.xlu0 %1573
        %v1577 = vadd.f32 %v1537, %v1572
        %v1578 = vadd.f32 %v1538, %v1574
        %s1579 = sld [smem:[#allocation3 + $0x61]]
        %v1580 = vstv %s1579
        %v1581 = vmul.f32 %v1580, %v1525
        %v1582 = vmul.f32 %v1580, %v1526
        %1585 = vrot.lane.b32.xlu0 %v1581, 127
        %v1586 = vpop.permute.xlu0 %1585
        %1587 = vrot.lane.b32.xlu0 %v1582, 127
        %v1588 = vpop.permute.xlu0 %1587
        %v1591 = vadd.f32 %v1543, %v1586
        %v1592 = vadd.f32 %v1544, %v1588
        %s1593 = sld [smem:[#allocation3 + $0x105]]
        %v1594 = vstv %s1593
        %v1595 = vmul.f32 %v1594, %v1525
        %v1596 = vmul.f32 %v1594, %v1526
        %1599 = vrot.lane.b32.xlu0 %v1595, 127
        %v1600 = vpop.permute.xlu0 %1599
        %1601 = vrot.lane.b32.xlu0 %v1596, 127
        %v1602 = vpop.permute.xlu0 %1601
        %v1605 = vadd.f32 %v1549, %v1600
        %v1606 = vadd.f32 %v1550, %v1602
        %s1607 = sld [smem:[#allocation3 + $0x1a]]
        %v1608 = vstv %s1607
        %v1609 = vmul.f32 %v1608, %v1525
        %v1610 = vmul.f32 %v1608, %v1526
        %1613 = vrot.lane.b32.xlu0 %v1609, 126
        %v1614 = vpop.permute.xlu0 %1613
        %1615 = vrot.lane.b32.xlu0 %v1610, 126
        %v1616 = vpop.permute.xlu0 %1615
        %v1619 = vadd.f32 %v1563, %v1614
        %v1620 = vadd.f32 %v1564, %v1616
        %s1621 = sld [smem:[#allocation3 + $0x3e]]
        %v1622 = vstv %s1621
        %v1623 = vmul.f32 %v1622, %v1525
        %v1624 = vmul.f32 %v1622, %v1526
        %1627 = vrot.lane.b32.xlu0 %v1623, 126
        %v1628 = vpop.permute.xlu0 %1627
        %1629 = vrot.lane.b32.xlu0 %v1624, 126
        %v1630 = vpop.permute.xlu0 %1629
        %v1633 = vadd.f32 %v1577, %v1628
        %v1634 = vadd.f32 %v1578, %v1630
        %s1635 = sld [smem:[#allocation3 + $0x62]]
        %v1636 = vstv %s1635
        %v1637 = vmul.f32 %v1636, %v1525
        %v1638 = vmul.f32 %v1636, %v1526
        %1641 = vrot.lane.b32.xlu0 %v1637, 126
        %v1642 = vpop.permute.xlu0 %1641
        %1643 = vrot.lane.b32.xlu0 %v1638, 126
        %v1644 = vpop.permute.xlu0 %1643
        %v1647 = vadd.f32 %v1591, %v1642
        %v1648 = vadd.f32 %v1592, %v1644
        %s1649 = sld [smem:[#allocation3 + $0x106]]
        %v1650 = vstv %s1649
        %v1651 = vmul.f32 %v1650, %v1525
        %v1652 = vmul.f32 %v1650, %v1526
        %1655 = vrot.lane.b32.xlu0 %v1651, 126
        %v1656 = vpop.permute.xlu0 %1655
        %1657 = vrot.lane.b32.xlu0 %v1652, 126
        %v1658 = vpop.permute.xlu0 %1657
        %v1661 = vadd.f32 %v1605, %v1656
        %v1662 = vadd.f32 %v1606, %v1658
        %v1663 = vld [vmem:[%s256] sm:$0xff]
        %v1664 = vld [vmem:[%s256 + $0x8] sm:$0xff]
        %s1665 = sld [smem:[#allocation3 + $0x1b]]
        %v1666 = vstv %s1665
        %v1667 = vmul.f32 %v1666, %v1663
        %v1668 = vmul.f32 %v1666, %v1664
        %v1669 = vadd.f32 %v1619, %v1667
        %v1670 = vadd.f32 %v1620, %v1668
        %s1671 = sld [smem:[#allocation3 + $0x3f]]
        %v1672 = vstv %s1671
        %v1673 = vmul.f32 %v1672, %v1663
        %v1674 = vmul.f32 %v1672, %v1664
        %v1675 = vadd.f32 %v1633, %v1673
        %v1676 = vadd.f32 %v1634, %v1674
        %s1677 = sld [smem:[#allocation3 + $0x63]]
        %v1678 = vstv %s1677
        %v1679 = vmul.f32 %v1678, %v1663
        %v1680 = vmul.f32 %v1678, %v1664
        %v1681 = vadd.f32 %v1647, %v1679
        %v1682 = vadd.f32 %v1648, %v1680
        %s1683 = sld [smem:[#allocation3 + $0x107]]
        %v1684 = vstv %s1683
        %v1685 = vmul.f32 %v1684, %v1663
        %v1686 = vmul.f32 %v1684, %v1664
        %v1687 = vadd.f32 %v1661, %v1685
        %v1688 = vadd.f32 %v1662, %v1686
        %s1689 = sld [smem:[#allocation3 + $0x1c]]
        %v1690 = vstv %s1689
        %v1691 = vmul.f32 %v1690, %v1663
        %v1692 = vmul.f32 %v1690, %v1664
        %1695 = vrot.lane.b32.xlu0 %v1691, 127
        %v1696 = vpop.permute.xlu0 %1695
        %1697 = vrot.lane.b32.xlu0 %v1692, 127
        %v1698 = vpop.permute.xlu0 %1697
        %v1701 = vadd.f32 %v1669, %v1696
        %v1702 = vadd.f32 %v1670, %v1698
        %s1703 = sld [smem:[#allocation3 + $0x40]]
        %v1704 = vstv %s1703
        %v1705 = vmul.f32 %v1704, %v1663
        %v1706 = vmul.f32 %v1704, %v1664
        %1709 = vrot.lane.b32.xlu0 %v1705, 127
        %v1710 = vpop.permute.xlu0 %1709
        %1711 = vrot.lane.b32.xlu0 %v1706, 127
        %v1712 = vpop.permute.xlu0 %1711
        %v1715 = vadd.f32 %v1675, %v1710
        %v1716 = vadd.f32 %v1676, %v1712
        %s1717 = sld [smem:[#allocation3 + $0x64]]
        %v1718 = vstv %s1717
        %v1719 = vmul.f32 %v1718, %v1663
        %v1720 = vmul.f32 %v1718, %v1664
        %1723 = vrot.lane.b32.xlu0 %v1719, 127
        %v1724 = vpop.permute.xlu0 %1723
        %1725 = vrot.lane.b32.xlu0 %v1720, 127
        %v1726 = vpop.permute.xlu0 %1725
        %v1729 = vadd.f32 %v1681, %v1724
        %v1730 = vadd.f32 %v1682, %v1726
        %s1731 = sld [smem:[#allocation3 + $0x108]]
        %v1732 = vstv %s1731
        %v1733 = vmul.f32 %v1732, %v1663
        %v1734 = vmul.f32 %v1732, %v1664
        %1737 = vrot.lane.b32.xlu0 %v1733, 127
        %v1738 = vpop.permute.xlu0 %1737
        %1739 = vrot.lane.b32.xlu0 %v1734, 127
        %v1740 = vpop.permute.xlu0 %1739
        %v1743 = vadd.f32 %v1687, %v1738
        %v1744 = vadd.f32 %v1688, %v1740
        %s1745 = sld [smem:[#allocation3 + $0x1d]]
        %v1746 = vstv %s1745
        %v1747 = vmul.f32 %v1746, %v1663
        %v1748 = vmul.f32 %v1746, %v1664
        %1751 = vrot.lane.b32.xlu0 %v1747, 126
        %v1752 = vpop.permute.xlu0 %1751
        %1753 = vrot.lane.b32.xlu0 %v1748, 126
        %v1754 = vpop.permute.xlu0 %1753
        %v1757 = vadd.f32 %v1701, %v1752
        %v1758 = vadd.f32 %v1702, %v1754
        %s1759 = sld [smem:[#allocation3 + $0x41]]
        %v1760 = vstv %s1759
        %v1761 = vmul.f32 %v1760, %v1663
        %v1762 = vmul.f32 %v1760, %v1664
        %1765 = vrot.lane.b32.xlu0 %v1761, 126
        %v1766 = vpop.permute.xlu0 %1765
        %1767 = vrot.lane.b32.xlu0 %v1762, 126
        %v1768 = vpop.permute.xlu0 %1767
        %v1771 = vadd.f32 %v1715, %v1766
        %v1772 = vadd.f32 %v1716, %v1768
        %s1773 = sld [smem:[#allocation3 + $0x65]]
        %v1774 = vstv %s1773
        %v1775 = vmul.f32 %v1774, %v1663
        %v1776 = vmul.f32 %v1774, %v1664
        %1779 = vrot.lane.b32.xlu0 %v1775, 126
        %v1780 = vpop.permute.xlu0 %1779
        %1781 = vrot.lane.b32.xlu0 %v1776, 126
        %v1782 = vpop.permute.xlu0 %1781
        %v1785 = vadd.f32 %v1729, %v1780
        %v1786 = vadd.f32 %v1730, %v1782
        %s1787 = sld [smem:[#allocation3 + $0x109]]
        %v1788 = vstv %s1787
        %v1789 = vmul.f32 %v1788, %v1663
        %v1790 = vmul.f32 %v1788, %v1664
        %1793 = vrot.lane.b32.xlu0 %v1789, 126
        %v1794 = vpop.permute.xlu0 %1793
        %1795 = vrot.lane.b32.xlu0 %v1790, 126
        %v1796 = vpop.permute.xlu0 %1795
        %v1799 = vadd.f32 %v1743, %v1794
        %v1800 = vadd.f32 %v1744, %v1796
        %v1801 = vld [vmem:[%s256 + $0x1] sm:$0xff]
        %v1802 = vld [vmem:[%s256 + $0x9] sm:$0xff]
        %s1803 = sld [smem:[#allocation3 + $0x1e]]
        %v1804 = vstv %s1803
        %v1805 = vmul.f32 %v1804, %v1801
        %v1806 = vmul.f32 %v1804, %v1802
        %v1807 = vadd.f32 %v1757, %v1805
        %v1808 = vadd.f32 %v1758, %v1806
        %s1809 = sld [smem:[#allocation3 + $0x42]]
        %v1810 = vstv %s1809
        %v1811 = vmul.f32 %v1810, %v1801
        %v1812 = vmul.f32 %v1810, %v1802
        %v1813 = vadd.f32 %v1771, %v1811
        %v1814 = vadd.f32 %v1772, %v1812
        %s1815 = sld [smem:[#allocation3 + $0x66]]
        %v1816 = vstv %s1815
        %v1817 = vmul.f32 %v1816, %v1801
        %v1818 = vmul.f32 %v1816, %v1802
        %v1819 = vadd.f32 %v1785, %v1817
        %v1820 = vadd.f32 %v1786, %v1818
        %s1821 = sld [smem:[#allocation3 + $0x10a]]
        %v1822 = vstv %s1821
        %v1823 = vmul.f32 %v1822, %v1801
        %v1824 = vmul.f32 %v1822, %v1802
        %v1825 = vadd.f32 %v1799, %v1823
        %v1826 = vadd.f32 %v1800, %v1824
        %s1827 = sld [smem:[#allocation3 + $0x1f]]
        %v1828 = vstv %s1827
        %v1829 = vmul.f32 %v1828, %v1801
        %v1830 = vmul.f32 %v1828, %v1802
        %1833 = vrot.lane.b32.xlu0 %v1829, 127
        %v1834 = vpop.permute.xlu0 %1833
        %1835 = vrot.lane.b32.xlu0 %v1830, 127
        %v1836 = vpop.permute.xlu0 %1835
        %v1839 = vadd.f32 %v1807, %v1834
        %v1840 = vadd.f32 %v1808, %v1836
        %s1841 = sld [smem:[#allocation3 + $0x43]]
        %v1842 = vstv %s1841
        %v1843 = vmul.f32 %v1842, %v1801
        %v1844 = vmul.f32 %v1842, %v1802
        %1847 = vrot.lane.b32.xlu0 %v1843, 127
        %v1848 = vpop.permute.xlu0 %1847
        %1849 = vrot.lane.b32.xlu0 %v1844, 127
        %v1850 = vpop.permute.xlu0 %1849
        %v1853 = vadd.f32 %v1813, %v1848
        %v1854 = vadd.f32 %v1814, %v1850
        %s1855 = sld [smem:[#allocation3 + $0x67]]
        %v1856 = vstv %s1855
        %v1857 = vmul.f32 %v1856, %v1801
        %v1858 = vmul.f32 %v1856, %v1802
        %1861 = vrot.lane.b32.xlu0 %v1857, 127
        %v1862 = vpop.permute.xlu0 %1861
        %1863 = vrot.lane.b32.xlu0 %v1858, 127
        %v1864 = vpop.permute.xlu0 %1863
        %v1867 = vadd.f32 %v1819, %v1862
        %v1868 = vadd.f32 %v1820, %v1864
        %s1869 = sld [smem:[#allocation3 + $0x10b]]
        %v1870 = vstv %s1869
        %v1871 = vmul.f32 %v1870, %v1801
        %v1872 = vmul.f32 %v1870, %v1802
        %1875 = vrot.lane.b32.xlu0 %v1871, 127
        %v1876 = vpop.permute.xlu0 %1875
        %1877 = vrot.lane.b32.xlu0 %v1872, 127
        %v1878 = vpop.permute.xlu0 %1877
        %v1881 = vadd.f32 %v1825, %v1876
        %v1882 = vadd.f32 %v1826, %v1878
        %s1883 = sld [smem:[#allocation3 + $0x20]]
        %v1884 = vstv %s1883
        %v1885 = vmul.f32 %v1884, %v1801
        %v1886 = vmul.f32 %v1884, %v1802
        %1889 = vrot.lane.b32.xlu0 %v1885, 126
        %v1890 = vpop.permute.xlu0 %1889
        %1891 = vrot.lane.b32.xlu0 %v1886, 126
        %v1892 = vpop.permute.xlu0 %1891
        %v1895 = vadd.f32 %v1839, %v1890
        %v1896 = vadd.f32 %v1840, %v1892
        %s1897 = sld [smem:[#allocation3 + $0x44]]
        %v1898 = vstv %s1897
        %v1899 = vmul.f32 %v1898, %v1801
        %v1900 = vmul.f32 %v1898, %v1802
        %1903 = vrot.lane.b32.xlu0 %v1899, 126
        %v1904 = vpop.permute.xlu0 %1903
        %1905 = vrot.lane.b32.xlu0 %v1900, 126
        %v1906 = vpop.permute.xlu0 %1905
        %v1909 = vadd.f32 %v1853, %v1904
        %v1910 = vadd.f32 %v1854, %v1906
        %s1911 = sld [smem:[#allocation3 + $0x68]]
        %v1912 = vstv %s1911
        %v1913 = vmul.f32 %v1912, %v1801
        %v1914 = vmul.f32 %v1912, %v1802
        %1917 = vrot.lane.b32.xlu0 %v1913, 126
        %v1918 = vpop.permute.xlu0 %1917
        %1919 = vrot.lane.b32.xlu0 %v1914, 126
        %v1920 = vpop.permute.xlu0 %1919
        %v1923 = vadd.f32 %v1867, %v1918
        %v1924 = vadd.f32 %v1868, %v1920
        %s1925 = sld [smem:[#allocation3 + $0x10c]]
        %v1926 = vstv %s1925
        %v1927 = vmul.f32 %v1926, %v1801
        %v1928 = vmul.f32 %v1926, %v1802
        %1931 = vrot.lane.b32.xlu0 %v1927, 126
        %v1932 = vpop.permute.xlu0 %1931
        %1933 = vrot.lane.b32.xlu0 %v1928, 126
        %v1934 = vpop.permute.xlu0 %1933
        %v1937 = vadd.f32 %v1881, %v1932
        %v1938 = vadd.f32 %v1882, %v1934
        %v1939 = vld [vmem:[%s256 + $0x2] sm:$0xff]
        %v1940 = vld [vmem:[%s256 + $0xa] sm:$0xff]
        %s1941 = sld [smem:[#allocation3 + $0x21]]
        %v1942 = vstv %s1941
        %v1943 = vmul.f32 %v1942, %v1939
        %v1944 = vmul.f32 %v1942, %v1940
        %v1945 = vadd.f32 %v1895, %v1943
        %v1946 = vadd.f32 %v1896, %v1944
        %s1947 = sld [smem:[#allocation3 + $0x45]]
        %v1948 = vstv %s1947
        %v1949 = vmul.f32 %v1948, %v1939
        %v1950 = vmul.f32 %v1948, %v1940
        %v1951 = vadd.f32 %v1909, %v1949
        %v1952 = vadd.f32 %v1910, %v1950
        %s1953 = sld [smem:[#allocation3 + $0x69]]
        %v1954 = vstv %s1953
        %v1955 = vmul.f32 %v1954, %v1939
        %v1956 = vmul.f32 %v1954, %v1940
        %v1957 = vadd.f32 %v1923, %v1955
        %v1958 = vadd.f32 %v1924, %v1956
        %s1959 = sld [smem:[#allocation3 + $0x10d]]
        %v1960 = vstv %s1959
        %v1961 = vmul.f32 %v1960, %v1939
        %v1962 = vmul.f32 %v1960, %v1940
        %v1963 = vadd.f32 %v1937, %v1961
        %v1964 = vadd.f32 %v1938, %v1962
        %s1965 = sld [smem:[#allocation3 + $0x22]]
        %v1966 = vstv %s1965
        %v1967 = vmul.f32 %v1966, %v1939
        %v1968 = vmul.f32 %v1966, %v1940
        %1971 = vrot.lane.b32.xlu0 %v1967, 127
        %v1972 = vpop.permute.xlu0 %1971
        %1973 = vrot.lane.b32.xlu0 %v1968, 127
        %v1974 = vpop.permute.xlu0 %1973
        %v1977 = vadd.f32 %v1945, %v1972
        %v1978 = vadd.f32 %v1946, %v1974
        %s1979 = sld [smem:[#allocation3 + $0x46]]
        %v1980 = vstv %s1979
        %v1981 = vmul.f32 %v1980, %v1939
        %v1982 = vmul.f32 %v1980, %v1940
        %1985 = vrot.lane.b32.xlu0 %v1981, 127
        %v1986 = vpop.permute.xlu0 %1985
        %1987 = vrot.lane.b32.xlu0 %v1982, 127
        %v1988 = vpop.permute.xlu0 %1987
        %v1991 = vadd.f32 %v1951, %v1986
        %v1992 = vadd.f32 %v1952, %v1988
        %s1993 = sld [smem:[#allocation3 + $0x6a]]
        %v1994 = vstv %s1993
        %v1995 = vmul.f32 %v1994, %v1939
        %v1996 = vmul.f32 %v1994, %v1940
        %1999 = vrot.lane.b32.xlu0 %v1995, 127
        %v2000 = vpop.permute.xlu0 %1999
        %2001 = vrot.lane.b32.xlu0 %v1996, 127
        %v2002 = vpop.permute.xlu0 %2001
        %v2005 = vadd.f32 %v1957, %v2000
        %v2006 = vadd.f32 %v1958, %v2002
        %s2007 = sld [smem:[#allocation3 + $0x10e]]
        %v2008 = vstv %s2007
        %v2009 = vmul.f32 %v2008, %v1939
        %v2010 = vmul.f32 %v2008, %v1940
        %2013 = vrot.lane.b32.xlu0 %v2009, 127
        %v2014 = vpop.permute.xlu0 %2013
        %2015 = vrot.lane.b32.xlu0 %v2010, 127
        %v2016 = vpop.permute.xlu0 %2015
        %v2019 = vadd.f32 %v1963, %v2014
        %v2020 = vadd.f32 %v1964, %v2016
        %s2021 = sld [smem:[#allocation3 + $0x23]]
        %v2022 = vstv %s2021
        %v2023 = vmul.f32 %v2022, %v1939
        %v2024 = vmul.f32 %v2022, %v1940
        %2027 = vrot.lane.b32.xlu0 %v2023, 126
        %v2028 = vpop.permute.xlu0 %2027
        %2029 = vrot.lane.b32.xlu0 %v2024, 126
        %v2030 = vpop.permute.xlu0 %2029
        %v2033 = vadd.f32 %v1977, %v2028
        %v2034 = vadd.f32 %v1978, %v2030
        %s2035 = sld [smem:[#allocation3 + $0x47]]
        %v2036 = vstv %s2035
        %v2037 = vmul.f32 %v2036, %v1939
        %v2038 = vmul.f32 %v2036, %v1940
        %2041 = vrot.lane.b32.xlu0 %v2037, 126
        %v2042 = vpop.permute.xlu0 %2041
        %2043 = vrot.lane.b32.xlu0 %v2038, 126
        %v2044 = vpop.permute.xlu0 %2043
        %v2047 = vadd.f32 %v1991, %v2042
        %v2048 = vadd.f32 %v1992, %v2044
        %s2049 = sld [smem:[#allocation3 + $0x6b]]
        %v2050 = vstv %s2049
        %v2051 = vmul.f32 %v2050, %v1939
        %v2052 = vmul.f32 %v2050, %v1940
        %2055 = vrot.lane.b32.xlu0 %v2051, 126
        %v2056 = vpop.permute.xlu0 %2055
        %2057 = vrot.lane.b32.xlu0 %v2052, 126
        %v2058 = vpop.permute.xlu0 %2057
        %v2061 = vadd.f32 %v2005, %v2056
        %v2062 = vadd.f32 %v2006, %v2058
        %s2063 = sld [smem:[#allocation3 + $0x10f]]
        %v2064 = vstv %s2063
        %v2065 = vmul.f32 %v2064, %v1939
        %v2066 = vmul.f32 %v2064, %v1940
        %2069 = vrot.lane.b32.xlu0 %v2065, 126
        %v2070 = vpop.permute.xlu0 %2069
        %2071 = vrot.lane.b32.xlu0 %v2066, 126
        %v2072 = vpop.permute.xlu0 %2071
        %v2075 = vadd.f32 %v2019, %v2070
        %v2076 = vadd.f32 %v2020, %v2072
        %v2077 = vmul.f32 %v2033, %v2033
        %v2078 = vmul.f32 %v2034, %v2034
        %vm2079 = vcmask 130048
        %v2080 = vsel %vm2079, %v2077, 0.0
        %v2081 = vsel %vm2079, %v2078, 0.0
        %v2082 = vadd.f32 %v2080, %v2081
        %2083 = vadd.xlane.f32.xlu0 %v2082
        %v2084 = vpop.xlane.xlu0 %2083
        %v2085 = vrot.slane %v2084, 4
        %v2086 = vadd.f32 %v2084, %v2085
        %v2087 = vrot.slane %v2086, 2
        %v2088 = vadd.f32 %v2086, %v2087
        %v2089 = vrot.slane %v2088, 1
        %v2090 = vadd.f32 %v2088, %v2089
        %s2091 = vtos %v2090
        %v2092 = vstv %s2091
        %v2093 = vrcp.pop 256.0
        %v2094 = vmul.f32 %v2092, %v2093
        %v2095 = vadd.f32 %v2094, 1e-06
        %v2096 = vrsqrt.pop %v2095
        %v2097 = vmul.f32 %v2033, %v2096
        %v2098 = vmul.f32 %v2034, %v2096
        %s2099 = sld [smem:[#allocation6 + $0x80]]
        %v2100 = vstv %s2099
        %v2101 = vmul.f32 %v2100, %v2097
        %v2102 = vmul.f32 %v2100, %v2098
        %s2103 = sld [smem:[#allocation6 + $0x100]]
        %v2104 = vstv %s2103
        %v2105 = vadd.f32 %v2101, %v2104
        %v2106 = vadd.f32 %v2102, %v2104
        %s2107 = sld [smem:[#allocation6 + $0x180]]
        %v2108 = vstv %s2107
        %v2109 = vmax.f32 %v2105, %v2108
        %v2110 = vmax.f32 %v2106, %v2108
        %v2111 = vmul.f32 %v2047, %v2047
        %v2112 = vmul.f32 %v2048, %v2048
        %v2113 = vsel %vm2079, %v2111, 0.0
        %v2114 = vsel %vm2079, %v2112, 0.0
        %v2115 = vadd.f32 %v2113, %v2114
        %2116 = vadd.xlane.f32.xlu0 %v2115
        %v2117 = vpop.xlane.xlu0 %2116
        %v2118 = vrot.slane %v2117, 4
        %v2119 = vadd.f32 %v2117, %v2118
        %v2120 = vrot.slane %v2119, 2
        %v2121 = vadd.f32 %v2119, %v2120
        %v2122 = vrot.slane %v2121, 1
        %v2123 = vadd.f32 %v2121, %v2122
        %s2124 = vtos %v2123
        %v2125 = vstv %s2124
        %v2126 = vmul.f32 %v2125, %v2093
        %v2127 = vadd.f32 %v2126, 1e-06
        %v2128 = vrsqrt.pop %v2127
        %v2129 = vmul.f32 %v2047, %v2128
        %v2130 = vmul.f32 %v2048, %v2128
        %s2131 = sld [smem:[#allocation6 + $0x81]]
        %v2132 = vstv %s2131
        %v2133 = vmul.f32 %v2132, %v2129
        %v2134 = vmul.f32 %v2132, %v2130
        %s2135 = sld [smem:[#allocation6 + $0x101]]
        %v2136 = vstv %s2135
        %v2137 = vadd.f32 %v2133, %v2136
        %v2138 = vadd.f32 %v2134, %v2136
        %s2139 = sld [smem:[#allocation6 + $0x181]]
        %v2140 = vstv %s2139
        %v2141 = vmax.f32 %v2137, %v2140
        %v2142 = vmax.f32 %v2138, %v2140
        %v2143 = vmul.f32 %v2061, %v2061
        %v2144 = vmul.f32 %v2062, %v2062
        %v2145 = vsel %vm2079, %v2143, 0.0
        %v2146 = vsel %vm2079, %v2144, 0.0
        %v2147 = vadd.f32 %v2145, %v2146
        %2148 = vadd.xlane.f32.xlu0 %v2147
        %v2149 = vpop.xlane.xlu0 %2148
        %v2150 = vrot.slane %v2149, 4
        %v2151 = vadd.f32 %v2149, %v2150
        %v2152 = vrot.slane %v2151, 2
        %v2153 = vadd.f32 %v2151, %v2152
        %v2154 = vrot.slane %v2153, 1
        %v2155 = vadd.f32 %v2153, %v2154
        %s2156 = vtos %v2155
        %v2157 = vstv %s2156
        %v2158 = vmul.f32 %v2157, %v2093
        %v2159 = vadd.f32 %v2158, 1e-06
        %v2160 = vrsqrt.pop %v2159
        %v2161 = vmul.f32 %v2061, %v2160
        %v2162 = vmul.f32 %v2062, %v2160
        %s2163 = sld [smem:[#allocation6 + $0x82]]
        %v2164 = vstv %s2163
        %v2165 = vmul.f32 %v2164, %v2161
        %v2166 = vmul.f32 %v2164, %v2162
        %s2167 = sld [smem:[#allocation6 + $0x102]]
        %v2168 = vstv %s2167
        %v2169 = vadd.f32 %v2165, %v2168
        %v2170 = vadd.f32 %v2166, %v2168
        %s2171 = sld [smem:[#allocation6 + $0x182]]
        %v2172 = vstv %s2171
        %v2173 = vmax.f32 %v2169, %v2172
        %v2174 = vmax.f32 %v2170, %v2172
        %v2175 = vmul.f32 %v2075, %v2075
        %v2176 = vmul.f32 %v2076, %v2076
        %v2177 = vsel %vm2079, %v2175, 0.0
        %v2178 = vsel %vm2079, %v2176, 0.0
        %v2179 = vadd.f32 %v2177, %v2178
        %2180 = vadd.xlane.f32.xlu0 %v2179
        %v2181 = vpop.xlane.xlu0 %2180
        %v2182 = vrot.slane %v2181, 4
        %v2183 = vadd.f32 %v2181, %v2182
        %v2184 = vrot.slane %v2183, 2
        %v2185 = vadd.f32 %v2183, %v2184
        %v2186 = vrot.slane %v2185, 1
        %v2187 = vadd.f32 %v2185, %v2186
        %s2188 = vtos %v2187
        %v2189 = vstv %s2188
        %v2190 = vmul.f32 %v2189, %v2093
        %v2191 = vadd.f32 %v2190, 1e-06
        %v2192 = vrsqrt.pop %v2191
        %v2193 = vmul.f32 %v2075, %v2192
        %v2194 = vmul.f32 %v2076, %v2192
        %s2195 = sld [smem:[#allocation6 + $0x83]]
        %v2196 = vstv %s2195
        %v2197 = vmul.f32 %v2196, %v2193
        %v2198 = vmul.f32 %v2196, %v2194
        %s2199 = sld [smem:[#allocation6 + $0x103]]
        %v2200 = vstv %s2199
        %v2201 = vadd.f32 %v2197, %v2200
        %v2202 = vadd.f32 %v2198, %v2200
        %s2203 = sld [smem:[#allocation6 + $0x183]]
        %v2204 = vstv %s2203
        %v2205 = vmax.f32 %v2201, %v2204
        %v2206 = vmax.f32 %v2202, %v2204
        %2209 = vrot.lane.b32.xlu0 %v2109, 1
        %v2210 = vpop.permute.xlu0 %2209
        %2211 = vrot.lane.b32.xlu0 %v2110, 1
        %v2212 = vpop.permute.xlu0 %2211
        %2215 = vst.msk [vmem:[#allocation2 + $0x1] sm:$0xff] %vm215, %v2210
        %2216 = vst.msk [vmem:[#allocation2 + $0x9] sm:$0xff] %vm215, %v2212
        %2217 = vst.msk [vmem:[#allocation2 - $0x1] sm:$0x2] %vm218, %v2210
        %2218 = vst.msk [vmem:[#allocation2 + $0xb] sm:$0x40] %vm220, %v2212
        %2221 = vrot.lane.b32.xlu0 %v2141, 1
        %v2222 = vpop.permute.xlu0 %2221
        %2223 = vrot.lane.b32.xlu0 %v2142, 1
        %v2224 = vpop.permute.xlu0 %2223
        %2227 = vst.msk [vmem:[%s230 + $0x1] sm:$0xff] %vm215, %v2222
        %2228 = vst.msk [vmem:[%s230 + $0x9] sm:$0xff] %vm215, %v2224
        %2229 = vst.msk [vmem:[%s230 - $0x1] sm:$0x2] %vm218, %v2222
        %2230 = vst.msk [vmem:[%s230 + $0xb] sm:$0x40] %vm220, %v2224
        %2233 = vrot.lane.b32.xlu0 %v2173, 1
        %v2234 = vpop.permute.xlu0 %2233
        %2235 = vrot.lane.b32.xlu0 %v2174, 1
        %v2236 = vpop.permute.xlu0 %2235
        %2239 = vst.msk [vmem:[%s243 + $0x1] sm:$0xff] %vm215, %v2234
        %2240 = vst.msk [vmem:[%s243 + $0x9] sm:$0xff] %vm215, %v2236
        %2241 = vst.msk [vmem:[%s243 - $0x1] sm:$0x2] %vm218, %v2234
        %2242 = vst.msk [vmem:[%s243 + $0xb] sm:$0x40] %vm220, %v2236
        %2245 = vrot.lane.b32.xlu0 %v2205, 1
        %v2246 = vpop.permute.xlu0 %2245
        %2247 = vrot.lane.b32.xlu0 %v2206, 1
        %v2248 = vpop.permute.xlu0 %2247
        %2251 = vst.msk [vmem:[%s256 + $0x1] sm:$0xff] %vm215, %v2246
        %2252 = vst.msk [vmem:[%s256 + $0x9] sm:$0xff] %vm215, %v2248
        %2253 = vst.msk [vmem:[%s256 - $0x1] sm:$0x2] %vm218, %v2246
        %2254 = vst.msk [vmem:[%s256 + $0xb] sm:$0x40] %vm220, %v2248
        %v2255 = vld [vmem:[#allocation2] sm:$0xff]
        %v2256 = vld [vmem:[#allocation2 + $0x8] sm:$0xff]
        %v2257 = vld [vmem:[#allocation2 + $0x10] sm:$0x3]
        %2261 = vrot.lane.b32.xlu0 %v2255, 126
        %v2262 = vpop.permute.xlu0 %2261
        %2263 = vrot.lane.b32.xlu0 %v2256, 126
        %v2264 = vpop.permute.xlu0 %2263
        %2265 = vrot.lane.b32.xlu0 %v2257, 126
        %v2266 = vpop.permute.xlu0 %2265
        %2270 = vst.msk [vmem:[#allocation2] sm:$0xff] %vm276, %v2262
        %2271 = vst.msk [vmem:[#allocation2 + $0x8] sm:$0xff] %vm276, %v2264
        %2272 = vst.msk [vmem:[#allocation2 + $0x10] sm:$0x3] %vm279, %v2266
        %v2273 = vld [vmem:[#allocation2] sm:$0xff]
        %v2274 = vld [vmem:[#allocation2 + $0x8] sm:$0xff]
        %v2275 = vld [vmem:[#allocation2 + $0x10] sm:$0x3]
        %2279 = vrot.lane.b32.xlu0 %v2273, 2
        %v2280 = vpop.permute.xlu0 %2279
        %2281 = vrot.lane.b32.xlu0 %v2274, 2
        %v2282 = vpop.permute.xlu0 %2281
        %2283 = vrot.lane.b32.xlu0 %v2275, 2
        %v2284 = vpop.permute.xlu0 %2283
        %2288 = vst.msk [vmem:[#allocation2] sm:$0xff] %vm296, %v2280
        %2289 = vst.msk [vmem:[#allocation2 + $0x8] sm:$0xff] %vm296, %v2282
        %2290 = vst.msk [vmem:[#allocation2 + $0x10] sm:$0x3] %vm299, %v2284
        %v2291 = vld [vmem:[%s230] sm:$0xff]
        %v2292 = vld [vmem:[%s230 + $0x8] sm:$0xff]
        %v2293 = vld [vmem:[%s230 + $0x10] sm:$0x3]
        %2297 = vrot.lane.b32.xlu0 %v2291, 126
        %v2298 = vpop.permute.xlu0 %2297
        %2299 = vrot.lane.b32.xlu0 %v2292, 126
        %v2300 = vpop.permute.xlu0 %2299
        %2301 = vrot.lane.b32.xlu0 %v2293, 126
        %v2302 = vpop.permute.xlu0 %2301
        %2306 = vst.msk [vmem:[%s230] sm:$0xff] %vm276, %v2298
        %2307 = vst.msk [vmem:[%s230 + $0x8] sm:$0xff] %vm276, %v2300
        %2308 = vst.msk [vmem:[%s230 + $0x10] sm:$0x3] %vm279, %v2302
        %v2309 = vld [vmem:[%s230] sm:$0xff]
        %v2310 = vld [vmem:[%s230 + $0x8] sm:$0xff]
        %v2311 = vld [vmem:[%s230 + $0x10] sm:$0x3]
        %2315 = vrot.lane.b32.xlu0 %v2309, 2
        %v2316 = vpop.permute.xlu0 %2315
        %2317 = vrot.lane.b32.xlu0 %v2310, 2
        %v2318 = vpop.permute.xlu0 %2317
        %2319 = vrot.lane.b32.xlu0 %v2311, 2
        %v2320 = vpop.permute.xlu0 %2319
        %2324 = vst.msk [vmem:[%s230] sm:$0xff] %vm296, %v2316
        %2325 = vst.msk [vmem:[%s230 + $0x8] sm:$0xff] %vm296, %v2318
        %2326 = vst.msk [vmem:[%s230 + $0x10] sm:$0x3] %vm299, %v2320
        %v2327 = vld [vmem:[%s243] sm:$0xff]
        %v2328 = vld [vmem:[%s243 + $0x8] sm:$0xff]
        %v2329 = vld [vmem:[%s243 + $0x10] sm:$0x3]
        %2333 = vrot.lane.b32.xlu0 %v2327, 126
        %v2334 = vpop.permute.xlu0 %2333
        %2335 = vrot.lane.b32.xlu0 %v2328, 126
        %v2336 = vpop.permute.xlu0 %2335
        %2337 = vrot.lane.b32.xlu0 %v2329, 126
        %v2338 = vpop.permute.xlu0 %2337
        %2342 = vst.msk [vmem:[%s243] sm:$0xff] %vm276, %v2334
        %2343 = vst.msk [vmem:[%s243 + $0x8] sm:$0xff] %vm276, %v2336
        %2344 = vst.msk [vmem:[%s243 + $0x10] sm:$0x3] %vm279, %v2338
        %v2345 = vld [vmem:[%s243] sm:$0xff]
        %v2346 = vld [vmem:[%s243 + $0x8] sm:$0xff]
        %v2347 = vld [vmem:[%s243 + $0x10] sm:$0x3]
        %2351 = vrot.lane.b32.xlu0 %v2345, 2
        %v2352 = vpop.permute.xlu0 %2351
        %2353 = vrot.lane.b32.xlu0 %v2346, 2
        %v2354 = vpop.permute.xlu0 %2353
        %2355 = vrot.lane.b32.xlu0 %v2347, 2
        %v2356 = vpop.permute.xlu0 %2355
        %2360 = vst.msk [vmem:[%s243] sm:$0xff] %vm296, %v2352
        %2361 = vst.msk [vmem:[%s243 + $0x8] sm:$0xff] %vm296, %v2354
        %2362 = vst.msk [vmem:[%s243 + $0x10] sm:$0x3] %vm299, %v2356
        %v2363 = vld [vmem:[%s256] sm:$0xff]
        %v2364 = vld [vmem:[%s256 + $0x8] sm:$0xff]
        %v2365 = vld [vmem:[%s256 + $0x10] sm:$0x3]
        %2369 = vrot.lane.b32.xlu0 %v2363, 126
        %v2370 = vpop.permute.xlu0 %2369
        %2371 = vrot.lane.b32.xlu0 %v2364, 126
        %v2372 = vpop.permute.xlu0 %2371
        %2373 = vrot.lane.b32.xlu0 %v2365, 126
        %v2374 = vpop.permute.xlu0 %2373
        %2378 = vst.msk [vmem:[%s256] sm:$0xff] %vm276, %v2370
        %2379 = vst.msk [vmem:[%s256 + $0x8] sm:$0xff] %vm276, %v2372
        %2380 = vst.msk [vmem:[%s256 + $0x10] sm:$0x3] %vm279, %v2374
        %v2381 = vld [vmem:[%s256] sm:$0xff]
        %v2382 = vld [vmem:[%s256 + $0x8] sm:$0xff]
        %v2383 = vld [vmem:[%s256 + $0x10] sm:$0x3]
        %2387 = vrot.lane.b32.xlu0 %v2381, 2
        %v2388 = vpop.permute.xlu0 %2387
        %2389 = vrot.lane.b32.xlu0 %v2382, 2
        %v2390 = vpop.permute.xlu0 %2389
        %2391 = vrot.lane.b32.xlu0 %v2383, 2
        %v2392 = vpop.permute.xlu0 %2391
        %2396 = vst.msk [vmem:[%s256] sm:$0xff] %vm296, %v2388
        %2397 = vst.msk [vmem:[%s256 + $0x8] sm:$0xff] %vm296, %v2390
        %2398 = vst.msk [vmem:[%s256 + $0x10] sm:$0x3] %vm299, %v2392
        %s2399 = sld [smem:[#allocation6 + $0x200]]
        %v2400 = vstv %s2399
        %v2401 = vadd.f32 %v2400, 0.0
        %s2402 = sld [smem:[#allocation6 + $0x201]]
        %v2403 = vstv %s2402
        %v2404 = vadd.f32 %v2403, 0.0
        %s2405 = sld [smem:[#allocation6 + $0x202]]
        %v2406 = vstv %s2405
        %v2407 = vadd.f32 %v2406, 0.0
        %s2408 = sld [smem:[#allocation6 + $0x203]]
        %v2409 = vstv %s2408
        %v2410 = vadd.f32 %v2409, 0.0
        %v2411 = vld [vmem:[#allocation2] sm:$0xff]
        %v2412 = vld [vmem:[#allocation2 + $0x8] sm:$0xff]
        %s2413 = sld [smem:[#allocation3 + $0x80]]
        %v2414 = vstv %s2413
        %v2415 = vmul.f32 %v2414, %v2411
        %v2416 = vmul.f32 %v2414, %v2412
        %v2417 = vadd.f32 %v2401, %v2415
        %v2418 = vadd.f32 %v2401, %v2416
        %s2419 = sld [smem:[#allocation3 + $0xa4]]
        %v2420 = vstv %s2419
        %v2421 = vmul.f32 %v2420, %v2411
        %v2422 = vmul.f32 %v2420, %v2412
        %v2423 = vadd.f32 %v2404, %v2421
        %v2424 = vadd.f32 %v2404, %v2422
        %s2425 = sld [smem:[#allocation3 + $0xc8]]
        %v2426 = vstv %s2425
        %v2427 = vmul.f32 %v2426, %v2411
        %v2428 = vmul.f32 %v2426, %v2412
        %v2429 = vadd.f32 %v2407, %v2427
        %v2430 = vadd.f32 %v2407, %v2428
        %s2431 = sld [smem:[#allocation3 + $0xec]]
        %v2432 = vstv %s2431
        %v2433 = vmul.f32 %v2432, %v2411
        %v2434 = vmul.f32 %v2432, %v2412
        %v2435 = vadd.f32 %v2410, %v2433
        %v2436 = vadd.f32 %v2410, %v2434
        %s2437 = sld [smem:[#allocation3 + $0x81]]
        %v2438 = vstv %s2437
        %v2439 = vmul.f32 %v2438, %v2411
        %v2440 = vmul.f32 %v2438, %v2412
        %2443 = vrot.lane.b32.xlu0 %v2439, 127
        %v2444 = vpop.permute.xlu0 %2443
        %2445 = vrot.lane.b32.xlu0 %v2440, 127
        %v2446 = vpop.permute.xlu0 %2445
        %v2449 = vadd.f32 %v2417, %v2444
        %v2450 = vadd.f32 %v2418, %v2446
        %s2451 = sld [smem:[#allocation3 + $0xa5]]
        %v2452 = vstv %s2451
        %v2453 = vmul.f32 %v2452, %v2411
        %v2454 = vmul.f32 %v2452, %v2412
        %2457 = vrot.lane.b32.xlu0 %v2453, 127
        %v2458 = vpop.permute.xlu0 %2457
        %2459 = vrot.lane.b32.xlu0 %v2454, 127
        %v2460 = vpop.permute.xlu0 %2459
        %v2463 = vadd.f32 %v2423, %v2458
        %v2464 = vadd.f32 %v2424, %v2460
        %s2465 = sld [smem:[#allocation3 + $0xc9]]
        %v2466 = vstv %s2465
        %v2467 = vmul.f32 %v2466, %v2411
        %v2468 = vmul.f32 %v2466, %v2412
        %2471 = vrot.lane.b32.xlu0 %v2467, 127
        %v2472 = vpop.permute.xlu0 %2471
        %2473 = vrot.lane.b32.xlu0 %v2468, 127
        %v2474 = vpop.permute.xlu0 %2473
        %v2477 = vadd.f32 %v2429, %v2472
        %v2478 = vadd.f32 %v2430, %v2474
        %s2479 = sld [smem:[#allocation3 + $0xed]]
        %v2480 = vstv %s2479
        %v2481 = vmul.f32 %v2480, %v2411
        %v2482 = vmul.f32 %v2480, %v2412
        %2485 = vrot.lane.b32.xlu0 %v2481, 127
        %v2486 = vpop.permute.xlu0 %2485
        %2487 = vrot.lane.b32.xlu0 %v2482, 127
        %v2488 = vpop.permute.xlu0 %2487
        %v2491 = vadd.f32 %v2435, %v2486
        %v2492 = vadd.f32 %v2436, %v2488
        %s2493 = sld [smem:[#allocation3 + $0x82]]
        %v2494 = vstv %s2493
        %v2495 = vmul.f32 %v2494, %v2411
        %v2496 = vmul.f32 %v2494, %v2412
        %2499 = vrot.lane.b32.xlu0 %v2495, 126
        %v2500 = vpop.permute.xlu0 %2499
        %2501 = vrot.lane.b32.xlu0 %v2496, 126
        %v2502 = vpop.permute.xlu0 %2501
        %v2505 = vadd.f32 %v2449, %v2500
        %v2506 = vadd.f32 %v2450, %v2502
        %s2507 = sld [smem:[#allocation3 + $0xa6]]
        %v2508 = vstv %s2507
        %v2509 = vmul.f32 %v2508, %v2411
        %v2510 = vmul.f32 %v2508, %v2412
        %2513 = vrot.lane.b32.xlu0 %v2509, 126
        %v2514 = vpop.permute.xlu0 %2513
        %2515 = vrot.lane.b32.xlu0 %v2510, 126
        %v2516 = vpop.permute.xlu0 %2515
        %v2519 = vadd.f32 %v2463, %v2514
        %v2520 = vadd.f32 %v2464, %v2516
        %s2521 = sld [smem:[#allocation3 + $0xca]]
        %v2522 = vstv %s2521
        %v2523 = vmul.f32 %v2522, %v2411
        %v2524 = vmul.f32 %v2522, %v2412
        %2527 = vrot.lane.b32.xlu0 %v2523, 126
        %v2528 = vpop.permute.xlu0 %2527
        %2529 = vrot.lane.b32.xlu0 %v2524, 126
        %v2530 = vpop.permute.xlu0 %2529
        %v2533 = vadd.f32 %v2477, %v2528
        %v2534 = vadd.f32 %v2478, %v2530
        %s2535 = sld [smem:[#allocation3 + $0xee]]
        %v2536 = vstv %s2535
        %v2537 = vmul.f32 %v2536, %v2411
        %v2538 = vmul.f32 %v2536, %v2412
        %2541 = vrot.lane.b32.xlu0 %v2537, 126
        %v2542 = vpop.permute.xlu0 %2541
        %2543 = vrot.lane.b32.xlu0 %v2538, 126
        %v2544 = vpop.permute.xlu0 %2543
        %v2547 = vadd.f32 %v2491, %v2542
        %v2548 = vadd.f32 %v2492, %v2544
        %v2549 = vld [vmem:[#allocation2 + $0x1] sm:$0xff]
        %v2550 = vld [vmem:[#allocation2 + $0x9] sm:$0xff]
        %s2551 = sld [smem:[#allocation3 + $0x83]]
        %v2552 = vstv %s2551
        %v2553 = vmul.f32 %v2552, %v2549
        %v2554 = vmul.f32 %v2552, %v2550
        %v2555 = vadd.f32 %v2505, %v2553
        %v2556 = vadd.f32 %v2506, %v2554
        %s2557 = sld [smem:[#allocation3 + $0xa7]]
        %v2558 = vstv %s2557
        %v2559 = vmul.f32 %v2558, %v2549
        %v2560 = vmul.f32 %v2558, %v2550
        %v2561 = vadd.f32 %v2519, %v2559
        %v2562 = vadd.f32 %v2520, %v2560
        %s2563 = sld [smem:[#allocation3 + $0xcb]]
        %v2564 = vstv %s2563
        %v2565 = vmul.f32 %v2564, %v2549
        %v2566 = vmul.f32 %v2564, %v2550
        %v2567 = vadd.f32 %v2533, %v2565
        %v2568 = vadd.f32 %v2534, %v2566
        %s2569 = sld [smem:[#allocation3 + $0xef]]
        %v2570 = vstv %s2569
        %v2571 = vmul.f32 %v2570, %v2549
        %v2572 = vmul.f32 %v2570, %v2550
        %v2573 = vadd.f32 %v2547, %v2571
        %v2574 = vadd.f32 %v2548, %v2572
        %s2575 = sld [smem:[#allocation3 + $0x84]]
        %v2576 = vstv %s2575
        %v2577 = vmul.f32 %v2576, %v2549
        %v2578 = vmul.f32 %v2576, %v2550
        %2581 = vrot.lane.b32.xlu0 %v2577, 127
        %v2582 = vpop.permute.xlu0 %2581
        %2583 = vrot.lane.b32.xlu0 %v2578, 127
        %v2584 = vpop.permute.xlu0 %2583
        %v2587 = vadd.f32 %v2555, %v2582
        %v2588 = vadd.f32 %v2556, %v2584
        %s2589 = sld [smem:[#allocation3 + $0xa8]]
        %v2590 = vstv %s2589
        %v2591 = vmul.f32 %v2590, %v2549
        %v2592 = vmul.f32 %v2590, %v2550
        %2595 = vrot.lane.b32.xlu0 %v2591, 127
        %v2596 = vpop.permute.xlu0 %2595
        %2597 = vrot.lane.b32.xlu0 %v2592, 127
        %v2598 = vpop.permute.xlu0 %2597
        %v2601 = vadd.f32 %v2561, %v2596
        %v2602 = vadd.f32 %v2562, %v2598
        %s2603 = sld [smem:[#allocation3 + $0xcc]]
        %v2604 = vstv %s2603
        %v2605 = vmul.f32 %v2604, %v2549
        %v2606 = vmul.f32 %v2604, %v2550
        %2609 = vrot.lane.b32.xlu0 %v2605, 127
        %v2610 = vpop.permute.xlu0 %2609
        %2611 = vrot.lane.b32.xlu0 %v2606, 127
        %v2612 = vpop.permute.xlu0 %2611
        %v2615 = vadd.f32 %v2567, %v2610
        %v2616 = vadd.f32 %v2568, %v2612
        %s2617 = sld [smem:[#allocation3 + $0xf0]]
        %v2618 = vstv %s2617
        %v2619 = vmul.f32 %v2618, %v2549
        %v2620 = vmul.f32 %v2618, %v2550
        %2623 = vrot.lane.b32.xlu0 %v2619, 127
        %v2624 = vpop.permute.xlu0 %2623
        %2625 = vrot.lane.b32.xlu0 %v2620, 127
        %v2626 = vpop.permute.xlu0 %2625
        %v2629 = vadd.f32 %v2573, %v2624
        %v2630 = vadd.f32 %v2574, %v2626
        %s2631 = sld [smem:[#allocation3 + $0x85]]
        %v2632 = vstv %s2631
        %v2633 = vmul.f32 %v2632, %v2549
        %v2634 = vmul.f32 %v2632, %v2550
        %2637 = vrot.lane.b32.xlu0 %v2633, 126
        %v2638 = vpop.permute.xlu0 %2637
        %2639 = vrot.lane.b32.xlu0 %v2634, 126
        %v2640 = vpop.permute.xlu0 %2639
        %v2643 = vadd.f32 %v2587, %v2638
        %v2644 = vadd.f32 %v2588, %v2640
        %s2645 = sld [smem:[#allocation3 + $0xa9]]
        %v2646 = vstv %s2645
        %v2647 = vmul.f32 %v2646, %v2549
        %v2648 = vmul.f32 %v2646, %v2550
        %2651 = vrot.lane.b32.xlu0 %v2647, 126
        %v2652 = vpop.permute.xlu0 %2651
        %2653 = vrot.lane.b32.xlu0 %v2648, 126
        %v2654 = vpop.permute.xlu0 %2653
        %v2657 = vadd.f32 %v2601, %v2652
        %v2658 = vadd.f32 %v2602, %v2654
        %s2659 = sld [smem:[#allocation3 + $0xcd]]
        %v2660 = vstv %s2659
        %v2661 = vmul.f32 %v2660, %v2549
        %v2662 = vmul.f32 %v2660, %v2550
        %2665 = vrot.lane.b32.xlu0 %v2661, 126
        %v2666 = vpop.permute.xlu0 %2665
        %2667 = vrot.lane.b32.xlu0 %v2662, 126
        %v2668 = vpop.permute.xlu0 %2667
        %v2671 = vadd.f32 %v2615, %v2666
        %v2672 = vadd.f32 %v2616, %v2668
        %s2673 = sld [smem:[#allocation3 + $0xf1]]
        %v2674 = vstv %s2673
        %v2675 = vmul.f32 %v2674, %v2549
        %v2676 = vmul.f32 %v2674, %v2550
        %2679 = vrot.lane.b32.xlu0 %v2675, 126
        %v2680 = vpop.permute.xlu0 %2679
        %2681 = vrot.lane.b32.xlu0 %v2676, 126
        %v2682 = vpop.permute.xlu0 %2681
        %v2685 = vadd.f32 %v2629, %v2680
        %v2686 = vadd.f32 %v2630, %v2682
        %v2687 = vld [vmem:[#allocation2 + $0x2] sm:$0xff]
        %v2688 = vld [vmem:[#allocation2 + $0xa] sm:$0xff]
        %s2689 = sld [smem:[#allocation3 + $0x86]]
        %v2690 = vstv %s2689
        %v2691 = vmul.f32 %v2690, %v2687
        %v2692 = vmul.f32 %v2690, %v2688
        %v2693 = vadd.f32 %v2643, %v2691
        %v2694 = vadd.f32 %v2644, %v2692
        %s2695 = sld [smem:[#allocation3 + $0xaa]]
        %v2696 = vstv %s2695
        %v2697 = vmul.f32 %v2696, %v2687
        %v2698 = vmul.f32 %v2696, %v2688
        %v2699 = vadd.f32 %v2657, %v2697
        %v2700 = vadd.f32 %v2658, %v2698
        %s2701 = sld [smem:[#allocation3 + $0xce]]
        %v2702 = vstv %s2701
        %v2703 = vmul.f32 %v2702, %v2687
        %v2704 = vmul.f32 %v2702, %v2688
        %v2705 = vadd.f32 %v2671, %v2703
        %v2706 = vadd.f32 %v2672, %v2704
        %s2707 = sld [smem:[#allocation3 + $0xf2]]
        %v2708 = vstv %s2707
        %v2709 = vmul.f32 %v2708, %v2687
        %v2710 = vmul.f32 %v2708, %v2688
        %v2711 = vadd.f32 %v2685, %v2709
        %v2712 = vadd.f32 %v2686, %v2710
        %s2713 = sld [smem:[#allocation3 + $0x87]]
        %v2714 = vstv %s2713
        %v2715 = vmul.f32 %v2714, %v2687
        %v2716 = vmul.f32 %v2714, %v2688
        %2719 = vrot.lane.b32.xlu0 %v2715, 127
        %v2720 = vpop.permute.xlu0 %2719
        %2721 = vrot.lane.b32.xlu0 %v2716, 127
        %v2722 = vpop.permute.xlu0 %2721
        %v2725 = vadd.f32 %v2693, %v2720
        %v2726 = vadd.f32 %v2694, %v2722
        %s2727 = sld [smem:[#allocation3 + $0xab]]
        %v2728 = vstv %s2727
        %v2729 = vmul.f32 %v2728, %v2687
        %v2730 = vmul.f32 %v2728, %v2688
        %2733 = vrot.lane.b32.xlu0 %v2729, 127
        %v2734 = vpop.permute.xlu0 %2733
        %2735 = vrot.lane.b32.xlu0 %v2730, 127
        %v2736 = vpop.permute.xlu0 %2735
        %v2739 = vadd.f32 %v2699, %v2734
        %v2740 = vadd.f32 %v2700, %v2736
        %s2741 = sld [smem:[#allocation3 + $0xcf]]
        %v2742 = vstv %s2741
        %v2743 = vmul.f32 %v2742, %v2687
        %v2744 = vmul.f32 %v2742, %v2688
        %2747 = vrot.lane.b32.xlu0 %v2743, 127
        %v2748 = vpop.permute.xlu0 %2747
        %2749 = vrot.lane.b32.xlu0 %v2744, 127
        %v2750 = vpop.permute.xlu0 %2749
        %v2753 = vadd.f32 %v2705, %v2748
        %v2754 = vadd.f32 %v2706, %v2750
        %s2755 = sld [smem:[#allocation3 + $0xf3]]
        %v2756 = vstv %s2755
        %v2757 = vmul.f32 %v2756, %v2687
        %v2758 = vmul.f32 %v2756, %v2688
        %2761 = vrot.lane.b32.xlu0 %v2757, 127
        %v2762 = vpop.permute.xlu0 %2761
        %2763 = vrot.lane.b32.xlu0 %v2758, 127
        %v2764 = vpop.permute.xlu0 %2763
        %v2767 = vadd.f32 %v2711, %v2762
        %v2768 = vadd.f32 %v2712, %v2764
        %s2769 = sld [smem:[#allocation3 + $0x88]]
        %v2770 = vstv %s2769
        %v2771 = vmul.f32 %v2770, %v2687
        %v2772 = vmul.f32 %v2770, %v2688
        %2775 = vrot.lane.b32.xlu0 %v2771, 126
        %v2776 = vpop.permute.xlu0 %2775
        %2777 = vrot.lane.b32.xlu0 %v2772, 126
        %v2778 = vpop.permute.xlu0 %2777
        %v2781 = vadd.f32 %v2725, %v2776
        %v2782 = vadd.f32 %v2726, %v2778
        %s2783 = sld [smem:[#allocation3 + $0xac]]
        %v2784 = vstv %s2783
        %v2785 = vmul.f32 %v2784, %v2687
        %v2786 = vmul.f32 %v2784, %v2688
        %2789 = vrot.lane.b32.xlu0 %v2785, 126
        %v2790 = vpop.permute.xlu0 %2789
        %2791 = vrot.lane.b32.xlu0 %v2786, 126
        %v2792 = vpop.permute.xlu0 %2791
        %v2795 = vadd.f32 %v2739, %v2790
        %v2796 = vadd.f32 %v2740, %v2792
        %s2797 = sld [smem:[#allocation3 + $0xd0]]
        %v2798 = vstv %s2797
        %v2799 = vmul.f32 %v2798, %v2687
        %v2800 = vmul.f32 %v2798, %v2688
        %2803 = vrot.lane.b32.xlu0 %v2799, 126
        %v2804 = vpop.permute.xlu0 %2803
        %2805 = vrot.lane.b32.xlu0 %v2800, 126
        %v2806 = vpop.permute.xlu0 %2805
        %v2809 = vadd.f32 %v2753, %v2804
        %v2810 = vadd.f32 %v2754, %v2806
        %s2811 = sld [smem:[#allocation3 + $0xf4]]
        %v2812 = vstv %s2811
        %v2813 = vmul.f32 %v2812, %v2687
        %v2814 = vmul.f32 %v2812, %v2688
        %2817 = vrot.lane.b32.xlu0 %v2813, 126
        %v2818 = vpop.permute.xlu0 %2817
        %2819 = vrot.lane.b32.xlu0 %v2814, 126
        %v2820 = vpop.permute.xlu0 %2819
        %v2823 = vadd.f32 %v2767, %v2818
        %v2824 = vadd.f32 %v2768, %v2820
        %v2825 = vld [vmem:[%s230] sm:$0xff]
        %v2826 = vld [vmem:[%s230 + $0x8] sm:$0xff]
        %s2827 = sld [smem:[#allocation3 + $0x89]]
        %v2828 = vstv %s2827
        %v2829 = vmul.f32 %v2828, %v2825
        %v2830 = vmul.f32 %v2828, %v2826
        %v2831 = vadd.f32 %v2781, %v2829
        %v2832 = vadd.f32 %v2782, %v2830
        %s2833 = sld [smem:[#allocation3 + $0xad]]
        %v2834 = vstv %s2833
        %v2835 = vmul.f32 %v2834, %v2825
        %v2836 = vmul.f32 %v2834, %v2826
        %v2837 = vadd.f32 %v2795, %v2835
        %v2838 = vadd.f32 %v2796, %v2836
        %s2839 = sld [smem:[#allocation3 + $0xd1]]
        %v2840 = vstv %s2839
        %v2841 = vmul.f32 %v2840, %v2825
        %v2842 = vmul.f32 %v2840, %v2826
        %v2843 = vadd.f32 %v2809, %v2841
        %v2844 = vadd.f32 %v2810, %v2842
        %s2845 = sld [smem:[#allocation3 + $0xf5]]
        %v2846 = vstv %s2845
        %v2847 = vmul.f32 %v2846, %v2825
        %v2848 = vmul.f32 %v2846, %v2826
        %v2849 = vadd.f32 %v2823, %v2847
        %v2850 = vadd.f32 %v2824, %v2848
        %s2851 = sld [smem:[#allocation3 + $0x8a]]
        %v2852 = vstv %s2851
        %v2853 = vmul.f32 %v2852, %v2825
        %v2854 = vmul.f32 %v2852, %v2826
        %2857 = vrot.lane.b32.xlu0 %v2853, 127
        %v2858 = vpop.permute.xlu0 %2857
        %2859 = vrot.lane.b32.xlu0 %v2854, 127
        %v2860 = vpop.permute.xlu0 %2859
        %v2863 = vadd.f32 %v2831, %v2858
        %v2864 = vadd.f32 %v2832, %v2860
        %s2865 = sld [smem:[#allocation3 + $0xae]]
        %v2866 = vstv %s2865
        %v2867 = vmul.f32 %v2866, %v2825
        %v2868 = vmul.f32 %v2866, %v2826
        %2871 = vrot.lane.b32.xlu0 %v2867, 127
        %v2872 = vpop.permute.xlu0 %2871
        %2873 = vrot.lane.b32.xlu0 %v2868, 127
        %v2874 = vpop.permute.xlu0 %2873
        %v2877 = vadd.f32 %v2837, %v2872
        %v2878 = vadd.f32 %v2838, %v2874
        %s2879 = sld [smem:[#allocation3 + $0xd2]]
        %v2880 = vstv %s2879
        %v2881 = vmul.f32 %v2880, %v2825
        %v2882 = vmul.f32 %v2880, %v2826
        %2885 = vrot.lane.b32.xlu0 %v2881, 127
        %v2886 = vpop.permute.xlu0 %2885
        %2887 = vrot.lane.b32.xlu0 %v2882, 127
        %v2888 = vpop.permute.xlu0 %2887
        %v2891 = vadd.f32 %v2843, %v2886
        %v2892 = vadd.f32 %v2844, %v2888
        %s2893 = sld [smem:[#allocation3 + $0xf6]]
        %v2894 = vstv %s2893
        %v2895 = vmul.f32 %v2894, %v2825
        %v2896 = vmul.f32 %v2894, %v2826
        %2899 = vrot.lane.b32.xlu0 %v2895, 127
        %v2900 = vpop.permute.xlu0 %2899
        %2901 = vrot.lane.b32.xlu0 %v2896, 127
        %v2902 = vpop.permute.xlu0 %2901
        %v2905 = vadd.f32 %v2849, %v2900
        %v2906 = vadd.f32 %v2850, %v2902
        %s2907 = sld [smem:[#allocation3 + $0x8b]]
        %v2908 = vstv %s2907
        %v2909 = vmul.f32 %v2908, %v2825
        %v2910 = vmul.f32 %v2908, %v2826
        %2913 = vrot.lane.b32.xlu0 %v2909, 126
        %v2914 = vpop.permute.xlu0 %2913
        %2915 = vrot.lane.b32.xlu0 %v2910, 126
        %v2916 = vpop.permute.xlu0 %2915
        %v2919 = vadd.f32 %v2863, %v2914
        %v2920 = vadd.f32 %v2864, %v2916
        %s2921 = sld [smem:[#allocation3 + $0xaf]]
        %v2922 = vstv %s2921
        %v2923 = vmul.f32 %v2922, %v2825
        %v2924 = vmul.f32 %v2922, %v2826
        %2927 = vrot.lane.b32.xlu0 %v2923, 126
        %v2928 = vpop.permute.xlu0 %2927
        %2929 = vrot.lane.b32.xlu0 %v2924, 126
        %v2930 = vpop.permute.xlu0 %2929
        %v2933 = vadd.f32 %v2877, %v2928
        %v2934 = vadd.f32 %v2878, %v2930
        %s2935 = sld [smem:[#allocation3 + $0xd3]]
        %v2936 = vstv %s2935
        %v2937 = vmul.f32 %v2936, %v2825
        %v2938 = vmul.f32 %v2936, %v2826
        %2941 = vrot.lane.b32.xlu0 %v2937, 126
        %v2942 = vpop.permute.xlu0 %2941
        %2943 = vrot.lane.b32.xlu0 %v2938, 126
        %v2944 = vpop.permute.xlu0 %2943
        %v2947 = vadd.f32 %v2891, %v2942
        %v2948 = vadd.f32 %v2892, %v2944
        %s2949 = sld [smem:[#allocation3 + $0xf7]]
        %v2950 = vstv %s2949
        %v2951 = vmul.f32 %v2950, %v2825
        %v2952 = vmul.f32 %v2950, %v2826
        %2955 = vrot.lane.b32.xlu0 %v2951, 126
        %v2956 = vpop.permute.xlu0 %2955
        %2957 = vrot.lane.b32.xlu0 %v2952, 126
        %v2958 = vpop.permute.xlu0 %2957
        %v2961 = vadd.f32 %v2905, %v2956
        %v2962 = vadd.f32 %v2906, %v2958
        %v2963 = vld [vmem:[%s230 + $0x1] sm:$0xff]
        %v2964 = vld [vmem:[%s230 + $0x9] sm:$0xff]
        %s2965 = sld [smem:[#allocation3 + $0x8c]]
        %v2966 = vstv %s2965
        %v2967 = vmul.f32 %v2966, %v2963
        %v2968 = vmul.f32 %v2966, %v2964
        %v2969 = vadd.f32 %v2919, %v2967
        %v2970 = vadd.f32 %v2920, %v2968
        %s2971 = sld [smem:[#allocation3 + $0xb0]]
        %v2972 = vstv %s2971
        %v2973 = vmul.f32 %v2972, %v2963
        %v2974 = vmul.f32 %v2972, %v2964
        %v2975 = vadd.f32 %v2933, %v2973
        %v2976 = vadd.f32 %v2934, %v2974
        %s2977 = sld [smem:[#allocation3 + $0xd4]]
        %v2978 = vstv %s2977
        %v2979 = vmul.f32 %v2978, %v2963
        %v2980 = vmul.f32 %v2978, %v2964
        %v2981 = vadd.f32 %v2947, %v2979
        %v2982 = vadd.f32 %v2948, %v2980
        %s2983 = sld [smem:[#allocation3 + $0xf8]]
        %v2984 = vstv %s2983
        %v2985 = vmul.f32 %v2984, %v2963
        %v2986 = vmul.f32 %v2984, %v2964
        %v2987 = vadd.f32 %v2961, %v2985
        %v2988 = vadd.f32 %v2962, %v2986
        %s2989 = sld [smem:[#allocation3 + $0x8d]]
        %v2990 = vstv %s2989
        %v2991 = vmul.f32 %v2990, %v2963
        %v2992 = vmul.f32 %v2990, %v2964
        %2995 = vrot.lane.b32.xlu0 %v2991, 127
        %v2996 = vpop.permute.xlu0 %2995
        %2997 = vrot.lane.b32.xlu0 %v2992, 127
        %v2998 = vpop.permute.xlu0 %2997
        %v3001 = vadd.f32 %v2969, %v2996
        %v3002 = vadd.f32 %v2970, %v2998
        %s3003 = sld [smem:[#allocation3 + $0xb1]]
        %v3004 = vstv %s3003
        %v3005 = vmul.f32 %v3004, %v2963
        %v3006 = vmul.f32 %v3004, %v2964
        %3009 = vrot.lane.b32.xlu0 %v3005, 127
        %v3010 = vpop.permute.xlu0 %3009
        %3011 = vrot.lane.b32.xlu0 %v3006, 127
        %v3012 = vpop.permute.xlu0 %3011
        %v3015 = vadd.f32 %v2975, %v3010
        %v3016 = vadd.f32 %v2976, %v3012
        %s3017 = sld [smem:[#allocation3 + $0xd5]]
        %v3018 = vstv %s3017
        %v3019 = vmul.f32 %v3018, %v2963
        %v3020 = vmul.f32 %v3018, %v2964
        %3023 = vrot.lane.b32.xlu0 %v3019, 127
        %v3024 = vpop.permute.xlu0 %3023
        %3025 = vrot.lane.b32.xlu0 %v3020, 127
        %v3026 = vpop.permute.xlu0 %3025
        %v3029 = vadd.f32 %v2981, %v3024
        %v3030 = vadd.f32 %v2982, %v3026
        %s3031 = sld [smem:[#allocation3 + $0xf9]]
        %v3032 = vstv %s3031
        %v3033 = vmul.f32 %v3032, %v2963
        %v3034 = vmul.f32 %v3032, %v2964
        %3037 = vrot.lane.b32.xlu0 %v3033, 127
        %v3038 = vpop.permute.xlu0 %3037
        %3039 = vrot.lane.b32.xlu0 %v3034, 127
        %v3040 = vpop.permute.xlu0 %3039
        %v3043 = vadd.f32 %v2987, %v3038
        %v3044 = vadd.f32 %v2988, %v3040
        %s3045 = sld [smem:[#allocation3 + $0x8e]]
        %v3046 = vstv %s3045
        %v3047 = vmul.f32 %v3046, %v2963
        %v3048 = vmul.f32 %v3046, %v2964
        %3051 = vrot.lane.b32.xlu0 %v3047, 126
        %v3052 = vpop.permute.xlu0 %3051
        %3053 = vrot.lane.b32.xlu0 %v3048, 126
        %v3054 = vpop.permute.xlu0 %3053
        %v3057 = vadd.f32 %v3001, %v3052
        %v3058 = vadd.f32 %v3002, %v3054
        %s3059 = sld [smem:[#allocation3 + $0xb2]]
        %v3060 = vstv %s3059
        %v3061 = vmul.f32 %v3060, %v2963
        %v3062 = vmul.f32 %v3060, %v2964
        %3065 = vrot.lane.b32.xlu0 %v3061, 126
        %v3066 = vpop.permute.xlu0 %3065
        %3067 = vrot.lane.b32.xlu0 %v3062, 126
        %v3068 = vpop.permute.xlu0 %3067
        %v3071 = vadd.f32 %v3015, %v3066
        %v3072 = vadd.f32 %v3016, %v3068
        %s3073 = sld [smem:[#allocation3 + $0xd6]]
        %v3074 = vstv %s3073
        %v3075 = vmul.f32 %v3074, %v2963
        %v3076 = vmul.f32 %v3074, %v2964
        %3079 = vrot.lane.b32.xlu0 %v3075, 126
        %v3080 = vpop.permute.xlu0 %3079
        %3081 = vrot.lane.b32.xlu0 %v3076, 126
        %v3082 = vpop.permute.xlu0 %3081
        %v3085 = vadd.f32 %v3029, %v3080
        %v3086 = vadd.f32 %v3030, %v3082
        %s3087 = sld [smem:[#allocation3 + $0xfa]]
        %v3088 = vstv %s3087
        %v3089 = vmul.f32 %v3088, %v2963
        %v3090 = vmul.f32 %v3088, %v2964
        %3093 = vrot.lane.b32.xlu0 %v3089, 126
        %v3094 = vpop.permute.xlu0 %3093
        %3095 = vrot.lane.b32.xlu0 %v3090, 126
        %v3096 = vpop.permute.xlu0 %3095
        %v3099 = vadd.f32 %v3043, %v3094
        %v3100 = vadd.f32 %v3044, %v3096
        %v3101 = vld [vmem:[%s230 + $0x2] sm:$0xff]
        %v3102 = vld [vmem:[%s230 + $0xa] sm:$0xff]
        %s3103 = sld [smem:[#allocation3 + $0x8f]]
        %v3104 = vstv %s3103
        %v3105 = vmul.f32 %v3104, %v3101
        %v3106 = vmul.f32 %v3104, %v3102
        %v3107 = vadd.f32 %v3057, %v3105
        %v3108 = vadd.f32 %v3058, %v3106
        %s3109 = sld [smem:[#allocation3 + $0xb3]]
        %v3110 = vstv %s3109
        %v3111 = vmul.f32 %v3110, %v3101
        %v3112 = vmul.f32 %v3110, %v3102
        %v3113 = vadd.f32 %v3071, %v3111
        %v3114 = vadd.f32 %v3072, %v3112
        %s3115 = sld [smem:[#allocation3 + $0xd7]]
        %v3116 = vstv %s3115
        %v3117 = vmul.f32 %v3116, %v3101
        %v3118 = vmul.f32 %v3116, %v3102
        %v3119 = vadd.f32 %v3085, %v3117
        %v3120 = vadd.f32 %v3086, %v3118
        %s3121 = sld [smem:[#allocation3 + $0xfb]]
        %v3122 = vstv %s3121
        %v3123 = vmul.f32 %v3122, %v3101
        %v3124 = vmul.f32 %v3122, %v3102
        %v3125 = vadd.f32 %v3099, %v3123
        %v3126 = vadd.f32 %v3100, %v3124
        %s3127 = sld [smem:[#allocation3 + $0x90]]
        %v3128 = vstv %s3127
        %v3129 = vmul.f32 %v3128, %v3101
        %v3130 = vmul.f32 %v3128, %v3102
        %3133 = vrot.lane.b32.xlu0 %v3129, 127
        %v3134 = vpop.permute.xlu0 %3133
        %3135 = vrot.lane.b32.xlu0 %v3130, 127
        %v3136 = vpop.permute.xlu0 %3135
        %v3139 = vadd.f32 %v3107, %v3134
        %v3140 = vadd.f32 %v3108, %v3136
        %s3141 = sld [smem:[#allocation3 + $0xb4]]
        %v3142 = vstv %s3141
        %v3143 = vmul.f32 %v3142, %v3101
        %v3144 = vmul.f32 %v3142, %v3102
        %3147 = vrot.lane.b32.xlu0 %v3143, 127
        %v3148 = vpop.permute.xlu0 %3147
        %3149 = vrot.lane.b32.xlu0 %v3144, 127
        %v3150 = vpop.permute.xlu0 %3149
        %v3153 = vadd.f32 %v3113, %v3148
        %v3154 = vadd.f32 %v3114, %v3150
        %s3155 = sld [smem:[#allocation3 + $0xd8]]
        %v3156 = vstv %s3155
        %v3157 = vmul.f32 %v3156, %v3101
        %v3158 = vmul.f32 %v3156, %v3102
        %3161 = vrot.lane.b32.xlu0 %v3157, 127
        %v3162 = vpop.permute.xlu0 %3161
        %3163 = vrot.lane.b32.xlu0 %v3158, 127
        %v3164 = vpop.permute.xlu0 %3163
        %v3167 = vadd.f32 %v3119, %v3162
        %v3168 = vadd.f32 %v3120, %v3164
        %s3169 = sld [smem:[#allocation3 + $0xfc]]
        %v3170 = vstv %s3169
        %v3171 = vmul.f32 %v3170, %v3101
        %v3172 = vmul.f32 %v3170, %v3102
        %3175 = vrot.lane.b32.xlu0 %v3171, 127
        %v3176 = vpop.permute.xlu0 %3175
        %3177 = vrot.lane.b32.xlu0 %v3172, 127
        %v3178 = vpop.permute.xlu0 %3177
        %v3181 = vadd.f32 %v3125, %v3176
        %v3182 = vadd.f32 %v3126, %v3178
        %s3183 = sld [smem:[#allocation3 + $0x91]]
        %v3184 = vstv %s3183
        %v3185 = vmul.f32 %v3184, %v3101
        %v3186 = vmul.f32 %v3184, %v3102
        %3189 = vrot.lane.b32.xlu0 %v3185, 126
        %v3190 = vpop.permute.xlu0 %3189
        %3191 = vrot.lane.b32.xlu0 %v3186, 126
        %v3192 = vpop.permute.xlu0 %3191
        %v3195 = vadd.f32 %v3139, %v3190
        %v3196 = vadd.f32 %v3140, %v3192
        %s3197 = sld [smem:[#allocation3 + $0xb5]]
        %v3198 = vstv %s3197
        %v3199 = vmul.f32 %v3198, %v3101
        %v3200 = vmul.f32 %v3198, %v3102
        %3203 = vrot.lane.b32.xlu0 %v3199, 126
        %v3204 = vpop.permute.xlu0 %3203
        %3205 = vrot.lane.b32.xlu0 %v3200, 126
        %v3206 = vpop.permute.xlu0 %3205
        %v3209 = vadd.f32 %v3153, %v3204
        %v3210 = vadd.f32 %v3154, %v3206
        %s3211 = sld [smem:[#allocation3 + $0xd9]]
        %v3212 = vstv %s3211
        %v3213 = vmul.f32 %v3212, %v3101
        %v3214 = vmul.f32 %v3212, %v3102
        %3217 = vrot.lane.b32.xlu0 %v3213, 126
        %v3218 = vpop.permute.xlu0 %3217
        %3219 = vrot.lane.b32.xlu0 %v3214, 126
        %v3220 = vpop.permute.xlu0 %3219
        %v3223 = vadd.f32 %v3167, %v3218
        %v3224 = vadd.f32 %v3168, %v3220
        %s3225 = sld [smem:[#allocation3 + $0xfd]]
        %v3226 = vstv %s3225
        %v3227 = vmul.f32 %v3226, %v3101
        %v3228 = vmul.f32 %v3226, %v3102
        %3231 = vrot.lane.b32.xlu0 %v3227, 126
        %v3232 = vpop.permute.xlu0 %3231
        %3233 = vrot.lane.b32.xlu0 %v3228, 126
        %v3234 = vpop.permute.xlu0 %3233
        %v3237 = vadd.f32 %v3181, %v3232
        %v3238 = vadd.f32 %v3182, %v3234
        %v3239 = vld [vmem:[%s243] sm:$0xff]
        %v3240 = vld [vmem:[%s243 + $0x8] sm:$0xff]
        %s3241 = sld [smem:[#allocation3 + $0x92]]
        %v3242 = vstv %s3241
        %v3243 = vmul.f32 %v3242, %v3239
        %v3244 = vmul.f32 %v3242, %v3240
        %v3245 = vadd.f32 %v3195, %v3243
        %v3246 = vadd.f32 %v3196, %v3244
        %s3247 = sld [smem:[#allocation3 + $0xb6]]
        %v3248 = vstv %s3247
        %v3249 = vmul.f32 %v3248, %v3239
        %v3250 = vmul.f32 %v3248, %v3240
        %v3251 = vadd.f32 %v3209, %v3249
        %v3252 = vadd.f32 %v3210, %v3250
        %s3253 = sld [smem:[#allocation3 + $0xda]]
        %v3254 = vstv %s3253
        %v3255 = vmul.f32 %v3254, %v3239
        %v3256 = vmul.f32 %v3254, %v3240
        %v3257 = vadd.f32 %v3223, %v3255
        %v3258 = vadd.f32 %v3224, %v3256
        %s3259 = sld [smem:[#allocation3 + $0xfe]]
        %v3260 = vstv %s3259
        %v3261 = vmul.f32 %v3260, %v3239
        %v3262 = vmul.f32 %v3260, %v3240
        %v3263 = vadd.f32 %v3237, %v3261
        %v3264 = vadd.f32 %v3238, %v3262
        %s3265 = sld [smem:[#allocation3 + $0x93]]
        %v3266 = vstv %s3265
        %v3267 = vmul.f32 %v3266, %v3239
        %v3268 = vmul.f32 %v3266, %v3240
        %3271 = vrot.lane.b32.xlu0 %v3267, 127
        %v3272 = vpop.permute.xlu0 %3271
        %3273 = vrot.lane.b32.xlu0 %v3268, 127
        %v3274 = vpop.permute.xlu0 %3273
        %v3277 = vadd.f32 %v3245, %v3272
        %v3278 = vadd.f32 %v3246, %v3274
        %s3279 = sld [smem:[#allocation3 + $0xb7]]
        %v3280 = vstv %s3279
        %v3281 = vmul.f32 %v3280, %v3239
        %v3282 = vmul.f32 %v3280, %v3240
        %3285 = vrot.lane.b32.xlu0 %v3281, 127
        %v3286 = vpop.permute.xlu0 %3285
        %3287 = vrot.lane.b32.xlu0 %v3282, 127
        %v3288 = vpop.permute.xlu0 %3287
        %v3291 = vadd.f32 %v3251, %v3286
        %v3292 = vadd.f32 %v3252, %v3288
        %s3293 = sld [smem:[#allocation3 + $0xdb]]
        %v3294 = vstv %s3293
        %v3295 = vmul.f32 %v3294, %v3239
        %v3296 = vmul.f32 %v3294, %v3240
        %3299 = vrot.lane.b32.xlu0 %v3295, 127
        %v3300 = vpop.permute.xlu0 %3299
        %3301 = vrot.lane.b32.xlu0 %v3296, 127
        %v3302 = vpop.permute.xlu0 %3301
        %v3305 = vadd.f32 %v3257, %v3300
        %v3306 = vadd.f32 %v3258, %v3302
        %s3307 = sld [smem:[#allocation3 + $0xff]]
        %v3308 = vstv %s3307
        %v3309 = vmul.f32 %v3308, %v3239
        %v3310 = vmul.f32 %v3308, %v3240
        %3313 = vrot.lane.b32.xlu0 %v3309, 127
        %v3314 = vpop.permute.xlu0 %3313
        %3315 = vrot.lane.b32.xlu0 %v3310, 127
        %v3316 = vpop.permute.xlu0 %3315
        %v3319 = vadd.f32 %v3263, %v3314
        %v3320 = vadd.f32 %v3264, %v3316
        %s3321 = sld [smem:[#allocation3 + $0x94]]
        %v3322 = vstv %s3321
        %v3323 = vmul.f32 %v3322, %v3239
        %v3324 = vmul.f32 %v3322, %v3240
        %3327 = vrot.lane.b32.xlu0 %v3323, 126
        %v3328 = vpop.permute.xlu0 %3327
        %3329 = vrot.lane.b32.xlu0 %v3324, 126
        %v3330 = vpop.permute.xlu0 %3329
        %v3333 = vadd.f32 %v3277, %v3328
        %v3334 = vadd.f32 %v3278, %v3330
        %s3335 = sld [smem:[#allocation3 + $0xb8]]
        %v3336 = vstv %s3335
        %v3337 = vmul.f32 %v3336, %v3239
        %v3338 = vmul.f32 %v3336, %v3240
        %3341 = vrot.lane.b32.xlu0 %v3337, 126
        %v3342 = vpop.permute.xlu0 %3341
        %3343 = vrot.lane.b32.xlu0 %v3338, 126
        %v3344 = vpop.permute.xlu0 %3343
        %v3347 = vadd.f32 %v3291, %v3342
        %v3348 = vadd.f32 %v3292, %v3344
        %s3349 = sld [smem:[#allocation3 + $0xdc]]
        %v3350 = vstv %s3349
        %v3351 = vmul.f32 %v3350, %v3239
        %v3352 = vmul.f32 %v3350, %v3240
        %3355 = vrot.lane.b32.xlu0 %v3351, 126
        %v3356 = vpop.permute.xlu0 %3355
        %3357 = vrot.lane.b32.xlu0 %v3352, 126
        %v3358 = vpop.permute.xlu0 %3357
        %v3361 = vadd.f32 %v3305, %v3356
        %v3362 = vadd.f32 %v3306, %v3358
        %s3363 = sld [smem:[#allocation3 + $0x180]]
        %v3364 = vstv %s3363
        %v3365 = vmul.f32 %v3364, %v3239
        %v3366 = vmul.f32 %v3364, %v3240
        %3369 = vrot.lane.b32.xlu0 %v3365, 126
        %v3370 = vpop.permute.xlu0 %3369
        %3371 = vrot.lane.b32.xlu0 %v3366, 126
        %v3372 = vpop.permute.xlu0 %3371
        %v3375 = vadd.f32 %v3319, %v3370
        %v3376 = vadd.f32 %v3320, %v3372
        %v3377 = vld [vmem:[%s243 + $0x1] sm:$0xff]
        %v3378 = vld [vmem:[%s243 + $0x9] sm:$0xff]
        %s3379 = sld [smem:[#allocation3 + $0x95]]
        %v3380 = vstv %s3379
        %v3381 = vmul.f32 %v3380, %v3377
        %v3382 = vmul.f32 %v3380, %v3378
        %v3383 = vadd.f32 %v3333, %v3381
        %v3384 = vadd.f32 %v3334, %v3382
        %s3385 = sld [smem:[#allocation3 + $0xb9]]
        %v3386 = vstv %s3385
        %v3387 = vmul.f32 %v3386, %v3377
        %v3388 = vmul.f32 %v3386, %v3378
        %v3389 = vadd.f32 %v3347, %v3387
        %v3390 = vadd.f32 %v3348, %v3388
        %s3391 = sld [smem:[#allocation3 + $0xdd]]
        %v3392 = vstv %s3391
        %v3393 = vmul.f32 %v3392, %v3377
        %v3394 = vmul.f32 %v3392, %v3378
        %v3395 = vadd.f32 %v3361, %v3393
        %v3396 = vadd.f32 %v3362, %v3394
        %s3397 = sld [smem:[#allocation3 + $0x181]]
        %v3398 = vstv %s3397
        %v3399 = vmul.f32 %v3398, %v3377
        %v3400 = vmul.f32 %v3398, %v3378
        %v3401 = vadd.f32 %v3375, %v3399
        %v3402 = vadd.f32 %v3376, %v3400
        %s3403 = sld [smem:[#allocation3 + $0x96]]
        %v3404 = vstv %s3403
        %v3405 = vmul.f32 %v3404, %v3377
        %v3406 = vmul.f32 %v3404, %v3378
        %3409 = vrot.lane.b32.xlu0 %v3405, 127
        %v3410 = vpop.permute.xlu0 %3409
        %3411 = vrot.lane.b32.xlu0 %v3406, 127
        %v3412 = vpop.permute.xlu0 %3411
        %v3415 = vadd.f32 %v3383, %v3410
        %v3416 = vadd.f32 %v3384, %v3412
        %s3417 = sld [smem:[#allocation3 + $0xba]]
        %v3418 = vstv %s3417
        %v3419 = vmul.f32 %v3418, %v3377
        %v3420 = vmul.f32 %v3418, %v3378
        %3423 = vrot.lane.b32.xlu0 %v3419, 127
        %v3424 = vpop.permute.xlu0 %3423
        %3425 = vrot.lane.b32.xlu0 %v3420, 127
        %v3426 = vpop.permute.xlu0 %3425
        %v3429 = vadd.f32 %v3389, %v3424
        %v3430 = vadd.f32 %v3390, %v3426
        %s3431 = sld [smem:[#allocation3 + $0xde]]
        %v3432 = vstv %s3431
        %v3433 = vmul.f32 %v3432, %v3377
        %v3434 = vmul.f32 %v3432, %v3378
        %3437 = vrot.lane.b32.xlu0 %v3433, 127
        %v3438 = vpop.permute.xlu0 %3437
        %3439 = vrot.lane.b32.xlu0 %v3434, 127
        %v3440 = vpop.permute.xlu0 %3439
        %v3443 = vadd.f32 %v3395, %v3438
        %v3444 = vadd.f32 %v3396, %v3440
        %s3445 = sld [smem:[#allocation3 + $0x182]]
        %v3446 = vstv %s3445
        %v3447 = vmul.f32 %v3446, %v3377
        %v3448 = vmul.f32 %v3446, %v3378
        %3451 = vrot.lane.b32.xlu0 %v3447, 127
        %v3452 = vpop.permute.xlu0 %3451
        %3453 = vrot.lane.b32.xlu0 %v3448, 127
        %v3454 = vpop.permute.xlu0 %3453
        %v3457 = vadd.f32 %v3401, %v3452
        %v3458 = vadd.f32 %v3402, %v3454
        %s3459 = sld [smem:[#allocation3 + $0x97]]
        %v3460 = vstv %s3459
        %v3461 = vmul.f32 %v3460, %v3377
        %v3462 = vmul.f32 %v3460, %v3378
        %3465 = vrot.lane.b32.xlu0 %v3461, 126
        %v3466 = vpop.permute.xlu0 %3465
        %3467 = vrot.lane.b32.xlu0 %v3462, 126
        %v3468 = vpop.permute.xlu0 %3467
        %v3471 = vadd.f32 %v3415, %v3466
        %v3472 = vadd.f32 %v3416, %v3468
        %s3473 = sld [smem:[#allocation3 + $0xbb]]
        %v3474 = vstv %s3473
        %v3475 = vmul.f32 %v3474, %v3377
        %v3476 = vmul.f32 %v3474, %v3378
        %3479 = vrot.lane.b32.xlu0 %v3475, 126
        %v3480 = vpop.permute.xlu0 %3479
        %3481 = vrot.lane.b32.xlu0 %v3476, 126
        %v3482 = vpop.permute.xlu0 %3481
        %v3485 = vadd.f32 %v3429, %v3480
        %v3486 = vadd.f32 %v3430, %v3482
        %s3487 = sld [smem:[#allocation3 + $0xdf]]
        %v3488 = vstv %s3487
        %v3489 = vmul.f32 %v3488, %v3377
        %v3490 = vmul.f32 %v3488, %v3378
        %3493 = vrot.lane.b32.xlu0 %v3489, 126
        %v3494 = vpop.permute.xlu0 %3493
        %3495 = vrot.lane.b32.xlu0 %v3490, 126
        %v3496 = vpop.permute.xlu0 %3495
        %v3499 = vadd.f32 %v3443, %v3494
        %v3500 = vadd.f32 %v3444, %v3496
        %s3501 = sld [smem:[#allocation3 + $0x183]]
        %v3502 = vstv %s3501
        %v3503 = vmul.f32 %v3502, %v3377
        %v3504 = vmul.f32 %v3502, %v3378
        %3507 = vrot.lane.b32.xlu0 %v3503, 126
        %v3508 = vpop.permute.xlu0 %3507
        %3509 = vrot.lane.b32.xlu0 %v3504, 126
        %v3510 = vpop.permute.xlu0 %3509
        %v3513 = vadd.f32 %v3457, %v3508
        %v3514 = vadd.f32 %v3458, %v3510
        %v3515 = vld [vmem:[%s243 + $0x2] sm:$0xff]
        %v3516 = vld [vmem:[%s243 + $0xa] sm:$0xff]
        %s3517 = sld [smem:[#allocation3 + $0x98]]
        %v3518 = vstv %s3517
        %v3519 = vmul.f32 %v3518, %v3515
        %v3520 = vmul.f32 %v3518, %v3516
        %v3521 = vadd.f32 %v3471, %v3519
        %v3522 = vadd.f32 %v3472, %v3520
        %s3523 = sld [smem:[#allocation3 + $0xbc]]
        %v3524 = vstv %s3523
        %v3525 = vmul.f32 %v3524, %v3515
        %v3526 = vmul.f32 %v3524, %v3516
        %v3527 = vadd.f32 %v3485, %v3525
        %v3528 = vadd.f32 %v3486, %v3526
        %s3529 = sld [smem:[#allocation3 + $0xe0]]
        %v3530 = vstv %s3529
        %v3531 = vmul.f32 %v3530, %v3515
        %v3532 = vmul.f32 %v3530, %v3516
        %v3533 = vadd.f32 %v3499, %v3531
        %v3534 = vadd.f32 %v3500, %v3532
        %s3535 = sld [smem:[#allocation3 + $0x184]]
        %v3536 = vstv %s3535
        %v3537 = vmul.f32 %v3536, %v3515
        %v3538 = vmul.f32 %v3536, %v3516
        %v3539 = vadd.f32 %v3513, %v3537
        %v3540 = vadd.f32 %v3514, %v3538
        %s3541 = sld [smem:[#allocation3 + $0x99]]
        %v3542 = vstv %s3541
        %v3543 = vmul.f32 %v3542, %v3515
        %v3544 = vmul.f32 %v3542, %v3516
        %3547 = vrot.lane.b32.xlu0 %v3543, 127
        %v3548 = vpop.permute.xlu0 %3547
        %3549 = vrot.lane.b32.xlu0 %v3544, 127
        %v3550 = vpop.permute.xlu0 %3549
        %v3553 = vadd.f32 %v3521, %v3548
        %v3554 = vadd.f32 %v3522, %v3550
        %s3555 = sld [smem:[#allocation3 + $0xbd]]
        %v3556 = vstv %s3555
        %v3557 = vmul.f32 %v3556, %v3515
        %v3558 = vmul.f32 %v3556, %v3516
        %3561 = vrot.lane.b32.xlu0 %v3557, 127
        %v3562 = vpop.permute.xlu0 %3561
        %3563 = vrot.lane.b32.xlu0 %v3558, 127
        %v3564 = vpop.permute.xlu0 %3563
        %v3567 = vadd.f32 %v3527, %v3562
        %v3568 = vadd.f32 %v3528, %v3564
        %s3569 = sld [smem:[#allocation3 + $0xe1]]
        %v3570 = vstv %s3569
        %v3571 = vmul.f32 %v3570, %v3515
        %v3572 = vmul.f32 %v3570, %v3516
        %3575 = vrot.lane.b32.xlu0 %v3571, 127
        %v3576 = vpop.permute.xlu0 %3575
        %3577 = vrot.lane.b32.xlu0 %v3572, 127
        %v3578 = vpop.permute.xlu0 %3577
        %v3581 = vadd.f32 %v3533, %v3576
        %v3582 = vadd.f32 %v3534, %v3578
        %s3583 = sld [smem:[#allocation3 + $0x185]]
        %v3584 = vstv %s3583
        %v3585 = vmul.f32 %v3584, %v3515
        %v3586 = vmul.f32 %v3584, %v3516
        %3589 = vrot.lane.b32.xlu0 %v3585, 127
        %v3590 = vpop.permute.xlu0 %3589
        %3591 = vrot.lane.b32.xlu0 %v3586, 127
        %v3592 = vpop.permute.xlu0 %3591
        %v3595 = vadd.f32 %v3539, %v3590
        %v3596 = vadd.f32 %v3540, %v3592
        %s3597 = sld [smem:[#allocation3 + $0x9a]]
        %v3598 = vstv %s3597
        %v3599 = vmul.f32 %v3598, %v3515
        %v3600 = vmul.f32 %v3598, %v3516
        %3603 = vrot.lane.b32.xlu0 %v3599, 126
        %v3604 = vpop.permute.xlu0 %3603
        %3605 = vrot.lane.b32.xlu0 %v3600, 126
        %v3606 = vpop.permute.xlu0 %3605
        %v3609 = vadd.f32 %v3553, %v3604
        %v3610 = vadd.f32 %v3554, %v3606
        %s3611 = sld [smem:[#allocation3 + $0xbe]]
        %v3612 = vstv %s3611
        %v3613 = vmul.f32 %v3612, %v3515
        %v3614 = vmul.f32 %v3612, %v3516
        %3617 = vrot.lane.b32.xlu0 %v3613, 126
        %v3618 = vpop.permute.xlu0 %3617
        %3619 = vrot.lane.b32.xlu0 %v3614, 126
        %v3620 = vpop.permute.xlu0 %3619
        %v3623 = vadd.f32 %v3567, %v3618
        %v3624 = vadd.f32 %v3568, %v3620
        %s3625 = sld [smem:[#allocation3 + $0xe2]]
        %v3626 = vstv %s3625
        %v3627 = vmul.f32 %v3626, %v3515
        %v3628 = vmul.f32 %v3626, %v3516
        %3631 = vrot.lane.b32.xlu0 %v3627, 126
        %v3632 = vpop.permute.xlu0 %3631
        %3633 = vrot.lane.b32.xlu0 %v3628, 126
        %v3634 = vpop.permute.xlu0 %3633
        %v3637 = vadd.f32 %v3581, %v3632
        %v3638 = vadd.f32 %v3582, %v3634
        %s3639 = sld [smem:[#allocation3 + $0x186]]
        %v3640 = vstv %s3639
        %v3641 = vmul.f32 %v3640, %v3515
        %v3642 = vmul.f32 %v3640, %v3516
        %3645 = vrot.lane.b32.xlu0 %v3641, 126
        %v3646 = vpop.permute.xlu0 %3645
        %3647 = vrot.lane.b32.xlu0 %v3642, 126
        %v3648 = vpop.permute.xlu0 %3647
        %v3651 = vadd.f32 %v3595, %v3646
        %v3652 = vadd.f32 %v3596, %v3648
        %v3653 = vld [vmem:[%s256] sm:$0xff]
        %v3654 = vld [vmem:[%s256 + $0x8] sm:$0xff]
        %s3655 = sld [smem:[#allocation3 + $0x9b]]
        %v3656 = vstv %s3655
        %v3657 = vmul.f32 %v3656, %v3653
        %v3658 = vmul.f32 %v3656, %v3654
        %v3659 = vadd.f32 %v3609, %v3657
        %v3660 = vadd.f32 %v3610, %v3658
        %s3661 = sld [smem:[#allocation3 + $0xbf]]
        %v3662 = vstv %s3661
        %v3663 = vmul.f32 %v3662, %v3653
        %v3664 = vmul.f32 %v3662, %v3654
        %v3665 = vadd.f32 %v3623, %v3663
        %v3666 = vadd.f32 %v3624, %v3664
        %s3667 = sld [smem:[#allocation3 + $0xe3]]
        %v3668 = vstv %s3667
        %v3669 = vmul.f32 %v3668, %v3653
        %v3670 = vmul.f32 %v3668, %v3654
        %v3671 = vadd.f32 %v3637, %v3669
        %v3672 = vadd.f32 %v3638, %v3670
        %s3673 = sld [smem:[#allocation3 + $0x187]]
        %v3674 = vstv %s3673
        %v3675 = vmul.f32 %v3674, %v3653
        %v3676 = vmul.f32 %v3674, %v3654
        %v3677 = vadd.f32 %v3651, %v3675
        %v3678 = vadd.f32 %v3652, %v3676
        %s3679 = sld [smem:[#allocation3 + $0x9c]]
        %v3680 = vstv %s3679
        %v3681 = vmul.f32 %v3680, %v3653
        %v3682 = vmul.f32 %v3680, %v3654
        %3685 = vrot.lane.b32.xlu0 %v3681, 127
        %v3686 = vpop.permute.xlu0 %3685
        %3687 = vrot.lane.b32.xlu0 %v3682, 127
        %v3688 = vpop.permute.xlu0 %3687
        %v3691 = vadd.f32 %v3659, %v3686
        %v3692 = vadd.f32 %v3660, %v3688
        %s3693 = sld [smem:[#allocation3 + $0xc0]]
        %v3694 = vstv %s3693
        %v3695 = vmul.f32 %v3694, %v3653
        %v3696 = vmul.f32 %v3694, %v3654
        %3699 = vrot.lane.b32.xlu0 %v3695, 127
        %v3700 = vpop.permute.xlu0 %3699
        %3701 = vrot.lane.b32.xlu0 %v3696, 127
        %v3702 = vpop.permute.xlu0 %3701
        %v3705 = vadd.f32 %v3665, %v3700
        %v3706 = vadd.f32 %v3666, %v3702
        %s3707 = sld [smem:[#allocation3 + $0xe4]]
        %v3708 = vstv %s3707
        %v3709 = vmul.f32 %v3708, %v3653
        %v3710 = vmul.f32 %v3708, %v3654
        %3713 = vrot.lane.b32.xlu0 %v3709, 127
        %v3714 = vpop.permute.xlu0 %3713
        %3715 = vrot.lane.b32.xlu0 %v3710, 127
        %v3716 = vpop.permute.xlu0 %3715
        %v3719 = vadd.f32 %v3671, %v3714
        %v3720 = vadd.f32 %v3672, %v3716
        %s3721 = sld [smem:[#allocation3 + $0x188]]
        %v3722 = vstv %s3721
        %v3723 = vmul.f32 %v3722, %v3653
        %v3724 = vmul.f32 %v3722, %v3654
        %3727 = vrot.lane.b32.xlu0 %v3723, 127
        %v3728 = vpop.permute.xlu0 %3727
        %3729 = vrot.lane.b32.xlu0 %v3724, 127
        %v3730 = vpop.permute.xlu0 %3729
        %v3733 = vadd.f32 %v3677, %v3728
        %v3734 = vadd.f32 %v3678, %v3730
        %s3735 = sld [smem:[#allocation3 + $0x9d]]
        %v3736 = vstv %s3735
        %v3737 = vmul.f32 %v3736, %v3653
        %v3738 = vmul.f32 %v3736, %v3654
        %3741 = vrot.lane.b32.xlu0 %v3737, 126
        %v3742 = vpop.permute.xlu0 %3741
        %3743 = vrot.lane.b32.xlu0 %v3738, 126
        %v3744 = vpop.permute.xlu0 %3743
        %v3747 = vadd.f32 %v3691, %v3742
        %v3748 = vadd.f32 %v3692, %v3744
        %s3749 = sld [smem:[#allocation3 + $0xc1]]
        %v3750 = vstv %s3749
        %v3751 = vmul.f32 %v3750, %v3653
        %v3752 = vmul.f32 %v3750, %v3654
        %3755 = vrot.lane.b32.xlu0 %v3751, 126
        %v3756 = vpop.permute.xlu0 %3755
        %3757 = vrot.lane.b32.xlu0 %v3752, 126
        %v3758 = vpop.permute.xlu0 %3757
        %v3761 = vadd.f32 %v3705, %v3756
        %v3762 = vadd.f32 %v3706, %v3758
        %s3763 = sld [smem:[#allocation3 + $0xe5]]
        %v3764 = vstv %s3763
        %v3765 = vmul.f32 %v3764, %v3653
        %v3766 = vmul.f32 %v3764, %v3654
        %3769 = vrot.lane.b32.xlu0 %v3765, 126
        %v3770 = vpop.permute.xlu0 %3769
        %3771 = vrot.lane.b32.xlu0 %v3766, 126
        %v3772 = vpop.permute.xlu0 %3771
        %v3775 = vadd.f32 %v3719, %v3770
        %v3776 = vadd.f32 %v3720, %v3772
        %s3777 = sld [smem:[#allocation3 + $0x189]]
        %v3778 = vstv %s3777
        %v3779 = vmul.f32 %v3778, %v3653
        %v3780 = vmul.f32 %v3778, %v3654
        %3783 = vrot.lane.b32.xlu0 %v3779, 126
        %v3784 = vpop.permute.xlu0 %3783
        %3785 = vrot.lane.b32.xlu0 %v3780, 126
        %v3786 = vpop.permute.xlu0 %3785
        %v3789 = vadd.f32 %v3733, %v3784
        %v3790 = vadd.f32 %v3734, %v3786
        %v3791 = vld [vmem:[%s256 + $0x1] sm:$0xff]
        %v3792 = vld [vmem:[%s256 + $0x9] sm:$0xff]
        %s3793 = sld [smem:[#allocation3 + $0x9e]]
        %v3794 = vstv %s3793
        %v3795 = vmul.f32 %v3794, %v3791
        %v3796 = vmul.f32 %v3794, %v3792
        %v3797 = vadd.f32 %v3747, %v3795
        %v3798 = vadd.f32 %v3748, %v3796
        %s3799 = sld [smem:[#allocation3 + $0xc2]]
        %v3800 = vstv %s3799
        %v3801 = vmul.f32 %v3800, %v3791
        %v3802 = vmul.f32 %v3800, %v3792
        %v3803 = vadd.f32 %v3761, %v3801
        %v3804 = vadd.f32 %v3762, %v3802
        %s3805 = sld [smem:[#allocation3 + $0xe6]]
        %v3806 = vstv %s3805
        %v3807 = vmul.f32 %v3806, %v3791
        %v3808 = vmul.f32 %v3806, %v3792
        %v3809 = vadd.f32 %v3775, %v3807
        %v3810 = vadd.f32 %v3776, %v3808
        %s3811 = sld [smem:[#allocation3 + $0x18a]]
        %v3812 = vstv %s3811
        %v3813 = vmul.f32 %v3812, %v3791
        %v3814 = vmul.f32 %v3812, %v3792
        %v3815 = vadd.f32 %v3789, %v3813
        %v3816 = vadd.f32 %v3790, %v3814
        %s3817 = sld [smem:[#allocation3 + $0x9f]]
        %v3818 = vstv %s3817
        %v3819 = vmul.f32 %v3818, %v3791
        %v3820 = vmul.f32 %v3818, %v3792
        %3823 = vrot.lane.b32.xlu0 %v3819, 127
        %v3824 = vpop.permute.xlu0 %3823
        %3825 = vrot.lane.b32.xlu0 %v3820, 127
        %v3826 = vpop.permute.xlu0 %3825
        %v3829 = vadd.f32 %v3797, %v3824
        %v3830 = vadd.f32 %v3798, %v3826
        %s3831 = sld [smem:[#allocation3 + $0xc3]]
        %v3832 = vstv %s3831
        %v3833 = vmul.f32 %v3832, %v3791
        %v3834 = vmul.f32 %v3832, %v3792
        %3837 = vrot.lane.b32.xlu0 %v3833, 127
        %v3838 = vpop.permute.xlu0 %3837
        %3839 = vrot.lane.b32.xlu0 %v3834, 127
        %v3840 = vpop.permute.xlu0 %3839
        %v3843 = vadd.f32 %v3803, %v3838
        %v3844 = vadd.f32 %v3804, %v3840
        %s3845 = sld [smem:[#allocation3 + $0xe7]]
        %v3846 = vstv %s3845
        %v3847 = vmul.f32 %v3846, %v3791
        %v3848 = vmul.f32 %v3846, %v3792
        %3851 = vrot.lane.b32.xlu0 %v3847, 127
        %v3852 = vpop.permute.xlu0 %3851
        %3853 = vrot.lane.b32.xlu0 %v3848, 127
        %v3854 = vpop.permute.xlu0 %3853
        %v3857 = vadd.f32 %v3809, %v3852
        %v3858 = vadd.f32 %v3810, %v3854
        %s3859 = sld [smem:[#allocation3 + $0x18b]]
        %v3860 = vstv %s3859
        %v3861 = vmul.f32 %v3860, %v3791
        %v3862 = vmul.f32 %v3860, %v3792
        %3865 = vrot.lane.b32.xlu0 %v3861, 127
        %v3866 = vpop.permute.xlu0 %3865
        %3867 = vrot.lane.b32.xlu0 %v3862, 127
        %v3868 = vpop.permute.xlu0 %3867
        %v3871 = vadd.f32 %v3815, %v3866
        %v3872 = vadd.f32 %v3816, %v3868
        %s3873 = sld [smem:[#allocation3 + $0xa0]]
        %v3874 = vstv %s3873
        %v3875 = vmul.f32 %v3874, %v3791
        %v3876 = vmul.f32 %v3874, %v3792
        %3879 = vrot.lane.b32.xlu0 %v3875, 126
        %v3880 = vpop.permute.xlu0 %3879
        %3881 = vrot.lane.b32.xlu0 %v3876, 126
        %v3882 = vpop.permute.xlu0 %3881
        %v3885 = vadd.f32 %v3829, %v3880
        %v3886 = vadd.f32 %v3830, %v3882
        %s3887 = sld [smem:[#allocation3 + $0xc4]]
        %v3888 = vstv %s3887
        %v3889 = vmul.f32 %v3888, %v3791
        %v3890 = vmul.f32 %v3888, %v3792
        %3893 = vrot.lane.b32.xlu0 %v3889, 126
        %v3894 = vpop.permute.xlu0 %3893
        %3895 = vrot.lane.b32.xlu0 %v3890, 126
        %v3896 = vpop.permute.xlu0 %3895
        %v3899 = vadd.f32 %v3843, %v3894
        %v3900 = vadd.f32 %v3844, %v3896
        %s3901 = sld [smem:[#allocation3 + $0xe8]]
        %v3902 = vstv %s3901
        %v3903 = vmul.f32 %v3902, %v3791
        %v3904 = vmul.f32 %v3902, %v3792
        %3907 = vrot.lane.b32.xlu0 %v3903, 126
        %v3908 = vpop.permute.xlu0 %3907
        %3909 = vrot.lane.b32.xlu0 %v3904, 126
        %v3910 = vpop.permute.xlu0 %3909
        %v3913 = vadd.f32 %v3857, %v3908
        %v3914 = vadd.f32 %v3858, %v3910
        %s3915 = sld [smem:[#allocation3 + $0x18c]]
        %v3916 = vstv %s3915
        %v3917 = vmul.f32 %v3916, %v3791
        %v3918 = vmul.f32 %v3916, %v3792
        %3921 = vrot.lane.b32.xlu0 %v3917, 126
        %v3922 = vpop.permute.xlu0 %3921
        %3923 = vrot.lane.b32.xlu0 %v3918, 126
        %v3924 = vpop.permute.xlu0 %3923
        %v3927 = vadd.f32 %v3871, %v3922
        %v3928 = vadd.f32 %v3872, %v3924
        %v3929 = vld [vmem:[%s256 + $0x2] sm:$0xff]
        %v3930 = vld [vmem:[%s256 + $0xa] sm:$0xff]
        %s3931 = sld [smem:[#allocation3 + $0xa1]]
        %v3932 = vstv %s3931
        %v3933 = vmul.f32 %v3932, %v3929
        %v3934 = vmul.f32 %v3932, %v3930
        %v3935 = vadd.f32 %v3885, %v3933
        %v3936 = vadd.f32 %v3886, %v3934
        %s3937 = sld [smem:[#allocation3 + $0xc5]]
        %v3938 = vstv %s3937
        %v3939 = vmul.f32 %v3938, %v3929
        %v3940 = vmul.f32 %v3938, %v3930
        %v3941 = vadd.f32 %v3899, %v3939
        %v3942 = vadd.f32 %v3900, %v3940
        %s3943 = sld [smem:[#allocation3 + $0xe9]]
        %v3944 = vstv %s3943
        %v3945 = vmul.f32 %v3944, %v3929
        %v3946 = vmul.f32 %v3944, %v3930
        %v3947 = vadd.f32 %v3913, %v3945
        %v3948 = vadd.f32 %v3914, %v3946
        %s3949 = sld [smem:[#allocation3 + $0x18d]]
        %v3950 = vstv %s3949
        %v3951 = vmul.f32 %v3950, %v3929
        %v3952 = vmul.f32 %v3950, %v3930
        %v3953 = vadd.f32 %v3927, %v3951
        %v3954 = vadd.f32 %v3928, %v3952
        %s3955 = sld [smem:[#allocation3 + $0xa2]]
        %v3956 = vstv %s3955
        %v3957 = vmul.f32 %v3956, %v3929
        %v3958 = vmul.f32 %v3956, %v3930
        %3961 = vrot.lane.b32.xlu0 %v3957, 127
        %v3962 = vpop.permute.xlu0 %3961
        %3963 = vrot.lane.b32.xlu0 %v3958, 127
        %v3964 = vpop.permute.xlu0 %3963
        %v3967 = vadd.f32 %v3935, %v3962
        %v3968 = vadd.f32 %v3936, %v3964
        %s3969 = sld [smem:[#allocation3 + $0xc6]]
        %v3970 = vstv %s3969
        %v3971 = vmul.f32 %v3970, %v3929
        %v3972 = vmul.f32 %v3970, %v3930
        %3975 = vrot.lane.b32.xlu0 %v3971, 127
        %v3976 = vpop.permute.xlu0 %3975
        %3977 = vrot.lane.b32.xlu0 %v3972, 127
        %v3978 = vpop.permute.xlu0 %3977
        %v3981 = vadd.f32 %v3941, %v3976
        %v3982 = vadd.f32 %v3942, %v3978
        %s3983 = sld [smem:[#allocation3 + $0xea]]
        %v3984 = vstv %s3983
        %v3985 = vmul.f32 %v3984, %v3929
        %v3986 = vmul.f32 %v3984, %v3930
        %3989 = vrot.lane.b32.xlu0 %v3985, 127
        %v3990 = vpop.permute.xlu0 %3989
        %3991 = vrot.lane.b32.xlu0 %v3986, 127
        %v3992 = vpop.permute.xlu0 %3991
        %v3995 = vadd.f32 %v3947, %v3990
        %v3996 = vadd.f32 %v3948, %v3992
        %s3997 = sld [smem:[#allocation3 + $0x18e]]
        %v3998 = vstv %s3997
        %v3999 = vmul.f32 %v3998, %v3929
        %v4000 = vmul.f32 %v3998, %v3930
        %4003 = vrot.lane.b32.xlu0 %v3999, 127
        %v4004 = vpop.permute.xlu0 %4003
        %4005 = vrot.lane.b32.xlu0 %v4000, 127
        %v4006 = vpop.permute.xlu0 %4005
        %v4009 = vadd.f32 %v3953, %v4004
        %v4010 = vadd.f32 %v3954, %v4006
        %s4011 = sld [smem:[#allocation3 + $0xa3]]
        %v4012 = vstv %s4011
        %v4013 = vmul.f32 %v4012, %v3929
        %v4014 = vmul.f32 %v4012, %v3930
        %4017 = vrot.lane.b32.xlu0 %v4013, 126
        %v4018 = vpop.permute.xlu0 %4017
        %4019 = vrot.lane.b32.xlu0 %v4014, 126
        %v4020 = vpop.permute.xlu0 %4019
        %v4023 = vadd.f32 %v3967, %v4018
        %v4024 = vadd.f32 %v3968, %v4020
        %s4025 = sld [smem:[#allocation3 + $0xc7]]
        %v4026 = vstv %s4025
        %v4027 = vmul.f32 %v4026, %v3929
        %v4028 = vmul.f32 %v4026, %v3930
        %4031 = vrot.lane.b32.xlu0 %v4027, 126
        %v4032 = vpop.permute.xlu0 %4031
        %4033 = vrot.lane.b32.xlu0 %v4028, 126
        %v4034 = vpop.permute.xlu0 %4033
        %v4037 = vadd.f32 %v3981, %v4032
        %v4038 = vadd.f32 %v3982, %v4034
        %s4039 = sld [smem:[#allocation3 + $0xeb]]
        %v4040 = vstv %s4039
        %v4041 = vmul.f32 %v4040, %v3929
        %v4042 = vmul.f32 %v4040, %v3930
        %4045 = vrot.lane.b32.xlu0 %v4041, 126
        %v4046 = vpop.permute.xlu0 %4045
        %4047 = vrot.lane.b32.xlu0 %v4042, 126
        %v4048 = vpop.permute.xlu0 %4047
        %v4051 = vadd.f32 %v3995, %v4046
        %v4052 = vadd.f32 %v3996, %v4048
        %s4053 = sld [smem:[#allocation3 + $0x18f]]
        %v4054 = vstv %s4053
        %v4055 = vmul.f32 %v4054, %v3929
        %v4056 = vmul.f32 %v4054, %v3930
        %4059 = vrot.lane.b32.xlu0 %v4055, 126
        %v4060 = vpop.permute.xlu0 %4059
        %4061 = vrot.lane.b32.xlu0 %v4056, 126
        %v4062 = vpop.permute.xlu0 %4061
        %v4065 = vadd.f32 %v4009, %v4060
        %v4066 = vadd.f32 %v4010, %v4062
        %v4067 = vmul.f32 %v4023, %v4023
        %v4068 = vmul.f32 %v4024, %v4024
        %v4069 = vsel %vm2079, %v4067, 0.0
        %v4070 = vsel %vm2079, %v4068, 0.0
        %v4071 = vadd.f32 %v4069, %v4070
        %4072 = vadd.xlane.f32.xlu0 %v4071
        %v4073 = vpop.xlane.xlu0 %4072
        %v4074 = vrot.slane %v4073, 4
        %v4075 = vadd.f32 %v4073, %v4074
        %v4076 = vrot.slane %v4075, 2
        %v4077 = vadd.f32 %v4075, %v4076
        %v4078 = vrot.slane %v4077, 1
        %v4079 = vadd.f32 %v4077, %v4078
        %s4080 = vtos %v4079
        %v4081 = vstv %s4080
        %v4082 = vmul.f32 %v4081, %v2093
        %v4083 = vadd.f32 %v4082, 1e-06
        %v4084 = vrsqrt.pop %v4083
        %v4085 = vmul.f32 %v4023, %v4084
        %v4086 = vmul.f32 %v4024, %v4084
        %s4087 = sld [smem:[#allocation6 + $0x280]]
        %v4088 = vstv %s4087
        %v4089 = vmul.f32 %v4088, %v4085
        %v4090 = vmul.f32 %v4088, %v4086
        %s4091 = sld [smem:[#allocation6 + $0x300]]
        %v4092 = vstv %s4091
        %v4093 = vadd.f32 %v4089, %v4092
        %v4094 = vadd.f32 %v4090, %v4092
        %v4095 = vadd.f32 %v4093, %v196
        %v4096 = vadd.f32 %v4094, %v197
        %4097 = vst.msk [vmem:[%s190] sm:$0xff] %vm2079, %v4095
        %4098 = vst.msk [vmem:[%s190 + $0x8] sm:$0xff] %vm2079, %v4096
        %v4099 = vmul.f32 %v4037, %v4037
        %v4100 = vmul.f32 %v4038, %v4038
        %v4101 = vsel %vm2079, %v4099, 0.0
        %v4102 = vsel %vm2079, %v4100, 0.0
        %v4103 = vadd.f32 %v4101, %v4102
        %4104 = vadd.xlane.f32.xlu0 %v4103
        %v4105 = vpop.xlane.xlu0 %4104
        %v4106 = vrot.slane %v4105, 4
        %v4107 = vadd.f32 %v4105, %v4106
        %v4108 = vrot.slane %v4107, 2
        %v4109 = vadd.f32 %v4107, %v4108
        %v4110 = vrot.slane %v4109, 1
        %v4111 = vadd.f32 %v4109, %v4110
        %s4112 = vtos %v4111
        %v4113 = vstv %s4112
        %v4114 = vmul.f32 %v4113, %v2093
        %v4115 = vadd.f32 %v4114, 1e-06
        %v4116 = vrsqrt.pop %v4115
        %v4117 = vmul.f32 %v4037, %v4116
        %v4118 = vmul.f32 %v4038, %v4116
        %s4119 = sld [smem:[#allocation6 + $0x281]]
        %v4120 = vstv %s4119
        %v4121 = vmul.f32 %v4120, %v4117
        %v4122 = vmul.f32 %v4120, %v4118
        %s4123 = sld [smem:[#allocation6 + $0x301]]
        %v4124 = vstv %s4123
        %v4125 = vadd.f32 %v4121, %v4124
        %v4126 = vadd.f32 %v4122, %v4124
        %v4127 = vadd.f32 %v4125, %v199
        %v4128 = vadd.f32 %v4126, %v200
        %s4129 = scalar_lea.vmem %s190, 16 [#allocation8]
        %4130 = vst.msk [vmem:[%s4129] sm:$0xff] %vm2079, %v4127
        %4131 = vst.msk [vmem:[%s4129 + $0x8] sm:$0xff] %vm2079, %v4128
        %v4132 = vmul.f32 %v4051, %v4051
        %v4133 = vmul.f32 %v4052, %v4052
        %v4134 = vsel %vm2079, %v4132, 0.0
        %v4135 = vsel %vm2079, %v4133, 0.0
        %v4136 = vadd.f32 %v4134, %v4135
        %4137 = vadd.xlane.f32.xlu0 %v4136
        %v4138 = vpop.xlane.xlu0 %4137
        %v4139 = vrot.slane %v4138, 4
        %v4140 = vadd.f32 %v4138, %v4139
        %v4141 = vrot.slane %v4140, 2
        %v4142 = vadd.f32 %v4140, %v4141
        %v4143 = vrot.slane %v4142, 1
        %v4144 = vadd.f32 %v4142, %v4143
        %s4145 = vtos %v4144
        %v4146 = vstv %s4145
        %v4147 = vmul.f32 %v4146, %v2093
        %v4148 = vadd.f32 %v4147, 1e-06
        %v4149 = vrsqrt.pop %v4148
        %v4150 = vmul.f32 %v4051, %v4149
        %v4151 = vmul.f32 %v4052, %v4149
        %s4152 = sld [smem:[#allocation6 + $0x282]]
        %v4153 = vstv %s4152
        %v4154 = vmul.f32 %v4153, %v4150
        %v4155 = vmul.f32 %v4153, %v4151
        %s4156 = sld [smem:[#allocation6 + $0x302]]
        %v4157 = vstv %s4156
        %v4158 = vadd.f32 %v4154, %v4157
        %v4159 = vadd.f32 %v4155, %v4157
        %v4160 = vadd.f32 %v4158, %v202
        %v4161 = vadd.f32 %v4159, %v203
        %s4162 = scalar_lea.vmem %s190, 32 [#allocation8]
        %4163 = vst.msk [vmem:[%s4162] sm:$0xff] %vm2079, %v4160
        %4164 = vst.msk [vmem:[%s4162 + $0x8] sm:$0xff] %vm2079, %v4161
        %v4165 = vmul.f32 %v4065, %v4065
        %v4166 = vmul.f32 %v4066, %v4066
        %v4167 = vsel %vm2079, %v4165, 0.0
        %v4168 = vsel %vm2079, %v4166, 0.0
        %v4169 = vadd.f32 %v4167, %v4168
        %4170 = vadd.xlane.f32.xlu0 %v4169
        %v4171 = vpop.xlane.xlu0 %4170
        %v4172 = vrot.slane %v4171, 4
        %v4173 = vadd.f32 %v4171, %v4172
        %v4174 = vrot.slane %v4173, 2
        %v4175 = vadd.f32 %v4173, %v4174
        %v4176 = vrot.slane %v4175, 1
        %v4177 = vadd.f32 %v4175, %v4176
        %s4178 = vtos %v4177
        %v4179 = vstv %s4178
        %v4180 = vmul.f32 %v4179, %v2093
        %v4181 = vadd.f32 %v4180, 1e-06
        %v4182 = vrsqrt.pop %v4181
        %v4183 = vmul.f32 %v4065, %v4182
        %v4184 = vmul.f32 %v4066, %v4182
        %s4185 = sld [smem:[#allocation6 + $0x283]]
        %v4186 = vstv %s4185
        %v4187 = vmul.f32 %v4186, %v4183
        %v4188 = vmul.f32 %v4186, %v4184
        %s4189 = sld [smem:[#allocation6 + $0x303]]
        %v4190 = vstv %s4189
        %v4191 = vadd.f32 %v4187, %v4190
        %v4192 = vadd.f32 %v4188, %v4190
        %v4193 = vadd.f32 %v4191, %v205
        %v4194 = vadd.f32 %v4192, %v206
        %s4195 = scalar_lea.vmem %s190, 48 [#allocation8]
        %4196 = vst.msk [vmem:[%s4195] sm:$0xff] %vm2079, %v4193
        %4197 = vst.msk [vmem:[%s4195 + $0x8] sm:$0xff] %vm2079, %v4194
        %s4198 = sand.u32 %s95, 1
        %s4199 = scalar_lea.sflag [#allocation4], %s4198
        %s4200 = sand.u32 %s95, 1
        %s4201 = smul.addr %s4200, 64
        %s4202 = scalar_lea.vmem [#allocation8], %s4201
        // Predicated region
        $region41: #{residual_block.1} parent=31 // pred_check
          %p4203 = pneg %p105
        $region42: #{residual_block.1} parent=31 // pred_check_branch
          %4205 = sbr.rel (%p4203) target = $region44
        $region43: #{residual_block.1} parent=31 // pred_region
          %s4207 = ssub.s32 1024, 1024
          %4208 = vsyncadd %s4199, %s4207
          %s4209 = smul.addr %s19, 8
          %s4210 = smul.addr %s4209, 128
          %s4211 = scalar_lea.hbm %s3, %s4210
          %s4212 = sshll.u32 %s4202, 4
          %s4213 = int_to_ptr.vmem [resolvable:$true] %s4212
          %4218 = dma.vmem_to_hbm [thread:$0]  %s4213, 1024, %s4211, %s4199, 128, 128, 8
        $region44: #{residual_block.1} parent=31 // pred_fallthru
          _
      $region32: #{residual_block.1} parent=5 // pred_fallthru
        _
      %p4219 = scmp.le.s32.totalorder 2, %s14
      // Predicated region
      $region45: #{residual_block.1} parent=5 // pred_check
        %p4220 = pneg %p4219
      $region46: #{residual_block.1} parent=5 // pred_check_branch
        %4222 = sbr.rel (%p4220) target = $region48
      $region47: #{residual_block.1} parent=5 // pred_region
        %s4223 = ssub.s32 %s14, 2
        // Predicated region
        $region49: #{residual_block.1} parent=47 // pred_check
          %p4224 = pneg %p111
        $region50: #{residual_block.1} parent=47 // pred_check_branch
          %4226 = sbr.rel (%p4224) target = $region52
        $region51: #{residual_block.1} parent=47 // pred_region
          %s4227 = sand.u32 %s96, 1
          %s4228 = scalar_lea.sflag [#allocation4], %s4227
          %s4229 = sand.u32 %s96, 1
          %s4230 = smul.addr %s4229, 64
          %s4231 = scalar_lea.vmem [#allocation8], %s4230
          %4232 = dma.done %s4228, 1024
        $region52: #{residual_block.1} parent=47 // pred_fallthru
          _
      $region48: #{residual_block.1} parent=5 // pred_fallthru
        _
    $region6: #{residual_block.1} parent=1 // loop_footer
      %s18 = sadd.s32 1, %s14
    $region7: #{residual_block.1} parent=1 // loop_footer_branch
      %13 = sbr.rel target = $region3
    $region8: #{residual_block.1} parent=1 // loop_exit
      _
    %4233 = vsyncpa [#allocation4], 1
    %s4234 = scalar_lea.sflag [#allocation4], 1
    %4235 = vsyncpa %s4234, 1
    %4236 = vsyncpa [#allocation5], 1
    %s4237 = scalar_lea.sflag [#allocation5], 1
    %4238 = vsyncpa %s4237, 1
    %4239 = vsyncpa [#allocation7], 1

</llo_original>
